<compile_context>
chip_gen: v6e
topology: v6e:2x2x1
jax: 0.10.0
libtpu: 0.0.40
codegen_flags: <defaults>
</compile_context>

<pallas_src>
import functools

import jax
import jax.numpy as jnp
from jax.experimental import pallas as pl
from jax.experimental.pallas import tpu as pltpu

EPS = 1e-5        # nn.InstanceNorm2d default eps (affine=False, no running stats)
LANE = 128        # channel padding target -> lane-dense stores
IN_CHUNK = 128    # max spatial rows per InstanceNorm block


# ------------------------------------------------------------------ helpers

def _ceil_to(x, m):
    return (x + m - 1) // m * m


def _pad_axis(x, axis, new_size):
    if x.shape[axis] == new_size:
        return x
    pad = [(0, 0)] * x.ndim
    pad[axis] = (0, new_size - x.shape[axis])
    return jnp.pad(x, pad)


def _pick_chunk(hw):
    for th in (IN_CHUNK, 64, 32, 16, 8):
        if th <= hw and hw % th == 0:
            return th
    return hw


# ------------------------------------------------------------------ conv kernel (tap accumulation, no im2col)

def _tap_conv_kernel(x_ref, w_ref, b_ref, o_ref, acc_ref, *,
                     k, stride, cin, wq, wo, activation):
    di = pl.program_id(2)

    @pl.when(di == 0)
    def _():
        acc_ref[...] = jnp.zeros_like(acc_ref)

    row = x_ref[...][0, 0]          # (stride*wq, cin)  one padded input row (bf16)
    w_di = w_ref[di]                # (k*cin, cout)     weight slab for this row tap
    acc = acc_ref[...]
    for dj in range(k):             # static column taps
        start = (dj % stride) * wq + dj // stride
        xs = row[start:start + wo, :]                    # (wo, cin)
        ws = w_di[dj * cin:(dj + 1) * cin, :]            # (cin, cout)
        acc = acc + jnp.dot(xs, ws, preferred_element_type=jnp.float32)
    acc_ref[...] = acc

    @pl.when(di == k - 1)
    def _():
        y = acc_ref[...] + b_ref[...]
        if activation == "tanh":
            y = jnp.tanh(y)
        elif activation == "relu":
            y = jnp.maximum(y, 0.0)
        o_ref[...] = y[None, None].astype(o_ref.dtype)


def tap_conv(x, w, b, *, k, stride, pad_lo, pad_hi, activation=None,
             out_dtype=jnp.bfloat16):
    """x: (N,H,W,Cin_pad) bf16; w: (k, k*Cin_pad, Cout_pad) bf16; b: (1, Cout_pad) f32."""
    N, H, W, cin = x.shape
    cout = w.shape[-1]
    xp = jnp.pad(x, ((0, 0), (pad_lo, pad_hi), (pad_lo, pad_hi), (0, 0)))
    Hp, Wp = H + pad_lo + pad_hi, W + pad_lo + pad_hi
    Ho = (Hp - k) // stride + 1
    Wo = (Wp - k) // stride + 1

    if stride == 1:
        wq = Wp
        x_ph = xp
    else:
        # phase-major column layout so each tap's window is a contiguous static slice
        wq = -(-Wp // stride)
        xp = _pad_axis(xp, 2, wq * stride)
        x_ph = xp.reshape(N, Hp, wq, stride, cin).transpose(0, 1, 3, 2, 4)
        x_ph = x_ph.reshape(N, Hp, stride * wq, cin)

    kernel = functools.partial(_tap_conv_kernel, k=k, stride=stride, cin=cin,
                               wq=wq, wo=Wo, activation=activation)
    return pl.pallas_call(
        kernel,
        out_shape=jax.ShapeDtypeStruct((N, Ho, Wo, cout), out_dtype),
        grid_spec=pltpu.PrefetchScalarGridSpec(
            num_scalar_prefetch=0,
            grid=(N, Ho, k),
            in_specs=[
                pl.BlockSpec((1, 1, stride * wq, cin),
                             lambda n, r, di: (n, stride * r + di, 0, 0)),
                pl.BlockSpec((k, k * cin, cout), lambda n, r, di: (0, 0, 0)),
                pl.BlockSpec((1, cout), lambda n, r, di: (0, 0)),
            ],
            out_specs=pl.BlockSpec((1, 1, Wo, cout), lambda n, r, di: (n, r, 0, 0)),
            scratch_shapes=[pltpu.VMEM((Wo, cout), jnp.float32)],
        ),
        compiler_params=pltpu.CompilerParams(
            dimension_semantics=("parallel", "parallel", "arbitrary")),
    )(x_ph, w, b)


# ------------------------------------------------------------------ conv wrappers (weight prep / channel padding)

def _prep_conv_weight(w_pt, cin_pad, cout_pad):
    # torch Conv2d layout (Cout, Cin, k, k) -> (k, k*cin_pad, cout_pad), zero padded
    cout, cin, k, _ = w_pt.shape
    w = jnp.transpose(w_pt, (2, 3, 1, 0))                        # (kh, kw, Cin, Cout)
    w = _pad_axis(_pad_axis(w, 2, cin_pad), 3, cout_pad)
    return w.reshape(k, k * cin_pad, cout_pad).astype(jnp.bfloat16)


def _prep_convt_weight(w_pt, cin_pad, cout_pad):
    # torch ConvTranspose2d layout (Cin, Cout, k, k) -> equivalent forward-conv slabs
    cin, cout, k, _ = w_pt.shape
    w = jnp.transpose(jnp.flip(w_pt, axis=(2, 3)), (2, 3, 0, 1))  # (kh, kw, Cin, Cout)
    w = _pad_axis(_pad_axis(w, 2, cin_pad), 3, cout_pad)
    return w.reshape(k, k * cin_pad, cout_pad).astype(jnp.bfloat16)


def _prep_bias(b, cout_pad):
    return _pad_axis(b.reshape(1, -1).astype(jnp.float32), 1, cout_pad)


def conv2d(x, w_pt, b, *, stride=1, pad=1, activation=None, out_dtype=jnp.bfloat16):
    cout, _, k, _ = w_pt.shape
    cout_pad = _ceil_to(cout, LANE)
    w = _prep_conv_weight(w_pt, x.shape[-1], cout_pad)
    return tap_conv(x, w, _prep_bias(b, cout_pad), k=k, stride=stride,
                    pad_lo=pad, pad_hi=pad, activation=activation,
                    out_dtype=out_dtype)


def conv_transpose2d(x, w_pt, b, *, stride=2, pad=1, out_pad=1,
                     out_dtype=jnp.bfloat16):
    # TODO(synk): sub-pixel decomposition (stride^2 stride-1 convs + interleave) would
    # avoid feeding the MXU the zero-dilated input; kept as dilation for simplicity.
    _, cout, k, _ = w_pt.shape
    N, H, W, C = x.shape
    xd = jnp.zeros((N, (H - 1) * stride + 1, (W - 1) * stride + 1, C), x.dtype)
    xd = xd.at[:, ::stride, ::stride, :].set(x)
    cout_pad = _ceil_to(cout, LANE)
    w = _prep_convt_weight(w_pt, C, cout_pad)
    return tap_conv(xd, w, _prep_bias(b, cout_pad), k=k, stride=1,
                    pad_lo=k - 1 - pad, pad_hi=k - 1 - pad + out_pad,
                    out_dtype=out_dtype)


# ------------------------------------------------------------------ InstanceNorm (tiled, two-pass, fused ReLU / residual)

def _make_instnorm_kernel(hw, relu, has_residual):
    def kernel(*refs):
        if has_residual:
            x_ref, r_ref, o_ref, sum_ref, ssq_ref = refs
        else:
            x_ref, o_ref, sum_ref, ssq_ref = refs
        p = pl.program_id(1)
        c = pl.program_id(2)
        nchunks = pl.num_programs(2)

        @pl.when((p == 0) & (c == 0))
        def _():
            sum_ref[...] = jnp.zeros_like(sum_ref)
            ssq_ref[...] = jnp.zeros_like(ssq_ref)

        x = x_ref[...][0].astype(jnp.float32)            # (th, C)

        @pl.when(p == 0)
        def _():
            sum_ref[...] += jnp.sum(x, axis=0, keepdims=True)
            ssq_ref[...] += jnp.sum(x * x, axis=0, keepdims=True)

        @pl.when((p == 0) & (c == nchunks - 1))
        def _():
            mean = sum_ref[...] / hw
            var = ssq_ref[...] / hw - mean * mean
            sum_ref[...] = mean
            ssq_ref[...] = jax.lax.rsqrt(jnp.maximum(var, 0.0) + EPS)

        @pl.when(p == 1)
        def _():
            y = (x - sum_ref[...]) * ssq_ref[...]
            if relu:
                y = jnp.maximum(y, 0.0)
            if has_residual:
                y = y + r_ref[...][0].astype(jnp.float32)
            o_ref[...] = y[None].astype(o_ref.dtype)

    return kernel


def instance_norm(x, *, relu=False, residual=None):
    N, H, W, C = x.shape
    hw = H * W
    th = _pick_chunk(hw)
    nchunks = hw // th
    x2 = x.reshape(N, hw, C)

    in_specs = [pl.BlockSpec((1, th, C), lambda n, p, c: (n, c, 0))]
    args = [x2]
    if residual is not None:
        # residual only needed in pass 1: keep its block index constant during pass 0
        in_specs.append(pl.BlockSpec((1, th, C), lambda n, p, c: (n, c * p, 0)))
        args.append(residual.reshape(N, hw, C))

    out = pl.pallas_call(
        _make_instnorm_kernel(hw, relu, residual is not None),
        out_shape=jax.ShapeDtypeStruct((N, hw, C), x.dtype),
        grid_spec=pltpu.PrefetchScalarGridSpec(
            num_scalar_prefetch=0,
            grid=(N, 2, nchunks),
            in_specs=in_specs,
            out_specs=pl.BlockSpec((1, th, C), lambda n, p, c: (n, c * p, 0)),
            scratch_shapes=[pltpu.VMEM((1, C), jnp.float32),
                            pltpu.VMEM((1, C), jnp.float32)],
        ),
        compiler_params=pltpu.CompilerParams(
            dimension_semantics=("parallel", "arbitrary", "arbitrary")),
    )(*args)
    return out.reshape(N, H, W, C)


# ------------------------------------------------------------------ model

def init_params(key, input_nc, output_nc, ngf, n_blocks):
    params = {}

    def conv_init(k_, cout, cin, k):
        k1, k2 = jax.random.split(k_)
        w = jax.random.normal(k1, (cout, cin, k, k), jnp.float32) * 0.1
        b = jax.random.normal(k2, (cout,), jnp.float32) * 0.1
        return w, b

    def convt_init(k_, cin, cout, k):
        k1, k2 = jax.random.split(k_)
        w = jax.random.normal(k1, (cin, cout, k, k), jnp.float32) * 0.1
        b = jax.random.normal(k2, (cout,), jnp.float32) * 0.1
        return w, b

    keys = iter(jax.random.split(key, 64))
    params["c0_w"], params["c0_b"] = conv_init(next(keys), ngf, input_nc, 7)
    for i in range(2):
        mult = 2 ** i
        params[f"down{i}_w"], params[f"down{i}_b"] = conv_init(
            next(keys), ngf * mult * 2, ngf * mult, 3)
    mult = 4
    for i in range(n_blocks):
        params[f"blk{i}_c1_w"], params[f"blk{i}_c1_b"] = conv_init(
            next(keys), ngf * mult, ngf * mult, 3)
        params[f"blk{i}_c2_w"], params[f"blk{i}_c2_b"] = conv_init(
            next(keys), ngf * mult, ngf * mult, 3)
    for i in range(2):
        mult = 2 ** (2 - i)
        params[f"up{i}_w"], params[f"up{i}_b"] = convt_init(
            next(keys), ngf * mult, ngf * mult // 2, 3)
    params["cf_w"], params["cf_b"] = conv_init(next(keys), output_nc, ngf, 7)
    return params


@functools.partial(jax.jit, static_argnames=("n_blocks",))
def resnet_generator_forward(x_nchw, params, n_blocks):
    x = jnp.transpose(x_nchw, (0, 2, 3, 1))                        # NCHW -> NHWC
    x = _pad_axis(x, 3, _ceil_to(x.shape[-1], LANE)).astype(jnp.bfloat16)

    # initial 7x7 conv + InstanceNorm + ReLU
    x = conv2d(x, params["c0_w"], params["c0_b"], stride=1, pad=3)
    x = instance_norm(x, relu=True)

    # 2 downsampling convs (stride 2) + IN + ReLU
    for i in range(2):
        x = conv2d(x, params[f"down{i}_w"], params[f"down{i}_b"], stride=2, pad=1)
        x = instance_norm(x, relu=True)

    # n_blocks ResnetBlocks: x + IN(conv(ReLU(IN(conv(x)))))
    for i in range(n_blocks):
        res = x
        h = conv2d(x, params[f"blk{i}_c1_w"], params[f"blk{i}_c1_b"], stride=1, pad=1)
        h = instance_norm(h, relu=True)
        h = conv2d(h, params[f"blk{i}_c2_w"], params[f"blk{i}_c2_b"], stride=1, pad=1)
        x = instance_norm(h, residual=res)

    # 2 upsampling ConvTranspose2d + IN + ReLU
    for i in range(2):
        x = conv_transpose2d(x, params[f"up{i}_w"], params[f"up{i}_b"],
                             stride=2, pad=1, out_pad=1)
        x = instance_norm(x, relu=True)

    # final 7x7 conv + tanh (fused epilogue, f32 output); drop the channel padding
    x = conv2d(x, params["cf_w"], params["cf_b"], stride=1, pad=3,
               activation="tanh", out_dtype=jnp.float32)
    x = x[..., :params["cf_w"].shape[0]]
    return jnp.transpose(x, (0, 3, 1, 2))                          # NHWC -> NCHW


# ------------------------------------------------------------------ main

if __name__ == "__main__":
    batch, input_nc, output_nc, ngf, n_blocks, spatial = 2, 4, 4, 8, 2, 16

    key = jax.random.PRNGKey(0)
    kx, kp = jax.random.split(key)
    x = jax.random.normal(kx, (batch, input_nc, spatial, spatial), jnp.float32)
    params = init_params(kp, input_nc, output_nc, ngf, n_blocks)

    out = resnet_generator_forward(x, params, n_blocks)
    out = jax.block_until_ready(out)

    assert out.shape == (batch, output_nc, spatial, spatial), out.shape
    assert bool(jnp.all(jnp.isfinite(out)))
    assert bool(jnp.all(jnp.abs(out) <= 1.0))  # tanh output range
    print("KERNEL_OK")
</pallas_src>

<mosaic_0001>
module attributes {stable_mosaic.version = 11 : i64} {
  func.func @kernel(%arg0: i32, %arg1: i32, %arg2: i32, %arg3: memref<1x128x128xbf16, #tpu.memory_space<vmem>>, %arg4: memref<1x128x128xbf16, #tpu.memory_space<vmem>>, %arg5: memref<1x128xf32, #tpu.memory_space<vmem>>, %arg6: memref<1x128xf32, #tpu.memory_space<vmem>>) attributes {dimension_semantics = [#tpu.dimension_semantics<parallel>, #tpu.dimension_semantics<arbitrary>, #tpu.dimension_semantics<arbitrary>], iteration_bounds = array<i64: 2, 2, 2>, scalar_prefetch = 0 : i64, scratch_operands = 2 : i64, tpu.core_type = #tpu.core_type<tc>, window_params = [{transform_indices = @transform_0, window_bounds = array<i64: 1, 128, 128>}, {transform_indices = @transform_1, window_bounds = array<i64: 1, 128, 128>}]} {
    %c0_i32 = arith.constant 0 : i32
    %0 = arith.cmpi eq, %arg1, %c0_i32 : i32
    %c0_i32_0 = arith.constant 0 : i32
    %1 = arith.cmpi eq, %arg2, %c0_i32_0 : i32
    %2 = arith.andi %0, %1 : i1
    %3 = arith.extui %2 : i1 to i32
    %c0_i32_1 = arith.constant 0 : i32
    %4 = arith.cmpi ne, %3, %c0_i32_1 : i32
    scf.if %4 {
      %cst = arith.constant 0.000000e+00 : f32
      %19 = vector.broadcast %cst : f32 to vector<1x128xf32>
      %c0_10 = arith.constant 0 : index
      %c0_11 = arith.constant 0 : index
      %20 = vector.load %arg5[%c0_10, %c0_11] : memref<1x128xf32, #tpu.memory_space<vmem>>, vector<1x128xf32>
      tpu.vector_store %arg5[%c0_10, %c0_11], %19 {strides = array<i32>} : memref<1x128xf32, #tpu.memory_space<vmem>>, vector<1x128xf32>,
      %cst_12 = arith.constant 0.000000e+00 : f32
      %21 = vector.broadcast %cst_12 : f32 to vector<1x128xf32>
      %c0_13 = arith.constant 0 : index
      %c0_14 = arith.constant 0 : index
      %22 = vector.load %arg6[%c0_13, %c0_14] : memref<1x128xf32, #tpu.memory_space<vmem>>, vector<1x128xf32>
      tpu.vector_store %arg6[%c0_13, %c0_14], %21 {strides = array<i32>} : memref<1x128xf32, #tpu.memory_space<vmem>>, vector<1x128xf32>,
    } else {
    }
    %c0 = arith.constant 0 : index
    %c0_2 = arith.constant 0 : index
    %c0_3 = arith.constant 0 : index
    %5 = vector.load %arg3[%c0, %c0_2, %c0_3] : memref<1x128x128xbf16, #tpu.memory_space<vmem>>, vector<1x128x128xbf16>
    %6 = vector.shape_cast %5 : vector<1x128x128xbf16> to vector<128x128xbf16>
    %7 = arith.extf %6 : vector<128x128xbf16> to vector<128x128xf32>
    %c0_i32_4 = arith.constant 0 : i32
    %8 = arith.cmpi eq, %arg1, %c0_i32_4 : i32
    %9 = arith.extui %8 : i1 to i32
    %c0_i32_5 = arith.constant 0 : i32
    %10 = arith.cmpi ne, %9, %c0_i32_5 : i32
    scf.if %10 {
      %c0_10 = arith.constant 0 : index
      %c0_11 = arith.constant 0 : index
      %19 = vector.load %arg5[%c0_10, %c0_11] : memref<1x128xf32, #tpu.memory_space<vmem>>, vector<1x128xf32>
      %cst = arith.constant dense<0.000000e+00> : vector<128xf32>
      %20 = vector.multi_reduction <add>, %7, %cst [0] : vector<128x128xf32> to vector<128xf32>
      %21 = vector.shape_cast %20 : vector<128xf32> to vector<1x128xf32>
      %22 = arith.addf %19, %21 : vector<1x128xf32>
      %c0_12 = arith.constant 0 : index
      %c0_13 = arith.constant 0 : index
      %23 = vector.load %arg5[%c0_12, %c0_13] : memref<1x128xf32, #tpu.memory_space<vmem>>, vector<1x128xf32>
      tpu.vector_store %arg5[%c0_12, %c0_13], %22 {strides = array<i32>} : memref<1x128xf32, #tpu.memory_space<vmem>>, vector<1x128xf32>,
      %c0_14 = arith.constant 0 : index
      %c0_15 = arith.constant 0 : index
      %24 = vector.load %arg6[%c0_14, %c0_15] : memref<1x128xf32, #tpu.memory_space<vmem>>, vector<1x128xf32>
      %25 = arith.mulf %7, %7 : vector<128x128xf32>
      %cst_16 = arith.constant dense<0.000000e+00> : vector<128xf32>
      %26 = vector.multi_reduction <add>, %25, %cst_16 [0] : vector<128x128xf32> to vector<128xf32>
      %27 = vector.shape_cast %26 : vector<128xf32> to vector<1x128xf32>
      %28 = arith.addf %24, %27 : vector<1x128xf32>
      %c0_17 = arith.constant 0 : index
      %c0_18 = arith.constant 0 : index
      %29 = vector.load %arg6[%c0_17, %c0_18] : memref<1x128xf32, #tpu.memory_space<vmem>>, vector<1x128xf32>
      tpu.vector_store %arg6[%c0_17, %c0_18], %28 {strides = array<i32>} : memref<1x128xf32, #tpu.memory_space<vmem>>, vector<1x128xf32>,
    } else {
    }
    %c0_i32_6 = arith.constant 0 : i32
    %11 = arith.cmpi eq, %arg1, %c0_i32_6 : i32
    %c1_i32 = arith.constant 1 : i32
    %12 = arith.cmpi eq, %arg2, %c1_i32 : i32
    %13 = arith.andi %11, %12 : i1
    %14 = arith.extui %13 : i1 to i32
    %c0_i32_7 = arith.constant 0 : i32
    %15 = arith.cmpi ne, %14, %c0_i32_7 : i32
    scf.if %15 {
      %c0_10 = arith.constant 0 : index
      %c0_11 = arith.constant 0 : index
      %19 = vector.load %arg5[%c0_10, %c0_11] : memref<1x128xf32, #tpu.memory_space<vmem>>, vector<1x128xf32>
      %cst = arith.constant 2.560000e+02 : f32
      %20 = vector.broadcast %cst : f32 to vector<1x128xf32>
      %21 = arith.divf %19, %20 : vector<1x128xf32>
      %c0_12 = arith.constant 0 : index
      %c0_13 = arith.constant 0 : index
      %22 = vector.load %arg6[%c0_12, %c0_13] : memref<1x128xf32, #tpu.memory_space<vmem>>, vector<1x128xf32>
      %cst_14 = arith.constant 2.560000e+02 : f32
      %23 = vector.broadcast %cst_14 : f32 to vector<1x128xf32>
      %24 = arith.divf %22, %23 : vector<1x128xf32>
      %25 = arith.mulf %21, %21 : vector<1x128xf32>
      %26 = arith.subf %24, %25 : vector<1x128xf32>
      %c0_15 = arith.constant 0 : index
      %c0_16 = arith.constant 0 : index
      %27 = vector.load %arg5[%c0_15, %c0_16] : memref<1x128xf32, #tpu.memory_space<vmem>>, vector<1x128xf32>
      tpu.vector_store %arg5[%c0_15, %c0_16], %21 {strides = array<i32>} : memref<1x128xf32, #tpu.memory_space<vmem>>, vector<1x128xf32>,
      %cst_17 = arith.constant 0.000000e+00 : f32
      %28 = vector.broadcast %cst_17 : f32 to vector<1x128xf32>
      %29 = arith.maximumf %26, %28 : vector<1x128xf32>
      %cst_18 = arith.constant 9.99999974E-6 : f32
      %30 = vector.broadcast %cst_18 : f32 to vector<1x128xf32>
      %31 = arith.addf %29, %30 : vector<1x128xf32>
      %32 = math.rsqrt %31 : vector<1x128xf32>
      %c0_19 = arith.constant 0 : index
      %c0_20 = arith.constant 0 : index
      %33 = vector.load %arg6[%c0_19, %c0_20] : memref<1x128xf32, #tpu.memory_space<vmem>>, vector<1x128xf32>
      tpu.vector_store %arg6[%c0_19, %c0_20], %32 {strides = array<i32>} : memref<1x128xf32, #tpu.memory_space<vmem>>, vector<1x128xf32>,
    } else {
    }
    %c1_i32_8 = arith.constant 1 : i32
    %16 = arith.cmpi eq, %arg1, %c1_i32_8 : i32
    %17 = arith.extui %16 : i1 to i32
    %c0_i32_9 = arith.constant 0 : i32
    %18 = arith.cmpi ne, %17, %c0_i32_9 : i32
    scf.if %18 {
      %c0_10 = arith.constant 0 : index
      %c0_11 = arith.constant 0 : index
      %19 = vector.load %arg5[%c0_10, %c0_11] : memref<1x128xf32, #tpu.memory_space<vmem>>, vector<1x128xf32>
      %20 = vector.broadcast %19 : vector<1x128xf32> to vector<128x128xf32>
      %21 = arith.subf %7, %20 : vector<128x128xf32>
      %c0_12 = arith.constant 0 : index
      %c0_13 = arith.constant 0 : index
      %22 = vector.load %arg6[%c0_12, %c0_13] : memref<1x128xf32, #tpu.memory_space<vmem>>, vector<1x128xf32>
      %23 = vector.broadcast %22 : vector<1x128xf32> to vector<128x128xf32>
      %24 = arith.mulf %21, %23 : vector<128x128xf32>
      %cst = arith.constant 0.000000e+00 : f32
      %25 = vector.broadcast %cst : f32 to vector<128x128xf32>
      %26 = arith.maximumf %24, %25 : vector<128x128xf32>
      %27 = vector.shape_cast %26 : vector<128x128xf32> to vector<1x128x128xf32>
      %28 = arith.truncf %27 : vector<1x128x128xf32> to vector<1x128x128xbf16>
      %c0_14 = arith.constant 0 : index
      %c0_15 = arith.constant 0 : index
      %c0_16 = arith.constant 0 : index
      %29 = vector.load %arg4[%c0_14, %c0_15, %c0_16] : memref<1x128x128xbf16, #tpu.memory_space<vmem>>, vector<1x128x128xbf16>
      tpu.vector_store %arg4[%c0_14, %c0_15, %c0_16], %28 {strides = array<i32>} : memref<1x128x128xbf16, #tpu.memory_space<vmem>>, vector<1x128x128xbf16>,
    } else {
    }
    return
  }
  func.func @transform_0(%arg0: i32, %arg1: i32, %arg2: i32) -> (i32, i32, i32) {
    %c0_i32 = arith.constant 0 : i32
    %c0_i32_0 = arith.constant 0 : i32
    return %arg0, %arg2, %c0_i32 : i32, i32, i32
  }
  func.func @transform_1(%arg0: i32, %arg1: i32, %arg2: i32) -> (i32, i32, i32) {
    %0 = arith.muli %arg2, %arg1 : i32
    %c0_i32 = arith.constant 0 : i32
    %c0_i32_0 = arith.constant 0 : i32
    return %arg0, %0, %c0_i32 : i32, i32, i32
  }
}

module attributes {stable_mosaic.version = 11 : i64} {
  func.func @_tap_conv_kernel(%arg0: i32, %arg1: i32, %arg2: i32, %arg3: memref<1x1x22x128xbf16, #tpu.memory_space<vmem>>, %arg4: memref<7x896x128xbf16, #tpu.memory_space<vmem>>, %arg5: memref<1x128xf32, #tpu.memory_space<vmem>>, %arg6: memref<1x1x16x128xbf16, #tpu.memory_space<vmem>>, %arg7: memref<16x128xf32, #tpu.memory_space<vmem>>) attributes {dimension_semantics = [#tpu.dimension_semantics<parallel>, #tpu.dimension_semantics<parallel>, #tpu.dimension_semantics<arbitrary>], iteration_bounds = array<i64: 2, 16, 7>, scalar_prefetch = 0 : i64, scratch_operands = 1 : i64, tpu.core_type = #tpu.core_type<tc>, window_params = [{transform_indices = @transform_0, window_bounds = array<i64: 1, 1, 22, 128>}, {pipeline_mode = #tpu.pipeline_mode<synchronous>, transform_indices = @transform_1, window_bounds = array<i64: 7, 896, 128>}, {pipeline_mode = #tpu.pipeline_mode<synchronous>, transform_indices = @transform_2, window_bounds = array<i64: 1, 128>}, {transform_indices = @transform_3, window_bounds = array<i64: 1, 1, 16, 128>}]} {
    %c0_i32 = arith.constant 0 : i32
    %0 = arith.cmpi eq, %arg2, %c0_i32 : i32
    %1 = arith.extui %0 : i1 to i32
    %c0_i32_0 = arith.constant 0 : i32
    %2 = arith.cmpi ne, %1, %c0_i32_0 : i32
    scf.if %2 {
      %cst_17 = arith.constant 0.000000e+00 : f32
      %41 = vector.broadcast %cst_17 : f32 to vector<16x128xf32>
      %c0_18 = arith.constant 0 : index
      %c0_19 = arith.constant 0 : index
      %42 = vector.load %arg7[%c0_18, %c0_19] : memref<16x128xf32, #tpu.memory_space<vmem>>, vector<16x128xf32>
      tpu.vector_store %arg7[%c0_18, %c0_19], %41 {strides = array<i32>} : memref<16x128xf32, #tpu.memory_space<vmem>>, vector<16x128xf32>,
    } else {
    }
    %c0 = arith.constant 0 : index
    %c0_1 = arith.constant 0 : index
    %c0_2 = arith.constant 0 : index
    %c0_3 = arith.constant 0 : index
    %3 = vector.load %arg3[%c0, %c0_1, %c0_2, %c0_3] : memref<1x1x22x128xbf16, #tpu.memory_space<vmem>>, vector<1x1x22x128xbf16>
    %4 = vector.shape_cast %3 : vector<1x1x22x128xbf16> to vector<22x128xbf16>
    %5 = arith.index_cast %arg2 : i32 to index
    %c0_4 = arith.constant 0 : index
    %c0_5 = arith.constant 0 : index
    %6 = vector.load %arg4[%5, %c0_4, %c0_5] : memref<7x896x128xbf16, #tpu.memory_space<vmem>>, vector<1x896x128xbf16>
    %7 = vector.shape_cast %6 : vector<1x896x128xbf16> to vector<896x128xbf16>
    %c0_6 = arith.constant 0 : index
    %c0_7 = arith.constant 0 : index
    %8 = vector.load %arg7[%c0_6, %c0_7] : memref<16x128xf32, #tpu.memory_space<vmem>>, vector<16x128xf32>
    %9 = vector.extract_strided_slice %4 {offsets = [0, 0], sizes = [16, 128], strides = [1, 1]} : vector<22x128xbf16> to vector<16x128xbf16>
    %10 = vector.extract_strided_slice %7 {offsets = [0, 0], sizes = [128, 128], strides = [1, 1]} : vector<896x128xbf16> to vector<128x128xbf16>
    %cst = arith.constant dense<0.000000e+00> : vector<16x128xf32>
    %11 = tpu.matmul %9, %10, %cst {dimension_numbers = #tpu.dot_dimension_numbers<[1], [0], [0], [1], [0, 0, 1, 1], [], []>} : vector<16x128xbf16>, vector<128x128xbf16>, vector<16x128xf32> -> vector<16x128xf32>
    %12 = arith.addf %8, %11 : vector<16x128xf32>
    %13 = vector.extract_strided_slice %4 {offsets = [1, 0], sizes = [16, 128], strides = [1, 1]} : vector<22x128xbf16> to vector<16x128xbf16>
    %14 = vector.extract_strided_slice %7 {offsets = [128, 0], sizes = [128, 128], strides = [1, 1]} : vector<896x128xbf16> to vector<128x128xbf16>
    %cst_8 = arith.constant dense<0.000000e+00> : vector<16x128xf32>
    %15 = tpu.matmul %13, %14, %cst_8 {dimension_numbers = #tpu.dot_dimension_numbers<[1], [0], [0], [1], [0, 0, 1, 1], [], []>} : vector<16x128xbf16>, vector<128x128xbf16>, vector<16x128xf32> -> vector<16x128xf32>
    %16 = arith.addf %12, %15 : vector<16x128xf32>
    %17 = vector.extract_strided_slice %4 {offsets = [2, 0], sizes = [16, 128], strides = [1, 1]} : vector<22x128xbf16> to vector<16x128xbf16>
    %18 = vector.extract_strided_slice %7 {offsets = [256, 0], sizes = [128, 128], strides = [1, 1]} : vector<896x128xbf16> to vector<128x128xbf16>
    %cst_9 = arith.constant dense<0.000000e+00> : vector<16x128xf32>
    %19 = tpu.matmul %17, %18, %cst_9 {dimension_numbers = #tpu.dot_dimension_numbers<[1], [0], [0], [1], [0, 0, 1, 1], [], []>} : vector<16x128xbf16>, vector<128x128xbf16>, vector<16x128xf32> -> vector<16x128xf32>
    %20 = arith.addf %16, %19 : vector<16x128xf32>
    %21 = vector.extract_strided_slice %4 {offsets = [3, 0], sizes = [16, 128], strides = [1, 1]} : vector<22x128xbf16> to vector<16x128xbf16>
    %22 = vector.extract_strided_slice %7 {offsets = [384, 0], sizes = [128, 128], strides = [1, 1]} : vector<896x128xbf16> to vector<128x128xbf16>
    %cst_10 = arith.constant dense<0.000000e+00> : vector<16x128xf32>
    %23 = tpu.matmul %21, %22, %cst_10 {dimension_numbers = #tpu.dot_dimension_numbers<[1], [0], [0], [1], [0, 0, 1, 1], [], []>} : vector<16x128xbf16>, vector<128x128xbf16>, vector<16x128xf32> -> vector<16x128xf32>
    %24 = arith.addf %20, %23 : vector<16x128xf32>
    %25 = vector.extract_strided_slice %4 {offsets = [4, 0], sizes = [16, 128], strides = [1, 1]} : vector<22x128xbf16> to vector<16x128xbf16>
    %26 = vector.extract_strided_slice %7 {offsets = [512, 0], sizes = [128, 128], strides = [1, 1]} : vector<896x128xbf16> to vector<128x128xbf16>
    %cst_11 = arith.constant dense<0.000000e+00> : vector<16x128xf32>
    %27 = tpu.matmul %25, %26, %cst_11 {dimension_numbers = #tpu.dot_dimension_numbers<[1], [0], [0], [1], [0, 0, 1, 1], [], []>} : vector<16x128xbf16>, vector<128x128xbf16>, vector<16x128xf32> -> vector<16x128xf32>
    %28 = arith.addf %24, %27 : vector<16x128xf32>
    %29 = vector.extract_strided_slice %4 {offsets = [5, 0], sizes = [16, 128], strides = [1, 1]} : vector<22x128xbf16> to vector<16x128xbf16>
    %30 = vector.extract_strided_slice %7 {offsets = [640, 0], sizes = [128, 128], strides = [1, 1]} : vector<896x128xbf16> to vector<128x128xbf16>
    %cst_12 = arith.constant dense<0.000000e+00> : vector<16x128xf32>
    %31 = tpu.matmul %29, %30, %cst_12 {dimension_numbers = #tpu.dot_dimension_numbers<[1], [0], [0], [1], [0, 0, 1, 1], [], []>} : vector<16x128xbf16>, vector<128x128xbf16>, vector<16x128xf32> -> vector<16x128xf32>
    %32 = arith.addf %28, %31 : vector<16x128xf32>
    %33 = vector.extract_strided_slice %4 {offsets = [6, 0], sizes = [16, 128], strides = [1, 1]} : vector<22x128xbf16> to vector<16x128xbf16>
    %34 = vector.extract_strided_slice %7 {offsets = [768, 0], sizes = [128, 128], strides = [1, 1]} : vector<896x128xbf16> to vector<128x128xbf16>
    %cst_13 = arith.constant dense<0.000000e+00> : vector<16x128xf32>
    %35 = tpu.matmul %33, %34, %cst_13 {dimension_numbers = #tpu.dot_dimension_numbers<[1], [0], [0], [1], [0, 0, 1, 1], [], []>} : vector<16x128xbf16>, vector<128x128xbf16>, vector<16x128xf32> -> vector<16x128xf32>
    %36 = arith.addf %32, %35 : vector<16x128xf32>
    %c0_14 = arith.constant 0 : index
    %c0_15 = arith.constant 0 : index
    %37 = vector.load %arg7[%c0_14, %c0_15] : memref<16x128xf32, #tpu.memory_space<vmem>>, vector<16x128xf32>
    tpu.vector_store %arg7[%c0_14, %c0_15], %36 {strides = array<i32>} : memref<16x128xf32, #tpu.memory_space<vmem>>, vector<16x128xf32>,
    %c6_i32 = arith.constant 6 : i32
    %38 = arith.cmpi eq, %arg2, %c6_i32 : i32
    %39 = arith.extui %38 : i1 to i32
    %c0_i32_16 = arith.constant 0 : i32
    %40 = arith.cmpi ne, %39, %c0_i32_16 : i32
    scf.if %40 {
      %c0_17 = arith.constant 0 : index
      %c0_18 = arith.constant 0 : index
      %41 = vector.load %arg7[%c0_17, %c0_18] : memref<16x128xf32, #tpu.memory_space<vmem>>, vector<16x128xf32>
      %c0_19 = arith.constant 0 : index
      %c0_20 = arith.constant 0 : index
      %42 = vector.load %arg5[%c0_19, %c0_20] : memref<1x128xf32, #tpu.memory_space<vmem>>, vector<1x128xf32>
      %43 = vector.broadcast %42 : vector<1x128xf32> to vector<16x128xf32>
      %44 = arith.addf %41, %43 : vector<16x128xf32>
      %45 = vector.shape_cast %44 : vector<16x128xf32> to vector<1x1x16x128xf32>
      %46 = arith.truncf %45 : vector<1x1x16x128xf32> to vector<1x1x16x128xbf16>
      %c0_21 = arith.constant 0 : index
      %c0_22 = arith.constant 0 : index
      %c0_23 = arith.constant 0 : index
      %c0_24 = arith.constant 0 : index
      %47 = vector.load %arg6[%c0_21, %c0_22, %c0_23, %c0_24] : memref<1x1x16x128xbf16, #tpu.memory_space<vmem>>, vector<1x1x16x128xbf16>
      tpu.vector_store %arg6[%c0_21, %c0_22, %c0_23, %c0_24], %46 {strides = array<i32>} : memref<1x1x16x128xbf16, #tpu.memory_space<vmem>>, vector<1x1x16x128xbf16>,
    } else {
    }
    return
  }
  func.func @transform_0(%arg0: i32, %arg1: i32, %arg2: i32) -> (i32, i32, i32, i32) {
    %c1_i32 = arith.constant 1 : i32
    %0 = arith.muli %c1_i32, %arg1 : i32
    %1 = arith.addi %0, %arg2 : i32
    %c0_i32 = arith.constant 0 : i32
    %c0_i32_0 = arith.constant 0 : i32
    %c0_i32_1 = arith.constant 0 : i32
    return %arg0, %1, %c0_i32, %c0_i32_0 : i32, i32, i32, i32
  }
  func.func @transform_1(%arg0: i32, %arg1: i32, %arg2: i32) -> (i32, i32, i32) {
    %c0_i32 = arith.constant 0 : i32
    %c0_i32_0 = arith.constant 0 : i32
    %c0_i32_1 = arith.constant 0 : i32
    %c0_i32_2 = arith.constant 0 : i32
    return %c0_i32, %c0_i32_0, %c0_i32_1 : i32, i32, i32
  }
  func.func @transform_2(%arg0: i32, %arg1: i32, %arg2: i32) -> (i32, i32) {
    %c0_i32 = arith.constant 0 : i32
    %c0_i32_0 = arith.constant 0 : i32
    %c0_i32_1 = arith.constant 0 : i32
    return %c0_i32, %c0_i32_0 : i32, i32
  }
  func.func @transform_3(%arg0: i32, %arg1: i32, %arg2: i32) -> (i32, i32, i32, i32) {
    %c0_i32 = arith.constant 0 : i32
    %c0_i32_0 = arith.constant 0 : i32
    %c0_i32_1 = arith.constant 0 : i32
    return %arg0, %arg1, %c0_i32, %c0_i32_0 : i32, i32, i32, i32
  }
}

module attributes {stable_mosaic.version = 11 : i64} {
  func.func @_tap_conv_kernel(%arg0: i32, %arg1: i32, %arg2: i32, %arg3: memref<1x1x18x128xbf16, #tpu.memory_space<vmem>>, %arg4: memref<3x384x128xbf16, #tpu.memory_space<vmem>>, %arg5: memref<1x128xf32, #tpu.memory_space<vmem>>, %arg6: memref<1x1x8x128xbf16, #tpu.memory_space<vmem>>, %arg7: memref<8x128xf32, #tpu.memory_space<vmem>>) attributes {dimension_semantics = [#tpu.dimension_semantics<parallel>, #tpu.dimension_semantics<parallel>, #tpu.dimension_semantics<arbitrary>], iteration_bounds = array<i64: 2, 8, 3>, scalar_prefetch = 0 : i64, scratch_operands = 1 : i64, tpu.core_type = #tpu.core_type<tc>, window_params = [{transform_indices = @transform_0, window_bounds = array<i64: 1, 1, 18, 128>}, {pipeline_mode = #tpu.pipeline_mode<synchronous>, transform_indices = @transform_1, window_bounds = array<i64: 3, 384, 128>}, {pipeline_mode = #tpu.pipeline_mode<synchronous>, transform_indices = @transform_2, window_bounds = array<i64: 1, 128>}, {transform_indices = @transform_3, window_bounds = array<i64: 1, 1, 8, 128>}]} {
    %c0_i32 = arith.constant 0 : i32
    %0 = arith.cmpi eq, %arg2, %c0_i32 : i32
    %1 = arith.extui %0 : i1 to i32
    %c0_i32_0 = arith.constant 0 : i32
    %2 = arith.cmpi ne, %1, %c0_i32_0 : i32
    scf.if %2 {
      %cst_13 = arith.constant 0.000000e+00 : f32
      %25 = vector.broadcast %cst_13 : f32 to vector<8x128xf32>
      %c0_14 = arith.constant 0 : index
      %c0_15 = arith.constant 0 : index
      %26 = vector.load %arg7[%c0_14, %c0_15] : memref<8x128xf32, #tpu.memory_space<vmem>>, vector<8x128xf32>
      tpu.vector_store %arg7[%c0_14, %c0_15], %25 {strides = array<i32>} : memref<8x128xf32, #tpu.memory_space<vmem>>, vector<8x128xf32>,
    } else {
    }
    %c0 = arith.constant 0 : index
    %c0_1 = arith.constant 0 : index
    %c0_2 = arith.constant 0 : index
    %c0_3 = arith.constant 0 : index
    %3 = vector.load %arg3[%c0, %c0_1, %c0_2, %c0_3] : memref<1x1x18x128xbf16, #tpu.memory_space<vmem>>, vector<1x1x18x128xbf16>
    %4 = vector.shape_cast %3 : vector<1x1x18x128xbf16> to vector<18x128xbf16>
    %5 = arith.index_cast %arg2 : i32 to index
    %c0_4 = arith.constant 0 : index
    %c0_5 = arith.constant 0 : index
    %6 = vector.load %arg4[%5, %c0_4, %c0_5] : memref<3x384x128xbf16, #tpu.memory_space<vmem>>, vector<1x384x128xbf16>
    %7 = vector.shape_cast %6 : vector<1x384x128xbf16> to vector<384x128xbf16>
    %c0_6 = arith.constant 0 : index
    %c0_7 = arith.constant 0 : index
    %8 = vector.load %arg7[%c0_6, %c0_7] : memref<8x128xf32, #tpu.memory_space<vmem>>, vector<8x128xf32>
    %9 = vector.extract_strided_slice %4 {offsets = [0, 0], sizes = [8, 128], strides = [1, 1]} : vector<18x128xbf16> to vector<8x128xbf16>
    %10 = vector.extract_strided_slice %7 {offsets = [0, 0], sizes = [128, 128], strides = [1, 1]} : vector<384x128xbf16> to vector<128x128xbf16>
    %cst = arith.constant dense<0.000000e+00> : vector<8x128xf32>
    %11 = tpu.matmul %9, %10, %cst {dimension_numbers = #tpu.dot_dimension_numbers<[1], [0], [0], [1], [0, 0, 1, 1], [], []>} : vector<8x128xbf16>, vector<128x128xbf16>, vector<8x128xf32> -> vector<8x128xf32>
    %12 = arith.addf %8, %11 : vector<8x128xf32>
    %13 = vector.extract_strided_slice %4 {offsets = [9, 0], sizes = [8, 128], strides = [1, 1]} : vector<18x128xbf16> to vector<8x128xbf16>
    %14 = vector.extract_strided_slice %7 {offsets = [128, 0], sizes = [128, 128], strides = [1, 1]} : vector<384x128xbf16> to vector<128x128xbf16>
    %cst_8 = arith.constant dense<0.000000e+00> : vector<8x128xf32>
    %15 = tpu.matmul %13, %14, %cst_8 {dimension_numbers = #tpu.dot_dimension_numbers<[1], [0], [0], [1], [0, 0, 1, 1], [], []>} : vector<8x128xbf16>, vector<128x128xbf16>, vector<8x128xf32> -> vector<8x128xf32>
    %16 = arith.addf %12, %15 : vector<8x128xf32>
    %17 = vector.extract_strided_slice %4 {offsets = [1, 0], sizes = [8, 128], strides = [1, 1]} : vector<18x128xbf16> to vector<8x128xbf16>
    %18 = vector.extract_strided_slice %7 {offsets = [256, 0], sizes = [128, 128], strides = [1, 1]} : vector<384x128xbf16> to vector<128x128xbf16>
    %cst_9 = arith.constant dense<0.000000e+00> : vector<8x128xf32>
    %19 = tpu.matmul %17, %18, %cst_9 {dimension_numbers = #tpu.dot_dimension_numbers<[1], [0], [0], [1], [0, 0, 1, 1], [], []>} : vector<8x128xbf16>, vector<128x128xbf16>, vector<8x128xf32> -> vector<8x128xf32>
    %20 = arith.addf %16, %19 : vector<8x128xf32>
    %c0_10 = arith.constant 0 : index
    %c0_11 = arith.constant 0 : index
    %21 = vector.load %arg7[%c0_10, %c0_11] : memref<8x128xf32, #tpu.memory_space<vmem>>, vector<8x128xf32>
    tpu.vector_store %arg7[%c0_10, %c0_11], %20 {strides = array<i32>} : memref<8x128xf32, #tpu.memory_space<vmem>>, vector<8x128xf32>,
    %c2_i32 = arith.constant 2 : i32
    %22 = arith.cmpi eq, %arg2, %c2_i32 : i32
    %23 = arith.extui %22 : i1 to i32
    %c0_i32_12 = arith.constant 0 : i32
    %24 = arith.cmpi ne, %23, %c0_i32_12 : i32
    scf.if %24 {
      %c0_13 = arith.constant 0 : index
      %c0_14 = arith.constant 0 : index
      %25 = vector.load %arg7[%c0_13, %c0_14] : memref<8x128xf32, #tpu.memory_space<vmem>>, vector<8x128xf32>
      %c0_15 = arith.constant 0 : index
      %c0_16 = arith.constant 0 : index
      %26 = vector.load %arg5[%c0_15, %c0_16] : memref<1x128xf32, #tpu.memory_space<vmem>>, vector<1x128xf32>
      %27 = vector.broadcast %26 : vector<1x128xf32> to vector<8x128xf32>
      %28 = arith.addf %25, %27 : vector<8x128xf32>
      %29 = vector.shape_cast %28 : vector<8x128xf32> to vector<1x1x8x128xf32>
      %30 = arith.truncf %29 : vector<1x1x8x128xf32> to vector<1x1x8x128xbf16>
      %c0_17 = arith.constant 0 : index
      %c0_18 = arith.constant 0 : index
      %c0_19 = arith.constant 0 : index
      %c0_20 = arith.constant 0 : index
      %31 = vector.load %arg6[%c0_17, %c0_18, %c0_19, %c0_20] : memref<1x1x8x128xbf16, #tpu.memory_space<vmem>>, vector<1x1x8x128xbf16>
      tpu.vector_store %arg6[%c0_17, %c0_18, %c0_19, %c0_20], %30 {strides = array<i32>} : memref<1x1x8x128xbf16, #tpu.memory_space<vmem>>, vector<1x1x8x128xbf16>,
    } else {
    }
    return
  }
  func.func @transform_0(%arg0: i32, %arg1: i32, %arg2: i32) -> (i32, i32, i32, i32) {
    %c2_i32 = arith.constant 2 : i32
    %0 = arith.muli %c2_i32, %arg1 : i32
    %1 = arith.addi %0, %arg2 : i32
    %c0_i32 = arith.constant 0 : i32
    %c0_i32_0 = arith.constant 0 : i32
    %c0_i32_1 = arith.constant 0 : i32
    return %arg0, %1, %c0_i32, %c0_i32_0 : i32, i32, i32, i32
  }
  func.func @transform_1(%arg0: i32, %arg1: i32, %arg2: i32) -> (i32, i32, i32) {
    %c0_i32 = arith.constant 0 : i32
    %c0_i32_0 = arith.constant 0 : i32
    %c0_i32_1 = arith.constant 0 : i32
    %c0_i32_2 = arith.constant 0 : i32
    return %c0_i32, %c0_i32_0, %c0_i32_1 : i32, i32, i32
  }
  func.func @transform_2(%arg0: i32, %arg1: i32, %arg2: i32) -> (i32, i32) {
    %c0_i32 = arith.constant 0 : i32
    %c0_i32_0 = arith.constant 0 : i32
    %c0_i32_1 = arith.constant 0 : i32
    return %c0_i32, %c0_i32_0 : i32, i32
  }
  func.func @transform_3(%arg0: i32, %arg1: i32, %arg2: i32) -> (i32, i32, i32, i32) {
    %c0_i32 = arith.constant 0 : i32
    %c0_i32_0 = arith.constant 0 : i32
    %c0_i32_1 = arith.constant 0 : i32
    return %arg0, %arg1, %c0_i32, %c0_i32_0 : i32, i32, i32, i32
  }
}

module attributes {stable_mosaic.version = 11 : i64} {
  func.func @kernel(%arg0: i32, %arg1: i32, %arg2: i32, %arg3: memref<1x64x128xbf16, #tpu.memory_space<vmem>>, %arg4: memref<1x64x128xbf16, #tpu.memory_space<vmem>>, %arg5: memref<1x128xf32, #tpu.memory_space<vmem>>, %arg6: memref<1x128xf32, #tpu.memory_space<vmem>>) attributes {dimension_semantics = [#tpu.dimension_semantics<parallel>, #tpu.dimension_semantics<arbitrary>, #tpu.dimension_semantics<arbitrary>], iteration_bounds = array<i64: 2, 2, 1>, scalar_prefetch = 0 : i64, scratch_operands = 2 : i64, tpu.core_type = #tpu.core_type<tc>, window_params = [{transform_indices = @transform_0, window_bounds = array<i64: 1, 64, 128>}, {transform_indices = @transform_1, window_bounds = array<i64: 1, 64, 128>}]} {
    %c0_i32 = arith.constant 0 : i32
    %0 = arith.cmpi eq, %arg1, %c0_i32 : i32
    %c0_i32_0 = arith.constant 0 : i32
    %1 = arith.cmpi eq, %arg2, %c0_i32_0 : i32
    %2 = arith.andi %0, %1 : i1
    %3 = arith.extui %2 : i1 to i32
    %c0_i32_1 = arith.constant 0 : i32
    %4 = arith.cmpi ne, %3, %c0_i32_1 : i32
    scf.if %4 {
      %cst = arith.constant 0.000000e+00 : f32
      %19 = vector.broadcast %cst : f32 to vector<1x128xf32>
      %c0_10 = arith.constant 0 : index
      %c0_11 = arith.constant 0 : index
      %20 = vector.load %arg5[%c0_10, %c0_11] : memref<1x128xf32, #tpu.memory_space<vmem>>, vector<1x128xf32>
      tpu.vector_store %arg5[%c0_10, %c0_11], %19 {strides = array<i32>} : memref<1x128xf32, #tpu.memory_space<vmem>>, vector<1x128xf32>,
      %cst_12 = arith.constant 0.000000e+00 : f32
      %21 = vector.broadcast %cst_12 : f32 to vector<1x128xf32>
      %c0_13 = arith.constant 0 : index
      %c0_14 = arith.constant 0 : index
      %22 = vector.load %arg6[%c0_13, %c0_14] : memref<1x128xf32, #tpu.memory_space<vmem>>, vector<1x128xf32>
      tpu.vector_store %arg6[%c0_13, %c0_14], %21 {strides = array<i32>} : memref<1x128xf32, #tpu.memory_space<vmem>>, vector<1x128xf32>,
    } else {
    }
    %c0 = arith.constant 0 : index
    %c0_2 = arith.constant 0 : index
    %c0_3 = arith.constant 0 : index
    %5 = vector.load %arg3[%c0, %c0_2, %c0_3] : memref<1x64x128xbf16, #tpu.memory_space<vmem>>, vector<1x64x128xbf16>
    %6 = vector.shape_cast %5 : vector<1x64x128xbf16> to vector<64x128xbf16>
    %7 = arith.extf %6 : vector<64x128xbf16> to vector<64x128xf32>
    %c0_i32_4 = arith.constant 0 : i32
    %8 = arith.cmpi eq, %arg1, %c0_i32_4 : i32
    %9 = arith.extui %8 : i1 to i32
    %c0_i32_5 = arith.constant 0 : i32
    %10 = arith.cmpi ne, %9, %c0_i32_5 : i32
    scf.if %10 {
      %c0_10 = arith.constant 0 : index
      %c0_11 = arith.constant 0 : index
      %19 = vector.load %arg5[%c0_10, %c0_11] : memref<1x128xf32, #tpu.memory_space<vmem>>, vector<1x128xf32>
      %cst = arith.constant dense<0.000000e+00> : vector<128xf32>
      %20 = vector.multi_reduction <add>, %7, %cst [0] : vector<64x128xf32> to vector<128xf32>
      %21 = vector.shape_cast %20 : vector<128xf32> to vector<1x128xf32>
      %22 = arith.addf %19, %21 : vector<1x128xf32>
      %c0_12 = arith.constant 0 : index
      %c0_13 = arith.constant 0 : index
      %23 = vector.load %arg5[%c0_12, %c0_13] : memref<1x128xf32, #tpu.memory_space<vmem>>, vector<1x128xf32>
      tpu.vector_store %arg5[%c0_12, %c0_13], %22 {strides = array<i32>} : memref<1x128xf32, #tpu.memory_space<vmem>>, vector<1x128xf32>,
      %c0_14 = arith.constant 0 : index
      %c0_15 = arith.constant 0 : index
      %24 = vector.load %arg6[%c0_14, %c0_15] : memref<1x128xf32, #tpu.memory_space<vmem>>, vector<1x128xf32>
      %25 = arith.mulf %7, %7 : vector<64x128xf32>
      %cst_16 = arith.constant dense<0.000000e+00> : vector<128xf32>
      %26 = vector.multi_reduction <add>, %25, %cst_16 [0] : vector<64x128xf32> to vector<128xf32>
      %27 = vector.shape_cast %26 : vector<128xf32> to vector<1x128xf32>
      %28 = arith.addf %24, %27 : vector<1x128xf32>
      %c0_17 = arith.constant 0 : index
      %c0_18 = arith.constant 0 : index
      %29 = vector.load %arg6[%c0_17, %c0_18] : memref<1x128xf32, #tpu.memory_space<vmem>>, vector<1x128xf32>
      tpu.vector_store %arg6[%c0_17, %c0_18], %28 {strides = array<i32>} : memref<1x128xf32, #tpu.memory_space<vmem>>, vector<1x128xf32>,
    } else {
    }
    %c0_i32_6 = arith.constant 0 : i32
    %11 = arith.cmpi eq, %arg1, %c0_i32_6 : i32
    %c0_i32_7 = arith.constant 0 : i32
    %12 = arith.cmpi eq, %arg2, %c0_i32_7 : i32
    %13 = arith.andi %11, %12 : i1
    %14 = arith.extui %13 : i1 to i32
    %c0_i32_8 = arith.constant 0 : i32
    %15 = arith.cmpi ne, %14, %c0_i32_8 : i32
    scf.if %15 {
      %c0_10 = arith.constant 0 : index
      %c0_11 = arith.constant 0 : index
      %19 = vector.load %arg5[%c0_10, %c0_11] : memref<1x128xf32, #tpu.memory_space<vmem>>, vector<1x128xf32>
      %cst = arith.constant 6.400000e+01 : f32
      %20 = vector.broadcast %cst : f32 to vector<1x128xf32>
      %21 = arith.divf %19, %20 : vector<1x128xf32>
      %c0_12 = arith.constant 0 : index
      %c0_13 = arith.constant 0 : index
      %22 = vector.load %arg6[%c0_12, %c0_13] : memref<1x128xf32, #tpu.memory_space<vmem>>, vector<1x128xf32>
      %cst_14 = arith.constant 6.400000e+01 : f32
      %23 = vector.broadcast %cst_14 : f32 to vector<1x128xf32>
      %24 = arith.divf %22, %23 : vector<1x128xf32>
      %25 = arith.mulf %21, %21 : vector<1x128xf32>
      %26 = arith.subf %24, %25 : vector<1x128xf32>
      %c0_15 = arith.constant 0 : index
      %c0_16 = arith.constant 0 : index
      %27 = vector.load %arg5[%c0_15, %c0_16] : memref<1x128xf32, #tpu.memory_space<vmem>>, vector<1x128xf32>
      tpu.vector_store %arg5[%c0_15, %c0_16], %21 {strides = array<i32>} : memref<1x128xf32, #tpu.memory_space<vmem>>, vector<1x128xf32>,
      %cst_17 = arith.constant 0.000000e+00 : f32
      %28 = vector.broadcast %cst_17 : f32 to vector<1x128xf32>
      %29 = arith.maximumf %26, %28 : vector<1x128xf32>
      %cst_18 = arith.constant 9.99999974E-6 : f32
      %30 = vector.broadcast %cst_18 : f32 to vector<1x128xf32>
      %31 = arith.addf %29, %30 : vector<1x128xf32>
      %32 = math.rsqrt %31 : vector<1x128xf32>
      %c0_19 = arith.constant 0 : index
      %c0_20 = arith.constant 0 : index
      %33 = vector.load %arg6[%c0_19, %c0_20] : memref<1x128xf32, #tpu.memory_space<vmem>>, vector<1x128xf32>
      tpu.vector_store %arg6[%c0_19, %c0_20], %32 {strides = array<i32>} : memref<1x128xf32, #tpu.memory_space<vmem>>, vector<1x128xf32>,
    } else {
    }
    %c1_i32 = arith.constant 1 : i32
    %16 = arith.cmpi eq, %arg1, %c1_i32 : i32
    %17 = arith.extui %16 : i1 to i32
    %c0_i32_9 = arith.constant 0 : i32
    %18 = arith.cmpi ne, %17, %c0_i32_9 : i32
    scf.if %18 {
      %c0_10 = arith.constant 0 : index
      %c0_11 = arith.constant 0 : index
      %19 = vector.load %arg5[%c0_10, %c0_11] : memref<1x128xf32, #tpu.memory_space<vmem>>, vector<1x128xf32>
      %20 = vector.broadcast %19 : vector<1x128xf32> to vector<64x128xf32>
      %21 = arith.subf %7, %20 : vector<64x128xf32>
      %c0_12 = arith.constant 0 : index
      %c0_13 = arith.constant 0 : index
      %22 = vector.load %arg6[%c0_12, %c0_13] : memref<1x128xf32, #tpu.memory_space<vmem>>, vector<1x128xf32>
      %23 = vector.broadcast %22 : vector<1x128xf32> to vector<64x128xf32>
      %24 = arith.mulf %21, %23 : vector<64x128xf32>
      %cst = arith.constant 0.000000e+00 : f32
      %25 = vector.broadcast %cst : f32 to vector<64x128xf32>
      %26 = arith.maximumf %24, %25 : vector<64x128xf32>
      %27 = vector.shape_cast %26 : vector<64x128xf32> to vector<1x64x128xf32>
      %28 = arith.truncf %27 : vector<1x64x128xf32> to vector<1x64x128xbf16>
      %c0_14 = arith.constant 0 : index
      %c0_15 = arith.constant 0 : index
      %c0_16 = arith.constant 0 : index
      %29 = vector.load %arg4[%c0_14, %c0_15, %c0_16] : memref<1x64x128xbf16, #tpu.memory_space<vmem>>, vector<1x64x128xbf16>
      tpu.vector_store %arg4[%c0_14, %c0_15, %c0_16], %28 {strides = array<i32>} : memref<1x64x128xbf16, #tpu.memory_space<vmem>>, vector<1x64x128xbf16>,
    } else {
    }
    return
  }
  func.func @transform_0(%arg0: i32, %arg1: i32, %arg2: i32) -> (i32, i32, i32) {
    %c0_i32 = arith.constant 0 : i32
    %c0_i32_0 = arith.constant 0 : i32
    return %arg0, %arg2, %c0_i32 : i32, i32, i32
  }
  func.func @transform_1(%arg0: i32, %arg1: i32, %arg2: i32) -> (i32, i32, i32) {
    %0 = arith.muli %arg2, %arg1 : i32
    %c0_i32 = arith.constant 0 : i32
    %c0_i32_0 = arith.constant 0 : i32
    return %arg0, %0, %c0_i32 : i32, i32, i32
  }
}

module attributes {stable_mosaic.version = 11 : i64} {
  func.func @_tap_conv_kernel(%arg0: i32, %arg1: i32, %arg2: i32, %arg3: memref<1x1x10x128xbf16, #tpu.memory_space<vmem>>, %arg4: memref<3x384x128xbf16, #tpu.memory_space<vmem>>, %arg5: memref<1x128xf32, #tpu.memory_space<vmem>>, %arg6: memref<1x1x4x128xbf16, #tpu.memory_space<vmem>>, %arg7: memref<4x128xf32, #tpu.memory_space<vmem>>) attributes {dimension_semantics = [#tpu.dimension_semantics<parallel>, #tpu.dimension_semantics<parallel>, #tpu.dimension_semantics<arbitrary>], iteration_bounds = array<i64: 2, 4, 3>, scalar_prefetch = 0 : i64, scratch_operands = 1 : i64, tpu.core_type = #tpu.core_type<tc>, window_params = [{transform_indices = @transform_0, window_bounds = array<i64: 1, 1, 10, 128>}, {pipeline_mode = #tpu.pipeline_mode<synchronous>, transform_indices = @transform_1, window_bounds = array<i64: 3, 384, 128>}, {pipeline_mode = #tpu.pipeline_mode<synchronous>, transform_indices = @transform_2, window_bounds = array<i64: 1, 128>}, {transform_indices = @transform_3, window_bounds = array<i64: 1, 1, 4, 128>}]} {
    %c0_i32 = arith.constant 0 : i32
    %0 = arith.cmpi eq, %arg2, %c0_i32 : i32
    %1 = arith.extui %0 : i1 to i32
    %c0_i32_0 = arith.constant 0 : i32
    %2 = arith.cmpi ne, %1, %c0_i32_0 : i32
    scf.if %2 {
      %cst_13 = arith.constant 0.000000e+00 : f32
      %25 = vector.broadcast %cst_13 : f32 to vector<4x128xf32>
      %c0_14 = arith.constant 0 : index
      %c0_15 = arith.constant 0 : index
      %26 = vector.load %arg7[%c0_14, %c0_15] : memref<4x128xf32, #tpu.memory_space<vmem>>, vector<4x128xf32>
      tpu.vector_store %arg7[%c0_14, %c0_15], %25 {strides = array<i32>} : memref<4x128xf32, #tpu.memory_space<vmem>>, vector<4x128xf32>,
    } else {
    }
    %c0 = arith.constant 0 : index
    %c0_1 = arith.constant 0 : index
    %c0_2 = arith.constant 0 : index
    %c0_3 = arith.constant 0 : index
    %3 = vector.load %arg3[%c0, %c0_1, %c0_2, %c0_3] : memref<1x1x10x128xbf16, #tpu.memory_space<vmem>>, vector<1x1x10x128xbf16>
    %4 = vector.shape_cast %3 : vector<1x1x10x128xbf16> to vector<10x128xbf16>
    %5 = arith.index_cast %arg2 : i32 to index
    %c0_4 = arith.constant 0 : index
    %c0_5 = arith.constant 0 : index
    %6 = vector.load %arg4[%5, %c0_4, %c0_5] : memref<3x384x128xbf16, #tpu.memory_space<vmem>>, vector<1x384x128xbf16>
    %7 = vector.shape_cast %6 : vector<1x384x128xbf16> to vector<384x128xbf16>
    %c0_6 = arith.constant 0 : index
    %c0_7 = arith.constant 0 : index
    %8 = vector.load %arg7[%c0_6, %c0_7] : memref<4x128xf32, #tpu.memory_space<vmem>>, vector<4x128xf32>
    %9 = vector.extract_strided_slice %4 {offsets = [0, 0], sizes = [4, 128], strides = [1, 1]} : vector<10x128xbf16> to vector<4x128xbf16>
    %10 = vector.extract_strided_slice %7 {offsets = [0, 0], sizes = [128, 128], strides = [1, 1]} : vector<384x128xbf16> to vector<128x128xbf16>
    %cst = arith.constant dense<0.000000e+00> : vector<4x128xf32>
    %11 = tpu.matmul %9, %10, %cst {dimension_numbers = #tpu.dot_dimension_numbers<[1], [0], [0], [1], [0, 0, 1, 1], [], []>} : vector<4x128xbf16>, vector<128x128xbf16>, vector<4x128xf32> -> vector<4x128xf32>
    %12 = arith.addf %8, %11 : vector<4x128xf32>
    %13 = vector.extract_strided_slice %4 {offsets = [5, 0], sizes = [4, 128], strides = [1, 1]} : vector<10x128xbf16> to vector<4x128xbf16>
    %14 = vector.extract_strided_slice %7 {offsets = [128, 0], sizes = [128, 128], strides = [1, 1]} : vector<384x128xbf16> to vector<128x128xbf16>
    %cst_8 = arith.constant dense<0.000000e+00> : vector<4x128xf32>
    %15 = tpu.matmul %13, %14, %cst_8 {dimension_numbers = #tpu.dot_dimension_numbers<[1], [0], [0], [1], [0, 0, 1, 1], [], []>} : vector<4x128xbf16>, vector<128x128xbf16>, vector<4x128xf32> -> vector<4x128xf32>
    %16 = arith.addf %12, %15 : vector<4x128xf32>
    %17 = vector.extract_strided_slice %4 {offsets = [1, 0], sizes = [4, 128], strides = [1, 1]} : vector<10x128xbf16> to vector<4x128xbf16>
    %18 = vector.extract_strided_slice %7 {offsets = [256, 0], sizes = [128, 128], strides = [1, 1]} : vector<384x128xbf16> to vector<128x128xbf16>
    %cst_9 = arith.constant dense<0.000000e+00> : vector<4x128xf32>
    %19 = tpu.matmul %17, %18, %cst_9 {dimension_numbers = #tpu.dot_dimension_numbers<[1], [0], [0], [1], [0, 0, 1, 1], [], []>} : vector<4x128xbf16>, vector<128x128xbf16>, vector<4x128xf32> -> vector<4x128xf32>
    %20 = arith.addf %16, %19 : vector<4x128xf32>
    %c0_10 = arith.constant 0 : index
    %c0_11 = arith.constant 0 : index
    %21 = vector.load %arg7[%c0_10, %c0_11] : memref<4x128xf32, #tpu.memory_space<vmem>>, vector<4x128xf32>
    tpu.vector_store %arg7[%c0_10, %c0_11], %20 {strides = array<i32>} : memref<4x128xf32, #tpu.memory_space<vmem>>, vector<4x128xf32>,
    %c2_i32 = arith.constant 2 : i32
    %22 = arith.cmpi eq, %arg2, %c2_i32 : i32
    %23 = arith.extui %22 : i1 to i32
    %c0_i32_12 = arith.constant 0 : i32
    %24 = arith.cmpi ne, %23, %c0_i32_12 : i32
    scf.if %24 {
      %c0_13 = arith.constant 0 : index
      %c0_14 = arith.constant 0 : index
      %25 = vector.load %arg7[%c0_13, %c0_14] : memref<4x128xf32, #tpu.memory_space<vmem>>, vector<4x128xf32>
      %c0_15 = arith.constant 0 : index
      %c0_16 = arith.constant 0 : index
      %26 = vector.load %arg5[%c0_15, %c0_16] : memref<1x128xf32, #tpu.memory_space<vmem>>, vector<1x128xf32>
      %27 = vector.broadcast %26 : vector<1x128xf32> to vector<4x128xf32>
      %28 = arith.addf %25, %27 : vector<4x128xf32>
      %29 = vector.shape_cast %28 : vector<4x128xf32> to vector<1x1x4x128xf32>
      %30 = arith.truncf %29 : vector<1x1x4x128xf32> to vector<1x1x4x128xbf16>
      %c0_17 = arith.constant 0 : index
      %c0_18 = arith.constant 0 : index
      %c0_19 = arith.constant 0 : index
      %c0_20 = arith.constant 0 : index
      %31 = vector.load %arg6[%c0_17, %c0_18, %c0_19, %c0_20] : memref<1x1x4x128xbf16, #tpu.memory_space<vmem>>, vector<1x1x4x128xbf16>
      tpu.vector_store %arg6[%c0_17, %c0_18, %c0_19, %c0_20], %30 {strides = array<i32>} : memref<1x1x4x128xbf16, #tpu.memory_space<vmem>>, vector<1x1x4x128xbf16>,
    } else {
    }
    return
  }
  func.func @transform_0(%arg0: i32, %arg1: i32, %arg2: i32) -> (i32, i32, i32, i32) {
    %c2_i32 = arith.constant 2 : i32
    %0 = arith.muli %c2_i32, %arg1 : i32
    %1 = arith.addi %0, %arg2 : i32
    %c0_i32 = arith.constant 0 : i32
    %c0_i32_0 = arith.constant 0 : i32
    %c0_i32_1 = arith.constant 0 : i32
    return %arg0, %1, %c0_i32, %c0_i32_0 : i32, i32, i32, i32
  }
  func.func @transform_1(%arg0: i32, %arg1: i32, %arg2: i32) -> (i32, i32, i32) {
    %c0_i32 = arith.constant 0 : i32
    %c0_i32_0 = arith.constant 0 : i32
    %c0_i32_1 = arith.constant 0 : i32
    %c0_i32_2 = arith.constant 0 : i32
    return %c0_i32, %c0_i32_0, %c0_i32_1 : i32, i32, i32
  }
  func.func @transform_2(%arg0: i32, %arg1: i32, %arg2: i32) -> (i32, i32) {
    %c0_i32 = arith.constant 0 : i32
    %c0_i32_0 = arith.constant 0 : i32
    %c0_i32_1 = arith.constant 0 : i32
    return %c0_i32, %c0_i32_0 : i32, i32
  }
  func.func @transform_3(%arg0: i32, %arg1: i32, %arg2: i32) -> (i32, i32, i32, i32) {
    %c0_i32 = arith.constant 0 : i32
    %c0_i32_0 = arith.constant 0 : i32
    %c0_i32_1 = arith.constant 0 : i32
    return %arg0, %arg1, %c0_i32, %c0_i32_0 : i32, i32, i32, i32
  }
}

module attributes {stable_mosaic.version = 11 : i64} {
  func.func @kernel(%arg0: i32, %arg1: i32, %arg2: i32, %arg3: memref<1x16x128xbf16, #tpu.memory_space<vmem>>, %arg4: memref<1x16x128xbf16, #tpu.memory_space<vmem>>, %arg5: memref<1x128xf32, #tpu.memory_space<vmem>>, %arg6: memref<1x128xf32, #tpu.memory_space<vmem>>) attributes {dimension_semantics = [#tpu.dimension_semantics<parallel>, #tpu.dimension_semantics<arbitrary>, #tpu.dimension_semantics<arbitrary>], iteration_bounds = array<i64: 2, 2, 1>, scalar_prefetch = 0 : i64, scratch_operands = 2 : i64, tpu.core_type = #tpu.core_type<tc>, window_params = [{transform_indices = @transform_0, window_bounds = array<i64: 1, 16, 128>}, {transform_indices = @transform_1, window_bounds = array<i64: 1, 16, 128>}]} {
    %c0_i32 = arith.constant 0 : i32
    %0 = arith.cmpi eq, %arg1, %c0_i32 : i32
    %c0_i32_0 = arith.constant 0 : i32
    %1 = arith.cmpi eq, %arg2, %c0_i32_0 : i32
    %2 = arith.andi %0, %1 : i1
    %3 = arith.extui %2 : i1 to i32
    %c0_i32_1 = arith.constant 0 : i32
    %4 = arith.cmpi ne, %3, %c0_i32_1 : i32
    scf.if %4 {
      %cst = arith.constant 0.000000e+00 : f32
      %19 = vector.broadcast %cst : f32 to vector<1x128xf32>
      %c0_10 = arith.constant 0 : index
      %c0_11 = arith.constant 0 : index
      %20 = vector.load %arg5[%c0_10, %c0_11] : memref<1x128xf32, #tpu.memory_space<vmem>>, vector<1x128xf32>
      tpu.vector_store %arg5[%c0_10, %c0_11], %19 {strides = array<i32>} : memref<1x128xf32, #tpu.memory_space<vmem>>, vector<1x128xf32>,
      %cst_12 = arith.constant 0.000000e+00 : f32
      %21 = vector.broadcast %cst_12 : f32 to vector<1x128xf32>
      %c0_13 = arith.constant 0 : index
      %c0_14 = arith.constant 0 : index
      %22 = vector.load %arg6[%c0_13, %c0_14] : memref<1x128xf32, #tpu.memory_space<vmem>>, vector<1x128xf32>
      tpu.vector_store %arg6[%c0_13, %c0_14], %21 {strides = array<i32>} : memref<1x128xf32, #tpu.memory_space<vmem>>, vector<1x128xf32>,
    } else {
    }
    %c0 = arith.constant 0 : index
    %c0_2 = arith.constant 0 : index
    %c0_3 = arith.constant 0 : index
    %5 = vector.load %arg3[%c0, %c0_2, %c0_3] : memref<1x16x128xbf16, #tpu.memory_space<vmem>>, vector<1x16x128xbf16>
    %6 = vector.shape_cast %5 : vector<1x16x128xbf16> to vector<16x128xbf16>
    %7 = arith.extf %6 : vector<16x128xbf16> to vector<16x128xf32>
    %c0_i32_4 = arith.constant 0 : i32
    %8 = arith.cmpi eq, %arg1, %c0_i32_4 : i32
    %9 = arith.extui %8 : i1 to i32
    %c0_i32_5 = arith.constant 0 : i32
    %10 = arith.cmpi ne, %9, %c0_i32_5 : i32
    scf.if %10 {
      %c0_10 = arith.constant 0 : index
      %c0_11 = arith.constant 0 : index
      %19 = vector.load %arg5[%c0_10, %c0_11] : memref<1x128xf32, #tpu.memory_space<vmem>>, vector<1x128xf32>
      %cst = arith.constant dense<0.000000e+00> : vector<128xf32>
      %20 = vector.multi_reduction <add>, %7, %cst [0] : vector<16x128xf32> to vector<128xf32>
      %21 = vector.shape_cast %20 : vector<128xf32> to vector<1x128xf32>
      %22 = arith.addf %19, %21 : vector<1x128xf32>
      %c0_12 = arith.constant 0 : index
      %c0_13 = arith.constant 0 : index
      %23 = vector.load %arg5[%c0_12, %c0_13] : memref<1x128xf32, #tpu.memory_space<vmem>>, vector<1x128xf32>
      tpu.vector_store %arg5[%c0_12, %c0_13], %22 {strides = array<i32>} : memref<1x128xf32, #tpu.memory_space<vmem>>, vector<1x128xf32>,
      %c0_14 = arith.constant 0 : index
      %c0_15 = arith.constant 0 : index
      %24 = vector.load %arg6[%c0_14, %c0_15] : memref<1x128xf32, #tpu.memory_space<vmem>>, vector<1x128xf32>
      %25 = arith.mulf %7, %7 : vector<16x128xf32>
      %cst_16 = arith.constant dense<0.000000e+00> : vector<128xf32>
      %26 = vector.multi_reduction <add>, %25, %cst_16 [0] : vector<16x128xf32> to vector<128xf32>
      %27 = vector.shape_cast %26 : vector<128xf32> to vector<1x128xf32>
      %28 = arith.addf %24, %27 : vector<1x128xf32>
      %c0_17 = arith.constant 0 : index
      %c0_18 = arith.constant 0 : index
      %29 = vector.load %arg6[%c0_17, %c0_18] : memref<1x128xf32, #tpu.memory_space<vmem>>, vector<1x128xf32>
      tpu.vector_store %arg6[%c0_17, %c0_18], %28 {strides = array<i32>} : memref<1x128xf32, #tpu.memory_space<vmem>>, vector<1x128xf32>,
    } else {
    }
    %c0_i32_6 = arith.constant 0 : i32
    %11 = arith.cmpi eq, %arg1, %c0_i32_6 : i32
    %c0_i32_7 = arith.constant 0 : i32
    %12 = arith.cmpi eq, %arg2, %c0_i32_7 : i32
    %13 = arith.andi %11, %12 : i1
    %14 = arith.extui %13 : i1 to i32
    %c0_i32_8 = arith.constant 0 : i32
    %15 = arith.cmpi ne, %14, %c0_i32_8 : i32
    scf.if %15 {
      %c0_10 = arith.constant 0 : index
      %c0_11 = arith.constant 0 : index
      %19 = vector.load %arg5[%c0_10, %c0_11] : memref<1x128xf32, #tpu.memory_space<vmem>>, vector<1x128xf32>
      %cst = arith.constant 1.600000e+01 : f32
      %20 = vector.broadcast %cst : f32 to vector<1x128xf32>
      %21 = arith.divf %19, %20 : vector<1x128xf32>
      %c0_12 = arith.constant 0 : index
      %c0_13 = arith.constant 0 : index
      %22 = vector.load %arg6[%c0_12, %c0_13] : memref<1x128xf32, #tpu.memory_space<vmem>>, vector<1x128xf32>
      %cst_14 = arith.constant 1.600000e+01 : f32
      %23 = vector.broadcast %cst_14 : f32 to vector<1x128xf32>
      %24 = arith.divf %22, %23 : vector<1x128xf32>
      %25 = arith.mulf %21, %21 : vector<1x128xf32>
      %26 = arith.subf %24, %25 : vector<1x128xf32>
      %c0_15 = arith.constant 0 : index
      %c0_16 = arith.constant 0 : index
      %27 = vector.load %arg5[%c0_15, %c0_16] : memref<1x128xf32, #tpu.memory_space<vmem>>, vector<1x128xf32>
      tpu.vector_store %arg5[%c0_15, %c0_16], %21 {strides = array<i32>} : memref<1x128xf32, #tpu.memory_space<vmem>>, vector<1x128xf32>,
      %cst_17 = arith.constant 0.000000e+00 : f32
      %28 = vector.broadcast %cst_17 : f32 to vector<1x128xf32>
      %29 = arith.maximumf %26, %28 : vector<1x128xf32>
      %cst_18 = arith.constant 9.99999974E-6 : f32
      %30 = vector.broadcast %cst_18 : f32 to vector<1x128xf32>
      %31 = arith.addf %29, %30 : vector<1x128xf32>
      %32 = math.rsqrt %31 : vector<1x128xf32>
      %c0_19 = arith.constant 0 : index
      %c0_20 = arith.constant 0 : index
      %33 = vector.load %arg6[%c0_19, %c0_20] : memref<1x128xf32, #tpu.memory_space<vmem>>, vector<1x128xf32>
      tpu.vector_store %arg6[%c0_19, %c0_20], %32 {strides = array<i32>} : memref<1x128xf32, #tpu.memory_space<vmem>>, vector<1x128xf32>,
    } else {
    }
    %c1_i32 = arith.constant 1 : i32
    %16 = arith.cmpi eq, %arg1, %c1_i32 : i32
    %17 = arith.extui %16 : i1 to i32
    %c0_i32_9 = arith.constant 0 : i32
    %18 = arith.cmpi ne, %17, %c0_i32_9 : i32
    scf.if %18 {
      %c0_10 = arith.constant 0 : index
      %c0_11 = arith.constant 0 : index
      %19 = vector.load %arg5[%c0_10, %c0_11] : memref<1x128xf32, #tpu.memory_space<vmem>>, vector<1x128xf32>
      %20 = vector.broadcast %19 : vector<1x128xf32> to vector<16x128xf32>
      %21 = arith.subf %7, %20 : vector<16x128xf32>
      %c0_12 = arith.constant 0 : index
      %c0_13 = arith.constant 0 : index
      %22 = vector.load %arg6[%c0_12, %c0_13] : memref<1x128xf32, #tpu.memory_space<vmem>>, vector<1x128xf32>
      %23 = vector.broadcast %22 : vector<1x128xf32> to vector<16x128xf32>
      %24 = arith.mulf %21, %23 : vector<16x128xf32>
      %cst = arith.constant 0.000000e+00 : f32
      %25 = vector.broadcast %cst : f32 to vector<16x128xf32>
      %26 = arith.maximumf %24, %25 : vector<16x128xf32>
      %27 = vector.shape_cast %26 : vector<16x128xf32> to vector<1x16x128xf32>
      %28 = arith.truncf %27 : vector<1x16x128xf32> to vector<1x16x128xbf16>
      %c0_14 = arith.constant 0 : index
      %c0_15 = arith.constant 0 : index
      %c0_16 = arith.constant 0 : index
      %29 = vector.load %arg4[%c0_14, %c0_15, %c0_16] : memref<1x16x128xbf16, #tpu.memory_space<vmem>>, vector<1x16x128xbf16>
      tpu.vector_store %arg4[%c0_14, %c0_15, %c0_16], %28 {strides = array<i32>} : memref<1x16x128xbf16, #tpu.memory_space<vmem>>, vector<1x16x128xbf16>,
    } else {
    }
    return
  }
  func.func @transform_0(%arg0: i32, %arg1: i32, %arg2: i32) -> (i32, i32, i32) {
    %c0_i32 = arith.constant 0 : i32
    %c0_i32_0 = arith.constant 0 : i32
    return %arg0, %arg2, %c0_i32 : i32, i32, i32
  }
  func.func @transform_1(%arg0: i32, %arg1: i32, %arg2: i32) -> (i32, i32, i32) {
    %0 = arith.muli %arg2, %arg1 : i32
    %c0_i32 = arith.constant 0 : i32
    %c0_i32_0 = arith.constant 0 : i32
    return %arg0, %0, %c0_i32 : i32, i32, i32
  }
}

module attributes {stable_mosaic.version = 11 : i64} {
  func.func @_tap_conv_kernel(%arg0: i32, %arg1: i32, %arg2: i32, %arg3: memref<1x1x6x128xbf16, #tpu.memory_space<vmem>>, %arg4: memref<3x384x128xbf16, #tpu.memory_space<vmem>>, %arg5: memref<1x128xf32, #tpu.memory_space<vmem>>, %arg6: memref<1x1x4x128xbf16, #tpu.memory_space<vmem>>, %arg7: memref<4x128xf32, #tpu.memory_space<vmem>>) attributes {dimension_semantics = [#tpu.dimension_semantics<parallel>, #tpu.dimension_semantics<parallel>, #tpu.dimension_semantics<arbitrary>], iteration_bounds = array<i64: 2, 4, 3>, scalar_prefetch = 0 : i64, scratch_operands = 1 : i64, tpu.core_type = #tpu.core_type<tc>, window_params = [{transform_indices = @transform_0, window_bounds = array<i64: 1, 1, 6, 128>}, {pipeline_mode = #tpu.pipeline_mode<synchronous>, transform_indices = @transform_1, window_bounds = array<i64: 3, 384, 128>}, {pipeline_mode = #tpu.pipeline_mode<synchronous>, transform_indices = @transform_2, window_bounds = array<i64: 1, 128>}, {transform_indices = @transform_3, window_bounds = array<i64: 1, 1, 4, 128>}]} {
    %c0_i32 = arith.constant 0 : i32
    %0 = arith.cmpi eq, %arg2, %c0_i32 : i32
    %1 = arith.extui %0 : i1 to i32
    %c0_i32_0 = arith.constant 0 : i32
    %2 = arith.cmpi ne, %1, %c0_i32_0 : i32
    scf.if %2 {
      %cst_13 = arith.constant 0.000000e+00 : f32
      %25 = vector.broadcast %cst_13 : f32 to vector<4x128xf32>
      %c0_14 = arith.constant 0 : index
      %c0_15 = arith.constant 0 : index
      %26 = vector.load %arg7[%c0_14, %c0_15] : memref<4x128xf32, #tpu.memory_space<vmem>>, vector<4x128xf32>
      tpu.vector_store %arg7[%c0_14, %c0_15], %25 {strides = array<i32>} : memref<4x128xf32, #tpu.memory_space<vmem>>, vector<4x128xf32>,
    } else {
    }
    %c0 = arith.constant 0 : index
    %c0_1 = arith.constant 0 : index
    %c0_2 = arith.constant 0 : index
    %c0_3 = arith.constant 0 : index
    %3 = vector.load %arg3[%c0, %c0_1, %c0_2, %c0_3] : memref<1x1x6x128xbf16, #tpu.memory_space<vmem>>, vector<1x1x6x128xbf16>
    %4 = vector.shape_cast %3 : vector<1x1x6x128xbf16> to vector<6x128xbf16>
    %5 = arith.index_cast %arg2 : i32 to index
    %c0_4 = arith.constant 0 : index
    %c0_5 = arith.constant 0 : index
    %6 = vector.load %arg4[%5, %c0_4, %c0_5] : memref<3x384x128xbf16, #tpu.memory_space<vmem>>, vector<1x384x128xbf16>
    %7 = vector.shape_cast %6 : vector<1x384x128xbf16> to vector<384x128xbf16>
    %c0_6 = arith.constant 0 : index
    %c0_7 = arith.constant 0 : index
    %8 = vector.load %arg7[%c0_6, %c0_7] : memref<4x128xf32, #tpu.memory_space<vmem>>, vector<4x128xf32>
    %9 = vector.extract_strided_slice %4 {offsets = [0, 0], sizes = [4, 128], strides = [1, 1]} : vector<6x128xbf16> to vector<4x128xbf16>
    %10 = vector.extract_strided_slice %7 {offsets = [0, 0], sizes = [128, 128], strides = [1, 1]} : vector<384x128xbf16> to vector<128x128xbf16>
    %cst = arith.constant dense<0.000000e+00> : vector<4x128xf32>
    %11 = tpu.matmul %9, %10, %cst {dimension_numbers = #tpu.dot_dimension_numbers<[1], [0], [0], [1], [0, 0, 1, 1], [], []>} : vector<4x128xbf16>, vector<128x128xbf16>, vector<4x128xf32> -> vector<4x128xf32>
    %12 = arith.addf %8, %11 : vector<4x128xf32>
    %13 = vector.extract_strided_slice %4 {offsets = [1, 0], sizes = [4, 128], strides = [1, 1]} : vector<6x128xbf16> to vector<4x128xbf16>
    %14 = vector.extract_strided_slice %7 {offsets = [128, 0], sizes = [128, 128], strides = [1, 1]} : vector<384x128xbf16> to vector<128x128xbf16>
    %cst_8 = arith.constant dense<0.000000e+00> : vector<4x128xf32>
    %15 = tpu.matmul %13, %14, %cst_8 {dimension_numbers = #tpu.dot_dimension_numbers<[1], [0], [0], [1], [0, 0, 1, 1], [], []>} : vector<4x128xbf16>, vector<128x128xbf16>, vector<4x128xf32> -> vector<4x128xf32>
    %16 = arith.addf %12, %15 : vector<4x128xf32>
    %17 = vector.extract_strided_slice %4 {offsets = [2, 0], sizes = [4, 128], strides = [1, 1]} : vector<6x128xbf16> to vector<4x128xbf16>
    %18 = vector.extract_strided_slice %7 {offsets = [256, 0], sizes = [128, 128], strides = [1, 1]} : vector<384x128xbf16> to vector<128x128xbf16>
    %cst_9 = arith.constant dense<0.000000e+00> : vector<4x128xf32>
    %19 = tpu.matmul %17, %18, %cst_9 {dimension_numbers = #tpu.dot_dimension_numbers<[1], [0], [0], [1], [0, 0, 1, 1], [], []>} : vector<4x128xbf16>, vector<128x128xbf16>, vector<4x128xf32> -> vector<4x128xf32>
    %20 = arith.addf %16, %19 : vector<4x128xf32>
    %c0_10 = arith.constant 0 : index
    %c0_11 = arith.constant 0 : index
    %21 = vector.load %arg7[%c0_10, %c0_11] : memref<4x128xf32, #tpu.memory_space<vmem>>, vector<4x128xf32>
    tpu.vector_store %arg7[%c0_10, %c0_11], %20 {strides = array<i32>} : memref<4x128xf32, #tpu.memory_space<vmem>>, vector<4x128xf32>,
    %c2_i32 = arith.constant 2 : i32
    %22 = arith.cmpi eq, %arg2, %c2_i32 : i32
    %23 = arith.extui %22 : i1 to i32
    %c0_i32_12 = arith.constant 0 : i32
    %24 = arith.cmpi ne, %23, %c0_i32_12 : i32
    scf.if %24 {
      %c0_13 = arith.constant 0 : index
      %c0_14 = arith.constant 0 : index
      %25 = vector.load %arg7[%c0_13, %c0_14] : memref<4x128xf32, #tpu.memory_space<vmem>>, vector<4x128xf32>
      %c0_15 = arith.constant 0 : index
      %c0_16 = arith.constant 0 : index
      %26 = vector.load %arg5[%c0_15, %c0_16] : memref<1x128xf32, #tpu.memory_space<vmem>>, vector<1x128xf32>
      %27 = vector.broadcast %26 : vector<1x128xf32> to vector<4x128xf32>
      %28 = arith.addf %25, %27 : vector<4x128xf32>
      %29 = vector.shape_cast %28 : vector<4x128xf32> to vector<1x1x4x128xf32>
      %30 = arith.truncf %29 : vector<1x1x4x128xf32> to vector<1x1x4x128xbf16>
      %c0_17 = arith.constant 0 : index
      %c0_18 = arith.constant 0 : index
      %c0_19 = arith.constant 0 : index
      %c0_20 = arith.constant 0 : index
      %31 = vector.load %arg6[%c0_17, %c0_18, %c0_19, %c0_20] : memref<1x1x4x128xbf16, #tpu.memory_space<vmem>>, vector<1x1x4x128xbf16>
      tpu.vector_store %arg6[%c0_17, %c0_18, %c0_19, %c0_20], %30 {strides = array<i32>} : memref<1x1x4x128xbf16, #tpu.memory_space<vmem>>, vector<1x1x4x128xbf16>,
    } else {
    }
    return
  }
  func.func @transform_0(%arg0: i32, %arg1: i32, %arg2: i32) -> (i32, i32, i32, i32) {
    %c1_i32 = arith.constant 1 : i32
    %0 = arith.muli %c1_i32, %arg1 : i32
    %1 = arith.addi %0, %arg2 : i32
    %c0_i32 = arith.constant 0 : i32
    %c0_i32_0 = arith.constant 0 : i32
    %c0_i32_1 = arith.constant 0 : i32
    return %arg0, %1, %c0_i32, %c0_i32_0 : i32, i32, i32, i32
  }
  func.func @transform_1(%arg0: i32, %arg1: i32, %arg2: i32) -> (i32, i32, i32) {
    %c0_i32 = arith.constant 0 : i32
    %c0_i32_0 = arith.constant 0 : i32
    %c0_i32_1 = arith.constant 0 : i32
    %c0_i32_2 = arith.constant 0 : i32
    return %c0_i32, %c0_i32_0, %c0_i32_1 : i32, i32, i32
  }
  func.func @transform_2(%arg0: i32, %arg1: i32, %arg2: i32) -> (i32, i32) {
    %c0_i32 = arith.constant 0 : i32
    %c0_i32_0 = arith.constant 0 : i32
    %c0_i32_1 = arith.constant 0 : i32
    return %c0_i32, %c0_i32_0 : i32, i32
  }
  func.func @transform_3(%arg0: i32, %arg1: i32, %arg2: i32) -> (i32, i32, i32, i32) {
    %c0_i32 = arith.constant 0 : i32
    %c0_i32_0 = arith.constant 0 : i32
    %c0_i32_1 = arith.constant 0 : i32
    return %arg0, %arg1, %c0_i32, %c0_i32_0 : i32, i32, i32, i32
  }
}

module attributes {stable_mosaic.version = 11 : i64} {
  func.func @kernel(%arg0: i32, %arg1: i32, %arg2: i32, %arg3: memref<1x16x128xbf16, #tpu.memory_space<vmem>>, %arg4: memref<1x16x128xbf16, #tpu.memory_space<vmem>>, %arg5: memref<1x16x128xbf16, #tpu.memory_space<vmem>>, %arg6: memref<1x128xf32, #tpu.memory_space<vmem>>, %arg7: memref<1x128xf32, #tpu.memory_space<vmem>>) attributes {dimension_semantics = [#tpu.dimension_semantics<parallel>, #tpu.dimension_semantics<arbitrary>, #tpu.dimension_semantics<arbitrary>], iteration_bounds = array<i64: 2, 2, 1>, scalar_prefetch = 0 : i64, scratch_operands = 2 : i64, tpu.core_type = #tpu.core_type<tc>, window_params = [{transform_indices = @transform_0, window_bounds = array<i64: 1, 16, 128>}, {transform_indices = @transform_1, window_bounds = array<i64: 1, 16, 128>}, {transform_indices = @transform_2, window_bounds = array<i64: 1, 16, 128>}]} {
    %c0_i32 = arith.constant 0 : i32
    %0 = arith.cmpi eq, %arg1, %c0_i32 : i32
    %c0_i32_0 = arith.constant 0 : i32
    %1 = arith.cmpi eq, %arg2, %c0_i32_0 : i32
    %2 = arith.andi %0, %1 : i1
    %3 = arith.extui %2 : i1 to i32
    %c0_i32_1 = arith.constant 0 : i32
    %4 = arith.cmpi ne, %3, %c0_i32_1 : i32
    scf.if %4 {
      %cst = arith.constant 0.000000e+00 : f32
      %19 = vector.broadcast %cst : f32 to vector<1x128xf32>
      %c0_10 = arith.constant 0 : index
      %c0_11 = arith.constant 0 : index
      %20 = vector.load %arg6[%c0_10, %c0_11] : memref<1x128xf32, #tpu.memory_space<vmem>>, vector<1x128xf32>
      tpu.vector_store %arg6[%c0_10, %c0_11], %19 {strides = array<i32>} : memref<1x128xf32, #tpu.memory_space<vmem>>, vector<1x128xf32>,
      %cst_12 = arith.constant 0.000000e+00 : f32
      %21 = vector.broadcast %cst_12 : f32 to vector<1x128xf32>
      %c0_13 = arith.constant 0 : index
      %c0_14 = arith.constant 0 : index
      %22 = vector.load %arg7[%c0_13, %c0_14] : memref<1x128xf32, #tpu.memory_space<vmem>>, vector<1x128xf32>
      tpu.vector_store %arg7[%c0_13, %c0_14], %21 {strides = array<i32>} : memref<1x128xf32, #tpu.memory_space<vmem>>, vector<1x128xf32>,
    } else {
    }
    %c0 = arith.constant 0 : index
    %c0_2 = arith.constant 0 : index
    %c0_3 = arith.constant 0 : index
    %5 = vector.load %arg3[%c0, %c0_2, %c0_3] : memref<1x16x128xbf16, #tpu.memory_space<vmem>>, vector<1x16x128xbf16>
    %6 = vector.shape_cast %5 : vector<1x16x128xbf16> to vector<16x128xbf16>
    %7 = arith.extf %6 : vector<16x128xbf16> to vector<16x128xf32>
    %c0_i32_4 = arith.constant 0 : i32
    %8 = arith.cmpi eq, %arg1, %c0_i32_4 : i32
    %9 = arith.extui %8 : i1 to i32
    %c0_i32_5 = arith.constant 0 : i32
    %10 = arith.cmpi ne, %9, %c0_i32_5 : i32
    scf.if %10 {
      %c0_10 = arith.constant 0 : index
      %c0_11 = arith.constant 0 : index
      %19 = vector.load %arg6[%c0_10, %c0_11] : memref<1x128xf32, #tpu.memory_space<vmem>>, vector<1x128xf32>
      %cst = arith.constant dense<0.000000e+00> : vector<128xf32>
      %20 = vector.multi_reduction <add>, %7, %cst [0] : vector<16x128xf32> to vector<128xf32>
      %21 = vector.shape_cast %20 : vector<128xf32> to vector<1x128xf32>
      %22 = arith.addf %19, %21 : vector<1x128xf32>
      %c0_12 = arith.constant 0 : index
      %c0_13 = arith.constant 0 : index
      %23 = vector.load %arg6[%c0_12, %c0_13] : memref<1x128xf32, #tpu.memory_space<vmem>>, vector<1x128xf32>
      tpu.vector_store %arg6[%c0_12, %c0_13], %22 {strides = array<i32>} : memref<1x128xf32, #tpu.memory_space<vmem>>, vector<1x128xf32>,
      %c0_14 = arith.constant 0 : index
      %c0_15 = arith.constant 0 : index
      %24 = vector.load %arg7[%c0_14, %c0_15] : memref<1x128xf32, #tpu.memory_space<vmem>>, vector<1x128xf32>
      %25 = arith.mulf %7, %7 : vector<16x128xf32>
      %cst_16 = arith.constant dense<0.000000e+00> : vector<128xf32>
      %26 = vector.multi_reduction <add>, %25, %cst_16 [0] : vector<16x128xf32> to vector<128xf32>
      %27 = vector.shape_cast %26 : vector<128xf32> to vector<1x128xf32>
      %28 = arith.addf %24, %27 : vector<1x128xf32>
      %c0_17 = arith.constant 0 : index
      %c0_18 = arith.constant 0 : index
      %29 = vector.load %arg7[%c0_17, %c0_18] : memref<1x128xf32, #tpu.memory_space<vmem>>, vector<1x128xf32>
      tpu.vector_store %arg7[%c0_17, %c0_18], %28 {strides = array<i32>} : memref<1x128xf32, #tpu.memory_space<vmem>>, vector<1x128xf32>,
    } else {
    }
    %c0_i32_6 = arith.constant 0 : i32
    %11 = arith.cmpi eq, %arg1, %c0_i32_6 : i32
    %c0_i32_7 = arith.constant 0 : i32
    %12 = arith.cmpi eq, %arg2, %c0_i32_7 : i32
    %13 = arith.andi %11, %12 : i1
    %14 = arith.extui %13 : i1 to i32
    %c0_i32_8 = arith.constant 0 : i32
    %15 = arith.cmpi ne, %14, %c0_i32_8 : i32
    scf.if %15 {
      %c0_10 = arith.constant 0 : index
      %c0_11 = arith.constant 0 : index
      %19 = vector.load %arg6[%c0_10, %c0_11] : memref<1x128xf32, #tpu.memory_space<vmem>>, vector<1x128xf32>
      %cst = arith.constant 1.600000e+01 : f32
      %20 = vector.broadcast %cst : f32 to vector<1x128xf32>
      %21 = arith.divf %19, %20 : vector<1x128xf32>
      %c0_12 = arith.constant 0 : index
      %c0_13 = arith.constant 0 : index
      %22 = vector.load %arg7[%c0_12, %c0_13] : memref<1x128xf32, #tpu.memory_space<vmem>>, vector<1x128xf32>
      %cst_14 = arith.constant 1.600000e+01 : f32
      %23 = vector.broadcast %cst_14 : f32 to vector<1x128xf32>
      %24 = arith.divf %22, %23 : vector<1x128xf32>
      %25 = arith.mulf %21, %21 : vector<1x128xf32>
      %26 = arith.subf %24, %25 : vector<1x128xf32>
      %c0_15 = arith.constant 0 : index
      %c0_16 = arith.constant 0 : index
      %27 = vector.load %arg6[%c0_15, %c0_16] : memref<1x128xf32, #tpu.memory_space<vmem>>, vector<1x128xf32>
      tpu.vector_store %arg6[%c0_15, %c0_16], %21 {strides = array<i32>} : memref<1x128xf32, #tpu.memory_space<vmem>>, vector<1x128xf32>,
      %cst_17 = arith.constant 0.000000e+00 : f32
      %28 = vector.broadcast %cst_17 : f32 to vector<1x128xf32>
      %29 = arith.maximumf %26, %28 : vector<1x128xf32>
      %cst_18 = arith.constant 9.99999974E-6 : f32
      %30 = vector.broadcast %cst_18 : f32 to vector<1x128xf32>
      %31 = arith.addf %29, %30 : vector<1x128xf32>
      %32 = math.rsqrt %31 : vector<1x128xf32>
      %c0_19 = arith.constant 0 : index
      %c0_20 = arith.constant 0 : index
      %33 = vector.load %arg7[%c0_19, %c0_20] : memref<1x128xf32, #tpu.memory_space<vmem>>, vector<1x128xf32>
      tpu.vector_store %arg7[%c0_19, %c0_20], %32 {strides = array<i32>} : memref<1x128xf32, #tpu.memory_space<vmem>>, vector<1x128xf32>,
    } else {
    }
    %c1_i32 = arith.constant 1 : i32
    %16 = arith.cmpi eq, %arg1, %c1_i32 : i32
    %17 = arith.extui %16 : i1 to i32
    %c0_i32_9 = arith.constant 0 : i32
    %18 = arith.cmpi ne, %17, %c0_i32_9 : i32
    scf.if %18 {
      %c0_10 = arith.constant 0 : index
      %c0_11 = arith.constant 0 : index
      %19 = vector.load %arg6[%c0_10, %c0_11] : memref<1x128xf32, #tpu.memory_space<vmem>>, vector<1x128xf32>
      %20 = vector.broadcast %19 : vector<1x128xf32> to vector<16x128xf32>
      %21 = arith.subf %7, %20 : vector<16x128xf32>
      %c0_12 = arith.constant 0 : index
      %c0_13 = arith.constant 0 : index
      %22 = vector.load %arg7[%c0_12, %c0_13] : memref<1x128xf32, #tpu.memory_space<vmem>>, vector<1x128xf32>
      %23 = vector.broadcast %22 : vector<1x128xf32> to vector<16x128xf32>
      %24 = arith.mulf %21, %23 : vector<16x128xf32>
      %c0_14 = arith.constant 0 : index
      %c0_15 = arith.constant 0 : index
      %c0_16 = arith.constant 0 : index
      %25 = vector.load %arg4[%c0_14, %c0_15, %c0_16] : memref<1x16x128xbf16, #tpu.memory_space<vmem>>, vector<1x16x128xbf16>
      %26 = vector.shape_cast %25 : vector<1x16x128xbf16> to vector<16x128xbf16>
      %27 = arith.extf %26 : vector<16x128xbf16> to vector<16x128xf32>
      %28 = arith.addf %24, %27 : vector<16x128xf32>
      %29 = vector.shape_cast %28 : vector<16x128xf32> to vector<1x16x128xf32>
      %30 = arith.truncf %29 : vector<1x16x128xf32> to vector<1x16x128xbf16>
      %c0_17 = arith.constant 0 : index
      %c0_18 = arith.constant 0 : index
      %c0_19 = arith.constant 0 : index
      %31 = vector.load %arg5[%c0_17, %c0_18, %c0_19] : memref<1x16x128xbf16, #tpu.memory_space<vmem>>, vector<1x16x128xbf16>
      tpu.vector_store %arg5[%c0_17, %c0_18, %c0_19], %30 {strides = array<i32>} : memref<1x16x128xbf16, #tpu.memory_space<vmem>>, vector<1x16x128xbf16>,
    } else {
    }
    return
  }
  func.func @transform_0(%arg0: i32, %arg1: i32, %arg2: i32) -> (i32, i32, i32) {
    %c0_i32 = arith.constant 0 : i32
    %c0_i32_0 = arith.constant 0 : i32
    return %arg0, %arg2, %c0_i32 : i32, i32, i32
  }
  func.func @transform_1(%arg0: i32, %arg1: i32, %arg2: i32) -> (i32, i32, i32) {
    %0 = arith.muli %arg2, %arg1 : i32
    %c0_i32 = arith.constant 0 : i32
    %c0_i32_0 = arith.constant 0 : i32
    return %arg0, %0, %c0_i32 : i32, i32, i32
  }
  func.func @transform_2(%arg0: i32, %arg1: i32, %arg2: i32) -> (i32, i32, i32) {
    %0 = arith.muli %arg2, %arg1 : i32
    %c0_i32 = arith.constant 0 : i32
    %c0_i32_0 = arith.constant 0 : i32
    return %arg0, %0, %c0_i32 : i32, i32, i32
  }
}

module attributes {stable_mosaic.version = 11 : i64} {
  func.func @_tap_conv_kernel(%arg0: i32, %arg1: i32, %arg2: i32, %arg3: memref<1x1x10x128xbf16, #tpu.memory_space<vmem>>, %arg4: memref<3x384x128xbf16, #tpu.memory_space<vmem>>, %arg5: memref<1x128xf32, #tpu.memory_space<vmem>>, %arg6: memref<1x1x8x128xbf16, #tpu.memory_space<vmem>>, %arg7: memref<8x128xf32, #tpu.memory_space<vmem>>) attributes {dimension_semantics = [#tpu.dimension_semantics<parallel>, #tpu.dimension_semantics<parallel>, #tpu.dimension_semantics<arbitrary>], iteration_bounds = array<i64: 2, 8, 3>, scalar_prefetch = 0 : i64, scratch_operands = 1 : i64, tpu.core_type = #tpu.core_type<tc>, window_params = [{transform_indices = @transform_0, window_bounds = array<i64: 1, 1, 10, 128>}, {pipeline_mode = #tpu.pipeline_mode<synchronous>, transform_indices = @transform_1, window_bounds = array<i64: 3, 384, 128>}, {pipeline_mode = #tpu.pipeline_mode<synchronous>, transform_indices = @transform_2, window_bounds = array<i64: 1, 128>}, {transform_indices = @transform_3, window_bounds = array<i64: 1, 1, 8, 128>}]} {
    %c0_i32 = arith.constant 0 : i32
    %0 = arith.cmpi eq, %arg2, %c0_i32 : i32
    %1 = arith.extui %0 : i1 to i32
    %c0_i32_0 = arith.constant 0 : i32
    %2 = arith.cmpi ne, %1, %c0_i32_0 : i32
    scf.if %2 {
      %cst_13 = arith.constant 0.000000e+00 : f32
      %25 = vector.broadcast %cst_13 : f32 to vector<8x128xf32>
      %c0_14 = arith.constant 0 : index
      %c0_15 = arith.constant 0 : index
      %26 = vector.load %arg7[%c0_14, %c0_15] : memref<8x128xf32, #tpu.memory_space<vmem>>, vector<8x128xf32>
      tpu.vector_store %arg7[%c0_14, %c0_15], %25 {strides = array<i32>} : memref<8x128xf32, #tpu.memory_space<vmem>>, vector<8x128xf32>,
    } else {
    }
    %c0 = arith.constant 0 : index
    %c0_1 = arith.constant 0 : index
    %c0_2 = arith.constant 0 : index
    %c0_3 = arith.constant 0 : index
    %3 = vector.load %arg3[%c0, %c0_1, %c0_2, %c0_3] : memref<1x1x10x128xbf16, #tpu.memory_space<vmem>>, vector<1x1x10x128xbf16>
    %4 = vector.shape_cast %3 : vector<1x1x10x128xbf16> to vector<10x128xbf16>
    %5 = arith.index_cast %arg2 : i32 to index
    %c0_4 = arith.constant 0 : index
    %c0_5 = arith.constant 0 : index
    %6 = vector.load %arg4[%5, %c0_4, %c0_5] : memref<3x384x128xbf16, #tpu.memory_space<vmem>>, vector<1x384x128xbf16>
    %7 = vector.shape_cast %6 : vector<1x384x128xbf16> to vector<384x128xbf16>
    %c0_6 = arith.constant 0 : index
    %c0_7 = arith.constant 0 : index
    %8 = vector.load %arg7[%c0_6, %c0_7] : memref<8x128xf32, #tpu.memory_space<vmem>>, vector<8x128xf32>
    %9 = vector.extract_strided_slice %4 {offsets = [0, 0], sizes = [8, 128], strides = [1, 1]} : vector<10x128xbf16> to vector<8x128xbf16>
    %10 = vector.extract_strided_slice %7 {offsets = [0, 0], sizes = [128, 128], strides = [1, 1]} : vector<384x128xbf16> to vector<128x128xbf16>
    %cst = arith.constant dense<0.000000e+00> : vector<8x128xf32>
    %11 = tpu.matmul %9, %10, %cst {dimension_numbers = #tpu.dot_dimension_numbers<[1], [0], [0], [1], [0, 0, 1, 1], [], []>} : vector<8x128xbf16>, vector<128x128xbf16>, vector<8x128xf32> -> vector<8x128xf32>
    %12 = arith.addf %8, %11 : vector<8x128xf32>
    %13 = vector.extract_strided_slice %4 {offsets = [1, 0], sizes = [8, 128], strides = [1, 1]} : vector<10x128xbf16> to vector<8x128xbf16>
    %14 = vector.extract_strided_slice %7 {offsets = [128, 0], sizes = [128, 128], strides = [1, 1]} : vector<384x128xbf16> to vector<128x128xbf16>
    %cst_8 = arith.constant dense<0.000000e+00> : vector<8x128xf32>
    %15 = tpu.matmul %13, %14, %cst_8 {dimension_numbers = #tpu.dot_dimension_numbers<[1], [0], [0], [1], [0, 0, 1, 1], [], []>} : vector<8x128xbf16>, vector<128x128xbf16>, vector<8x128xf32> -> vector<8x128xf32>
    %16 = arith.addf %12, %15 : vector<8x128xf32>
    %17 = vector.extract_strided_slice %4 {offsets = [2, 0], sizes = [8, 128], strides = [1, 1]} : vector<10x128xbf16> to vector<8x128xbf16>
    %18 = vector.extract_strided_slice %7 {offsets = [256, 0], sizes = [128, 128], strides = [1, 1]} : vector<384x128xbf16> to vector<128x128xbf16>
    %cst_9 = arith.constant dense<0.000000e+00> : vector<8x128xf32>
    %19 = tpu.matmul %17, %18, %cst_9 {dimension_numbers = #tpu.dot_dimension_numbers<[1], [0], [0], [1], [0, 0, 1, 1], [], []>} : vector<8x128xbf16>, vector<128x128xbf16>, vector<8x128xf32> -> vector<8x128xf32>
    %20 = arith.addf %16, %19 : vector<8x128xf32>
    %c0_10 = arith.constant 0 : index
    %c0_11 = arith.constant 0 : index
    %21 = vector.load %arg7[%c0_10, %c0_11] : memref<8x128xf32, #tpu.memory_space<vmem>>, vector<8x128xf32>
    tpu.vector_store %arg7[%c0_10, %c0_11], %20 {strides = array<i32>} : memref<8x128xf32, #tpu.memory_space<vmem>>, vector<8x128xf32>,
    %c2_i32 = arith.constant 2 : i32
    %22 = arith.cmpi eq, %arg2, %c2_i32 : i32
    %23 = arith.extui %22 : i1 to i32
    %c0_i32_12 = arith.constant 0 : i32
    %24 = arith.cmpi ne, %23, %c0_i32_12 : i32
    scf.if %24 {
      %c0_13 = arith.constant 0 : index
      %c0_14 = arith.constant 0 : index
      %25 = vector.load %arg7[%c0_13, %c0_14] : memref<8x128xf32, #tpu.memory_space<vmem>>, vector<8x128xf32>
      %c0_15 = arith.constant 0 : index
      %c0_16 = arith.constant 0 : index
      %26 = vector.load %arg5[%c0_15, %c0_16] : memref<1x128xf32, #tpu.memory_space<vmem>>, vector<1x128xf32>
      %27 = vector.broadcast %26 : vector<1x128xf32> to vector<8x128xf32>
      %28 = arith.addf %25, %27 : vector<8x128xf32>
      %29 = vector.shape_cast %28 : vector<8x128xf32> to vector<1x1x8x128xf32>
      %30 = arith.truncf %29 : vector<1x1x8x128xf32> to vector<1x1x8x128xbf16>
      %c0_17 = arith.constant 0 : index
      %c0_18 = arith.constant 0 : index
      %c0_19 = arith.constant 0 : index
      %c0_20 = arith.constant 0 : index
      %31 = vector.load %arg6[%c0_17, %c0_18, %c0_19, %c0_20] : memref<1x1x8x128xbf16, #tpu.memory_space<vmem>>, vector<1x1x8x128xbf16>
      tpu.vector_store %arg6[%c0_17, %c0_18, %c0_19, %c0_20], %30 {strides = array<i32>} : memref<1x1x8x128xbf16, #tpu.memory_space<vmem>>, vector<1x1x8x128xbf16>,
    } else {
    }
    return
  }
  func.func @transform_0(%arg0: i32, %arg1: i32, %arg2: i32) -> (i32, i32, i32, i32) {
    %c1_i32 = arith.constant 1 : i32
    %0 = arith.muli %c1_i32, %arg1 : i32
    %1 = arith.addi %0, %arg2 : i32
    %c0_i32 = arith.constant 0 : i32
    %c0_i32_0 = arith.constant 0 : i32
    %c0_i32_1 = arith.constant 0 : i32
    return %arg0, %1, %c0_i32, %c0_i32_0 : i32, i32, i32, i32
  }
  func.func @transform_1(%arg0: i32, %arg1: i32, %arg2: i32) -> (i32, i32, i32) {
    %c0_i32 = arith.constant 0 : i32
    %c0_i32_0 = arith.constant 0 : i32
    %c0_i32_1 = arith.constant 0 : i32
    %c0_i32_2 = arith.constant 0 : i32
    return %c0_i32, %c0_i32_0, %c0_i32_1 : i32, i32, i32
  }
  func.func @transform_2(%arg0: i32, %arg1: i32, %arg2: i32) -> (i32, i32) {
    %c0_i32 = arith.constant 0 : i32
    %c0_i32_0 = arith.constant 0 : i32
    %c0_i32_1 = arith.constant 0 : i32
    return %c0_i32, %c0_i32_0 : i32, i32
  }
  func.func @transform_3(%arg0: i32, %arg1: i32, %arg2: i32) -> (i32, i32, i32, i32) {
    %c0_i32 = arith.constant 0 : i32
    %c0_i32_0 = arith.constant 0 : i32
    %c0_i32_1 = arith.constant 0 : i32
    return %arg0, %arg1, %c0_i32, %c0_i32_0 : i32, i32, i32, i32
  }
}

module attributes {stable_mosaic.version = 11 : i64} {
  func.func @_tap_conv_kernel(%arg0: i32, %arg1: i32, %arg2: i32, %arg3: memref<1x1x18x128xbf16, #tpu.memory_space<vmem>>, %arg4: memref<3x384x128xbf16, #tpu.memory_space<vmem>>, %arg5: memref<1x128xf32, #tpu.memory_space<vmem>>, %arg6: memref<1x1x16x128xbf16, #tpu.memory_space<vmem>>, %arg7: memref<16x128xf32, #tpu.memory_space<vmem>>) attributes {dimension_semantics = [#tpu.dimension_semantics<parallel>, #tpu.dimension_semantics<parallel>, #tpu.dimension_semantics<arbitrary>], iteration_bounds = array<i64: 2, 16, 3>, scalar_prefetch = 0 : i64, scratch_operands = 1 : i64, tpu.core_type = #tpu.core_type<tc>, window_params = [{transform_indices = @transform_0, window_bounds = array<i64: 1, 1, 18, 128>}, {pipeline_mode = #tpu.pipeline_mode<synchronous>, transform_indices = @transform_1, window_bounds = array<i64: 3, 384, 128>}, {pipeline_mode = #tpu.pipeline_mode<synchronous>, transform_indices = @transform_2, window_bounds = array<i64: 1, 128>}, {transform_indices = @transform_3, window_bounds = array<i64: 1, 1, 16, 128>}]} {
    %c0_i32 = arith.constant 0 : i32
    %0 = arith.cmpi eq, %arg2, %c0_i32 : i32
    %1 = arith.extui %0 : i1 to i32
    %c0_i32_0 = arith.constant 0 : i32
    %2 = arith.cmpi ne, %1, %c0_i32_0 : i32
    scf.if %2 {
      %cst_13 = arith.constant 0.000000e+00 : f32
      %25 = vector.broadcast %cst_13 : f32 to vector<16x128xf32>
      %c0_14 = arith.constant 0 : index
      %c0_15 = arith.constant 0 : index
      %26 = vector.load %arg7[%c0_14, %c0_15] : memref<16x128xf32, #tpu.memory_space<vmem>>, vector<16x128xf32>
      tpu.vector_store %arg7[%c0_14, %c0_15], %25 {strides = array<i32>} : memref<16x128xf32, #tpu.memory_space<vmem>>, vector<16x128xf32>,
    } else {
    }
    %c0 = arith.constant 0 : index
    %c0_1 = arith.constant 0 : index
    %c0_2 = arith.constant 0 : index
    %c0_3 = arith.constant 0 : index
    %3 = vector.load %arg3[%c0, %c0_1, %c0_2, %c0_3] : memref<1x1x18x128xbf16, #tpu.memory_space<vmem>>, vector<1x1x18x128xbf16>
    %4 = vector.shape_cast %3 : vector<1x1x18x128xbf16> to vector<18x128xbf16>
    %5 = arith.index_cast %arg2 : i32 to index
    %c0_4 = arith.constant 0 : index
    %c0_5 = arith.constant 0 : index
    %6 = vector.load %arg4[%5, %c0_4, %c0_5] : memref<3x384x128xbf16, #tpu.memory_space<vmem>>, vector<1x384x128xbf16>
    %7 = vector.shape_cast %6 : vector<1x384x128xbf16> to vector<384x128xbf16>
    %c0_6 = arith.constant 0 : index
    %c0_7 = arith.constant 0 : index
    %8 = vector.load %arg7[%c0_6, %c0_7] : memref<16x128xf32, #tpu.memory_space<vmem>>, vector<16x128xf32>
    %9 = vector.extract_strided_slice %4 {offsets = [0, 0], sizes = [16, 128], strides = [1, 1]} : vector<18x128xbf16> to vector<16x128xbf16>
    %10 = vector.extract_strided_slice %7 {offsets = [0, 0], sizes = [128, 128], strides = [1, 1]} : vector<384x128xbf16> to vector<128x128xbf16>
    %cst = arith.constant dense<0.000000e+00> : vector<16x128xf32>
    %11 = tpu.matmul %9, %10, %cst {dimension_numbers = #tpu.dot_dimension_numbers<[1], [0], [0], [1], [0, 0, 1, 1], [], []>} : vector<16x128xbf16>, vector<128x128xbf16>, vector<16x128xf32> -> vector<16x128xf32>
    %12 = arith.addf %8, %11 : vector<16x128xf32>
    %13 = vector.extract_strided_slice %4 {offsets = [1, 0], sizes = [16, 128], strides = [1, 1]} : vector<18x128xbf16> to vector<16x128xbf16>
    %14 = vector.extract_strided_slice %7 {offsets = [128, 0], sizes = [128, 128], strides = [1, 1]} : vector<384x128xbf16> to vector<128x128xbf16>
    %cst_8 = arith.constant dense<0.000000e+00> : vector<16x128xf32>
    %15 = tpu.matmul %13, %14, %cst_8 {dimension_numbers = #tpu.dot_dimension_numbers<[1], [0], [0], [1], [0, 0, 1, 1], [], []>} : vector<16x128xbf16>, vector<128x128xbf16>, vector<16x128xf32> -> vector<16x128xf32>
    %16 = arith.addf %12, %15 : vector<16x128xf32>
    %17 = vector.extract_strided_slice %4 {offsets = [2, 0], sizes = [16, 128], strides = [1, 1]} : vector<18x128xbf16> to vector<16x128xbf16>
    %18 = vector.extract_strided_slice %7 {offsets = [256, 0], sizes = [128, 128], strides = [1, 1]} : vector<384x128xbf16> to vector<128x128xbf16>
    %cst_9 = arith.constant dense<0.000000e+00> : vector<16x128xf32>
    %19 = tpu.matmul %17, %18, %cst_9 {dimension_numbers = #tpu.dot_dimension_numbers<[1], [0], [0], [1], [0, 0, 1, 1], [], []>} : vector<16x128xbf16>, vector<128x128xbf16>, vector<16x128xf32> -> vector<16x128xf32>
    %20 = arith.addf %16, %19 : vector<16x128xf32>
    %c0_10 = arith.constant 0 : index
    %c0_11 = arith.constant 0 : index
    %21 = vector.load %arg7[%c0_10, %c0_11] : memref<16x128xf32, #tpu.memory_space<vmem>>, vector<16x128xf32>
    tpu.vector_store %arg7[%c0_10, %c0_11], %20 {strides = array<i32>} : memref<16x128xf32, #tpu.memory_space<vmem>>, vector<16x128xf32>,
    %c2_i32 = arith.constant 2 : i32
    %22 = arith.cmpi eq, %arg2, %c2_i32 : i32
    %23 = arith.extui %22 : i1 to i32
    %c0_i32_12 = arith.constant 0 : i32
    %24 = arith.cmpi ne, %23, %c0_i32_12 : i32
    scf.if %24 {
      %c0_13 = arith.constant 0 : index
      %c0_14 = arith.constant 0 : index
      %25 = vector.load %arg7[%c0_13, %c0_14] : memref<16x128xf32, #tpu.memory_space<vmem>>, vector<16x128xf32>
      %c0_15 = arith.constant 0 : index
      %c0_16 = arith.constant 0 : index
      %26 = vector.load %arg5[%c0_15, %c0_16] : memref<1x128xf32, #tpu.memory_space<vmem>>, vector<1x128xf32>
      %27 = vector.broadcast %26 : vector<1x128xf32> to vector<16x128xf32>
      %28 = arith.addf %25, %27 : vector<16x128xf32>
      %29 = vector.shape_cast %28 : vector<16x128xf32> to vector<1x1x16x128xf32>
      %30 = arith.truncf %29 : vector<1x1x16x128xf32> to vector<1x1x16x128xbf16>
      %c0_17 = arith.constant 0 : index
      %c0_18 = arith.constant 0 : index
      %c0_19 = arith.constant 0 : index
      %c0_20 = arith.constant 0 : index
      %31 = vector.load %arg6[%c0_17, %c0_18, %c0_19, %c0_20] : memref<1x1x16x128xbf16, #tpu.memory_space<vmem>>, vector<1x1x16x128xbf16>
      tpu.vector_store %arg6[%c0_17, %c0_18, %c0_19, %c0_20], %30 {strides = array<i32>} : memref<1x1x16x128xbf16, #tpu.memory_space<vmem>>, vector<1x1x16x128xbf16>,
    } else {
    }
    return
  }
  func.func @transform_0(%arg0: i32, %arg1: i32, %arg2: i32) -> (i32, i32, i32, i32) {
    %c1_i32 = arith.constant 1 : i32
    %0 = arith.muli %c1_i32, %arg1 : i32
    %1 = arith.addi %0, %arg2 : i32
    %c0_i32 = arith.constant 0 : i32
    %c0_i32_0 = arith.constant 0 : i32
    %c0_i32_1 = arith.constant 0 : i32
    return %arg0, %1, %c0_i32, %c0_i32_0 : i32, i32, i32, i32
  }
  func.func @transform_1(%arg0: i32, %arg1: i32, %arg2: i32) -> (i32, i32, i32) {
    %c0_i32 = arith.constant 0 : i32
    %c0_i32_0 = arith.constant 0 : i32
    %c0_i32_1 = arith.constant 0 : i32
    %c0_i32_2 = arith.constant 0 : i32
    return %c0_i32, %c0_i32_0, %c0_i32_1 : i32, i32, i32
  }
  func.func @transform_2(%arg0: i32, %arg1: i32, %arg2: i32) -> (i32, i32) {
    %c0_i32 = arith.constant 0 : i32
    %c0_i32_0 = arith.constant 0 : i32
    %c0_i32_1 = arith.constant 0 : i32
    return %c0_i32, %c0_i32_0 : i32, i32
  }
  func.func @transform_3(%arg0: i32, %arg1: i32, %arg2: i32) -> (i32, i32, i32, i32) {
    %c0_i32 = arith.constant 0 : i32
    %c0_i32_0 = arith.constant 0 : i32
    %c0_i32_1 = arith.constant 0 : i32
    return %arg0, %arg1, %c0_i32, %c0_i32_0 : i32, i32, i32, i32
  }
}

module attributes {stable_mosaic.version = 11 : i64} {
  func.func @_tap_conv_kernel(%arg0: i32, %arg1: i32, %arg2: i32, %arg3: memref<1x1x22x128xbf16, #tpu.memory_space<vmem>>, %arg4: memref<7x896x128xbf16, #tpu.memory_space<vmem>>, %arg5: memref<1x128xf32, #tpu.memory_space<vmem>>, %arg6: memref<1x1x16x128xf32, #tpu.memory_space<vmem>>, %arg7: memref<16x128xf32, #tpu.memory_space<vmem>>) attributes {dimension_semantics = [#tpu.dimension_semantics<parallel>, #tpu.dimension_semantics<parallel>, #tpu.dimension_semantics<arbitrary>], iteration_bounds = array<i64: 2, 16, 7>, scalar_prefetch = 0 : i64, scratch_operands = 1 : i64, tpu.core_type = #tpu.core_type<tc>, window_params = [{transform_indices = @transform_0, window_bounds = array<i64: 1, 1, 22, 128>}, {pipeline_mode = #tpu.pipeline_mode<synchronous>, transform_indices = @transform_1, window_bounds = array<i64: 7, 896, 128>}, {pipeline_mode = #tpu.pipeline_mode<synchronous>, transform_indices = @transform_2, window_bounds = array<i64: 1, 128>}, {transform_indices = @transform_3, window_bounds = array<i64: 1, 1, 16, 128>}]} {
    %c0_i32 = arith.constant 0 : i32
    %0 = arith.cmpi eq, %arg2, %c0_i32 : i32
    %1 = arith.extui %0 : i1 to i32
    %c0_i32_0 = arith.constant 0 : i32
    %2 = arith.cmpi ne, %1, %c0_i32_0 : i32
    scf.if %2 {
      %cst_17 = arith.constant 0.000000e+00 : f32
      %41 = vector.broadcast %cst_17 : f32 to vector<16x128xf32>
      %c0_18 = arith.constant 0 : index
      %c0_19 = arith.constant 0 : index
      %42 = vector.load %arg7[%c0_18, %c0_19] : memref<16x128xf32, #tpu.memory_space<vmem>>, vector<16x128xf32>
      tpu.vector_store %arg7[%c0_18, %c0_19], %41 {strides = array<i32>} : memref<16x128xf32, #tpu.memory_space<vmem>>, vector<16x128xf32>,
    } else {
    }
    %c0 = arith.constant 0 : index
    %c0_1 = arith.constant 0 : index
    %c0_2 = arith.constant 0 : index
    %c0_3 = arith.constant 0 : index
    %3 = vector.load %arg3[%c0, %c0_1, %c0_2, %c0_3] : memref<1x1x22x128xbf16, #tpu.memory_space<vmem>>, vector<1x1x22x128xbf16>
    %4 = vector.shape_cast %3 : vector<1x1x22x128xbf16> to vector<22x128xbf16>
    %5 = arith.index_cast %arg2 : i32 to index
    %c0_4 = arith.constant 0 : index
    %c0_5 = arith.constant 0 : index
    %6 = vector.load %arg4[%5, %c0_4, %c0_5] : memref<7x896x128xbf16, #tpu.memory_space<vmem>>, vector<1x896x128xbf16>
    %7 = vector.shape_cast %6 : vector<1x896x128xbf16> to vector<896x128xbf16>
    %c0_6 = arith.constant 0 : index
    %c0_7 = arith.constant 0 : index
    %8 = vector.load %arg7[%c0_6, %c0_7] : memref<16x128xf32, #tpu.memory_space<vmem>>, vector<16x128xf32>
    %9 = vector.extract_strided_slice %4 {offsets = [0, 0], sizes = [16, 128], strides = [1, 1]} : vector<22x128xbf16> to vector<16x128xbf16>
    %10 = vector.extract_strided_slice %7 {offsets = [0, 0], sizes = [128, 128], strides = [1, 1]} : vector<896x128xbf16> to vector<128x128xbf16>
    %cst = arith.constant dense<0.000000e+00> : vector<16x128xf32>
    %11 = tpu.matmul %9, %10, %cst {dimension_numbers = #tpu.dot_dimension_numbers<[1], [0], [0], [1], [0, 0, 1, 1], [], []>} : vector<16x128xbf16>, vector<128x128xbf16>, vector<16x128xf32> -> vector<16x128xf32>
    %12 = arith.addf %8, %11 : vector<16x128xf32>
    %13 = vector.extract_strided_slice %4 {offsets = [1, 0], sizes = [16, 128], strides = [1, 1]} : vector<22x128xbf16> to vector<16x128xbf16>
    %14 = vector.extract_strided_slice %7 {offsets = [128, 0], sizes = [128, 128], strides = [1, 1]} : vector<896x128xbf16> to vector<128x128xbf16>
    %cst_8 = arith.constant dense<0.000000e+00> : vector<16x128xf32>
    %15 = tpu.matmul %13, %14, %cst_8 {dimension_numbers = #tpu.dot_dimension_numbers<[1], [0], [0], [1], [0, 0, 1, 1], [], []>} : vector<16x128xbf16>, vector<128x128xbf16>, vector<16x128xf32> -> vector<16x128xf32>
    %16 = arith.addf %12, %15 : vector<16x128xf32>
    %17 = vector.extract_strided_slice %4 {offsets = [2, 0], sizes = [16, 128], strides = [1, 1]} : vector<22x128xbf16> to vector<16x128xbf16>
    %18 = vector.extract_strided_slice %7 {offsets = [256, 0], sizes = [128, 128], strides = [1, 1]} : vector<896x128xbf16> to vector<128x128xbf16>
    %cst_9 = arith.constant dense<0.000000e+00> : vector<16x128xf32>
    %19 = tpu.matmul %17, %18, %cst_9 {dimension_numbers = #tpu.dot_dimension_numbers<[1], [0], [0], [1], [0, 0, 1, 1], [], []>} : vector<16x128xbf16>, vector<128x128xbf16>, vector<16x128xf32> -> vector<16x128xf32>
    %20 = arith.addf %16, %19 : vector<16x128xf32>
    %21 = vector.extract_strided_slice %4 {offsets = [3, 0], sizes = [16, 128], strides = [1, 1]} : vector<22x128xbf16> to vector<16x128xbf16>
    %22 = vector.extract_strided_slice %7 {offsets = [384, 0], sizes = [128, 128], strides = [1, 1]} : vector<896x128xbf16> to vector<128x128xbf16>
    %cst_10 = arith.constant dense<0.000000e+00> : vector<16x128xf32>
    %23 = tpu.matmul %21, %22, %cst_10 {dimension_numbers = #tpu.dot_dimension_numbers<[1], [0], [0], [1], [0, 0, 1, 1], [], []>} : vector<16x128xbf16>, vector<128x128xbf16>, vector<16x128xf32> -> vector<16x128xf32>
    %24 = arith.addf %20, %23 : vector<16x128xf32>
    %25 = vector.extract_strided_slice %4 {offsets = [4, 0], sizes = [16, 128], strides = [1, 1]} : vector<22x128xbf16> to vector<16x128xbf16>
    %26 = vector.extract_strided_slice %7 {offsets = [512, 0], sizes = [128, 128], strides = [1, 1]} : vector<896x128xbf16> to vector<128x128xbf16>
    %cst_11 = arith.constant dense<0.000000e+00> : vector<16x128xf32>
    %27 = tpu.matmul %25, %26, %cst_11 {dimension_numbers = #tpu.dot_dimension_numbers<[1], [0], [0], [1], [0, 0, 1, 1], [], []>} : vector<16x128xbf16>, vector<128x128xbf16>, vector<16x128xf32> -> vector<16x128xf32>
    %28 = arith.addf %24, %27 : vector<16x128xf32>
    %29 = vector.extract_strided_slice %4 {offsets = [5, 0], sizes = [16, 128], strides = [1, 1]} : vector<22x128xbf16> to vector<16x128xbf16>
    %30 = vector.extract_strided_slice %7 {offsets = [640, 0], sizes = [128, 128], strides = [1, 1]} : vector<896x128xbf16> to vector<128x128xbf16>
    %cst_12 = arith.constant dense<0.000000e+00> : vector<16x128xf32>
    %31 = tpu.matmul %29, %30, %cst_12 {dimension_numbers = #tpu.dot_dimension_numbers<[1], [0], [0], [1], [0, 0, 1, 1], [], []>} : vector<16x128xbf16>, vector<128x128xbf16>, vector<16x128xf32> -> vector<16x128xf32>
    %32 = arith.addf %28, %31 : vector<16x128xf32>
    %33 = vector.extract_strided_slice %4 {offsets = [6, 0], sizes = [16, 128], strides = [1, 1]} : vector<22x128xbf16> to vector<16x128xbf16>
    %34 = vector.extract_strided_slice %7 {offsets = [768, 0], sizes = [128, 128], strides = [1, 1]} : vector<896x128xbf16> to vector<128x128xbf16>
    %cst_13 = arith.constant dense<0.000000e+00> : vector<16x128xf32>
    %35 = tpu.matmul %33, %34, %cst_13 {dimension_numbers = #tpu.dot_dimension_numbers<[1], [0], [0], [1], [0, 0, 1, 1], [], []>} : vector<16x128xbf16>, vector<128x128xbf16>, vector<16x128xf32> -> vector<16x128xf32>
    %36 = arith.addf %32, %35 : vector<16x128xf32>
    %c0_14 = arith.constant 0 : index
    %c0_15 = arith.constant 0 : index
    %37 = vector.load %arg7[%c0_14, %c0_15] : memref<16x128xf32, #tpu.memory_space<vmem>>, vector<16x128xf32>
    tpu.vector_store %arg7[%c0_14, %c0_15], %36 {strides = array<i32>} : memref<16x128xf32, #tpu.memory_space<vmem>>, vector<16x128xf32>,
    %c6_i32 = arith.constant 6 : i32
    %38 = arith.cmpi eq, %arg2, %c6_i32 : i32
    %39 = arith.extui %38 : i1 to i32
    %c0_i32_16 = arith.constant 0 : i32
    %40 = arith.cmpi ne, %39, %c0_i32_16 : i32
    scf.if %40 {
      %c0_17 = arith.constant 0 : index
      %c0_18 = arith.constant 0 : index
      %41 = vector.load %arg7[%c0_17, %c0_18] : memref<16x128xf32, #tpu.memory_space<vmem>>, vector<16x128xf32>
      %c0_19 = arith.constant 0 : index
      %c0_20 = arith.constant 0 : index
      %42 = vector.load %arg5[%c0_19, %c0_20] : memref<1x128xf32, #tpu.memory_space<vmem>>, vector<1x128xf32>
      %43 = vector.broadcast %42 : vector<1x128xf32> to vector<16x128xf32>
      %44 = arith.addf %41, %43 : vector<16x128xf32>
      %45 = math.tanh %44 : vector<16x128xf32>
      %46 = vector.shape_cast %45 : vector<16x128xf32> to vector<1x1x16x128xf32>
      %c0_21 = arith.constant 0 : index
      %c0_22 = arith.constant 0 : index
      %c0_23 = arith.constant 0 : index
      %c0_24 = arith.constant 0 : index
      %47 = vector.load %arg6[%c0_21, %c0_22, %c0_23, %c0_24] : memref<1x1x16x128xf32, #tpu.memory_space<vmem>>, vector<1x1x16x128xf32>
      tpu.vector_store %arg6[%c0_21, %c0_22, %c0_23, %c0_24], %46 {strides = array<i32>} : memref<1x1x16x128xf32, #tpu.memory_space<vmem>>, vector<1x1x16x128xf32>,
    } else {
    }
    return
  }
  func.func @transform_0(%arg0: i32, %arg1: i32, %arg2: i32) -> (i32, i32, i32, i32) {
    %c1_i32 = arith.constant 1 : i32
    %0 = arith.muli %c1_i32, %arg1 : i32
    %1 = arith.addi %0, %arg2 : i32
    %c0_i32 = arith.constant 0 : i32
    %c0_i32_0 = arith.constant 0 : i32
    %c0_i32_1 = arith.constant 0 : i32
    return %arg0, %1, %c0_i32, %c0_i32_0 : i32, i32, i32, i32
  }
  func.func @transform_1(%arg0: i32, %arg1: i32, %arg2: i32) -> (i32, i32, i32) {
    %c0_i32 = arith.constant 0 : i32
    %c0_i32_0 = arith.constant 0 : i32
    %c0_i32_1 = arith.constant 0 : i32
    %c0_i32_2 = arith.constant 0 : i32
    return %c0_i32, %c0_i32_0, %c0_i32_1 : i32, i32, i32
  }
  func.func @transform_2(%arg0: i32, %arg1: i32, %arg2: i32) -> (i32, i32) {
    %c0_i32 = arith.constant 0 : i32
    %c0_i32_0 = arith.constant 0 : i32
    %c0_i32_1 = arith.constant 0 : i32
    return %c0_i32, %c0_i32_0 : i32, i32
  }
  func.func @transform_3(%arg0: i32, %arg1: i32, %arg2: i32) -> (i32, i32, i32, i32) {
    %c0_i32 = arith.constant 0 : i32
    %c0_i32_0 = arith.constant 0 : i32
    %c0_i32_1 = arith.constant 0 : i32
    return %arg0, %arg1, %c0_i32, %c0_i32_0 : i32, i32, i32, i32
  }
}

</mosaic_0001>

<llo_original>
// kernel: resnet_generator_forward.20
$region0: #{resnet_generator_forward.20}
  #allocation0 [shape = 'u32[]', space=smem, size = 0x4, offset = 0x4, fixed_abs, tag = 'smem constant byte address 0x4 - core index']
  #allocation1 [shape = 'u32[144,128]{1,0:T(1,128)}', space=vmem, size = 0x12000, scoped, tag = 'internal scratch']
  #allocation2 [shape = 'f32[1,128]{1,0:T(1,128)}', space=vmem, size = 0x200, scoped, tag = 'scratch operand']
  #allocation3 [shape = 'f32[1,128]{1,0:T(1,128)}', space=vmem, size = 0x200, scoped, tag = 'scratch operand']
  %s0 = inlined_call_operand.vmem [shape: bf16[2,256,128], index: 0, kind: input, shape index: {}]
  %s1 = inlined_call_operand.vmem [shape: bf16[2,256,128], index: 1, kind: output, shape index: {}]
  %s2 = sld [smem:[#allocation0]]
  $region53: #{resnet_generator_forward.20} parent=0
    _
  %s4 = ssub.s32 1, %s2
  %s5 = scalar_select 0, %s4, %s2
  loop: start=0, step=1, limit=10
  $region2: #{resnet_generator_forward.20} parent=0 // loop_pre_header
    _
  $region3: #{resnet_generator_forward.20} parent=0 // loop_header
    %s7 = sphi 0, %s11
    %p8 = scmp.ge.s32.totalorder %s7, 10
    %s14 = sphi 0, %s33
    %s15 = sphi 0, %s29
    %s16 = sphi 0, %s25
    %s17 = sphi 0, %s14
    %s18 = sphi 0, %s15
    %s19 = sphi 0, %s16
    %s20 = sphi 0, %s17
    %s21 = sphi 0, %s18
    %s22 = sphi 0, %s19
    %s38 = sphi 0, %s40
    %s41 = sphi 0, %s38
    %s42 = sphi 0, %s41
    %s58 = sphi 0, %s42
    %s68 = sphi 0, %s70
    %s71 = sphi 0, %s68
    %s72 = sphi 0, %s71
    %s88 = sphi 0, %s72
  $region4: #{resnet_generator_forward.20} parent=0 // loop_header_branch
    %10 = sbr.rel (%p8) target = $region8
  $region5: #{resnet_generator_forward.20} parent=0 // loop_body
    %s12 = ssub.s32 %s7, 1
    %s13 = ssub.s32 %s7, 2
    %s23 = sadd.s32 1, %s16
    %p24 = scmp.ge.s32.totalorder %s23, 2
    %s25 = scalar_select %p24, 0, %s23
    %s26 = sadd.s32 1, %s15
    %s27 = scalar_select %p24, %s26, %s15
    %p28 = scmp.ge.s32.totalorder %s27, 2
    %s29 = scalar_select %p28, 0, %s27
    %s30 = sadd.s32 1, %s14
    %s31 = scalar_select %p28, %s30, %s14
    %p32 = scmp.ge.s32.totalorder %s31, 2
    %s33 = scalar_select %p32, 0, %s31
    %s34 = ssub.s32 %s14, %s33
    %s35 = ssub.s32 %s16, %s25
    %s36 = sor.u32 %s34, %s35
    %p37 = scmp.eq.s32.totalorder %s36, 0
    %s39 = sadd.s32 %s38, 1
    %s40 = scalar_select %p37, %s38, %s39
    %p43 = pneg %p37
    %p44 = scmp.eq.s32.totalorder %s7, 7
    %p45 = por %p43, %p44
    %p46 = scmp.ne.s32.totalorder %s38, %s41
    %p47 = scmp.eq.s32.totalorder %s7, 0
    %p48 = por %p46, %p47
    %p49 = scmp.ne.s32.totalorder %s38, %s41
    %p50 = scmp.eq.s32.totalorder %s12, 7
    %p51 = por %p49, %p50
    %p52 = scmp.ne.s32.totalorder %s41, %s42
    %p53 = scmp.eq.s32.totalorder %s12, 0
    %p54 = por %p52, %p53
    %p55 = scmp.ne.s32.totalorder %s41, %s42
    %p56 = scmp.eq.s32.totalorder %s13, 7
    %p57 = por %p55, %p56
    %p59 = scmp.ne.s32.totalorder %s42, %s58
    %p60 = scmp.eq.s32.totalorder %s13, 0
    %p61 = por %p59, %p60
    %s62 = smul.u32 %s16, %s15
    %s63 = smul.u32 %s25, %s29
    %s64 = ssub.s32 %s14, %s33
    %s65 = ssub.s32 %s62, %s63
    %s66 = sor.u32 %s64, %s65
    %p67 = scmp.eq.s32.totalorder %s66, 0
    %s69 = sadd.s32 %s68, 1
    %s70 = scalar_select %p67, %s68, %s69
    %p73 = pneg %p67
    %p74 = scmp.eq.s32.totalorder %s7, 7
    %p75 = por %p73, %p74
    %p76 = scmp.ne.s32.totalorder %s68, %s71
    %p77 = scmp.eq.s32.totalorder %s7, 0
    %p78 = por %p76, %p77
    %p79 = scmp.ne.s32.totalorder %s68, %s71
    %p80 = scmp.eq.s32.totalorder %s12, 7
    %p81 = por %p79, %p80
    %p82 = scmp.ne.s32.totalorder %s71, %s72
    %p83 = scmp.eq.s32.totalorder %s12, 0
    %p84 = por %p82, %p83
    %p85 = scmp.ne.s32.totalorder %s71, %s72
    %p86 = scmp.eq.s32.totalorder %s13, 7
    %p87 = por %p85, %p86
    %p89 = scmp.ne.s32.totalorder %s72, %s88
    %p90 = scmp.eq.s32.totalorder %s13, 0
    %p91 = por %p89, %p90
    %p92 = scmp.le.s32.totalorder 1, %s7
    %p93 = scmp.lt.s32.totalorder %s7, 9
    %p94 = pnand %p92, %p93
    %p95 = pneg %p94
    // Predicated region
    $region9: #{resnet_generator_forward.20} parent=5 // pred_check
      _
    $region10: #{resnet_generator_forward.20} parent=5 // pred_check_branch
      %97 = sbr.rel (%p94) target = $region12
    $region11: #{resnet_generator_forward.20} parent=5 // pred_region
      %s98 = ssub.s32 %s7, 1
    $region12: #{resnet_generator_forward.20} parent=5 // pred_fallthru
      _
    %p99 = scmp.lt.s32.totalorder %s7, 8
    // Predicated region
    $region13: #{resnet_generator_forward.20} parent=5 // pred_check
      %p100 = pneg %p99
    $region14: #{resnet_generator_forward.20} parent=5 // pred_check_branch
      %102 = sbr.rel (%p100) target = $region16
    $region15: #{resnet_generator_forward.20} parent=5 // pred_region
      // Predicated region
      $region17: #{resnet_generator_forward.20} parent=15 // pred_check
        %p103 = pneg %p48
      $region18: #{resnet_generator_forward.20} parent=15 // pred_check_branch
        %105 = sbr.rel (%p103) target = $region20
      $region19: #{resnet_generator_forward.20} parent=15 // pred_region
        %s106 = smul.u32 16, %s16
        %p107 = scmp.lt.s32.totalorder %s14, 1
        %s108 = scalar_select %p107, %s14, 1
        %p109 = scmp.lt.s32.totalorder %s106, 31
        %s110 = scalar_select %p109, %s106, 31
        %s111 = smul.addr %s108, 32
        %s112 = sadd.s32 %s110, %s111
        %s113 = smul.addr %s112, 4
        %s114 = scalar_lea.vmem %s0, %s113
        %s115 = smul.u32 16, %s16
      $region20: #{resnet_generator_forward.20} parent=15 // pred_fallthru
        _
    $region16: #{resnet_generator_forward.20} parent=5 // pred_fallthru
      _
    %p116 = scmp.le.s32.totalorder 1, %s7
    %p117 = scmp.lt.s32.totalorder %s7, 9
    %p118 = pnand %p116, %p117
    %p119 = pneg %p118
    // Predicated region
    $region21: #{resnet_generator_forward.20} parent=5 // pred_check
      _
    $region22: #{resnet_generator_forward.20} parent=5 // pred_check_branch
      %121 = sbr.rel (%p118) target = $region24
    $region23: #{resnet_generator_forward.20} parent=5 // pred_region
      %s122 = ssub.s32 %s7, 1
      %s123 = smul.u32 16, %s19
      %p124 = scmp.lt.s32.totalorder %s17, 1
      %s125 = scalar_select %p124, %s17, 1
      %p126 = scmp.lt.s32.totalorder %s123, 31
      %s127 = scalar_select %p126, %s123, 31
      %s128 = smul.addr %s125, 32
      %s129 = sadd.s32 %s127, %s128
      %s130 = smul.addr %s129, 4
      %s131 = scalar_lea.vmem %s0, %s130
      %p132 = pneg %p54
      %p133 = pneg %p51
      %p134 = pneg %p84
      %p135 = pneg %p81
      %s136 = smul.u32 %s19, %s18
      %s137 = smul.u32 16, %s136
      %p138 = scmp.lt.s32.totalorder %s17, 1
      %s139 = scalar_select %p138, %s17, 1
      %p140 = scmp.lt.s32.totalorder %s137, 31
      %s141 = scalar_select %p140, %s137, 31
      %s142 = smul.addr %s139, 32
      %s143 = sadd.s32 %s141, %s142
      %s144 = smul.addr %s143, 4
      %s145 = scalar_lea.vmem %s1, %s144
      %s146 = smul.u32 16, %s19
      %p147 = scmp.lt.s32.totalorder %s17, 1
      %s148 = scalar_select %p147, %s17, 1
      %p149 = scmp.lt.s32.totalorder %s146, 31
      %s150 = scalar_select %p149, %s146, 31
      %s151 = smul.addr %s148, 32
      %s152 = sadd.s32 %s150, %s151
      %s153 = smul.addr %s152, 4
      %s154 = scalar_lea.vmem %s0, %s153
      %s155 = smul.u32 16, %s19
      %s156 = smul.u32 %s19, %s18
      %s157 = smul.u32 16, %s156
      %p158 = scmp.lt.s32.totalorder %s17, 1
      %s159 = scalar_select %p158, %s17, 1
      %p160 = scmp.lt.s32.totalorder %s157, 31
      %s161 = scalar_select %p160, %s157, 31
      %s162 = smul.addr %s159, 32
      %s163 = sadd.s32 %s161, %s162
      %s164 = smul.addr %s163, 4
      %s165 = scalar_lea.vmem %s1, %s164
      %s166 = smul.u32 %s19, %s18
      %s167 = smul.u32 16, %s166
      %p168 = scmp.eq.s32.totalorder %s18, 0
      %p169 = scmp.eq.s32.totalorder %s19, 0
      %p170 = pnand %p168, %p169
      %p171 = pneg %p170
      // Predicated region
      $region25: #{resnet_generator_forward.20} parent=23 // pred_check
        _
      $region26: #{resnet_generator_forward.20} parent=23 // pred_check_branch
        %173 = sbr.rel (%p170) target = $region28
      $region27: #{resnet_generator_forward.20} parent=23 // pred_region
        %174 = vst [vmem:[#allocation2] sm:$0x1] 0.0
        %175 = vst [vmem:[#allocation3] sm:$0x1] 0.0
      $region28: #{resnet_generator_forward.20} parent=23 // pred_fallthru
        _
      %v176 = vld [vmem:[%s154] sm:$0xf]
      %v177 = vld [vmem:[%s154 + $0x4] sm:$0xf]
      %v178 = vld [vmem:[%s154 + $0x8] sm:$0xf]
      %v179 = vld [vmem:[%s154 + $0xc] sm:$0xf]
      %v180 = vld [vmem:[%s154 + $0x10] sm:$0xf]
      %v181 = vld [vmem:[%s154 + $0x14] sm:$0xf]
      %v182 = vld [vmem:[%s154 + $0x18] sm:$0xf]
      %v183 = vld [vmem:[%s154 + $0x1c] sm:$0xf]
      %v184 = vld [vmem:[%s154 + $0x20] sm:$0xf]
      %v185 = vld [vmem:[%s154 + $0x24] sm:$0xf]
      %v186 = vld [vmem:[%s154 + $0x28] sm:$0xf]
      %v187 = vld [vmem:[%s154 + $0x2c] sm:$0xf]
      %v188 = vld [vmem:[%s154 + $0x30] sm:$0xf]
      %v189 = vld [vmem:[%s154 + $0x34] sm:$0xf]
      %v190 = vld [vmem:[%s154 + $0x38] sm:$0xf]
      %v191 = vld [vmem:[%s154 + $0x3c] sm:$0xf]
      %v192 = vunpack.c.l.bf16 %v176
      %v193 = vunpack.c.l.bf16 %v177
      %v194 = vunpack.c.l.bf16 %v178
      %v195 = vunpack.c.l.bf16 %v179
      %v196 = vunpack.c.l.bf16 %v180
      %v197 = vunpack.c.l.bf16 %v181
      %v198 = vunpack.c.l.bf16 %v182
      %v199 = vunpack.c.l.bf16 %v183
      %v200 = vunpack.c.l.bf16 %v184
      %v201 = vunpack.c.l.bf16 %v185
      %v202 = vunpack.c.l.bf16 %v186
      %v203 = vunpack.c.l.bf16 %v187
      %v204 = vunpack.c.l.bf16 %v188
      %v205 = vunpack.c.l.bf16 %v189
      %v206 = vunpack.c.l.bf16 %v190
      %v207 = vunpack.c.l.bf16 %v191
      // Predicated region
      $region29: #{resnet_generator_forward.20} parent=23 // pred_check
        %p208 = pneg %p168
      $region30: #{resnet_generator_forward.20} parent=23 // pred_check_branch
        %210 = sbr.rel (%p208) target = $region32
      $region31: #{resnet_generator_forward.20} parent=23 // pred_region
        %v211 = vld [vmem:[#allocation2] sm:$0x1]
        %v212 = vadd.f32 %v192, %v193
        %v213 = vadd.f32 %v212, %v194
        %v214 = vadd.f32 %v213, %v195
        %v215 = vadd.f32 %v214, %v196
        %v216 = vadd.f32 %v215, %v197
        %v217 = vadd.f32 %v216, %v198
        %v218 = vadd.f32 %v217, %v199
        %v219 = vadd.f32 %v218, %v200
        %v220 = vadd.f32 %v219, %v201
        %v221 = vadd.f32 %v220, %v202
        %v222 = vadd.f32 %v221, %v203
        %v223 = vadd.f32 %v222, %v204
        %v224 = vadd.f32 %v223, %v205
        %v225 = vadd.f32 %v224, %v206
        %v226 = vadd.f32 %v225, %v207
        %v227 = vrot.slane %v226, 4
        %v228 = vadd.f32 %v226, %v227
        %v229 = vrot.slane %v228, 2
        %v230 = vadd.f32 %v228, %v229
        %v231 = vrot.slane %v230, 1
        %v232 = vadd.f32 %v230, %v231
        %v233 = vadd.f32 %v211, %v232
        %234 = vst [vmem:[#allocation2] sm:$0x1] %v233
        %v235 = vld [vmem:[#allocation3] sm:$0x1]
        %v236 = vmul.f32 %v192, %v192
        %v237 = vmul.f32 %v193, %v193
        %v238 = vmul.f32 %v194, %v194
        %v239 = vmul.f32 %v195, %v195
        %v240 = vmul.f32 %v196, %v196
        %v241 = vmul.f32 %v197, %v197
        %v242 = vmul.f32 %v198, %v198
        %v243 = vmul.f32 %v199, %v199
        %v244 = vmul.f32 %v200, %v200
        %v245 = vmul.f32 %v201, %v201
        %v246 = vmul.f32 %v202, %v202
        %v247 = vmul.f32 %v203, %v203
        %v248 = vmul.f32 %v204, %v204
        %v249 = vmul.f32 %v205, %v205
        %v250 = vmul.f32 %v206, %v206
        %v251 = vmul.f32 %v207, %v207
        %v252 = vadd.f32 %v236, %v237
        %v253 = vadd.f32 %v252, %v238
        %v254 = vadd.f32 %v253, %v239
        %v255 = vadd.f32 %v254, %v240
        %v256 = vadd.f32 %v255, %v241
        %v257 = vadd.f32 %v256, %v242
        %v258 = vadd.f32 %v257, %v243
        %v259 = vadd.f32 %v258, %v244
        %v260 = vadd.f32 %v259, %v245
        %v261 = vadd.f32 %v260, %v246
        %v262 = vadd.f32 %v261, %v247
        %v263 = vadd.f32 %v262, %v248
        %v264 = vadd.f32 %v263, %v249
        %v265 = vadd.f32 %v264, %v250
        %v266 = vadd.f32 %v265, %v251
        %v267 = vrot.slane %v266, 4
        %v268 = vadd.f32 %v266, %v267
        %v269 = vrot.slane %v268, 2
        %v270 = vadd.f32 %v268, %v269
        %v271 = vrot.slane %v270, 1
        %v272 = vadd.f32 %v270, %v271
        %v273 = vadd.f32 %v235, %v272
        %274 = vst [vmem:[#allocation3] sm:$0x1] %v273
      $region32: #{resnet_generator_forward.20} parent=23 // pred_fallthru
        _
      %p275 = scmp.eq.s32.totalorder %s19, 1
      %p276 = pnand %p168, %p275
      %p277 = pneg %p276
      // Predicated region
      $region33: #{resnet_generator_forward.20} parent=23 // pred_check
        _
      $region34: #{resnet_generator_forward.20} parent=23 // pred_check_branch
        %279 = sbr.rel (%p276) target = $region36
      $region35: #{resnet_generator_forward.20} parent=23 // pred_region
        %v280 = vld [vmem:[#allocation2] sm:$0x1]
        %v281 = vrcp.pop 256.0
        %v282 = vmul.f32 %v280, %v281
        %v283 = vld [vmem:[#allocation3] sm:$0x1]
        %v284 = vmul.f32 %v283, %v281
        %v285 = vmul.f32 %v282, %v282
        %v286 = vsub.f32 %v284, %v285
        %287 = vst [vmem:[#allocation2] sm:$0x1] %v282
        %v288 = vmax.f32 %v286, 0.0
        %v289 = vadd.f32 %v288, 1e-05
        %v290 = vrsqrt.pop %v289
        %291 = vst [vmem:[#allocation3] sm:$0x1] %v290
      $region36: #{resnet_generator_forward.20} parent=23 // pred_fallthru
        _
      %p292 = scmp.eq.s32.totalorder %s18, 1
      // Predicated region
      $region37: #{resnet_generator_forward.20} parent=23 // pred_check
        %p293 = pneg %p292
      $region38: #{resnet_generator_forward.20} parent=23 // pred_check_branch
        %295 = sbr.rel (%p293) target = $region40
      $region39: #{resnet_generator_forward.20} parent=23 // pred_region
        %v296 = vld [vmem:[#allocation2] sm:$0x1]
        %v298 = vlaneseq
        %v299 = vshrl.u32 %v298, 7
        %v300 = vsub.s32 0, %v299
        %v301 = vrot.slane %v296, %v300
        %v303 = vsub.f32 %v192, %v301
        %v304 = vsub.f32 %v193, %v301
        %v305 = vsub.f32 %v194, %v301
        %v306 = vsub.f32 %v195, %v301
        %v307 = vsub.f32 %v196, %v301
        %v308 = vsub.f32 %v197, %v301
        %v309 = vsub.f32 %v198, %v301
        %v310 = vsub.f32 %v199, %v301
        %v311 = vsub.f32 %v200, %v301
        %v312 = vsub.f32 %v201, %v301
        %v313 = vsub.f32 %v202, %v301
        %v314 = vsub.f32 %v203, %v301
        %v315 = vsub.f32 %v204, %v301
        %v316 = vsub.f32 %v205, %v301
        %v317 = vsub.f32 %v206, %v301
        %v318 = vsub.f32 %v207, %v301
        %v319 = vld [vmem:[#allocation3] sm:$0x1]
        %v321 = vlaneseq
        %v322 = vshrl.u32 %v321, 7
        %v323 = vsub.s32 0, %v322
        %v324 = vrot.slane %v319, %v323
        %v326 = vmul.f32 %v303, %v324
        %v327 = vmul.f32 %v304, %v324
        %v328 = vmul.f32 %v305, %v324
        %v329 = vmul.f32 %v306, %v324
        %v330 = vmul.f32 %v307, %v324
        %v331 = vmul.f32 %v308, %v324
        %v332 = vmul.f32 %v309, %v324
        %v333 = vmul.f32 %v310, %v324
        %v334 = vmul.f32 %v311, %v324
        %v335 = vmul.f32 %v312, %v324
        %v336 = vmul.f32 %v313, %v324
        %v337 = vmul.f32 %v314, %v324
        %v338 = vmul.f32 %v315, %v324
        %v339 = vmul.f32 %v316, %v324
        %v340 = vmul.f32 %v317, %v324
        %v341 = vmul.f32 %v318, %v324
        %v342 = vmax.f32 %v326, 0.0
        %v343 = vmax.f32 %v327, 0.0
        %v344 = vmax.f32 %v328, 0.0
        %v345 = vmax.f32 %v329, 0.0
        %v346 = vmax.f32 %v330, 0.0
        %v347 = vmax.f32 %v331, 0.0
        %v348 = vmax.f32 %v332, 0.0
        %v349 = vmax.f32 %v333, 0.0
        %v350 = vmax.f32 %v334, 0.0
        %v351 = vmax.f32 %v335, 0.0
        %v352 = vmax.f32 %v336, 0.0
        %v353 = vmax.f32 %v337, 0.0
        %v354 = vmax.f32 %v338, 0.0
        %v355 = vmax.f32 %v339, 0.0
        %v356 = vmax.f32 %v340, 0.0
        %v357 = vmax.f32 %v341, 0.0
        %v358 = vpack.c.bf16 %v343, %v342
        %v359 = vpack.c.bf16 %v345, %v344
        %v360 = vpack.c.bf16 %v347, %v346
        %v361 = vpack.c.bf16 %v349, %v348
        %v362 = vpack.c.bf16 %v351, %v350
        %v363 = vpack.c.bf16 %v353, %v352
        %v364 = vpack.c.bf16 %v355, %v354
        %v365 = vpack.c.bf16 %v357, %v356
        %v374 = vunpack.c.l.b16 %v358
        %v375 = vunpack.c.h.b16 %v358
        %v376 = vunpack.c.l.b16 %v359
        %v377 = vunpack.c.h.b16 %v359
        %v378 = vunpack.c.l.b16 %v360
        %v379 = vunpack.c.h.b16 %v360
        %v380 = vunpack.c.l.b16 %v361
        %v381 = vunpack.c.h.b16 %v361
        %v382 = vunpack.c.l.b16 %v362
        %v383 = vunpack.c.h.b16 %v362
        %v384 = vunpack.c.l.b16 %v363
        %v385 = vunpack.c.h.b16 %v363
        %v386 = vunpack.c.l.b16 %v364
        %v387 = vunpack.c.h.b16 %v364
        %v388 = vunpack.c.l.b16 %v365
        %v389 = vunpack.c.h.b16 %v365
        %v390 = vpack.c.b16 %v374, %v374
        %v391 = vpack.c.b16 %v375, %v375
        %v392 = vpack.c.b16 %v376, %v376
        %v393 = vpack.c.b16 %v377, %v377
        %v394 = vpack.c.b16 %v378, %v378
        %v395 = vpack.c.b16 %v379, %v379
        %v396 = vpack.c.b16 %v380, %v380
        %v397 = vpack.c.b16 %v381, %v381
        %v398 = vpack.c.b16 %v382, %v382
        %v399 = vpack.c.b16 %v383, %v383
        %v400 = vpack.c.b16 %v384, %v384
        %v401 = vpack.c.b16 %v385, %v385
        %v402 = vpack.c.b16 %v386, %v386
        %v403 = vpack.c.b16 %v387, %v387
        %v404 = vpack.c.b16 %v388, %v388
        %v405 = vpack.c.b16 %v389, %v389
        %422 = vst [vmem:[%s165] sm:$0xf] %v390
        %423 = vst [vmem:[%s165 + $0x4] sm:$0xf] %v391
        %424 = vst [vmem:[%s165 + $0x8] sm:$0xf] %v392
        %425 = vst [vmem:[%s165 + $0xc] sm:$0xf] %v393
        %426 = vst [vmem:[%s165 + $0x10] sm:$0xf] %v394
        %427 = vst [vmem:[%s165 + $0x14] sm:$0xf] %v395
        %428 = vst [vmem:[%s165 + $0x18] sm:$0xf] %v396
        %429 = vst [vmem:[%s165 + $0x1c] sm:$0xf] %v397
        %430 = vst [vmem:[%s165 + $0x20] sm:$0xf] %v398
        %431 = vst [vmem:[%s165 + $0x24] sm:$0xf] %v399
        %432 = vst [vmem:[%s165 + $0x28] sm:$0xf] %v400
        %433 = vst [vmem:[%s165 + $0x2c] sm:$0xf] %v401
        %434 = vst [vmem:[%s165 + $0x30] sm:$0xf] %v402
        %435 = vst [vmem:[%s165 + $0x34] sm:$0xf] %v403
        %436 = vst [vmem:[%s165 + $0x38] sm:$0xf] %v404
        %437 = vst [vmem:[%s165 + $0x3c] sm:$0xf] %v405
      $region40: #{resnet_generator_forward.20} parent=23 // pred_fallthru
        _
      %s438 = smul.u32 %s19, %s18
      %s439 = smul.u32 16, %s438
      %p440 = scmp.lt.s32.totalorder %s17, 1
      %s441 = scalar_select %p440, %s17, 1
      %p442 = scmp.lt.s32.totalorder %s439, 31
      %s443 = scalar_select %p442, %s439, 31
      %s444 = smul.addr %s441, 32
      %s445 = sadd.s32 %s443, %s444
      %s446 = smul.addr %s445, 4
      %s447 = scalar_lea.vmem %s1, %s446
      // Predicated region
      $region41: #{resnet_generator_forward.20} parent=23 // pred_check
        %p448 = pneg %p81
      $region42: #{resnet_generator_forward.20} parent=23 // pred_check_branch
        %450 = sbr.rel (%p448) target = $region44
      $region43: #{resnet_generator_forward.20} parent=23 // pred_region
        %s451 = smul.u32 %s19, %s18
        %s452 = smul.u32 16, %s451
      $region44: #{resnet_generator_forward.20} parent=23 // pred_fallthru
        _
    $region24: #{resnet_generator_forward.20} parent=5 // pred_fallthru
      _
    %p453 = scmp.le.s32.totalorder 2, %s7
    // Predicated region
    $region45: #{resnet_generator_forward.20} parent=5 // pred_check
      %p454 = pneg %p453
    $region46: #{resnet_generator_forward.20} parent=5 // pred_check_branch
      %456 = sbr.rel (%p454) target = $region48
    $region47: #{resnet_generator_forward.20} parent=5 // pred_region
      %s457 = ssub.s32 %s7, 2
      // Predicated region
      $region49: #{resnet_generator_forward.20} parent=47 // pred_check
        %p458 = pneg %p87
      $region50: #{resnet_generator_forward.20} parent=47 // pred_check_branch
        %460 = sbr.rel (%p458) target = $region52
      $region51: #{resnet_generator_forward.20} parent=47 // pred_region
        %s461 = smul.u32 %s22, %s21
        %s462 = smul.u32 16, %s461
        %p463 = scmp.lt.s32.totalorder %s20, 1
        %s464 = scalar_select %p463, %s20, 1
        %p465 = scmp.lt.s32.totalorder %s462, 31
        %s466 = scalar_select %p465, %s462, 31
        %s467 = smul.addr %s464, 32
        %s468 = sadd.s32 %s466, %s467
        %s469 = smul.addr %s468, 4
        %s470 = scalar_lea.vmem %s1, %s469
      $region52: #{resnet_generator_forward.20} parent=47 // pred_fallthru
        _
    $region48: #{resnet_generator_forward.20} parent=5 // pred_fallthru
      _
  $region6: #{resnet_generator_forward.20} parent=0 // loop_footer
    %s11 = sadd.s32 1, %s7
  $region7: #{resnet_generator_forward.20} parent=0 // loop_footer_branch
    %6 = sbr.rel target = $region3
  $region8: #{resnet_generator_forward.20} parent=0 // loop_exit
    _

// kernel: resnet_generator_forward.19
$region0: #{resnet_generator_forward.19}
  #allocation0 [shape = 'u32[]', space=smem, size = 0x4, offset = 0x4, fixed_abs, tag = 'smem constant byte address 0x4 - core index']
  #allocation1 [shape = 'u32[144,128]{1,0:T(1,128)}', space=vmem, size = 0x12000, scoped, tag = 'internal scratch']
  #allocation2 [shape = 'f32[16,128]{1,0:T(8,128)}', space=vmem, size = 0x2000, scoped, tag = 'scratch operand']
  %s0 = inlined_call_operand.vmem [shape: bf16[2,22,22,128], index: 0, kind: input, shape index: {}]
  %s1 = inlined_call_operand.vmem [shape: bf16[7,896,128], index: 1, kind: input, shape index: {}]
  %s2 = inlined_call_operand.vmem [shape: f32[1,128], index: 2, kind: input, shape index: {}]
  %s3 = inlined_call_operand.vmem [shape: bf16[2,16,16,128], index: 3, kind: output, shape index: {}]
  %s4 = sld [smem:[#allocation0]]
  $region53: #{resnet_generator_forward.19} parent=0
    _
  %s6 = ssub.s32 1, %s4
  %s7 = scalar_select 0, %s6, %s4
  loop: start=0, step=1, limit=226
  $region2: #{resnet_generator_forward.19} parent=0 // loop_pre_header
    _
  $region3: #{resnet_generator_forward.19} parent=0 // loop_header
    %s9 = sphi 0, %s13
    %p10 = scmp.ge.s32.totalorder %s9, 226
    %s16 = sphi 0, %s35
    %s17 = sphi 0, %s31
    %s18 = sphi 0, %s27
    %s19 = sphi 0, %s16
    %s20 = sphi 0, %s17
    %s21 = sphi 0, %s18
    %s22 = sphi 0, %s19
    %s23 = sphi 0, %s20
    %s24 = sphi 0, %s21
    %s42 = sphi 0, %s44
    %s45 = sphi 0, %s42
    %s46 = sphi 0, %s45
    %s62 = sphi 0, %s46
    %s66 = sphi 0, %s66
    %s68 = sphi 0, %s66
    %s69 = sphi 0, %s68
    %s83 = sphi 0, %s69
    %s87 = sphi 0, %s87
    %s89 = sphi 0, %s87
    %s90 = sphi 0, %s89
    %s104 = sphi 0, %s90
    %s112 = sphi 0, %s114
    %s115 = sphi 0, %s112
    %s116 = sphi 0, %s115
    %s132 = sphi 0, %s116
  $region4: #{resnet_generator_forward.19} parent=0 // loop_header_branch
    %12 = sbr.rel (%p10) target = $region8
  $region5: #{resnet_generator_forward.19} parent=0 // loop_body
    %s14 = ssub.s32 %s9, 1
    %s15 = ssub.s32 %s9, 2
    %s25 = sadd.s32 1, %s18
    %p26 = scmp.ge.s32.totalorder %s25, 7
    %s27 = scalar_select %p26, 0, %s25
    %s28 = sadd.s32 1, %s17
    %s29 = scalar_select %p26, %s28, %s17
    %p30 = scmp.ge.s32.totalorder %s29, 16
    %s31 = scalar_select %p30, 0, %s29
    %s32 = sadd.s32 1, %s16
    %s33 = scalar_select %p30, %s32, %s16
    %p34 = scmp.ge.s32.totalorder %s33, 2
    %s35 = scalar_select %p34, 0, %s33
    %s36 = sadd.s32 %s17, %s18
    %s37 = sadd.s32 %s31, %s27
    %s38 = ssub.s32 %s16, %s35
    %s39 = ssub.s32 %s36, %s37
    %s40 = sor.u32 %s38, %s39
    %p41 = scmp.eq.s32.totalorder %s40, 0
    %s43 = sadd.s32 %s42, 1
    %s44 = scalar_select %p41, %s42, %s43
    %p47 = pneg %p41
    %p48 = scmp.eq.s32.totalorder %s9, 223
    %p49 = por %p47, %p48
    %p50 = scmp.ne.s32.totalorder %s42, %s45
    %p51 = scmp.eq.s32.totalorder %s9, 0
    %p52 = por %p50, %p51
    %p53 = scmp.ne.s32.totalorder %s42, %s45
    %p54 = scmp.eq.s32.totalorder %s14, 223
    %p55 = por %p53, %p54
    %p56 = scmp.ne.s32.totalorder %s45, %s46
    %p57 = scmp.eq.s32.totalorder %s14, 0
    %p58 = por %p56, %p57
    %p59 = scmp.ne.s32.totalorder %s45, %s46
    %p60 = scmp.eq.s32.totalorder %s15, 223
    %p61 = por %p59, %p60
    %p63 = scmp.ne.s32.totalorder %s46, %s62
    %p64 = scmp.eq.s32.totalorder %s15, 0
    %p65 = por %p63, %p64
    %s67 = sadd.s32 %s66, 1
    %p70 = scmp.eq.s32.totalorder %s9, 223
    %p71 = scmp.ne.s32.totalorder %s66, %s68
    %p72 = scmp.eq.s32.totalorder %s9, 0
    %p73 = por %p71, %p72
    %p74 = scmp.ne.s32.totalorder %s66, %s68
    %p75 = scmp.eq.s32.totalorder %s14, 223
    %p76 = por %p74, %p75
    %p77 = scmp.ne.s32.totalorder %s68, %s69
    %p78 = scmp.eq.s32.totalorder %s14, 0
    %p79 = por %p77, %p78
    %p80 = scmp.ne.s32.totalorder %s68, %s69
    %p81 = scmp.eq.s32.totalorder %s15, 223
    %p82 = por %p80, %p81
    %p84 = scmp.ne.s32.totalorder %s69, %s83
    %p85 = scmp.eq.s32.totalorder %s15, 0
    %p86 = por %p84, %p85
    %s88 = sadd.s32 %s87, 1
    %p91 = scmp.eq.s32.totalorder %s9, 223
    %p92 = scmp.ne.s32.totalorder %s87, %s89
    %p93 = scmp.eq.s32.totalorder %s9, 0
    %p94 = por %p92, %p93
    %p95 = scmp.ne.s32.totalorder %s87, %s89
    %p96 = scmp.eq.s32.totalorder %s14, 223
    %p97 = por %p95, %p96
    %p98 = scmp.ne.s32.totalorder %s89, %s90
    %p99 = scmp.eq.s32.totalorder %s14, 0
    %p100 = por %p98, %p99
    %p101 = scmp.ne.s32.totalorder %s89, %s90
    %p102 = scmp.eq.s32.totalorder %s15, 223
    %p103 = por %p101, %p102
    %p105 = scmp.ne.s32.totalorder %s90, %s104
    %p106 = scmp.eq.s32.totalorder %s15, 0
    %p107 = por %p105, %p106
    %s108 = ssub.s32 %s16, %s35
    %s109 = ssub.s32 %s17, %s31
    %s110 = sor.u32 %s108, %s109
    %p111 = scmp.eq.s32.totalorder %s110, 0
    %s113 = sadd.s32 %s112, 1
    %s114 = scalar_select %p111, %s112, %s113
    %p117 = pneg %p111
    %p118 = scmp.eq.s32.totalorder %s9, 223
    %p119 = por %p117, %p118
    %p120 = scmp.ne.s32.totalorder %s112, %s115
    %p121 = scmp.eq.s32.totalorder %s9, 0
    %p122 = por %p120, %p121
    %p123 = scmp.ne.s32.totalorder %s112, %s115
    %p124 = scmp.eq.s32.totalorder %s14, 223
    %p125 = por %p123, %p124
    %p126 = scmp.ne.s32.totalorder %s115, %s116
    %p127 = scmp.eq.s32.totalorder %s14, 0
    %p128 = por %p126, %p127
    %p129 = scmp.ne.s32.totalorder %s115, %s116
    %p130 = scmp.eq.s32.totalorder %s15, 223
    %p131 = por %p129, %p130
    %p133 = scmp.ne.s32.totalorder %s116, %s132
    %p134 = scmp.eq.s32.totalorder %s15, 0
    %p135 = por %p133, %p134
    %p136 = scmp.le.s32.totalorder 1, %s9
    %p137 = scmp.lt.s32.totalorder %s9, 225
    %p138 = pnand %p136, %p137
    %p139 = pneg %p138
    // Predicated region
    $region9: #{resnet_generator_forward.19} parent=5 // pred_check
      _
    $region10: #{resnet_generator_forward.19} parent=5 // pred_check_branch
      %141 = sbr.rel (%p138) target = $region12
    $region11: #{resnet_generator_forward.19} parent=5 // pred_region
      %s142 = ssub.s32 %s9, 1
      // Predicated region
      $region13: #{resnet_generator_forward.19} parent=11 // pred_check
        %p143 = pneg %p79
      $region14: #{resnet_generator_forward.19} parent=11 // pred_check_branch
        %145 = sbr.rel (%p143) target = $region16
      $region15: #{resnet_generator_forward.19} parent=11 // pred_region
        _
      $region16: #{resnet_generator_forward.19} parent=11 // pred_fallthru
        _
      // Predicated region
      $region17: #{resnet_generator_forward.19} parent=11 // pred_check
        %p146 = pneg %p100
      $region18: #{resnet_generator_forward.19} parent=11 // pred_check_branch
        %148 = sbr.rel (%p146) target = $region20
      $region19: #{resnet_generator_forward.19} parent=11 // pred_region
        _
      $region20: #{resnet_generator_forward.19} parent=11 // pred_fallthru
        _
    $region12: #{resnet_generator_forward.19} parent=5 // pred_fallthru
      _
    %p149 = scmp.lt.s32.totalorder %s9, 224
    // Predicated region
    $region21: #{resnet_generator_forward.19} parent=5 // pred_check
      %p150 = pneg %p149
    $region22: #{resnet_generator_forward.19} parent=5 // pred_check_branch
      %152 = sbr.rel (%p150) target = $region24
    $region23: #{resnet_generator_forward.19} parent=5 // pred_region
      // Predicated region
      $region25: #{resnet_generator_forward.19} parent=23 // pred_check
        %p153 = pneg %p52
      $region26: #{resnet_generator_forward.19} parent=23 // pred_check_branch
        %155 = sbr.rel (%p153) target = $region28
      $region27: #{resnet_generator_forward.19} parent=23 // pred_region
        %s156 = sadd.s32 %s17, %s18
        %p157 = scmp.lt.s32.totalorder %s16, 1
        %s158 = scalar_select %p157, %s16, 1
        %p159 = scmp.lt.s32.totalorder %s156, 21
        %s160 = scalar_select %p159, %s156, 21
        %s161 = smul.addr %s160, 3
        %s162 = smul.addr %s158, 66
        %s163 = sadd.s32 %s161, %s162
        %s164 = smul.addr %s163, 4
        %s165 = scalar_lea.vmem %s0, %s164
        %s166 = sadd.s32 %s17, %s18
      $region28: #{resnet_generator_forward.19} parent=23 // pred_fallthru
        _
    $region24: #{resnet_generator_forward.19} parent=5 // pred_fallthru
      _
    %p167 = scmp.le.s32.totalorder 1, %s9
    %p168 = scmp.lt.s32.totalorder %s9, 225
    %p169 = pnand %p167, %p168
    %p170 = pneg %p169
    // Predicated region
    $region29: #{resnet_generator_forward.19} parent=5 // pred_check
      _
    $region30: #{resnet_generator_forward.19} parent=5 // pred_check_branch
      %172 = sbr.rel (%p169) target = $region32
    $region31: #{resnet_generator_forward.19} parent=5 // pred_region
      %s173 = ssub.s32 %s9, 1
      %s174 = sadd.s32 %s20, %s21
      %p175 = scmp.lt.s32.totalorder %s19, 1
      %s176 = scalar_select %p175, %s19, 1
      %p177 = scmp.lt.s32.totalorder %s174, 21
      %s178 = scalar_select %p177, %s174, 21
      %s179 = smul.addr %s178, 3
      %s180 = smul.addr %s176, 66
      %s181 = sadd.s32 %s179, %s180
      %s182 = smul.addr %s181, 4
      %s183 = scalar_lea.vmem %s0, %s182
      %p184 = pneg %p58
      %p185 = pneg %p55
      %p186 = pneg %p79
      %p187 = pneg %p76
      %p188 = pneg %p100
      %p189 = pneg %p97
      %p190 = pneg %p128
      %p191 = pneg %p125
      %p192 = scmp.lt.s32.totalorder %s19, 1
      %s193 = scalar_select %p192, %s19, 1
      %p194 = scmp.lt.s32.totalorder %s20, 15
      %s195 = scalar_select %p194, %s20, 15
      %s196 = smul.addr %s195, 2
      %s197 = smul.addr %s193, 32
      %s198 = sadd.s32 %s196, %s197
      %s199 = smul.addr %s198, 4
      %s200 = scalar_lea.vmem %s3, %s199
      %s201 = sadd.s32 %s20, %s21
      %p202 = scmp.lt.s32.totalorder %s19, 1
      %s203 = scalar_select %p202, %s19, 1
      %p204 = scmp.lt.s32.totalorder %s201, 21
      %s205 = scalar_select %p204, %s201, 21
      %s206 = smul.addr %s205, 3
      %s207 = smul.addr %s203, 66
      %s208 = sadd.s32 %s206, %s207
      %s209 = smul.addr %s208, 4
      %s210 = scalar_lea.vmem %s0, %s209
      %s211 = sadd.s32 %s20, %s21
      %p212 = scmp.lt.s32.totalorder %s19, 1
      %s213 = scalar_select %p212, %s19, 1
      %p214 = scmp.lt.s32.totalorder %s20, 15
      %s215 = scalar_select %p214, %s20, 15
      %s216 = smul.addr %s215, 2
      %s217 = smul.addr %s213, 32
      %s218 = sadd.s32 %s216, %s217
      %s219 = smul.addr %s218, 4
      %s220 = scalar_lea.vmem %s3, %s219
      %p222 = scmp.eq.s32.totalorder %s21, 0
      // Predicated region
      $region33: #{resnet_generator_forward.19} parent=31 // pred_check
        %p223 = pneg %p222
      $region34: #{resnet_generator_forward.19} parent=31 // pred_check_branch
        %225 = sbr.rel (%p223) target = $region36
      $region35: #{resnet_generator_forward.19} parent=31 // pred_region
        %226 = vst [vmem:[#allocation2] sm:$0xff] 0.0
        %227 = vst [vmem:[#allocation2 + $0x8] sm:$0xff] 0.0
      $region36: #{resnet_generator_forward.19} parent=31 // pred_fallthru
        _
      %v228 = vld [vmem:[%s210] sm:$0xf]
      %v229 = vld [vmem:[%s210 + $0x4] sm:$0xf]
      %v230 = vld [vmem:[%s210 + $0x8] sm:$0x7]
      %s231 = smul.u32 %s21, 112
      %s232 = smul.addr %s231, 4
      %s233 = scalar_lea.vmem %s1, %s232
      %v234 = vld [vmem:[%s233] sm:$0xf]
      %v235 = vld [vmem:[%s233 + $0x4] sm:$0xf]
      %v236 = vld [vmem:[%s233 + $0x8] sm:$0xf]
      %v237 = vld [vmem:[%s233 + $0xc] sm:$0xf]
      %v238 = vld [vmem:[%s233 + $0x10] sm:$0xf]
      %v239 = vld [vmem:[%s233 + $0x14] sm:$0xf]
      %v240 = vld [vmem:[%s233 + $0x18] sm:$0xf]
      %v241 = vld [vmem:[%s233 + $0x1c] sm:$0xf]
      %v242 = vld [vmem:[%s233 + $0x20] sm:$0xf]
      %v243 = vld [vmem:[%s233 + $0x24] sm:$0xf]
      %v244 = vld [vmem:[%s233 + $0x28] sm:$0xf]
      %v245 = vld [vmem:[%s233 + $0x2c] sm:$0xf]
      %v246 = vld [vmem:[%s233 + $0x30] sm:$0xf]
      %v247 = vld [vmem:[%s233 + $0x34] sm:$0xf]
      %v248 = vld [vmem:[%s233 + $0x38] sm:$0xf]
      %v249 = vld [vmem:[%s233 + $0x3c] sm:$0xf]
      %v250 = vld [vmem:[%s233 + $0x40] sm:$0xf]
      %v251 = vld [vmem:[%s233 + $0x44] sm:$0xf]
      %v252 = vld [vmem:[%s233 + $0x48] sm:$0xf]
      %v253 = vld [vmem:[%s233 + $0x4c] sm:$0xf]
      %v254 = vld [vmem:[%s233 + $0x50] sm:$0xf]
      %v255 = vld [vmem:[%s233 + $0x54] sm:$0xf]
      %v256 = vld [vmem:[%s233 + $0x58] sm:$0xf]
      %v257 = vld [vmem:[%s233 + $0x5c] sm:$0xf]
      %v258 = vld [vmem:[%s233 + $0x60] sm:$0xf]
      %v259 = vld [vmem:[%s233 + $0x64] sm:$0xf]
      %v260 = vld [vmem:[%s233 + $0x68] sm:$0xf]
      %v261 = vld [vmem:[%s233 + $0x6c] sm:$0xf]
      %v262 = vld [vmem:[%s233 + $0x70] sm:$0xf]
      %v263 = vld [vmem:[%s233 + $0x74] sm:$0xf]
      %v264 = vld [vmem:[%s233 + $0x78] sm:$0xf]
      %v265 = vld [vmem:[%s233 + $0x7c] sm:$0xf]
      %v266 = vld [vmem:[%s233 + $0x80] sm:$0xf]
      %v267 = vld [vmem:[%s233 + $0x84] sm:$0xf]
      %v268 = vld [vmem:[%s233 + $0x88] sm:$0xf]
      %v269 = vld [vmem:[%s233 + $0x8c] sm:$0xf]
      %v270 = vld [vmem:[%s233 + $0x90] sm:$0xf]
      %v271 = vld [vmem:[%s233 + $0x94] sm:$0xf]
      %v272 = vld [vmem:[%s233 + $0x98] sm:$0xf]
      %v273 = vld [vmem:[%s233 + $0x9c] sm:$0xf]
      %v274 = vld [vmem:[%s233 + $0xa0] sm:$0xf]
      %v275 = vld [vmem:[%s233 + $0xa4] sm:$0xf]
      %v276 = vld [vmem:[%s233 + $0xa8] sm:$0xf]
      %v277 = vld [vmem:[%s233 + $0xac] sm:$0xf]
      %v278 = vld [vmem:[%s233 + $0xb0] sm:$0xf]
      %v279 = vld [vmem:[%s233 + $0xb4] sm:$0xf]
      %v280 = vld [vmem:[%s233 + $0xb8] sm:$0xf]
      %v281 = vld [vmem:[%s233 + $0xbc] sm:$0xf]
      %v282 = vld [vmem:[%s233 + $0xc0] sm:$0xf]
      %v283 = vld [vmem:[%s233 + $0xc4] sm:$0xf]
      %v284 = vld [vmem:[%s233 + $0xc8] sm:$0xf]
      %v285 = vld [vmem:[%s233 + $0xcc] sm:$0xf]
      %v286 = vld [vmem:[%s233 + $0xd0] sm:$0xf]
      %v287 = vld [vmem:[%s233 + $0xd4] sm:$0xf]
      %v288 = vld [vmem:[%s233 + $0xd8] sm:$0xf]
      %v289 = vld [vmem:[%s233 + $0xdc] sm:$0xf]
      %v290 = vld [vmem:[%s233 + $0xe0] sm:$0xf]
      %v291 = vld [vmem:[%s233 + $0xe4] sm:$0xf]
      %v292 = vld [vmem:[%s233 + $0xe8] sm:$0xf]
      %v293 = vld [vmem:[%s233 + $0xec] sm:$0xf]
      %v294 = vld [vmem:[%s233 + $0xf0] sm:$0xf]
      %v295 = vld [vmem:[%s233 + $0xf4] sm:$0xf]
      %v296 = vld [vmem:[%s233 + $0xf8] sm:$0xf]
      %v297 = vld [vmem:[%s233 + $0xfc] sm:$0xf]
      %v298 = vld [vmem:[%s233 + $0x100] sm:$0xf]
      %v299 = vld [vmem:[%s233 + $0x104] sm:$0xf]
      %v300 = vld [vmem:[%s233 + $0x108] sm:$0xf]
      %v301 = vld [vmem:[%s233 + $0x10c] sm:$0xf]
      %v302 = vld [vmem:[%s233 + $0x110] sm:$0xf]
      %v303 = vld [vmem:[%s233 + $0x114] sm:$0xf]
      %v304 = vld [vmem:[%s233 + $0x118] sm:$0xf]
      %v305 = vld [vmem:[%s233 + $0x11c] sm:$0xf]
      %v306 = vld [vmem:[%s233 + $0x120] sm:$0xf]
      %v307 = vld [vmem:[%s233 + $0x124] sm:$0xf]
      %v308 = vld [vmem:[%s233 + $0x128] sm:$0xf]
      %v309 = vld [vmem:[%s233 + $0x12c] sm:$0xf]
      %v310 = vld [vmem:[%s233 + $0x130] sm:$0xf]
      %v311 = vld [vmem:[%s233 + $0x134] sm:$0xf]
      %v312 = vld [vmem:[%s233 + $0x138] sm:$0xf]
      %v313 = vld [vmem:[%s233 + $0x13c] sm:$0xf]
      %v314 = vld [vmem:[%s233 + $0x140] sm:$0xf]
      %v315 = vld [vmem:[%s233 + $0x144] sm:$0xf]
      %v316 = vld [vmem:[%s233 + $0x148] sm:$0xf]
      %v317 = vld [vmem:[%s233 + $0x14c] sm:$0xf]
      %v318 = vld [vmem:[%s233 + $0x150] sm:$0xf]
      %v319 = vld [vmem:[%s233 + $0x154] sm:$0xf]
      %v320 = vld [vmem:[%s233 + $0x158] sm:$0xf]
      %v321 = vld [vmem:[%s233 + $0x15c] sm:$0xf]
      %v322 = vld [vmem:[%s233 + $0x160] sm:$0xf]
      %v323 = vld [vmem:[%s233 + $0x164] sm:$0xf]
      %v324 = vld [vmem:[%s233 + $0x168] sm:$0xf]
      %v325 = vld [vmem:[%s233 + $0x16c] sm:$0xf]
      %v326 = vld [vmem:[%s233 + $0x170] sm:$0xf]
      %v327 = vld [vmem:[%s233 + $0x174] sm:$0xf]
      %v328 = vld [vmem:[%s233 + $0x178] sm:$0xf]
      %v329 = vld [vmem:[%s233 + $0x17c] sm:$0xf]
      %v330 = vld [vmem:[%s233 + $0x180] sm:$0xf]
      %v331 = vld [vmem:[%s233 + $0x184] sm:$0xf]
      %v332 = vld [vmem:[%s233 + $0x188] sm:$0xf]
      %v333 = vld [vmem:[%s233 + $0x18c] sm:$0xf]
      %v334 = vld [vmem:[%s233 + $0x190] sm:$0xf]
      %v335 = vld [vmem:[%s233 + $0x194] sm:$0xf]
      %v336 = vld [vmem:[%s233 + $0x198] sm:$0xf]
      %v337 = vld [vmem:[%s233 + $0x19c] sm:$0xf]
      %v338 = vld [vmem:[%s233 + $0x1a0] sm:$0xf]
      %v339 = vld [vmem:[%s233 + $0x1a4] sm:$0xf]
      %v340 = vld [vmem:[%s233 + $0x1a8] sm:$0xf]
      %v341 = vld [vmem:[%s233 + $0x1ac] sm:$0xf]
      %v342 = vld [vmem:[%s233 + $0x1b0] sm:$0xf]
      %v343 = vld [vmem:[%s233 + $0x1b4] sm:$0xf]
      %v344 = vld [vmem:[%s233 + $0x1b8] sm:$0xf]
      %v345 = vld [vmem:[%s233 + $0x1bc] sm:$0xf]
      %v346 = vld [vmem:[#allocation2] sm:$0xff]
      %v347 = vld [vmem:[#allocation2 + $0x8] sm:$0xff]
      %v350 = vunpack.c.l.b16 %v228
      %v351 = vunpack.c.l.b16 %v229
      %v352 = vpack.c.b16 %v351, %v350
      %v370 = vunpack.c.l.b16 %v234
      %v371 = vunpack.c.l.b16 %v235
      %v372 = vunpack.c.l.b16 %v236
      %v373 = vunpack.c.l.b16 %v237
      %v374 = vunpack.c.l.b16 %v238
      %v375 = vunpack.c.l.b16 %v239
      %v376 = vunpack.c.l.b16 %v240
      %v377 = vunpack.c.l.b16 %v241
      %v378 = vunpack.c.l.b16 %v242
      %v379 = vunpack.c.l.b16 %v243
      %v380 = vunpack.c.l.b16 %v244
      %v381 = vunpack.c.l.b16 %v245
      %v382 = vunpack.c.l.b16 %v246
      %v383 = vunpack.c.l.b16 %v247
      %v384 = vunpack.c.l.b16 %v248
      %v385 = vunpack.c.l.b16 %v249
      %v386 = vpack.c.b16 %v371, %v370
      %v387 = vpack.c.b16 %v373, %v372
      %v388 = vpack.c.b16 %v375, %v374
      %v389 = vpack.c.b16 %v377, %v376
      %v390 = vpack.c.b16 %v379, %v378
      %v391 = vpack.c.b16 %v381, %v380
      %v392 = vpack.c.b16 %v383, %v382
      %v393 = vpack.c.b16 %v385, %v384
      %402 = vmatprep.subr.bf16.mxu0 0
      %403 = vmatpush1.bf16.msra.mxu0 %v393
      %404 = vmatprep.subr.bf16.mxu0 0
      %405 = vmatpush1.bf16.msra.mxu0 %v392
      %406 = vmatprep.subr.bf16.mxu0 0
      %407 = vmatpush1.bf16.msra.mxu0 %v391
      %408 = vmatprep.subr.bf16.mxu0 0
      %409 = vmatpush1.bf16.msra.mxu0 %v390
      %410 = vmatprep.subr.bf16.mxu0 0
      %411 = vmatpush1.bf16.msra.mxu0 %v389
      %412 = vmatprep.subr.bf16.mxu0 0
      %413 = vmatpush1.bf16.msra.mxu0 %v388
      %414 = vmatprep.subr.bf16.mxu0 0
      %415 = vmatpush1.bf16.msra.mxu0 %v387
      %416 = vmatprep.subr.bf16.mxu0 0
      %417 = vmatpush1.bf16.msra.mxu0 %v386
      %418 = vmatprep.subr.bf16.mxu0 0
      %419 = vmatpush2.bf16.msra.mxu0 0
      %420 = vmatprep.subr.bf16.mxu0 0
      %421 = vmatpush2.bf16.msra.mxu0 0
      %422 = vmatprep.subr.bf16.mxu0 0
      %423 = vmatpush2.bf16.msra.mxu0 0
      %424 = vmatprep.subr.bf16.mxu0 0
      %425 = vmatpush2.bf16.msra.mxu0 0
      %426 = vmatprep.subr.bf16.mxu0 0
      %427 = vmatpush2.bf16.msra.mxu0 0
      %428 = vmatprep.subr.bf16.mxu0 0
      %429 = vmatpush2.bf16.msra.mxu0 0
      %430 = vmatprep.subr.bf16.mxu0 0
      %431 = vmatpush2.bf16.msra.mxu0 0
      %432 = vmatprep.subr.bf16.mxu0 0
      %433 = vmatpush2.bf16.msra.mxu0 0
      %434 = vmatprep.mubr.bf16.mxu0 0
      %435 = vmatmul.mubr.bf16.gmra.mxu0 %v352
      %v436 = vpop.f32.mrf.mxu0
      %v437 = vadd.f32 0.0, %v436
      %v438 = vpop.f32.mrf.mxu0
      %v439 = vpop.f32.mrf.mxu0
      %v440 = vadd.f32 0.0, %v439
      %v441 = vpop.f32.mrf.mxu0
      %442 = vdwg.mxu0
      %v443 = vadd.f32 %v346, %v437
      %v444 = vadd.f32 %v347, %v440
      %v446 = vunpack.c.l.b16 %v230
      %v447 = vpack.c.b16 %v446, %v446
      %vm448 = vsmask.f32 7424
      %v450 = vshrl.u32 %v352, 16
      %v452 = vshll.u32 %v352, 16
      %v454 = vrot.slane %v452, 1
      %v455 = vor.u32 %v450, %v454
      %v457 = vshll.u32 %v447, 16
      %v459 = vrot.slane %v457, 1
      %v460 = vsel %vm448, %v455, %v459
      %v478 = vunpack.c.l.b16 %v250
      %v479 = vunpack.c.l.b16 %v251
      %v480 = vunpack.c.l.b16 %v252
      %v481 = vunpack.c.l.b16 %v253
      %v482 = vunpack.c.l.b16 %v254
      %v483 = vunpack.c.l.b16 %v255
      %v484 = vunpack.c.l.b16 %v256
      %v485 = vunpack.c.l.b16 %v257
      %v486 = vunpack.c.l.b16 %v258
      %v487 = vunpack.c.l.b16 %v259
      %v488 = vunpack.c.l.b16 %v260
      %v489 = vunpack.c.l.b16 %v261
      %v490 = vunpack.c.l.b16 %v262
      %v491 = vunpack.c.l.b16 %v263
      %v492 = vunpack.c.l.b16 %v264
      %v493 = vunpack.c.l.b16 %v265
      %v494 = vpack.c.b16 %v479, %v478
      %v495 = vpack.c.b16 %v481, %v480
      %v496 = vpack.c.b16 %v483, %v482
      %v497 = vpack.c.b16 %v485, %v484
      %v498 = vpack.c.b16 %v487, %v486
      %v499 = vpack.c.b16 %v489, %v488
      %v500 = vpack.c.b16 %v491, %v490
      %v501 = vpack.c.b16 %v493, %v492
      %510 = vmatprep.subr.bf16.mxu0 0
      %511 = vmatpush1.bf16.msra.mxu0 %v501
      %512 = vmatprep.subr.bf16.mxu0 0
      %513 = vmatpush1.bf16.msra.mxu0 %v500
      %514 = vmatprep.subr.bf16.mxu0 0
      %515 = vmatpush1.bf16.msra.mxu0 %v499
      %516 = vmatprep.subr.bf16.mxu0 0
      %517 = vmatpush1.bf16.msra.mxu0 %v498
      %518 = vmatprep.subr.bf16.mxu0 0
      %519 = vmatpush1.bf16.msra.mxu0 %v497
      %520 = vmatprep.subr.bf16.mxu0 0
      %521 = vmatpush1.bf16.msra.mxu0 %v496
      %522 = vmatprep.subr.bf16.mxu0 0
      %523 = vmatpush1.bf16.msra.mxu0 %v495
      %524 = vmatprep.subr.bf16.mxu0 0
      %525 = vmatpush1.bf16.msra.mxu0 %v494
      %526 = vmatprep.subr.bf16.mxu0 0
      %527 = vmatpush2.bf16.msra.mxu0 0
      %528 = vmatprep.subr.bf16.mxu0 0
      %529 = vmatpush2.bf16.msra.mxu0 0
      %530 = vmatprep.subr.bf16.mxu0 0
      %531 = vmatpush2.bf16.msra.mxu0 0
      %532 = vmatprep.subr.bf16.mxu0 0
      %533 = vmatpush2.bf16.msra.mxu0 0
      %534 = vmatprep.subr.bf16.mxu0 0
      %535 = vmatpush2.bf16.msra.mxu0 0
      %536 = vmatprep.subr.bf16.mxu0 0
      %537 = vmatpush2.bf16.msra.mxu0 0
      %538 = vmatprep.subr.bf16.mxu0 0
      %539 = vmatpush2.bf16.msra.mxu0 0
      %540 = vmatprep.subr.bf16.mxu0 0
      %541 = vmatpush2.bf16.msra.mxu0 0
      %542 = vmatprep.mubr.bf16.mxu0 0
      %543 = vmatmul.mubr.bf16.gmra.mxu0 %v460
      %v544 = vpop.f32.mrf.mxu0
      %v545 = vadd.f32 0.0, %v544
      %v546 = vpop.f32.mrf.mxu0
      %v547 = vpop.f32.mrf.mxu0
      %v548 = vadd.f32 0.0, %v547
      %v549 = vpop.f32.mrf.mxu0
      %550 = vdwg.mxu0
      %v551 = vadd.f32 %v443, %v545
      %v552 = vadd.f32 %v444, %v548
      %vm553 = vcmask 1046528
      %v554 = vrot.slane %v352, 1
      %v555 = vrot.slane %v447, 1
      %v556 = vsel %vm553, %v554, %v555
      %v574 = vunpack.c.l.b16 %v266
      %v575 = vunpack.c.l.b16 %v267
      %v576 = vunpack.c.l.b16 %v268
      %v577 = vunpack.c.l.b16 %v269
      %v578 = vunpack.c.l.b16 %v270
      %v579 = vunpack.c.l.b16 %v271
      %v580 = vunpack.c.l.b16 %v272
      %v581 = vunpack.c.l.b16 %v273
      %v582 = vunpack.c.l.b16 %v274
      %v583 = vunpack.c.l.b16 %v275
      %v584 = vunpack.c.l.b16 %v276
      %v585 = vunpack.c.l.b16 %v277
      %v586 = vunpack.c.l.b16 %v278
      %v587 = vunpack.c.l.b16 %v279
      %v588 = vunpack.c.l.b16 %v280
      %v589 = vunpack.c.l.b16 %v281
      %v590 = vpack.c.b16 %v575, %v574
      %v591 = vpack.c.b16 %v577, %v576
      %v592 = vpack.c.b16 %v579, %v578
      %v593 = vpack.c.b16 %v581, %v580
      %v594 = vpack.c.b16 %v583, %v582
      %v595 = vpack.c.b16 %v585, %v584
      %v596 = vpack.c.b16 %v587, %v586
      %v597 = vpack.c.b16 %v589, %v588
      %606 = vmatprep.subr.bf16.mxu0 0
      %607 = vmatpush1.bf16.msra.mxu0 %v597
      %608 = vmatprep.subr.bf16.mxu0 0
      %609 = vmatpush1.bf16.msra.mxu0 %v596
      %610 = vmatprep.subr.bf16.mxu0 0
      %611 = vmatpush1.bf16.msra.mxu0 %v595
      %612 = vmatprep.subr.bf16.mxu0 0
      %613 = vmatpush1.bf16.msra.mxu0 %v594
      %614 = vmatprep.subr.bf16.mxu0 0
      %615 = vmatpush1.bf16.msra.mxu0 %v593
      %616 = vmatprep.subr.bf16.mxu0 0
      %617 = vmatpush1.bf16.msra.mxu0 %v592
      %618 = vmatprep.subr.bf16.mxu0 0
      %619 = vmatpush1.bf16.msra.mxu0 %v591
      %620 = vmatprep.subr.bf16.mxu0 0
      %621 = vmatpush1.bf16.msra.mxu0 %v590
      %622 = vmatprep.subr.bf16.mxu0 0
      %623 = vmatpush2.bf16.msra.mxu0 0
      %624 = vmatprep.subr.bf16.mxu0 0
      %625 = vmatpush2.bf16.msra.mxu0 0
      %626 = vmatprep.subr.bf16.mxu0 0
      %627 = vmatpush2.bf16.msra.mxu0 0
      %628 = vmatprep.subr.bf16.mxu0 0
      %629 = vmatpush2.bf16.msra.mxu0 0
      %630 = vmatprep.subr.bf16.mxu0 0
      %631 = vmatpush2.bf16.msra.mxu0 0
      %632 = vmatprep.subr.bf16.mxu0 0
      %633 = vmatpush2.bf16.msra.mxu0 0
      %634 = vmatprep.subr.bf16.mxu0 0
      %635 = vmatpush2.bf16.msra.mxu0 0
      %636 = vmatprep.subr.bf16.mxu0 0
      %637 = vmatpush2.bf16.msra.mxu0 0
      %638 = vmatprep.mubr.bf16.mxu0 0
      %639 = vmatmul.mubr.bf16.gmra.mxu0 %v556
      %v640 = vpop.f32.mrf.mxu0
      %v641 = vadd.f32 0.0, %v640
      %v642 = vpop.f32.mrf.mxu0
      %v643 = vpop.f32.mrf.mxu0
      %v644 = vadd.f32 0.0, %v643
      %v645 = vpop.f32.mrf.mxu0
      %646 = vdwg.mxu0
      %v647 = vadd.f32 %v551, %v641
      %v648 = vadd.f32 %v552, %v644
      %vm649 = vsmask.f32 6400
      %v650 = vrot.slane %v450, 1
      %v651 = vrot.slane %v452, 2
      %v652 = vor.u32 %v650, %v651
      %v653 = vshrl.u32 %v447, 16
      %v655 = vrot.slane %v653, 1
      %v656 = vrot.slane %v457, 2
      %v657 = vor.u32 %v655, %v656
      %v658 = vsel %vm649, %v652, %v657
      %v676 = vunpack.c.l.b16 %v282
      %v677 = vunpack.c.l.b16 %v283
      %v678 = vunpack.c.l.b16 %v284
      %v679 = vunpack.c.l.b16 %v285
      %v680 = vunpack.c.l.b16 %v286
      %v681 = vunpack.c.l.b16 %v287
      %v682 = vunpack.c.l.b16 %v288
      %v683 = vunpack.c.l.b16 %v289
      %v684 = vunpack.c.l.b16 %v290
      %v685 = vunpack.c.l.b16 %v291
      %v686 = vunpack.c.l.b16 %v292
      %v687 = vunpack.c.l.b16 %v293
      %v688 = vunpack.c.l.b16 %v294
      %v689 = vunpack.c.l.b16 %v295
      %v690 = vunpack.c.l.b16 %v296
      %v691 = vunpack.c.l.b16 %v297
      %v692 = vpack.c.b16 %v677, %v676
      %v693 = vpack.c.b16 %v679, %v678
      %v694 = vpack.c.b16 %v681, %v680
      %v695 = vpack.c.b16 %v683, %v682
      %v696 = vpack.c.b16 %v685, %v684
      %v697 = vpack.c.b16 %v687, %v686
      %v698 = vpack.c.b16 %v689, %v688
      %v699 = vpack.c.b16 %v691, %v690
      %708 = vmatprep.subr.bf16.mxu0 0
      %709 = vmatpush1.bf16.msra.mxu0 %v699
      %710 = vmatprep.subr.bf16.mxu0 0
      %711 = vmatpush1.bf16.msra.mxu0 %v698
      %712 = vmatprep.subr.bf16.mxu0 0
      %713 = vmatpush1.bf16.msra.mxu0 %v697
      %714 = vmatprep.subr.bf16.mxu0 0
      %715 = vmatpush1.bf16.msra.mxu0 %v696
      %716 = vmatprep.subr.bf16.mxu0 0
      %717 = vmatpush1.bf16.msra.mxu0 %v695
      %718 = vmatprep.subr.bf16.mxu0 0
      %719 = vmatpush1.bf16.msra.mxu0 %v694
      %720 = vmatprep.subr.bf16.mxu0 0
      %721 = vmatpush1.bf16.msra.mxu0 %v693
      %722 = vmatprep.subr.bf16.mxu0 0
      %723 = vmatpush1.bf16.msra.mxu0 %v692
      %724 = vmatprep.subr.bf16.mxu0 0
      %725 = vmatpush2.bf16.msra.mxu0 0
      %726 = vmatprep.subr.bf16.mxu0 0
      %727 = vmatpush2.bf16.msra.mxu0 0
      %728 = vmatprep.subr.bf16.mxu0 0
      %729 = vmatpush2.bf16.msra.mxu0 0
      %730 = vmatprep.subr.bf16.mxu0 0
      %731 = vmatpush2.bf16.msra.mxu0 0
      %732 = vmatprep.subr.bf16.mxu0 0
      %733 = vmatpush2.bf16.msra.mxu0 0
      %734 = vmatprep.subr.bf16.mxu0 0
      %735 = vmatpush2.bf16.msra.mxu0 0
      %736 = vmatprep.subr.bf16.mxu0 0
      %737 = vmatpush2.bf16.msra.mxu0 0
      %738 = vmatprep.subr.bf16.mxu0 0
      %739 = vmatpush2.bf16.msra.mxu0 0
      %740 = vmatprep.mubr.bf16.mxu0 0
      %741 = vmatmul.mubr.bf16.gmra.mxu0 %v658
      %v742 = vpop.f32.mrf.mxu0
      %v743 = vadd.f32 0.0, %v742
      %v744 = vpop.f32.mrf.mxu0
      %v745 = vpop.f32.mrf.mxu0
      %v746 = vadd.f32 0.0, %v745
      %v747 = vpop.f32.mrf.mxu0
      %748 = vdwg.mxu0
      %v749 = vadd.f32 %v647, %v743
      %v750 = vadd.f32 %v648, %v746
      %vm751 = vcmask 1045504
      %v752 = vrot.slane %v352, 2
      %v753 = vrot.slane %v447, 2
      %v754 = vsel %vm751, %v752, %v753
      %v772 = vunpack.c.l.b16 %v298
      %v773 = vunpack.c.l.b16 %v299
      %v774 = vunpack.c.l.b16 %v300
      %v775 = vunpack.c.l.b16 %v301
      %v776 = vunpack.c.l.b16 %v302
      %v777 = vunpack.c.l.b16 %v303
      %v778 = vunpack.c.l.b16 %v304
      %v779 = vunpack.c.l.b16 %v305
      %v780 = vunpack.c.l.b16 %v306
      %v781 = vunpack.c.l.b16 %v307
      %v782 = vunpack.c.l.b16 %v308
      %v783 = vunpack.c.l.b16 %v309
      %v784 = vunpack.c.l.b16 %v310
      %v785 = vunpack.c.l.b16 %v311
      %v786 = vunpack.c.l.b16 %v312
      %v787 = vunpack.c.l.b16 %v313
      %v788 = vpack.c.b16 %v773, %v772
      %v789 = vpack.c.b16 %v775, %v774
      %v790 = vpack.c.b16 %v777, %v776
      %v791 = vpack.c.b16 %v779, %v778
      %v792 = vpack.c.b16 %v781, %v780
      %v793 = vpack.c.b16 %v783, %v782
      %v794 = vpack.c.b16 %v785, %v784
      %v795 = vpack.c.b16 %v787, %v786
      %804 = vmatprep.subr.bf16.mxu0 0
      %805 = vmatpush1.bf16.msra.mxu0 %v795
      %806 = vmatprep.subr.bf16.mxu0 0
      %807 = vmatpush1.bf16.msra.mxu0 %v794
      %808 = vmatprep.subr.bf16.mxu0 0
      %809 = vmatpush1.bf16.msra.mxu0 %v793
      %810 = vmatprep.subr.bf16.mxu0 0
      %811 = vmatpush1.bf16.msra.mxu0 %v792
      %812 = vmatprep.subr.bf16.mxu0 0
      %813 = vmatpush1.bf16.msra.mxu0 %v791
      %814 = vmatprep.subr.bf16.mxu0 0
      %815 = vmatpush1.bf16.msra.mxu0 %v790
      %816 = vmatprep.subr.bf16.mxu0 0
      %817 = vmatpush1.bf16.msra.mxu0 %v789
      %818 = vmatprep.subr.bf16.mxu0 0
      %819 = vmatpush1.bf16.msra.mxu0 %v788
      %820 = vmatprep.subr.bf16.mxu0 0
      %821 = vmatpush2.bf16.msra.mxu0 0
      %822 = vmatprep.subr.bf16.mxu0 0
      %823 = vmatpush2.bf16.msra.mxu0 0
      %824 = vmatprep.subr.bf16.mxu0 0
      %825 = vmatpush2.bf16.msra.mxu0 0
      %826 = vmatprep.subr.bf16.mxu0 0
      %827 = vmatpush2.bf16.msra.mxu0 0
      %828 = vmatprep.subr.bf16.mxu0 0
      %829 = vmatpush2.bf16.msra.mxu0 0
      %830 = vmatprep.subr.bf16.mxu0 0
      %831 = vmatpush2.bf16.msra.mxu0 0
      %832 = vmatprep.subr.bf16.mxu0 0
      %833 = vmatpush2.bf16.msra.mxu0 0
      %834 = vmatprep.subr.bf16.mxu0 0
      %835 = vmatpush2.bf16.msra.mxu0 0
      %836 = vmatprep.mubr.bf16.mxu0 0
      %837 = vmatmul.mubr.bf16.gmra.mxu0 %v754
      %v838 = vpop.f32.mrf.mxu0
      %v839 = vadd.f32 0.0, %v838
      %v840 = vpop.f32.mrf.mxu0
      %v841 = vpop.f32.mrf.mxu0
      %v842 = vadd.f32 0.0, %v841
      %v843 = vpop.f32.mrf.mxu0
      %844 = vdwg.mxu0
      %v845 = vadd.f32 %v749, %v839
      %v846 = vadd.f32 %v750, %v842
      %vm847 = vsmask.f32 5376
      %v848 = vrot.slane %v450, 2
      %v849 = vrot.slane %v452, 3
      %v850 = vor.u32 %v848, %v849
      %v851 = vrot.slane %v653, 2
      %v852 = vrot.slane %v457, 3
      %v853 = vor.u32 %v851, %v852
      %v854 = vsel %vm847, %v850, %v853
      %v872 = vunpack.c.l.b16 %v314
      %v873 = vunpack.c.l.b16 %v315
      %v874 = vunpack.c.l.b16 %v316
      %v875 = vunpack.c.l.b16 %v317
      %v876 = vunpack.c.l.b16 %v318
      %v877 = vunpack.c.l.b16 %v319
      %v878 = vunpack.c.l.b16 %v320
      %v879 = vunpack.c.l.b16 %v321
      %v880 = vunpack.c.l.b16 %v322
      %v881 = vunpack.c.l.b16 %v323
      %v882 = vunpack.c.l.b16 %v324
      %v883 = vunpack.c.l.b16 %v325
      %v884 = vunpack.c.l.b16 %v326
      %v885 = vunpack.c.l.b16 %v327
      %v886 = vunpack.c.l.b16 %v328
      %v887 = vunpack.c.l.b16 %v329
      %v888 = vpack.c.b16 %v873, %v872
      %v889 = vpack.c.b16 %v875, %v874
      %v890 = vpack.c.b16 %v877, %v876
      %v891 = vpack.c.b16 %v879, %v878
      %v892 = vpack.c.b16 %v881, %v880
      %v893 = vpack.c.b16 %v883, %v882
      %v894 = vpack.c.b16 %v885, %v884
      %v895 = vpack.c.b16 %v887, %v886
      %904 = vmatprep.subr.bf16.mxu0 0
      %905 = vmatpush1.bf16.msra.mxu0 %v895
      %906 = vmatprep.subr.bf16.mxu0 0
      %907 = vmatpush1.bf16.msra.mxu0 %v894
      %908 = vmatprep.subr.bf16.mxu0 0
      %909 = vmatpush1.bf16.msra.mxu0 %v893
      %910 = vmatprep.subr.bf16.mxu0 0
      %911 = vmatpush1.bf16.msra.mxu0 %v892
      %912 = vmatprep.subr.bf16.mxu0 0
      %913 = vmatpush1.bf16.msra.mxu0 %v891
      %914 = vmatprep.subr.bf16.mxu0 0
      %915 = vmatpush1.bf16.msra.mxu0 %v890
      %916 = vmatprep.subr.bf16.mxu0 0
      %917 = vmatpush1.bf16.msra.mxu0 %v889
      %918 = vmatprep.subr.bf16.mxu0 0
      %919 = vmatpush1.bf16.msra.mxu0 %v888
      %920 = vmatprep.subr.bf16.mxu0 0
      %921 = vmatpush2.bf16.msra.mxu0 0
      %922 = vmatprep.subr.bf16.mxu0 0
      %923 = vmatpush2.bf16.msra.mxu0 0
      %924 = vmatprep.subr.bf16.mxu0 0
      %925 = vmatpush2.bf16.msra.mxu0 0
      %926 = vmatprep.subr.bf16.mxu0 0
      %927 = vmatpush2.bf16.msra.mxu0 0
      %928 = vmatprep.subr.bf16.mxu0 0
      %929 = vmatpush2.bf16.msra.mxu0 0
      %930 = vmatprep.subr.bf16.mxu0 0
      %931 = vmatpush2.bf16.msra.mxu0 0
      %932 = vmatprep.subr.bf16.mxu0 0
      %933 = vmatpush2.bf16.msra.mxu0 0
      %934 = vmatprep.subr.bf16.mxu0 0
      %935 = vmatpush2.bf16.msra.mxu0 0
      %936 = vmatprep.mubr.bf16.mxu0 0
      %937 = vmatmul.mubr.bf16.gmra.mxu0 %v854
      %v938 = vpop.f32.mrf.mxu0
      %v939 = vadd.f32 0.0, %v938
      %v940 = vpop.f32.mrf.mxu0
      %v941 = vpop.f32.mrf.mxu0
      %v942 = vadd.f32 0.0, %v941
      %v943 = vpop.f32.mrf.mxu0
      %944 = vdwg.mxu0
      %v945 = vadd.f32 %v845, %v939
      %v946 = vadd.f32 %v846, %v942
      %vm947 = vcmask 1044480
      %v948 = vrot.slane %v352, 3
      %v949 = vrot.slane %v447, 3
      %v950 = vsel %vm947, %v948, %v949
      %v968 = vunpack.c.l.b16 %v330
      %v969 = vunpack.c.l.b16 %v331
      %v970 = vunpack.c.l.b16 %v332
      %v971 = vunpack.c.l.b16 %v333
      %v972 = vunpack.c.l.b16 %v334
      %v973 = vunpack.c.l.b16 %v335
      %v974 = vunpack.c.l.b16 %v336
      %v975 = vunpack.c.l.b16 %v337
      %v976 = vunpack.c.l.b16 %v338
      %v977 = vunpack.c.l.b16 %v339
      %v978 = vunpack.c.l.b16 %v340
      %v979 = vunpack.c.l.b16 %v341
      %v980 = vunpack.c.l.b16 %v342
      %v981 = vunpack.c.l.b16 %v343
      %v982 = vunpack.c.l.b16 %v344
      %v983 = vunpack.c.l.b16 %v345
      %v984 = vpack.c.b16 %v969, %v968
      %v985 = vpack.c.b16 %v971, %v970
      %v986 = vpack.c.b16 %v973, %v972
      %v987 = vpack.c.b16 %v975, %v974
      %v988 = vpack.c.b16 %v977, %v976
      %v989 = vpack.c.b16 %v979, %v978
      %v990 = vpack.c.b16 %v981, %v980
      %v991 = vpack.c.b16 %v983, %v982
      %1000 = vmatprep.subr.bf16.mxu0 0
      %1001 = vmatpush1.bf16.msra.mxu0 %v991
      %1002 = vmatprep.subr.bf16.mxu0 0
      %1003 = vmatpush1.bf16.msra.mxu0 %v990
      %1004 = vmatprep.subr.bf16.mxu0 0
      %1005 = vmatpush1.bf16.msra.mxu0 %v989
      %1006 = vmatprep.subr.bf16.mxu0 0
      %1007 = vmatpush1.bf16.msra.mxu0 %v988
      %1008 = vmatprep.subr.bf16.mxu0 0
      %1009 = vmatpush1.bf16.msra.mxu0 %v987
      %1010 = vmatprep.subr.bf16.mxu0 0
      %1011 = vmatpush1.bf16.msra.mxu0 %v986
      %1012 = vmatprep.subr.bf16.mxu0 0
      %1013 = vmatpush1.bf16.msra.mxu0 %v985
      %1014 = vmatprep.subr.bf16.mxu0 0
      %1015 = vmatpush1.bf16.msra.mxu0 %v984
      %1016 = vmatprep.subr.bf16.mxu0 0
      %1017 = vmatpush2.bf16.msra.mxu0 0
      %1018 = vmatprep.subr.bf16.mxu0 0
      %1019 = vmatpush2.bf16.msra.mxu0 0
      %1020 = vmatprep.subr.bf16.mxu0 0
      %1021 = vmatpush2.bf16.msra.mxu0 0
      %1022 = vmatprep.subr.bf16.mxu0 0
      %1023 = vmatpush2.bf16.msra.mxu0 0
      %1024 = vmatprep.subr.bf16.mxu0 0
      %1025 = vmatpush2.bf16.msra.mxu0 0
      %1026 = vmatprep.subr.bf16.mxu0 0
      %1027 = vmatpush2.bf16.msra.mxu0 0
      %1028 = vmatprep.subr.bf16.mxu0 0
      %1029 = vmatpush2.bf16.msra.mxu0 0
      %1030 = vmatprep.subr.bf16.mxu0 0
      %1031 = vmatpush2.bf16.msra.mxu0 0
      %1032 = vmatprep.mubr.bf16.mxu0 0
      %1033 = vmatmul.mubr.bf16.gmra.mxu0 %v950
      %v1034 = vpop.f32.mrf.mxu0
      %v1035 = vadd.f32 0.0, %v1034
      %v1036 = vpop.f32.mrf.mxu0
      %v1037 = vpop.f32.mrf.mxu0
      %v1038 = vadd.f32 0.0, %v1037
      %v1039 = vpop.f32.mrf.mxu0
      %1040 = vdwg.mxu0
      %v1041 = vadd.f32 %v945, %v1035
      %v1042 = vadd.f32 %v946, %v1038
      %1043 = vst [vmem:[#allocation2] sm:$0xff] %v1041
      %1044 = vst [vmem:[#allocation2 + $0x8] sm:$0xff] %v1042
      %p1045 = scmp.eq.s32.totalorder %s21, 6
      // Predicated region
      $region37: #{resnet_generator_forward.19} parent=31 // pred_check
        %p1046 = pneg %p1045
      $region38: #{resnet_generator_forward.19} parent=31 // pred_check_branch
        %1048 = sbr.rel (%p1046) target = $region40
      $region39: #{resnet_generator_forward.19} parent=31 // pred_region
        %v1049 = vld [vmem:[#allocation2] sm:$0xff]
        %v1050 = vld [vmem:[#allocation2 + $0x8] sm:$0xff]
        %v1051 = vld [vmem:[%s2] sm:$0x1]
        %v1053 = vlaneseq
        %v1054 = vshrl.u32 %v1053, 7
        %v1055 = vsub.s32 0, %v1054
        %v1056 = vrot.slane %v1051, %v1055
        %v1058 = vadd.f32 %v1049, %v1056
        %v1059 = vadd.f32 %v1050, %v1056
        %v1060 = vpack.c.bf16 %v1059, %v1058
        %v1062 = vunpack.c.l.b16 %v1060
        %v1063 = vunpack.c.h.b16 %v1060
        %v1064 = vpack.c.b16 %v1062, %v1062
        %v1065 = vpack.c.b16 %v1063, %v1063
        %1068 = vst [vmem:[%s220] sm:$0xf] %v1064
        %1069 = vst [vmem:[%s220 + $0x4] sm:$0xf] %v1065
      $region40: #{resnet_generator_forward.19} parent=31 // pred_fallthru
        _
      %p1070 = scmp.lt.s32.totalorder %s19, 1
      %s1071 = scalar_select %p1070, %s19, 1
      %p1072 = scmp.lt.s32.totalorder %s20, 15
      %s1073 = scalar_select %p1072, %s20, 15
      %s1074 = smul.addr %s1073, 2
      %s1075 = smul.addr %s1071, 32
      %s1076 = sadd.s32 %s1074, %s1075
      %s1077 = smul.addr %s1076, 4
      %s1078 = scalar_lea.vmem %s3, %s1077
      // Predicated region
      $region41: #{resnet_generator_forward.19} parent=31 // pred_check
        %p1079 = pneg %p125
      $region42: #{resnet_generator_forward.19} parent=31 // pred_check_branch
        %1081 = sbr.rel (%p1079) target = $region44
      $region43: #{resnet_generator_forward.19} parent=31 // pred_region
        _
      $region44: #{resnet_generator_forward.19} parent=31 // pred_fallthru
        _
    $region32: #{resnet_generator_forward.19} parent=5 // pred_fallthru
      _
    %p1082 = scmp.le.s32.totalorder 2, %s9
    // Predicated region
    $region45: #{resnet_generator_forward.19} parent=5 // pred_check
      %p1083 = pneg %p1082
    $region46: #{resnet_generator_forward.19} parent=5 // pred_check_branch
      %1085 = sbr.rel (%p1083) target = $region48
    $region47: #{resnet_generator_forward.19} parent=5 // pred_region
      %s1086 = ssub.s32 %s9, 2
      // Predicated region
      $region49: #{resnet_generator_forward.19} parent=47 // pred_check
        %p1087 = pneg %p131
      $region50: #{resnet_generator_forward.19} parent=47 // pred_check_branch
        %1089 = sbr.rel (%p1087) target = $region52
      $region51: #{resnet_generator_forward.19} parent=47 // pred_region
        %p1090 = scmp.lt.s32.totalorder %s22, 1
        %s1091 = scalar_select %p1090, %s22, 1
        %p1092 = scmp.lt.s32.totalorder %s23, 15
        %s1093 = scalar_select %p1092, %s23, 15
        %s1094 = smul.addr %s1093, 2
        %s1095 = smul.addr %s1091, 32
        %s1096 = sadd.s32 %s1094, %s1095
        %s1097 = smul.addr %s1096, 4
        %s1098 = scalar_lea.vmem %s3, %s1097
      $region52: #{resnet_generator_forward.19} parent=47 // pred_fallthru
        _
    $region48: #{resnet_generator_forward.19} parent=5 // pred_fallthru
      _
  $region6: #{resnet_generator_forward.19} parent=0 // loop_footer
    %s13 = sadd.s32 1, %s9
  $region7: #{resnet_generator_forward.19} parent=0 // loop_footer_branch
    %8 = sbr.rel target = $region3
  $region8: #{resnet_generator_forward.19} parent=0 // loop_exit
    _

// kernel: resnet_generator_forward.21
$region0: #{resnet_generator_forward.21}
  #allocation0 [shape = 'u32[]', space=smem, size = 0x4, offset = 0x4, fixed_abs, tag = 'smem constant byte address 0x4 - core index']
  #allocation1 [shape = 'u32[144,128]{1,0:T(1,128)}', space=vmem, size = 0x12000, scoped, tag = 'internal scratch']
  #allocation2 [shape = 'f32[8,128]{1,0:T(8,128)}', space=vmem, size = 0x1000, scoped, tag = 'scratch operand']
  %s0 = inlined_call_operand.vmem [shape: bf16[2,18,18,128], index: 0, kind: input, shape index: {}]
  %s1 = inlined_call_operand.vmem [shape: bf16[3,384,128], index: 1, kind: input, shape index: {}]
  %s2 = inlined_call_operand.vmem [shape: f32[1,128], index: 2, kind: input, shape index: {}]
  %s3 = inlined_call_operand.vmem [shape: bf16[2,8,8,128], index: 3, kind: output, shape index: {}]
  %s4 = sld [smem:[#allocation0]]
  $region53: #{resnet_generator_forward.21} parent=0
    _
  %s6 = ssub.s32 1, %s4
  %s7 = scalar_select 0, %s6, %s4
  loop: start=0, step=1, limit=50
  $region2: #{resnet_generator_forward.21} parent=0 // loop_pre_header
    _
  $region3: #{resnet_generator_forward.21} parent=0 // loop_header
    %s9 = sphi 0, %s13
    %p10 = scmp.ge.s32.totalorder %s9, 50
    %s16 = sphi 0, %s35
    %s17 = sphi 0, %s31
    %s18 = sphi 0, %s27
    %s19 = sphi 0, %s16
    %s20 = sphi 0, %s17
    %s21 = sphi 0, %s18
    %s22 = sphi 0, %s19
    %s23 = sphi 0, %s20
    %s24 = sphi 0, %s21
    %s44 = sphi 0, %s46
    %s47 = sphi 0, %s44
    %s48 = sphi 0, %s47
    %s64 = sphi 0, %s48
    %s68 = sphi 0, %s68
    %s70 = sphi 0, %s68
    %s71 = sphi 0, %s70
    %s85 = sphi 0, %s71
    %s89 = sphi 0, %s89
    %s91 = sphi 0, %s89
    %s92 = sphi 0, %s91
    %s106 = sphi 0, %s92
    %s114 = sphi 0, %s116
    %s117 = sphi 0, %s114
    %s118 = sphi 0, %s117
    %s134 = sphi 0, %s118
  $region4: #{resnet_generator_forward.21} parent=0 // loop_header_branch
    %12 = sbr.rel (%p10) target = $region8
  $region5: #{resnet_generator_forward.21} parent=0 // loop_body
    %s14 = ssub.s32 %s9, 1
    %s15 = ssub.s32 %s9, 2
    %s25 = sadd.s32 1, %s18
    %p26 = scmp.ge.s32.totalorder %s25, 3
    %s27 = scalar_select %p26, 0, %s25
    %s28 = sadd.s32 1, %s17
    %s29 = scalar_select %p26, %s28, %s17
    %p30 = scmp.ge.s32.totalorder %s29, 8
    %s31 = scalar_select %p30, 0, %s29
    %s32 = sadd.s32 1, %s16
    %s33 = scalar_select %p30, %s32, %s16
    %p34 = scmp.ge.s32.totalorder %s33, 2
    %s35 = scalar_select %p34, 0, %s33
    %s36 = smul.u32 %s17, 2
    %s37 = sadd.s32 %s36, %s18
    %s38 = smul.u32 %s31, 2
    %s39 = sadd.s32 %s38, %s27
    %s40 = ssub.s32 %s16, %s35
    %s41 = ssub.s32 %s37, %s39
    %s42 = sor.u32 %s40, %s41
    %p43 = scmp.eq.s32.totalorder %s42, 0
    %s45 = sadd.s32 %s44, 1
    %s46 = scalar_select %p43, %s44, %s45
    %p49 = pneg %p43
    %p50 = scmp.eq.s32.totalorder %s9, 47
    %p51 = por %p49, %p50
    %p52 = scmp.ne.s32.totalorder %s44, %s47
    %p53 = scmp.eq.s32.totalorder %s9, 0
    %p54 = por %p52, %p53
    %p55 = scmp.ne.s32.totalorder %s44, %s47
    %p56 = scmp.eq.s32.totalorder %s14, 47
    %p57 = por %p55, %p56
    %p58 = scmp.ne.s32.totalorder %s47, %s48
    %p59 = scmp.eq.s32.totalorder %s14, 0
    %p60 = por %p58, %p59
    %p61 = scmp.ne.s32.totalorder %s47, %s48
    %p62 = scmp.eq.s32.totalorder %s15, 47
    %p63 = por %p61, %p62
    %p65 = scmp.ne.s32.totalorder %s48, %s64
    %p66 = scmp.eq.s32.totalorder %s15, 0
    %p67 = por %p65, %p66
    %s69 = sadd.s32 %s68, 1
    %p72 = scmp.eq.s32.totalorder %s9, 47
    %p73 = scmp.ne.s32.totalorder %s68, %s70
    %p74 = scmp.eq.s32.totalorder %s9, 0
    %p75 = por %p73, %p74
    %p76 = scmp.ne.s32.totalorder %s68, %s70
    %p77 = scmp.eq.s32.totalorder %s14, 47
    %p78 = por %p76, %p77
    %p79 = scmp.ne.s32.totalorder %s70, %s71
    %p80 = scmp.eq.s32.totalorder %s14, 0
    %p81 = por %p79, %p80
    %p82 = scmp.ne.s32.totalorder %s70, %s71
    %p83 = scmp.eq.s32.totalorder %s15, 47
    %p84 = por %p82, %p83
    %p86 = scmp.ne.s32.totalorder %s71, %s85
    %p87 = scmp.eq.s32.totalorder %s15, 0
    %p88 = por %p86, %p87
    %s90 = sadd.s32 %s89, 1
    %p93 = scmp.eq.s32.totalorder %s9, 47
    %p94 = scmp.ne.s32.totalorder %s89, %s91
    %p95 = scmp.eq.s32.totalorder %s9, 0
    %p96 = por %p94, %p95
    %p97 = scmp.ne.s32.totalorder %s89, %s91
    %p98 = scmp.eq.s32.totalorder %s14, 47
    %p99 = por %p97, %p98
    %p100 = scmp.ne.s32.totalorder %s91, %s92
    %p101 = scmp.eq.s32.totalorder %s14, 0
    %p102 = por %p100, %p101
    %p103 = scmp.ne.s32.totalorder %s91, %s92
    %p104 = scmp.eq.s32.totalorder %s15, 47
    %p105 = por %p103, %p104
    %p107 = scmp.ne.s32.totalorder %s92, %s106
    %p108 = scmp.eq.s32.totalorder %s15, 0
    %p109 = por %p107, %p108
    %s110 = ssub.s32 %s16, %s35
    %s111 = ssub.s32 %s17, %s31
    %s112 = sor.u32 %s110, %s111
    %p113 = scmp.eq.s32.totalorder %s112, 0
    %s115 = sadd.s32 %s114, 1
    %s116 = scalar_select %p113, %s114, %s115
    %p119 = pneg %p113
    %p120 = scmp.eq.s32.totalorder %s9, 47
    %p121 = por %p119, %p120
    %p122 = scmp.ne.s32.totalorder %s114, %s117
    %p123 = scmp.eq.s32.totalorder %s9, 0
    %p124 = por %p122, %p123
    %p125 = scmp.ne.s32.totalorder %s114, %s117
    %p126 = scmp.eq.s32.totalorder %s14, 47
    %p127 = por %p125, %p126
    %p128 = scmp.ne.s32.totalorder %s117, %s118
    %p129 = scmp.eq.s32.totalorder %s14, 0
    %p130 = por %p128, %p129
    %p131 = scmp.ne.s32.totalorder %s117, %s118
    %p132 = scmp.eq.s32.totalorder %s15, 47
    %p133 = por %p131, %p132
    %p135 = scmp.ne.s32.totalorder %s118, %s134
    %p136 = scmp.eq.s32.totalorder %s15, 0
    %p137 = por %p135, %p136
    %p138 = scmp.le.s32.totalorder 1, %s9
    %p139 = scmp.lt.s32.totalorder %s9, 49
    %p140 = pnand %p138, %p139
    %p141 = pneg %p140
    // Predicated region
    $region9: #{resnet_generator_forward.21} parent=5 // pred_check
      _
    $region10: #{resnet_generator_forward.21} parent=5 // pred_check_branch
      %143 = sbr.rel (%p140) target = $region12
    $region11: #{resnet_generator_forward.21} parent=5 // pred_region
      %s144 = ssub.s32 %s9, 1
      // Predicated region
      $region13: #{resnet_generator_forward.21} parent=11 // pred_check
        %p145 = pneg %p81
      $region14: #{resnet_generator_forward.21} parent=11 // pred_check_branch
        %147 = sbr.rel (%p145) target = $region16
      $region15: #{resnet_generator_forward.21} parent=11 // pred_region
        _
      $region16: #{resnet_generator_forward.21} parent=11 // pred_fallthru
        _
      // Predicated region
      $region17: #{resnet_generator_forward.21} parent=11 // pred_check
        %p148 = pneg %p102
      $region18: #{resnet_generator_forward.21} parent=11 // pred_check_branch
        %150 = sbr.rel (%p148) target = $region20
      $region19: #{resnet_generator_forward.21} parent=11 // pred_region
        _
      $region20: #{resnet_generator_forward.21} parent=11 // pred_fallthru
        _
    $region12: #{resnet_generator_forward.21} parent=5 // pred_fallthru
      _
    %p151 = scmp.lt.s32.totalorder %s9, 48
    // Predicated region
    $region21: #{resnet_generator_forward.21} parent=5 // pred_check
      %p152 = pneg %p151
    $region22: #{resnet_generator_forward.21} parent=5 // pred_check_branch
      %154 = sbr.rel (%p152) target = $region24
    $region23: #{resnet_generator_forward.21} parent=5 // pred_region
      // Predicated region
      $region25: #{resnet_generator_forward.21} parent=23 // pred_check
        %p155 = pneg %p54
      $region26: #{resnet_generator_forward.21} parent=23 // pred_check_branch
        %157 = sbr.rel (%p155) target = $region28
      $region27: #{resnet_generator_forward.21} parent=23 // pred_region
        %s158 = smul.u32 %s17, 2
        %s159 = sadd.s32 %s158, %s18
        %p160 = scmp.lt.s32.totalorder %s16, 1
        %s161 = scalar_select %p160, %s16, 1
        %p162 = scmp.lt.s32.totalorder %s159, 17
        %s163 = scalar_select %p162, %s159, 17
        %s164 = smul.addr %s163, 3
        %s165 = smul.addr %s161, 54
        %s166 = sadd.s32 %s164, %s165
        %s167 = smul.addr %s166, 4
        %s168 = scalar_lea.vmem %s0, %s167
        %s169 = smul.u32 %s17, 2
        %s170 = sadd.s32 %s169, %s18
      $region28: #{resnet_generator_forward.21} parent=23 // pred_fallthru
        _
    $region24: #{resnet_generator_forward.21} parent=5 // pred_fallthru
      _
    %p171 = scmp.le.s32.totalorder 1, %s9
    %p172 = scmp.lt.s32.totalorder %s9, 49
    %p173 = pnand %p171, %p172
    %p174 = pneg %p173
    // Predicated region
    $region29: #{resnet_generator_forward.21} parent=5 // pred_check
      _
    $region30: #{resnet_generator_forward.21} parent=5 // pred_check_branch
      %176 = sbr.rel (%p173) target = $region32
    $region31: #{resnet_generator_forward.21} parent=5 // pred_region
      %s177 = ssub.s32 %s9, 1
      %s178 = smul.u32 %s20, 2
      %s179 = sadd.s32 %s178, %s21
      %p180 = scmp.lt.s32.totalorder %s19, 1
      %s181 = scalar_select %p180, %s19, 1
      %p182 = scmp.lt.s32.totalorder %s179, 17
      %s183 = scalar_select %p182, %s179, 17
      %s184 = smul.addr %s183, 3
      %s185 = smul.addr %s181, 54
      %s186 = sadd.s32 %s184, %s185
      %s187 = smul.addr %s186, 4
      %s188 = scalar_lea.vmem %s0, %s187
      %p189 = pneg %p60
      %p190 = pneg %p57
      %p191 = pneg %p81
      %p192 = pneg %p78
      %p193 = pneg %p102
      %p194 = pneg %p99
      %p195 = pneg %p130
      %p196 = pneg %p127
      %p197 = scmp.lt.s32.totalorder %s19, 1
      %s198 = scalar_select %p197, %s19, 1
      %p199 = scmp.lt.s32.totalorder %s20, 7
      %s200 = scalar_select %p199, %s20, 7
      %s201 = smul.addr %s198, 8
      %s202 = sadd.s32 %s200, %s201
      %s203 = smul.addr %s202, 4
      %s204 = scalar_lea.vmem %s3, %s203
      %s205 = smul.u32 %s20, 2
      %s206 = sadd.s32 %s205, %s21
      %p207 = scmp.lt.s32.totalorder %s19, 1
      %s208 = scalar_select %p207, %s19, 1
      %p209 = scmp.lt.s32.totalorder %s206, 17
      %s210 = scalar_select %p209, %s206, 17
      %s211 = smul.addr %s210, 3
      %s212 = smul.addr %s208, 54
      %s213 = sadd.s32 %s211, %s212
      %s214 = smul.addr %s213, 4
      %s215 = scalar_lea.vmem %s0, %s214
      %s216 = smul.u32 %s20, 2
      %s217 = sadd.s32 %s216, %s21
      %p218 = scmp.lt.s32.totalorder %s19, 1
      %s219 = scalar_select %p218, %s19, 1
      %p220 = scmp.lt.s32.totalorder %s20, 7
      %s221 = scalar_select %p220, %s20, 7
      %s222 = smul.addr %s219, 8
      %s223 = sadd.s32 %s221, %s222
      %s224 = smul.addr %s223, 4
      %s225 = scalar_lea.vmem %s3, %s224
      %p227 = scmp.eq.s32.totalorder %s21, 0
      // Predicated region
      $region33: #{resnet_generator_forward.21} parent=31 // pred_check
        %p228 = pneg %p227
      $region34: #{resnet_generator_forward.21} parent=31 // pred_check_branch
        %230 = sbr.rel (%p228) target = $region36
      $region35: #{resnet_generator_forward.21} parent=31 // pred_region
        %231 = vst [vmem:[#allocation2] sm:$0xff] 0.0
      $region36: #{resnet_generator_forward.21} parent=31 // pred_fallthru
        _
      %v232 = vld [vmem:[%s215] sm:$0xf]
      %v233 = vld [vmem:[%s215 + $0x4] sm:$0xf]
      %v234 = vld [vmem:[%s215 + $0x8] sm:$0x1]
      %s235 = smul.u32 %s21, 48
      %s236 = smul.addr %s235, 4
      %s237 = scalar_lea.vmem %s1, %s236
      %v238 = vld [vmem:[%s237] sm:$0xf]
      %v239 = vld [vmem:[%s237 + $0x4] sm:$0xf]
      %v240 = vld [vmem:[%s237 + $0x8] sm:$0xf]
      %v241 = vld [vmem:[%s237 + $0xc] sm:$0xf]
      %v242 = vld [vmem:[%s237 + $0x10] sm:$0xf]
      %v243 = vld [vmem:[%s237 + $0x14] sm:$0xf]
      %v244 = vld [vmem:[%s237 + $0x18] sm:$0xf]
      %v245 = vld [vmem:[%s237 + $0x1c] sm:$0xf]
      %v246 = vld [vmem:[%s237 + $0x20] sm:$0xf]
      %v247 = vld [vmem:[%s237 + $0x24] sm:$0xf]
      %v248 = vld [vmem:[%s237 + $0x28] sm:$0xf]
      %v249 = vld [vmem:[%s237 + $0x2c] sm:$0xf]
      %v250 = vld [vmem:[%s237 + $0x30] sm:$0xf]
      %v251 = vld [vmem:[%s237 + $0x34] sm:$0xf]
      %v252 = vld [vmem:[%s237 + $0x38] sm:$0xf]
      %v253 = vld [vmem:[%s237 + $0x3c] sm:$0xf]
      %v254 = vld [vmem:[%s237 + $0x40] sm:$0xf]
      %v255 = vld [vmem:[%s237 + $0x44] sm:$0xf]
      %v256 = vld [vmem:[%s237 + $0x48] sm:$0xf]
      %v257 = vld [vmem:[%s237 + $0x4c] sm:$0xf]
      %v258 = vld [vmem:[%s237 + $0x50] sm:$0xf]
      %v259 = vld [vmem:[%s237 + $0x54] sm:$0xf]
      %v260 = vld [vmem:[%s237 + $0x58] sm:$0xf]
      %v261 = vld [vmem:[%s237 + $0x5c] sm:$0xf]
      %v262 = vld [vmem:[%s237 + $0x60] sm:$0xf]
      %v263 = vld [vmem:[%s237 + $0x64] sm:$0xf]
      %v264 = vld [vmem:[%s237 + $0x68] sm:$0xf]
      %v265 = vld [vmem:[%s237 + $0x6c] sm:$0xf]
      %v266 = vld [vmem:[%s237 + $0x70] sm:$0xf]
      %v267 = vld [vmem:[%s237 + $0x74] sm:$0xf]
      %v268 = vld [vmem:[%s237 + $0x78] sm:$0xf]
      %v269 = vld [vmem:[%s237 + $0x7c] sm:$0xf]
      %v270 = vld [vmem:[%s237 + $0x80] sm:$0xf]
      %v271 = vld [vmem:[%s237 + $0x84] sm:$0xf]
      %v272 = vld [vmem:[%s237 + $0x88] sm:$0xf]
      %v273 = vld [vmem:[%s237 + $0x8c] sm:$0xf]
      %v274 = vld [vmem:[%s237 + $0x90] sm:$0xf]
      %v275 = vld [vmem:[%s237 + $0x94] sm:$0xf]
      %v276 = vld [vmem:[%s237 + $0x98] sm:$0xf]
      %v277 = vld [vmem:[%s237 + $0x9c] sm:$0xf]
      %v278 = vld [vmem:[%s237 + $0xa0] sm:$0xf]
      %v279 = vld [vmem:[%s237 + $0xa4] sm:$0xf]
      %v280 = vld [vmem:[%s237 + $0xa8] sm:$0xf]
      %v281 = vld [vmem:[%s237 + $0xac] sm:$0xf]
      %v282 = vld [vmem:[%s237 + $0xb0] sm:$0xf]
      %v283 = vld [vmem:[%s237 + $0xb4] sm:$0xf]
      %v284 = vld [vmem:[%s237 + $0xb8] sm:$0xf]
      %v285 = vld [vmem:[%s237 + $0xbc] sm:$0xf]
      %v286 = vld [vmem:[#allocation2] sm:$0xff]
      %v303 = vunpack.c.l.b16 %v238
      %v304 = vunpack.c.l.b16 %v239
      %v305 = vunpack.c.l.b16 %v240
      %v306 = vunpack.c.l.b16 %v241
      %v307 = vunpack.c.l.b16 %v242
      %v308 = vunpack.c.l.b16 %v243
      %v309 = vunpack.c.l.b16 %v244
      %v310 = vunpack.c.l.b16 %v245
      %v311 = vunpack.c.l.b16 %v246
      %v312 = vunpack.c.l.b16 %v247
      %v313 = vunpack.c.l.b16 %v248
      %v314 = vunpack.c.l.b16 %v249
      %v315 = vunpack.c.l.b16 %v250
      %v316 = vunpack.c.l.b16 %v251
      %v317 = vunpack.c.l.b16 %v252
      %v318 = vunpack.c.l.b16 %v253
      %v319 = vpack.c.b16 %v304, %v303
      %v320 = vpack.c.b16 %v306, %v305
      %v321 = vpack.c.b16 %v308, %v307
      %v322 = vpack.c.b16 %v310, %v309
      %v323 = vpack.c.b16 %v312, %v311
      %v324 = vpack.c.b16 %v314, %v313
      %v325 = vpack.c.b16 %v316, %v315
      %v326 = vpack.c.b16 %v318, %v317
      %335 = vmatprep.subr.bf16.mxu0 0
      %336 = vmatpush1.bf16.msra.mxu0 %v326
      %337 = vmatprep.subr.bf16.mxu0 0
      %338 = vmatpush1.bf16.msra.mxu0 %v325
      %339 = vmatprep.subr.bf16.mxu0 0
      %340 = vmatpush1.bf16.msra.mxu0 %v324
      %341 = vmatprep.subr.bf16.mxu0 0
      %342 = vmatpush1.bf16.msra.mxu0 %v323
      %343 = vmatprep.subr.bf16.mxu0 0
      %344 = vmatpush1.bf16.msra.mxu0 %v322
      %345 = vmatprep.subr.bf16.mxu0 0
      %346 = vmatpush1.bf16.msra.mxu0 %v321
      %347 = vmatprep.subr.bf16.mxu0 0
      %348 = vmatpush1.bf16.msra.mxu0 %v320
      %349 = vmatprep.subr.bf16.mxu0 0
      %350 = vmatpush1.bf16.msra.mxu0 %v319
      %351 = vmatprep.subr.bf16.mxu0 0
      %352 = vmatpush2.bf16.msra.mxu0 0
      %353 = vmatprep.subr.bf16.mxu0 0
      %354 = vmatpush2.bf16.msra.mxu0 0
      %355 = vmatprep.subr.bf16.mxu0 0
      %356 = vmatpush2.bf16.msra.mxu0 0
      %357 = vmatprep.subr.bf16.mxu0 0
      %358 = vmatpush2.bf16.msra.mxu0 0
      %359 = vmatprep.subr.bf16.mxu0 0
      %360 = vmatpush2.bf16.msra.mxu0 0
      %361 = vmatprep.subr.bf16.mxu0 0
      %362 = vmatpush2.bf16.msra.mxu0 0
      %363 = vmatprep.subr.bf16.mxu0 0
      %364 = vmatpush2.bf16.msra.mxu0 0
      %365 = vmatprep.subr.bf16.mxu0 0
      %366 = vmatpush2.bf16.msra.mxu0 0
      %367 = vmatprep.mubr.bf16.mxu0 0
      %368 = vmatmul.mubr.bf16.gmra.mxu0 %v232
      %v369 = vpop.f32.mrf.mxu0
      %v370 = vadd.f32 0.0, %v369
      %v371 = vpop.f32.mrf.mxu0
      %v372 = vpop.f32.mrf.mxu0
      %v373 = vpop.f32.mrf.mxu0
      %374 = vdwg.mxu0
      %v375 = vadd.f32 %v286, %v370
      %v378 = vunpack.c.l.b16 %v233
      %v379 = vunpack.c.l.b16 %v234
      %v380 = vpack.c.b16 %v379, %v378
      %v382 = vshrl.u32 %v380, 16
      %v384 = vshll.u32 %v380, 16
      %v386 = vrot.slane %v384, 1
      %v387 = vor.u32 %v382, %v386
      %v405 = vunpack.c.l.b16 %v254
      %v406 = vunpack.c.l.b16 %v255
      %v407 = vunpack.c.l.b16 %v256
      %v408 = vunpack.c.l.b16 %v257
      %v409 = vunpack.c.l.b16 %v258
      %v410 = vunpack.c.l.b16 %v259
      %v411 = vunpack.c.l.b16 %v260
      %v412 = vunpack.c.l.b16 %v261
      %v413 = vunpack.c.l.b16 %v262
      %v414 = vunpack.c.l.b16 %v263
      %v415 = vunpack.c.l.b16 %v264
      %v416 = vunpack.c.l.b16 %v265
      %v417 = vunpack.c.l.b16 %v266
      %v418 = vunpack.c.l.b16 %v267
      %v419 = vunpack.c.l.b16 %v268
      %v420 = vunpack.c.l.b16 %v269
      %v421 = vpack.c.b16 %v406, %v405
      %v422 = vpack.c.b16 %v408, %v407
      %v423 = vpack.c.b16 %v410, %v409
      %v424 = vpack.c.b16 %v412, %v411
      %v425 = vpack.c.b16 %v414, %v413
      %v426 = vpack.c.b16 %v416, %v415
      %v427 = vpack.c.b16 %v418, %v417
      %v428 = vpack.c.b16 %v420, %v419
      %437 = vmatprep.subr.bf16.mxu0 0
      %438 = vmatpush1.bf16.msra.mxu0 %v428
      %439 = vmatprep.subr.bf16.mxu0 0
      %440 = vmatpush1.bf16.msra.mxu0 %v427
      %441 = vmatprep.subr.bf16.mxu0 0
      %442 = vmatpush1.bf16.msra.mxu0 %v426
      %443 = vmatprep.subr.bf16.mxu0 0
      %444 = vmatpush1.bf16.msra.mxu0 %v425
      %445 = vmatprep.subr.bf16.mxu0 0
      %446 = vmatpush1.bf16.msra.mxu0 %v424
      %447 = vmatprep.subr.bf16.mxu0 0
      %448 = vmatpush1.bf16.msra.mxu0 %v423
      %449 = vmatprep.subr.bf16.mxu0 0
      %450 = vmatpush1.bf16.msra.mxu0 %v422
      %451 = vmatprep.subr.bf16.mxu0 0
      %452 = vmatpush1.bf16.msra.mxu0 %v421
      %453 = vmatprep.subr.bf16.mxu0 0
      %454 = vmatpush2.bf16.msra.mxu0 0
      %455 = vmatprep.subr.bf16.mxu0 0
      %456 = vmatpush2.bf16.msra.mxu0 0
      %457 = vmatprep.subr.bf16.mxu0 0
      %458 = vmatpush2.bf16.msra.mxu0 0
      %459 = vmatprep.subr.bf16.mxu0 0
      %460 = vmatpush2.bf16.msra.mxu0 0
      %461 = vmatprep.subr.bf16.mxu0 0
      %462 = vmatpush2.bf16.msra.mxu0 0
      %463 = vmatprep.subr.bf16.mxu0 0
      %464 = vmatpush2.bf16.msra.mxu0 0
      %465 = vmatprep.subr.bf16.mxu0 0
      %466 = vmatpush2.bf16.msra.mxu0 0
      %467 = vmatprep.subr.bf16.mxu0 0
      %468 = vmatpush2.bf16.msra.mxu0 0
      %469 = vmatprep.mubr.bf16.mxu0 0
      %470 = vmatmul.mubr.bf16.gmra.mxu0 %v387
      %v471 = vpop.f32.mrf.mxu0
      %v472 = vadd.f32 0.0, %v471
      %v473 = vpop.f32.mrf.mxu0
      %v474 = vpop.f32.mrf.mxu0
      %v475 = vpop.f32.mrf.mxu0
      %476 = vdwg.mxu0
      %v477 = vadd.f32 %v375, %v472
      %v479 = vunpack.c.l.b16 %v232
      %v480 = vpack.c.b16 %v378, %v479
      %v482 = vshrl.u32 %v480, 16
      %v484 = vshll.u32 %v480, 16
      %v486 = vrot.slane %v484, 1
      %v487 = vor.u32 %v482, %v486
      %v505 = vunpack.c.l.b16 %v270
      %v506 = vunpack.c.l.b16 %v271
      %v507 = vunpack.c.l.b16 %v272
      %v508 = vunpack.c.l.b16 %v273
      %v509 = vunpack.c.l.b16 %v274
      %v510 = vunpack.c.l.b16 %v275
      %v511 = vunpack.c.l.b16 %v276
      %v512 = vunpack.c.l.b16 %v277
      %v513 = vunpack.c.l.b16 %v278
      %v514 = vunpack.c.l.b16 %v279
      %v515 = vunpack.c.l.b16 %v280
      %v516 = vunpack.c.l.b16 %v281
      %v517 = vunpack.c.l.b16 %v282
      %v518 = vunpack.c.l.b16 %v283
      %v519 = vunpack.c.l.b16 %v284
      %v520 = vunpack.c.l.b16 %v285
      %v521 = vpack.c.b16 %v506, %v505
      %v522 = vpack.c.b16 %v508, %v507
      %v523 = vpack.c.b16 %v510, %v509
      %v524 = vpack.c.b16 %v512, %v511
      %v525 = vpack.c.b16 %v514, %v513
      %v526 = vpack.c.b16 %v516, %v515
      %v527 = vpack.c.b16 %v518, %v517
      %v528 = vpack.c.b16 %v520, %v519
      %537 = vmatprep.subr.bf16.mxu0 0
      %538 = vmatpush1.bf16.msra.mxu0 %v528
      %539 = vmatprep.subr.bf16.mxu0 0
      %540 = vmatpush1.bf16.msra.mxu0 %v527
      %541 = vmatprep.subr.bf16.mxu0 0
      %542 = vmatpush1.bf16.msra.mxu0 %v526
      %543 = vmatprep.subr.bf16.mxu0 0
      %544 = vmatpush1.bf16.msra.mxu0 %v525
      %545 = vmatprep.subr.bf16.mxu0 0
      %546 = vmatpush1.bf16.msra.mxu0 %v524
      %547 = vmatprep.subr.bf16.mxu0 0
      %548 = vmatpush1.bf16.msra.mxu0 %v523
      %549 = vmatprep.subr.bf16.mxu0 0
      %550 = vmatpush1.bf16.msra.mxu0 %v522
      %551 = vmatprep.subr.bf16.mxu0 0
      %552 = vmatpush1.bf16.msra.mxu0 %v521
      %553 = vmatprep.subr.bf16.mxu0 0
      %554 = vmatpush2.bf16.msra.mxu0 0
      %555 = vmatprep.subr.bf16.mxu0 0
      %556 = vmatpush2.bf16.msra.mxu0 0
      %557 = vmatprep.subr.bf16.mxu0 0
      %558 = vmatpush2.bf16.msra.mxu0 0
      %559 = vmatprep.subr.bf16.mxu0 0
      %560 = vmatpush2.bf16.msra.mxu0 0
      %561 = vmatprep.subr.bf16.mxu0 0
      %562 = vmatpush2.bf16.msra.mxu0 0
      %563 = vmatprep.subr.bf16.mxu0 0
      %564 = vmatpush2.bf16.msra.mxu0 0
      %565 = vmatprep.subr.bf16.mxu0 0
      %566 = vmatpush2.bf16.msra.mxu0 0
      %567 = vmatprep.subr.bf16.mxu0 0
      %568 = vmatpush2.bf16.msra.mxu0 0
      %569 = vmatprep.mubr.bf16.mxu0 0
      %570 = vmatmul.mubr.bf16.gmra.mxu0 %v487
      %v571 = vpop.f32.mrf.mxu0
      %v572 = vadd.f32 0.0, %v571
      %v573 = vpop.f32.mrf.mxu0
      %v574 = vpop.f32.mrf.mxu0
      %v575 = vpop.f32.mrf.mxu0
      %576 = vdwg.mxu0
      %v577 = vadd.f32 %v477, %v572
      %578 = vst [vmem:[#allocation2] sm:$0xff] %v577
      %p579 = scmp.eq.s32.totalorder %s21, 2
      // Predicated region
      $region37: #{resnet_generator_forward.21} parent=31 // pred_check
        %p580 = pneg %p579
      $region38: #{resnet_generator_forward.21} parent=31 // pred_check_branch
        %582 = sbr.rel (%p580) target = $region40
      $region39: #{resnet_generator_forward.21} parent=31 // pred_region
        %v583 = vld [vmem:[#allocation2] sm:$0xff]
        %v584 = vld [vmem:[%s2] sm:$0x1]
        %v586 = vlaneseq
        %v587 = vshrl.u32 %v586, 7
        %v588 = vsub.s32 0, %v587
        %v589 = vrot.slane %v584, %v588
        %v591 = vadd.f32 %v583, %v589
        %v592 = vpack.c.bf16 %v591, %v591
        %593 = vst [vmem:[%s225] sm:$0xf] %v592
      $region40: #{resnet_generator_forward.21} parent=31 // pred_fallthru
        _
      %p594 = scmp.lt.s32.totalorder %s19, 1
      %s595 = scalar_select %p594, %s19, 1
      %p596 = scmp.lt.s32.totalorder %s20, 7
      %s597 = scalar_select %p596, %s20, 7
      %s598 = smul.addr %s595, 8
      %s599 = sadd.s32 %s597, %s598
      %s600 = smul.addr %s599, 4
      %s601 = scalar_lea.vmem %s3, %s600
      // Predicated region
      $region41: #{resnet_generator_forward.21} parent=31 // pred_check
        %p602 = pneg %p127
      $region42: #{resnet_generator_forward.21} parent=31 // pred_check_branch
        %604 = sbr.rel (%p602) target = $region44
      $region43: #{resnet_generator_forward.21} parent=31 // pred_region
        _
      $region44: #{resnet_generator_forward.21} parent=31 // pred_fallthru
        _
    $region32: #{resnet_generator_forward.21} parent=5 // pred_fallthru
      _
    %p605 = scmp.le.s32.totalorder 2, %s9
    // Predicated region
    $region45: #{resnet_generator_forward.21} parent=5 // pred_check
      %p606 = pneg %p605
    $region46: #{resnet_generator_forward.21} parent=5 // pred_check_branch
      %608 = sbr.rel (%p606) target = $region48
    $region47: #{resnet_generator_forward.21} parent=5 // pred_region
      %s609 = ssub.s32 %s9, 2
      // Predicated region
      $region49: #{resnet_generator_forward.21} parent=47 // pred_check
        %p610 = pneg %p133
      $region50: #{resnet_generator_forward.21} parent=47 // pred_check_branch
        %612 = sbr.rel (%p610) target = $region52
      $region51: #{resnet_generator_forward.21} parent=47 // pred_region
        %p613 = scmp.lt.s32.totalorder %s22, 1
        %s614 = scalar_select %p613, %s22, 1
        %p615 = scmp.lt.s32.totalorder %s23, 7
        %s616 = scalar_select %p615, %s23, 7
        %s617 = smul.addr %s614, 8
        %s618 = sadd.s32 %s616, %s617
        %s619 = smul.addr %s618, 4
        %s620 = scalar_lea.vmem %s3, %s619
      $region52: #{resnet_generator_forward.21} parent=47 // pred_fallthru
        _
    $region48: #{resnet_generator_forward.21} parent=5 // pred_fallthru
      _
  $region6: #{resnet_generator_forward.21} parent=0 // loop_footer
    %s13 = sadd.s32 1, %s9
  $region7: #{resnet_generator_forward.21} parent=0 // loop_footer_branch
    %8 = sbr.rel target = $region3
  $region8: #{resnet_generator_forward.21} parent=0 // loop_exit
    _

// kernel: resnet_generator_forward.22
$region0: #{resnet_generator_forward.22}
  #allocation0 [shape = 'u32[]', space=smem, size = 0x4, offset = 0x4, fixed_abs, tag = 'smem constant byte address 0x4 - core index']
  #allocation1 [shape = 'u32[144,128]{1,0:T(1,128)}', space=vmem, size = 0x12000, scoped, tag = 'internal scratch']
  #allocation2 [shape = 'f32[1,128]{1,0:T(1,128)}', space=vmem, size = 0x200, scoped, tag = 'scratch operand']
  #allocation3 [shape = 'f32[1,128]{1,0:T(1,128)}', space=vmem, size = 0x200, scoped, tag = 'scratch operand']
  %s0 = inlined_call_operand.vmem [shape: bf16[2,64,128], index: 0, kind: input, shape index: {}]
  %s1 = inlined_call_operand.vmem [shape: bf16[2,64,128], index: 1, kind: output, shape index: {}]
  %s2 = sld [smem:[#allocation0]]
  $region53: #{resnet_generator_forward.22} parent=0
    _
  %s4 = ssub.s32 1, %s2
  %s5 = scalar_select 0, %s4, %s2
  loop: start=0, step=1, limit=6
  $region2: #{resnet_generator_forward.22} parent=0 // loop_pre_header
    _
  $region3: #{resnet_generator_forward.22} parent=0 // loop_header
    %s7 = sphi 0, %s11
    %p8 = scmp.ge.s32.totalorder %s7, 6
    %s14 = sphi 0, %s33
    %s15 = sphi 0, %s29
    %s16 = sphi 0, %s25
    %s17 = sphi 0, %s14
    %s18 = sphi 0, %s15
    %s19 = sphi 0, %s16
    %s20 = sphi 0, %s17
    %s21 = sphi 0, %s18
    %s22 = sphi 0, %s19
    %s38 = sphi 0, %s40
    %s41 = sphi 0, %s38
    %s42 = sphi 0, %s41
    %s58 = sphi 0, %s42
    %s68 = sphi 0, %s70
    %s71 = sphi 0, %s68
    %s72 = sphi 0, %s71
    %s88 = sphi 0, %s72
  $region4: #{resnet_generator_forward.22} parent=0 // loop_header_branch
    %10 = sbr.rel (%p8) target = $region8
  $region5: #{resnet_generator_forward.22} parent=0 // loop_body
    %s12 = ssub.s32 %s7, 1
    %s13 = ssub.s32 %s7, 2
    %s23 = sadd.s32 1, %s16
    %p24 = scmp.ge.s32.totalorder %s23, 1
    %s25 = scalar_select %p24, 0, %s23
    %s26 = sadd.s32 1, %s15
    %s27 = scalar_select %p24, %s26, %s15
    %p28 = scmp.ge.s32.totalorder %s27, 2
    %s29 = scalar_select %p28, 0, %s27
    %s30 = sadd.s32 1, %s14
    %s31 = scalar_select %p28, %s30, %s14
    %p32 = scmp.ge.s32.totalorder %s31, 2
    %s33 = scalar_select %p32, 0, %s31
    %s34 = ssub.s32 %s14, %s33
    %s35 = ssub.s32 %s16, %s25
    %s36 = sor.u32 %s34, %s35
    %p37 = scmp.eq.s32.totalorder %s36, 0
    %s39 = sadd.s32 %s38, 1
    %s40 = scalar_select %p37, %s38, %s39
    %p43 = pneg %p37
    %p44 = scmp.eq.s32.totalorder %s7, 3
    %p45 = por %p43, %p44
    %p46 = scmp.ne.s32.totalorder %s38, %s41
    %p47 = scmp.eq.s32.totalorder %s7, 0
    %p48 = por %p46, %p47
    %p49 = scmp.ne.s32.totalorder %s38, %s41
    %p50 = scmp.eq.s32.totalorder %s12, 3
    %p51 = por %p49, %p50
    %p52 = scmp.ne.s32.totalorder %s41, %s42
    %p53 = scmp.eq.s32.totalorder %s12, 0
    %p54 = por %p52, %p53
    %p55 = scmp.ne.s32.totalorder %s41, %s42
    %p56 = scmp.eq.s32.totalorder %s13, 3
    %p57 = por %p55, %p56
    %p59 = scmp.ne.s32.totalorder %s42, %s58
    %p60 = scmp.eq.s32.totalorder %s13, 0
    %p61 = por %p59, %p60
    %s62 = smul.u32 %s16, %s15
    %s63 = smul.u32 %s25, %s29
    %s64 = ssub.s32 %s14, %s33
    %s65 = ssub.s32 %s62, %s63
    %s66 = sor.u32 %s64, %s65
    %p67 = scmp.eq.s32.totalorder %s66, 0
    %s69 = sadd.s32 %s68, 1
    %s70 = scalar_select %p67, %s68, %s69
    %p73 = pneg %p67
    %p74 = scmp.eq.s32.totalorder %s7, 3
    %p75 = por %p73, %p74
    %p76 = scmp.ne.s32.totalorder %s68, %s71
    %p77 = scmp.eq.s32.totalorder %s7, 0
    %p78 = por %p76, %p77
    %p79 = scmp.ne.s32.totalorder %s68, %s71
    %p80 = scmp.eq.s32.totalorder %s12, 3
    %p81 = por %p79, %p80
    %p82 = scmp.ne.s32.totalorder %s71, %s72
    %p83 = scmp.eq.s32.totalorder %s12, 0
    %p84 = por %p82, %p83
    %p85 = scmp.ne.s32.totalorder %s71, %s72
    %p86 = scmp.eq.s32.totalorder %s13, 3
    %p87 = por %p85, %p86
    %p89 = scmp.ne.s32.totalorder %s72, %s88
    %p90 = scmp.eq.s32.totalorder %s13, 0
    %p91 = por %p89, %p90
    %p92 = scmp.le.s32.totalorder 1, %s7
    %p93 = scmp.lt.s32.totalorder %s7, 5
    %p94 = pnand %p92, %p93
    %p95 = pneg %p94
    // Predicated region
    $region9: #{resnet_generator_forward.22} parent=5 // pred_check
      _
    $region10: #{resnet_generator_forward.22} parent=5 // pred_check_branch
      %97 = sbr.rel (%p94) target = $region12
    $region11: #{resnet_generator_forward.22} parent=5 // pred_region
      %s98 = ssub.s32 %s7, 1
    $region12: #{resnet_generator_forward.22} parent=5 // pred_fallthru
      _
    %p99 = scmp.lt.s32.totalorder %s7, 4
    // Predicated region
    $region13: #{resnet_generator_forward.22} parent=5 // pred_check
      %p100 = pneg %p99
    $region14: #{resnet_generator_forward.22} parent=5 // pred_check_branch
      %102 = sbr.rel (%p100) target = $region16
    $region15: #{resnet_generator_forward.22} parent=5 // pred_region
      // Predicated region
      $region17: #{resnet_generator_forward.22} parent=15 // pred_check
        %p103 = pneg %p48
      $region18: #{resnet_generator_forward.22} parent=15 // pred_check_branch
        %105 = sbr.rel (%p103) target = $region20
      $region19: #{resnet_generator_forward.22} parent=15 // pred_region
        %s106 = smul.u32 8, %s16
        %p107 = scmp.lt.s32.totalorder %s14, 1
        %s108 = scalar_select %p107, %s14, 1
        %p109 = scmp.lt.s32.totalorder %s106, 7
        %s110 = scalar_select %p109, %s106, 7
        %s111 = smul.addr %s108, 8
        %s112 = sadd.s32 %s110, %s111
        %s113 = smul.addr %s112, 4
        %s114 = scalar_lea.vmem %s0, %s113
        %s115 = smul.u32 8, %s16
      $region20: #{resnet_generator_forward.22} parent=15 // pred_fallthru
        _
    $region16: #{resnet_generator_forward.22} parent=5 // pred_fallthru
      _
    %p116 = scmp.le.s32.totalorder 1, %s7
    %p117 = scmp.lt.s32.totalorder %s7, 5
    %p118 = pnand %p116, %p117
    %p119 = pneg %p118
    // Predicated region
    $region21: #{resnet_generator_forward.22} parent=5 // pred_check
      _
    $region22: #{resnet_generator_forward.22} parent=5 // pred_check_branch
      %121 = sbr.rel (%p118) target = $region24
    $region23: #{resnet_generator_forward.22} parent=5 // pred_region
      %s122 = ssub.s32 %s7, 1
      %s123 = smul.u32 8, %s19
      %p124 = scmp.lt.s32.totalorder %s17, 1
      %s125 = scalar_select %p124, %s17, 1
      %p126 = scmp.lt.s32.totalorder %s123, 7
      %s127 = scalar_select %p126, %s123, 7
      %s128 = smul.addr %s125, 8
      %s129 = sadd.s32 %s127, %s128
      %s130 = smul.addr %s129, 4
      %s131 = scalar_lea.vmem %s0, %s130
      %p132 = pneg %p54
      %p133 = pneg %p51
      %p134 = pneg %p84
      %p135 = pneg %p81
      %s136 = smul.u32 %s19, %s18
      %s137 = smul.u32 8, %s136
      %p138 = scmp.lt.s32.totalorder %s17, 1
      %s139 = scalar_select %p138, %s17, 1
      %p140 = scmp.lt.s32.totalorder %s137, 7
      %s141 = scalar_select %p140, %s137, 7
      %s142 = smul.addr %s139, 8
      %s143 = sadd.s32 %s141, %s142
      %s144 = smul.addr %s143, 4
      %s145 = scalar_lea.vmem %s1, %s144
      %s146 = smul.u32 8, %s19
      %p147 = scmp.lt.s32.totalorder %s17, 1
      %s148 = scalar_select %p147, %s17, 1
      %p149 = scmp.lt.s32.totalorder %s146, 7
      %s150 = scalar_select %p149, %s146, 7
      %s151 = smul.addr %s148, 8
      %s152 = sadd.s32 %s150, %s151
      %s153 = smul.addr %s152, 4
      %s154 = scalar_lea.vmem %s0, %s153
      %s155 = smul.u32 8, %s19
      %s156 = smul.u32 %s19, %s18
      %s157 = smul.u32 8, %s156
      %p158 = scmp.lt.s32.totalorder %s17, 1
      %s159 = scalar_select %p158, %s17, 1
      %p160 = scmp.lt.s32.totalorder %s157, 7
      %s161 = scalar_select %p160, %s157, 7
      %s162 = smul.addr %s159, 8
      %s163 = sadd.s32 %s161, %s162
      %s164 = smul.addr %s163, 4
      %s165 = scalar_lea.vmem %s1, %s164
      %s166 = smul.u32 %s19, %s18
      %s167 = smul.u32 8, %s166
      %p168 = scmp.eq.s32.totalorder %s18, 0
      %p169 = scmp.eq.s32.totalorder %s19, 0
      %p170 = pnand %p168, %p169
      %p171 = pneg %p170
      // Predicated region
      $region25: #{resnet_generator_forward.22} parent=23 // pred_check
        _
      $region26: #{resnet_generator_forward.22} parent=23 // pred_check_branch
        %173 = sbr.rel (%p170) target = $region28
      $region27: #{resnet_generator_forward.22} parent=23 // pred_region
        %174 = vst [vmem:[#allocation2] sm:$0x1] 0.0
        %175 = vst [vmem:[#allocation3] sm:$0x1] 0.0
      $region28: #{resnet_generator_forward.22} parent=23 // pred_fallthru
        _
      %v176 = vld [vmem:[%s154] sm:$0xf]
      %v177 = vld [vmem:[%s154 + $0x4] sm:$0xf]
      %v178 = vld [vmem:[%s154 + $0x8] sm:$0xf]
      %v179 = vld [vmem:[%s154 + $0xc] sm:$0xf]
      %v180 = vld [vmem:[%s154 + $0x10] sm:$0xf]
      %v181 = vld [vmem:[%s154 + $0x14] sm:$0xf]
      %v182 = vld [vmem:[%s154 + $0x18] sm:$0xf]
      %v183 = vld [vmem:[%s154 + $0x1c] sm:$0xf]
      %v184 = vunpack.c.l.bf16 %v176
      %v185 = vunpack.c.l.bf16 %v177
      %v186 = vunpack.c.l.bf16 %v178
      %v187 = vunpack.c.l.bf16 %v179
      %v188 = vunpack.c.l.bf16 %v180
      %v189 = vunpack.c.l.bf16 %v181
      %v190 = vunpack.c.l.bf16 %v182
      %v191 = vunpack.c.l.bf16 %v183
      // Predicated region
      $region29: #{resnet_generator_forward.22} parent=23 // pred_check
        %p192 = pneg %p168
      $region30: #{resnet_generator_forward.22} parent=23 // pred_check_branch
        %194 = sbr.rel (%p192) target = $region32
      $region31: #{resnet_generator_forward.22} parent=23 // pred_region
        %v195 = vld [vmem:[#allocation2] sm:$0x1]
        %v196 = vadd.f32 %v184, %v185
        %v197 = vadd.f32 %v196, %v186
        %v198 = vadd.f32 %v197, %v187
        %v199 = vadd.f32 %v198, %v188
        %v200 = vadd.f32 %v199, %v189
        %v201 = vadd.f32 %v200, %v190
        %v202 = vadd.f32 %v201, %v191
        %v203 = vrot.slane %v202, 4
        %v204 = vadd.f32 %v202, %v203
        %v205 = vrot.slane %v204, 2
        %v206 = vadd.f32 %v204, %v205
        %v207 = vrot.slane %v206, 1
        %v208 = vadd.f32 %v206, %v207
        %v209 = vadd.f32 %v195, %v208
        %210 = vst [vmem:[#allocation2] sm:$0x1] %v209
        %v211 = vld [vmem:[#allocation3] sm:$0x1]
        %v212 = vmul.f32 %v184, %v184
        %v213 = vmul.f32 %v185, %v185
        %v214 = vmul.f32 %v186, %v186
        %v215 = vmul.f32 %v187, %v187
        %v216 = vmul.f32 %v188, %v188
        %v217 = vmul.f32 %v189, %v189
        %v218 = vmul.f32 %v190, %v190
        %v219 = vmul.f32 %v191, %v191
        %v220 = vadd.f32 %v212, %v213
        %v221 = vadd.f32 %v220, %v214
        %v222 = vadd.f32 %v221, %v215
        %v223 = vadd.f32 %v222, %v216
        %v224 = vadd.f32 %v223, %v217
        %v225 = vadd.f32 %v224, %v218
        %v226 = vadd.f32 %v225, %v219
        %v227 = vrot.slane %v226, 4
        %v228 = vadd.f32 %v226, %v227
        %v229 = vrot.slane %v228, 2
        %v230 = vadd.f32 %v228, %v229
        %v231 = vrot.slane %v230, 1
        %v232 = vadd.f32 %v230, %v231
        %v233 = vadd.f32 %v211, %v232
        %234 = vst [vmem:[#allocation3] sm:$0x1] %v233
      $region32: #{resnet_generator_forward.22} parent=23 // pred_fallthru
        _
      // Predicated region
      $region33: #{resnet_generator_forward.22} parent=23 // pred_check
        _
      $region34: #{resnet_generator_forward.22} parent=23 // pred_check_branch
        %236 = sbr.rel (%p170) target = $region36
      $region35: #{resnet_generator_forward.22} parent=23 // pred_region
        %v237 = vld [vmem:[#allocation2] sm:$0x1]
        %v238 = vrcp.pop 64.0
        %v239 = vmul.f32 %v237, %v238
        %v240 = vld [vmem:[#allocation3] sm:$0x1]
        %v241 = vmul.f32 %v240, %v238
        %v242 = vmul.f32 %v239, %v239
        %v243 = vsub.f32 %v241, %v242
        %244 = vst [vmem:[#allocation2] sm:$0x1] %v239
        %v245 = vmax.f32 %v243, 0.0
        %v246 = vadd.f32 %v245, 1e-05
        %v247 = vrsqrt.pop %v246
        %248 = vst [vmem:[#allocation3] sm:$0x1] %v247
      $region36: #{resnet_generator_forward.22} parent=23 // pred_fallthru
        _
      %p249 = scmp.eq.s32.totalorder %s18, 1
      // Predicated region
      $region37: #{resnet_generator_forward.22} parent=23 // pred_check
        %p250 = pneg %p249
      $region38: #{resnet_generator_forward.22} parent=23 // pred_check_branch
        %252 = sbr.rel (%p250) target = $region40
      $region39: #{resnet_generator_forward.22} parent=23 // pred_region
        %v253 = vld [vmem:[#allocation2] sm:$0x1]
        %v255 = vlaneseq
        %v256 = vshrl.u32 %v255, 7
        %v257 = vsub.s32 0, %v256
        %v258 = vrot.slane %v253, %v257
        %v260 = vsub.f32 %v184, %v258
        %v261 = vsub.f32 %v185, %v258
        %v262 = vsub.f32 %v186, %v258
        %v263 = vsub.f32 %v187, %v258
        %v264 = vsub.f32 %v188, %v258
        %v265 = vsub.f32 %v189, %v258
        %v266 = vsub.f32 %v190, %v258
        %v267 = vsub.f32 %v191, %v258
        %v268 = vld [vmem:[#allocation3] sm:$0x1]
        %v270 = vlaneseq
        %v271 = vshrl.u32 %v270, 7
        %v272 = vsub.s32 0, %v271
        %v273 = vrot.slane %v268, %v272
        %v275 = vmul.f32 %v260, %v273
        %v276 = vmul.f32 %v261, %v273
        %v277 = vmul.f32 %v262, %v273
        %v278 = vmul.f32 %v263, %v273
        %v279 = vmul.f32 %v264, %v273
        %v280 = vmul.f32 %v265, %v273
        %v281 = vmul.f32 %v266, %v273
        %v282 = vmul.f32 %v267, %v273
        %v283 = vmax.f32 %v275, 0.0
        %v284 = vmax.f32 %v276, 0.0
        %v285 = vmax.f32 %v277, 0.0
        %v286 = vmax.f32 %v278, 0.0
        %v287 = vmax.f32 %v279, 0.0
        %v288 = vmax.f32 %v280, 0.0
        %v289 = vmax.f32 %v281, 0.0
        %v290 = vmax.f32 %v282, 0.0
        %v291 = vpack.c.bf16 %v284, %v283
        %v292 = vpack.c.bf16 %v286, %v285
        %v293 = vpack.c.bf16 %v288, %v287
        %v294 = vpack.c.bf16 %v290, %v289
        %v299 = vunpack.c.l.b16 %v291
        %v300 = vunpack.c.h.b16 %v291
        %v301 = vunpack.c.l.b16 %v292
        %v302 = vunpack.c.h.b16 %v292
        %v303 = vunpack.c.l.b16 %v293
        %v304 = vunpack.c.h.b16 %v293
        %v305 = vunpack.c.l.b16 %v294
        %v306 = vunpack.c.h.b16 %v294
        %v307 = vpack.c.b16 %v299, %v299
        %v308 = vpack.c.b16 %v300, %v300
        %v309 = vpack.c.b16 %v301, %v301
        %v310 = vpack.c.b16 %v302, %v302
        %v311 = vpack.c.b16 %v303, %v303
        %v312 = vpack.c.b16 %v304, %v304
        %v313 = vpack.c.b16 %v305, %v305
        %v314 = vpack.c.b16 %v306, %v306
        %323 = vst [vmem:[%s165] sm:$0xf] %v307
        %324 = vst [vmem:[%s165 + $0x4] sm:$0xf] %v308
        %325 = vst [vmem:[%s165 + $0x8] sm:$0xf] %v309
        %326 = vst [vmem:[%s165 + $0xc] sm:$0xf] %v310
        %327 = vst [vmem:[%s165 + $0x10] sm:$0xf] %v311
        %328 = vst [vmem:[%s165 + $0x14] sm:$0xf] %v312
        %329 = vst [vmem:[%s165 + $0x18] sm:$0xf] %v313
        %330 = vst [vmem:[%s165 + $0x1c] sm:$0xf] %v314
      $region40: #{resnet_generator_forward.22} parent=23 // pred_fallthru
        _
      %s331 = smul.u32 %s19, %s18
      %s332 = smul.u32 8, %s331
      %p333 = scmp.lt.s32.totalorder %s17, 1
      %s334 = scalar_select %p333, %s17, 1
      %p335 = scmp.lt.s32.totalorder %s332, 7
      %s336 = scalar_select %p335, %s332, 7
      %s337 = smul.addr %s334, 8
      %s338 = sadd.s32 %s336, %s337
      %s339 = smul.addr %s338, 4
      %s340 = scalar_lea.vmem %s1, %s339
      // Predicated region
      $region41: #{resnet_generator_forward.22} parent=23 // pred_check
        %p341 = pneg %p81
      $region42: #{resnet_generator_forward.22} parent=23 // pred_check_branch
        %343 = sbr.rel (%p341) target = $region44
      $region43: #{resnet_generator_forward.22} parent=23 // pred_region
        %s344 = smul.u32 %s19, %s18
        %s345 = smul.u32 8, %s344
      $region44: #{resnet_generator_forward.22} parent=23 // pred_fallthru
        _
    $region24: #{resnet_generator_forward.22} parent=5 // pred_fallthru
      _
    %p346 = scmp.le.s32.totalorder 2, %s7
    // Predicated region
    $region45: #{resnet_generator_forward.22} parent=5 // pred_check
      %p347 = pneg %p346
    $region46: #{resnet_generator_forward.22} parent=5 // pred_check_branch
      %349 = sbr.rel (%p347) target = $region48
    $region47: #{resnet_generator_forward.22} parent=5 // pred_region
      %s350 = ssub.s32 %s7, 2
      // Predicated region
      $region49: #{resnet_generator_forward.22} parent=47 // pred_check
        %p351 = pneg %p87
      $region50: #{resnet_generator_forward.22} parent=47 // pred_check_branch
        %353 = sbr.rel (%p351) target = $region52
      $region51: #{resnet_generator_forward.22} parent=47 // pred_region
        %s354 = smul.u32 %s22, %s21
        %s355 = smul.u32 8, %s354
        %p356 = scmp.lt.s32.totalorder %s20, 1
        %s357 = scalar_select %p356, %s20, 1
        %p358 = scmp.lt.s32.totalorder %s355, 7
        %s359 = scalar_select %p358, %s355, 7
        %s360 = smul.addr %s357, 8
        %s361 = sadd.s32 %s359, %s360
        %s362 = smul.addr %s361, 4
        %s363 = scalar_lea.vmem %s1, %s362
      $region52: #{resnet_generator_forward.22} parent=47 // pred_fallthru
        _
    $region48: #{resnet_generator_forward.22} parent=5 // pred_fallthru
      _
  $region6: #{resnet_generator_forward.22} parent=0 // loop_footer
    %s11 = sadd.s32 1, %s7
  $region7: #{resnet_generator_forward.22} parent=0 // loop_footer_branch
    %6 = sbr.rel target = $region3
  $region8: #{resnet_generator_forward.22} parent=0 // loop_exit
    _

// kernel: resnet_generator_forward.24
$region0: #{resnet_generator_forward.24}
  #allocation0 [shape = 'u32[]', space=smem, size = 0x4, offset = 0x4, fixed_abs, tag = 'smem constant byte address 0x4 - core index']
  #allocation1 [shape = 'u32[144,128]{1,0:T(1,128)}', space=vmem, size = 0x12000, scoped, tag = 'internal scratch']
  #allocation2 [shape = 'f32[1,128]{1,0:T(1,128)}', space=vmem, size = 0x200, scoped, tag = 'scratch operand']
  #allocation3 [shape = 'f32[1,128]{1,0:T(1,128)}', space=vmem, size = 0x200, scoped, tag = 'scratch operand']
  %s0 = inlined_call_operand.vmem [shape: bf16[2,16,128], index: 0, kind: input, shape index: {}]
  %s1 = inlined_call_operand.vmem [shape: bf16[2,16,128], index: 1, kind: output, shape index: {}]
  %s2 = sld [smem:[#allocation0]]
  $region53: #{resnet_generator_forward.24} parent=0
    _
  %s4 = ssub.s32 1, %s2
  %s5 = scalar_select 0, %s4, %s2
  loop: start=0, step=1, limit=6
  $region2: #{resnet_generator_forward.24} parent=0 // loop_pre_header
    _
  $region3: #{resnet_generator_forward.24} parent=0 // loop_header
    %s7 = sphi 0, %s11
    %p8 = scmp.ge.s32.totalorder %s7, 6
    %s14 = sphi 0, %s33
    %s15 = sphi 0, %s29
    %s16 = sphi 0, %s25
    %s17 = sphi 0, %s14
    %s18 = sphi 0, %s15
    %s19 = sphi 0, %s16
    %s20 = sphi 0, %s17
    %s21 = sphi 0, %s18
    %s22 = sphi 0, %s19
    %s38 = sphi 0, %s40
    %s41 = sphi 0, %s38
    %s42 = sphi 0, %s41
    %s58 = sphi 0, %s42
    %s68 = sphi 0, %s70
    %s71 = sphi 0, %s68
    %s72 = sphi 0, %s71
    %s88 = sphi 0, %s72
  $region4: #{resnet_generator_forward.24} parent=0 // loop_header_branch
    %10 = sbr.rel (%p8) target = $region8
  $region5: #{resnet_generator_forward.24} parent=0 // loop_body
    %s12 = ssub.s32 %s7, 1
    %s13 = ssub.s32 %s7, 2
    %s23 = sadd.s32 1, %s16
    %p24 = scmp.ge.s32.totalorder %s23, 1
    %s25 = scalar_select %p24, 0, %s23
    %s26 = sadd.s32 1, %s15
    %s27 = scalar_select %p24, %s26, %s15
    %p28 = scmp.ge.s32.totalorder %s27, 2
    %s29 = scalar_select %p28, 0, %s27
    %s30 = sadd.s32 1, %s14
    %s31 = scalar_select %p28, %s30, %s14
    %p32 = scmp.ge.s32.totalorder %s31, 2
    %s33 = scalar_select %p32, 0, %s31
    %s34 = ssub.s32 %s14, %s33
    %s35 = ssub.s32 %s16, %s25
    %s36 = sor.u32 %s34, %s35
    %p37 = scmp.eq.s32.totalorder %s36, 0
    %s39 = sadd.s32 %s38, 1
    %s40 = scalar_select %p37, %s38, %s39
    %p43 = pneg %p37
    %p44 = scmp.eq.s32.totalorder %s7, 3
    %p45 = por %p43, %p44
    %p46 = scmp.ne.s32.totalorder %s38, %s41
    %p47 = scmp.eq.s32.totalorder %s7, 0
    %p48 = por %p46, %p47
    %p49 = scmp.ne.s32.totalorder %s38, %s41
    %p50 = scmp.eq.s32.totalorder %s12, 3
    %p51 = por %p49, %p50
    %p52 = scmp.ne.s32.totalorder %s41, %s42
    %p53 = scmp.eq.s32.totalorder %s12, 0
    %p54 = por %p52, %p53
    %p55 = scmp.ne.s32.totalorder %s41, %s42
    %p56 = scmp.eq.s32.totalorder %s13, 3
    %p57 = por %p55, %p56
    %p59 = scmp.ne.s32.totalorder %s42, %s58
    %p60 = scmp.eq.s32.totalorder %s13, 0
    %p61 = por %p59, %p60
    %s62 = smul.u32 %s16, %s15
    %s63 = smul.u32 %s25, %s29
    %s64 = ssub.s32 %s14, %s33
    %s65 = ssub.s32 %s62, %s63
    %s66 = sor.u32 %s64, %s65
    %p67 = scmp.eq.s32.totalorder %s66, 0
    %s69 = sadd.s32 %s68, 1
    %s70 = scalar_select %p67, %s68, %s69
    %p73 = pneg %p67
    %p74 = scmp.eq.s32.totalorder %s7, 3
    %p75 = por %p73, %p74
    %p76 = scmp.ne.s32.totalorder %s68, %s71
    %p77 = scmp.eq.s32.totalorder %s7, 0
    %p78 = por %p76, %p77
    %p79 = scmp.ne.s32.totalorder %s68, %s71
    %p80 = scmp.eq.s32.totalorder %s12, 3
    %p81 = por %p79, %p80
    %p82 = scmp.ne.s32.totalorder %s71, %s72
    %p83 = scmp.eq.s32.totalorder %s12, 0
    %p84 = por %p82, %p83
    %p85 = scmp.ne.s32.totalorder %s71, %s72
    %p86 = scmp.eq.s32.totalorder %s13, 3
    %p87 = por %p85, %p86
    %p89 = scmp.ne.s32.totalorder %s72, %s88
    %p90 = scmp.eq.s32.totalorder %s13, 0
    %p91 = por %p89, %p90
    %p92 = scmp.le.s32.totalorder 1, %s7
    %p93 = scmp.lt.s32.totalorder %s7, 5
    %p94 = pnand %p92, %p93
    %p95 = pneg %p94
    // Predicated region
    $region9: #{resnet_generator_forward.24} parent=5 // pred_check
      _
    $region10: #{resnet_generator_forward.24} parent=5 // pred_check_branch
      %97 = sbr.rel (%p94) target = $region12
    $region11: #{resnet_generator_forward.24} parent=5 // pred_region
      %s98 = ssub.s32 %s7, 1
    $region12: #{resnet_generator_forward.24} parent=5 // pred_fallthru
      _
    %p99 = scmp.lt.s32.totalorder %s7, 4
    // Predicated region
    $region13: #{resnet_generator_forward.24} parent=5 // pred_check
      %p100 = pneg %p99
    $region14: #{resnet_generator_forward.24} parent=5 // pred_check_branch
      %102 = sbr.rel (%p100) target = $region16
    $region15: #{resnet_generator_forward.24} parent=5 // pred_region
      // Predicated region
      $region17: #{resnet_generator_forward.24} parent=15 // pred_check
        %p103 = pneg %p48
      $region18: #{resnet_generator_forward.24} parent=15 // pred_check_branch
        %105 = sbr.rel (%p103) target = $region20
      $region19: #{resnet_generator_forward.24} parent=15 // pred_region
        %s106 = smul.u32 2, %s16
        %p107 = scmp.lt.s32.totalorder %s14, 1
        %s108 = scalar_select %p107, %s14, 1
        %p109 = scmp.lt.s32.totalorder %s106, 1
        %s110 = scalar_select %p109, %s106, 1
        %s111 = smul.addr %s108, 2
        %s112 = sadd.s32 %s110, %s111
        %s113 = smul.addr %s112, 4
        %s114 = scalar_lea.vmem %s0, %s113
        %s115 = smul.u32 2, %s16
      $region20: #{resnet_generator_forward.24} parent=15 // pred_fallthru
        _
    $region16: #{resnet_generator_forward.24} parent=5 // pred_fallthru
      _
    %p116 = scmp.le.s32.totalorder 1, %s7
    %p117 = scmp.lt.s32.totalorder %s7, 5
    %p118 = pnand %p116, %p117
    %p119 = pneg %p118
    // Predicated region
    $region21: #{resnet_generator_forward.24} parent=5 // pred_check
      _
    $region22: #{resnet_generator_forward.24} parent=5 // pred_check_branch
      %121 = sbr.rel (%p118) target = $region24
    $region23: #{resnet_generator_forward.24} parent=5 // pred_region
      %s122 = ssub.s32 %s7, 1
      %s123 = smul.u32 2, %s19
      %p124 = scmp.lt.s32.totalorder %s17, 1
      %s125 = scalar_select %p124, %s17, 1
      %p126 = scmp.lt.s32.totalorder %s123, 1
      %s127 = scalar_select %p126, %s123, 1
      %s128 = smul.addr %s125, 2
      %s129 = sadd.s32 %s127, %s128
      %s130 = smul.addr %s129, 4
      %s131 = scalar_lea.vmem %s0, %s130
      %p132 = pneg %p54
      %p133 = pneg %p51
      %p134 = pneg %p84
      %p135 = pneg %p81
      %s136 = smul.u32 %s19, %s18
      %s137 = smul.u32 2, %s136
      %p138 = scmp.lt.s32.totalorder %s17, 1
      %s139 = scalar_select %p138, %s17, 1
      %p140 = scmp.lt.s32.totalorder %s137, 1
      %s141 = scalar_select %p140, %s137, 1
      %s142 = smul.addr %s139, 2
      %s143 = sadd.s32 %s141, %s142
      %s144 = smul.addr %s143, 4
      %s145 = scalar_lea.vmem %s1, %s144
      %s146 = smul.u32 2, %s19
      %p147 = scmp.lt.s32.totalorder %s17, 1
      %s148 = scalar_select %p147, %s17, 1
      %p149 = scmp.lt.s32.totalorder %s146, 1
      %s150 = scalar_select %p149, %s146, 1
      %s151 = smul.addr %s148, 2
      %s152 = sadd.s32 %s150, %s151
      %s153 = smul.addr %s152, 4
      %s154 = scalar_lea.vmem %s0, %s153
      %s155 = smul.u32 2, %s19
      %s156 = smul.u32 %s19, %s18
      %s157 = smul.u32 2, %s156
      %p158 = scmp.lt.s32.totalorder %s17, 1
      %s159 = scalar_select %p158, %s17, 1
      %p160 = scmp.lt.s32.totalorder %s157, 1
      %s161 = scalar_select %p160, %s157, 1
      %s162 = smul.addr %s159, 2
      %s163 = sadd.s32 %s161, %s162
      %s164 = smul.addr %s163, 4
      %s165 = scalar_lea.vmem %s1, %s164
      %s166 = smul.u32 %s19, %s18
      %s167 = smul.u32 2, %s166
      %p168 = scmp.eq.s32.totalorder %s18, 0
      %p169 = scmp.eq.s32.totalorder %s19, 0
      %p170 = pnand %p168, %p169
      %p171 = pneg %p170
      // Predicated region
      $region25: #{resnet_generator_forward.24} parent=23 // pred_check
        _
      $region26: #{resnet_generator_forward.24} parent=23 // pred_check_branch
        %173 = sbr.rel (%p170) target = $region28
      $region27: #{resnet_generator_forward.24} parent=23 // pred_region
        %174 = vst [vmem:[#allocation2] sm:$0x1] 0.0
        %175 = vst [vmem:[#allocation3] sm:$0x1] 0.0
      $region28: #{resnet_generator_forward.24} parent=23 // pred_fallthru
        _
      %v176 = vld [vmem:[%s154] sm:$0xf]
      %v177 = vld [vmem:[%s154 + $0x4] sm:$0xf]
      %v178 = vunpack.c.l.bf16 %v176
      %v179 = vunpack.c.l.bf16 %v177
      // Predicated region
      $region29: #{resnet_generator_forward.24} parent=23 // pred_check
        %p180 = pneg %p168
      $region30: #{resnet_generator_forward.24} parent=23 // pred_check_branch
        %182 = sbr.rel (%p180) target = $region32
      $region31: #{resnet_generator_forward.24} parent=23 // pred_region
        %v183 = vld [vmem:[#allocation2] sm:$0x1]
        %v184 = vadd.f32 %v178, %v179
        %v185 = vrot.slane %v184, 4
        %v186 = vadd.f32 %v184, %v185
        %v187 = vrot.slane %v186, 2
        %v188 = vadd.f32 %v186, %v187
        %v189 = vrot.slane %v188, 1
        %v190 = vadd.f32 %v188, %v189
        %v191 = vadd.f32 %v183, %v190
        %192 = vst [vmem:[#allocation2] sm:$0x1] %v191
        %v193 = vld [vmem:[#allocation3] sm:$0x1]
        %v194 = vmul.f32 %v178, %v178
        %v195 = vmul.f32 %v179, %v179
        %v196 = vadd.f32 %v194, %v195
        %v197 = vrot.slane %v196, 4
        %v198 = vadd.f32 %v196, %v197
        %v199 = vrot.slane %v198, 2
        %v200 = vadd.f32 %v198, %v199
        %v201 = vrot.slane %v200, 1
        %v202 = vadd.f32 %v200, %v201
        %v203 = vadd.f32 %v193, %v202
        %204 = vst [vmem:[#allocation3] sm:$0x1] %v203
      $region32: #{resnet_generator_forward.24} parent=23 // pred_fallthru
        _
      // Predicated region
      $region33: #{resnet_generator_forward.24} parent=23 // pred_check
        _
      $region34: #{resnet_generator_forward.24} parent=23 // pred_check_branch
        %206 = sbr.rel (%p170) target = $region36
      $region35: #{resnet_generator_forward.24} parent=23 // pred_region
        %v207 = vld [vmem:[#allocation2] sm:$0x1]
        %v208 = vrcp.pop 16.0
        %v209 = vmul.f32 %v207, %v208
        %v210 = vld [vmem:[#allocation3] sm:$0x1]
        %v211 = vmul.f32 %v210, %v208
        %v212 = vmul.f32 %v209, %v209
        %v213 = vsub.f32 %v211, %v212
        %214 = vst [vmem:[#allocation2] sm:$0x1] %v209
        %v215 = vmax.f32 %v213, 0.0
        %v216 = vadd.f32 %v215, 1e-05
        %v217 = vrsqrt.pop %v216
        %218 = vst [vmem:[#allocation3] sm:$0x1] %v217
      $region36: #{resnet_generator_forward.24} parent=23 // pred_fallthru
        _
      %p219 = scmp.eq.s32.totalorder %s18, 1
      // Predicated region
      $region37: #{resnet_generator_forward.24} parent=23 // pred_check
        %p220 = pneg %p219
      $region38: #{resnet_generator_forward.24} parent=23 // pred_check_branch
        %222 = sbr.rel (%p220) target = $region40
      $region39: #{resnet_generator_forward.24} parent=23 // pred_region
        %v223 = vld [vmem:[#allocation2] sm:$0x1]
        %v225 = vlaneseq
        %v226 = vshrl.u32 %v225, 7
        %v227 = vsub.s32 0, %v226
        %v228 = vrot.slane %v223, %v227
        %v230 = vsub.f32 %v178, %v228
        %v231 = vsub.f32 %v179, %v228
        %v232 = vld [vmem:[#allocation3] sm:$0x1]
        %v234 = vlaneseq
        %v235 = vshrl.u32 %v234, 7
        %v236 = vsub.s32 0, %v235
        %v237 = vrot.slane %v232, %v236
        %v239 = vmul.f32 %v230, %v237
        %v240 = vmul.f32 %v231, %v237
        %v241 = vmax.f32 %v239, 0.0
        %v242 = vmax.f32 %v240, 0.0
        %v243 = vpack.c.bf16 %v242, %v241
        %v245 = vunpack.c.l.b16 %v243
        %v246 = vunpack.c.h.b16 %v243
        %v247 = vpack.c.b16 %v245, %v245
        %v248 = vpack.c.b16 %v246, %v246
        %251 = vst [vmem:[%s165] sm:$0xf] %v247
        %252 = vst [vmem:[%s165 + $0x4] sm:$0xf] %v248
      $region40: #{resnet_generator_forward.24} parent=23 // pred_fallthru
        _
      %s253 = smul.u32 %s19, %s18
      %s254 = smul.u32 2, %s253
      %p255 = scmp.lt.s32.totalorder %s17, 1
      %s256 = scalar_select %p255, %s17, 1
      %p257 = scmp.lt.s32.totalorder %s254, 1
      %s258 = scalar_select %p257, %s254, 1
      %s259 = smul.addr %s256, 2
      %s260 = sadd.s32 %s258, %s259
      %s261 = smul.addr %s260, 4
      %s262 = scalar_lea.vmem %s1, %s261
      // Predicated region
      $region41: #{resnet_generator_forward.24} parent=23 // pred_check
        %p263 = pneg %p81
      $region42: #{resnet_generator_forward.24} parent=23 // pred_check_branch
        %265 = sbr.rel (%p263) target = $region44
      $region43: #{resnet_generator_forward.24} parent=23 // pred_region
        %s266 = smul.u32 %s19, %s18
        %s267 = smul.u32 2, %s266
      $region44: #{resnet_generator_forward.24} parent=23 // pred_fallthru
        _
    $region24: #{resnet_generator_forward.24} parent=5 // pred_fallthru
      _
    %p268 = scmp.le.s32.totalorder 2, %s7
    // Predicated region
    $region45: #{resnet_generator_forward.24} parent=5 // pred_check
      %p269 = pneg %p268
    $region46: #{resnet_generator_forward.24} parent=5 // pred_check_branch
      %271 = sbr.rel (%p269) target = $region48
    $region47: #{resnet_generator_forward.24} parent=5 // pred_region
      %s272 = ssub.s32 %s7, 2
      // Predicated region
      $region49: #{resnet_generator_forward.24} parent=47 // pred_check
        %p273 = pneg %p87
      $region50: #{resnet_generator_forward.24} parent=47 // pred_check_branch
        %275 = sbr.rel (%p273) target = $region52
      $region51: #{resnet_generator_forward.24} parent=47 // pred_region
        %s276 = smul.u32 %s22, %s21
        %s277 = smul.u32 2, %s276
        %p278 = scmp.lt.s32.totalorder %s20, 1
        %s279 = scalar_select %p278, %s20, 1
        %p280 = scmp.lt.s32.totalorder %s277, 1
        %s281 = scalar_select %p280, %s277, 1
        %s282 = smul.addr %s279, 2
        %s283 = sadd.s32 %s281, %s282
        %s284 = smul.addr %s283, 4
        %s285 = scalar_lea.vmem %s1, %s284
      $region52: #{resnet_generator_forward.24} parent=47 // pred_fallthru
        _
    $region48: #{resnet_generator_forward.24} parent=5 // pred_fallthru
      _
  $region6: #{resnet_generator_forward.24} parent=0 // loop_footer
    %s11 = sadd.s32 1, %s7
  $region7: #{resnet_generator_forward.24} parent=0 // loop_footer_branch
    %6 = sbr.rel target = $region3
  $region8: #{resnet_generator_forward.24} parent=0 // loop_exit
    _

// kernel: resnet_generator_forward.23
$region0: #{resnet_generator_forward.23}
  #allocation0 [shape = 'u32[]', space=smem, size = 0x4, offset = 0x4, fixed_abs, tag = 'smem constant byte address 0x4 - core index']
  #allocation1 [shape = 'u32[144,128]{1,0:T(1,128)}', space=vmem, size = 0x12000, scoped, tag = 'internal scratch']
  #allocation2 [shape = 'f32[4,128]{1,0:T(4,128)}', space=vmem, size = 0x800, scoped, tag = 'scratch operand']
  %s0 = inlined_call_operand.vmem [shape: bf16[2,10,10,128], index: 0, kind: input, shape index: {}]
  %s1 = inlined_call_operand.vmem [shape: bf16[3,384,128], index: 1, kind: input, shape index: {}]
  %s2 = inlined_call_operand.vmem [shape: f32[1,128], index: 2, kind: input, shape index: {}]
  %s3 = inlined_call_operand.vmem [shape: bf16[2,4,4,128], index: 3, kind: output, shape index: {}]
  %s4 = sld [smem:[#allocation0]]
  $region53: #{resnet_generator_forward.23} parent=0
    _
  %s6 = ssub.s32 1, %s4
  %s7 = scalar_select 0, %s6, %s4
  loop: start=0, step=1, limit=26
  $region2: #{resnet_generator_forward.23} parent=0 // loop_pre_header
    _
  $region3: #{resnet_generator_forward.23} parent=0 // loop_header
    %s9 = sphi 0, %s13
    %p10 = scmp.ge.s32.totalorder %s9, 26
    %s16 = sphi 0, %s35
    %s17 = sphi 0, %s31
    %s18 = sphi 0, %s27
    %s19 = sphi 0, %s16
    %s20 = sphi 0, %s17
    %s21 = sphi 0, %s18
    %s22 = sphi 0, %s19
    %s23 = sphi 0, %s20
    %s24 = sphi 0, %s21
    %s44 = sphi 0, %s46
    %s47 = sphi 0, %s44
    %s48 = sphi 0, %s47
    %s64 = sphi 0, %s48
    %s68 = sphi 0, %s68
    %s70 = sphi 0, %s68
    %s71 = sphi 0, %s70
    %s85 = sphi 0, %s71
    %s89 = sphi 0, %s89
    %s91 = sphi 0, %s89
    %s92 = sphi 0, %s91
    %s106 = sphi 0, %s92
    %s114 = sphi 0, %s116
    %s117 = sphi 0, %s114
    %s118 = sphi 0, %s117
    %s134 = sphi 0, %s118
  $region4: #{resnet_generator_forward.23} parent=0 // loop_header_branch
    %12 = sbr.rel (%p10) target = $region8
  $region5: #{resnet_generator_forward.23} parent=0 // loop_body
    %s14 = ssub.s32 %s9, 1
    %s15 = ssub.s32 %s9, 2
    %s25 = sadd.s32 1, %s18
    %p26 = scmp.ge.s32.totalorder %s25, 3
    %s27 = scalar_select %p26, 0, %s25
    %s28 = sadd.s32 1, %s17
    %s29 = scalar_select %p26, %s28, %s17
    %p30 = scmp.ge.s32.totalorder %s29, 4
    %s31 = scalar_select %p30, 0, %s29
    %s32 = sadd.s32 1, %s16
    %s33 = scalar_select %p30, %s32, %s16
    %p34 = scmp.ge.s32.totalorder %s33, 2
    %s35 = scalar_select %p34, 0, %s33
    %s36 = smul.u32 %s17, 2
    %s37 = sadd.s32 %s36, %s18
    %s38 = smul.u32 %s31, 2
    %s39 = sadd.s32 %s38, %s27
    %s40 = ssub.s32 %s16, %s35
    %s41 = ssub.s32 %s37, %s39
    %s42 = sor.u32 %s40, %s41
    %p43 = scmp.eq.s32.totalorder %s42, 0
    %s45 = sadd.s32 %s44, 1
    %s46 = scalar_select %p43, %s44, %s45
    %p49 = pneg %p43
    %p50 = scmp.eq.s32.totalorder %s9, 23
    %p51 = por %p49, %p50
    %p52 = scmp.ne.s32.totalorder %s44, %s47
    %p53 = scmp.eq.s32.totalorder %s9, 0
    %p54 = por %p52, %p53
    %p55 = scmp.ne.s32.totalorder %s44, %s47
    %p56 = scmp.eq.s32.totalorder %s14, 23
    %p57 = por %p55, %p56
    %p58 = scmp.ne.s32.totalorder %s47, %s48
    %p59 = scmp.eq.s32.totalorder %s14, 0
    %p60 = por %p58, %p59
    %p61 = scmp.ne.s32.totalorder %s47, %s48
    %p62 = scmp.eq.s32.totalorder %s15, 23
    %p63 = por %p61, %p62
    %p65 = scmp.ne.s32.totalorder %s48, %s64
    %p66 = scmp.eq.s32.totalorder %s15, 0
    %p67 = por %p65, %p66
    %s69 = sadd.s32 %s68, 1
    %p72 = scmp.eq.s32.totalorder %s9, 23
    %p73 = scmp.ne.s32.totalorder %s68, %s70
    %p74 = scmp.eq.s32.totalorder %s9, 0
    %p75 = por %p73, %p74
    %p76 = scmp.ne.s32.totalorder %s68, %s70
    %p77 = scmp.eq.s32.totalorder %s14, 23
    %p78 = por %p76, %p77
    %p79 = scmp.ne.s32.totalorder %s70, %s71
    %p80 = scmp.eq.s32.totalorder %s14, 0
    %p81 = por %p79, %p80
    %p82 = scmp.ne.s32.totalorder %s70, %s71
    %p83 = scmp.eq.s32.totalorder %s15, 23
    %p84 = por %p82, %p83
    %p86 = scmp.ne.s32.totalorder %s71, %s85
    %p87 = scmp.eq.s32.totalorder %s15, 0
    %p88 = por %p86, %p87
    %s90 = sadd.s32 %s89, 1
    %p93 = scmp.eq.s32.totalorder %s9, 23
    %p94 = scmp.ne.s32.totalorder %s89, %s91
    %p95 = scmp.eq.s32.totalorder %s9, 0
    %p96 = por %p94, %p95
    %p97 = scmp.ne.s32.totalorder %s89, %s91
    %p98 = scmp.eq.s32.totalorder %s14, 23
    %p99 = por %p97, %p98
    %p100 = scmp.ne.s32.totalorder %s91, %s92
    %p101 = scmp.eq.s32.totalorder %s14, 0
    %p102 = por %p100, %p101
    %p103 = scmp.ne.s32.totalorder %s91, %s92
    %p104 = scmp.eq.s32.totalorder %s15, 23
    %p105 = por %p103, %p104
    %p107 = scmp.ne.s32.totalorder %s92, %s106
    %p108 = scmp.eq.s32.totalorder %s15, 0
    %p109 = por %p107, %p108
    %s110 = ssub.s32 %s16, %s35
    %s111 = ssub.s32 %s17, %s31
    %s112 = sor.u32 %s110, %s111
    %p113 = scmp.eq.s32.totalorder %s112, 0
    %s115 = sadd.s32 %s114, 1
    %s116 = scalar_select %p113, %s114, %s115
    %p119 = pneg %p113
    %p120 = scmp.eq.s32.totalorder %s9, 23
    %p121 = por %p119, %p120
    %p122 = scmp.ne.s32.totalorder %s114, %s117
    %p123 = scmp.eq.s32.totalorder %s9, 0
    %p124 = por %p122, %p123
    %p125 = scmp.ne.s32.totalorder %s114, %s117
    %p126 = scmp.eq.s32.totalorder %s14, 23
    %p127 = por %p125, %p126
    %p128 = scmp.ne.s32.totalorder %s117, %s118
    %p129 = scmp.eq.s32.totalorder %s14, 0
    %p130 = por %p128, %p129
    %p131 = scmp.ne.s32.totalorder %s117, %s118
    %p132 = scmp.eq.s32.totalorder %s15, 23
    %p133 = por %p131, %p132
    %p135 = scmp.ne.s32.totalorder %s118, %s134
    %p136 = scmp.eq.s32.totalorder %s15, 0
    %p137 = por %p135, %p136
    %p138 = scmp.le.s32.totalorder 1, %s9
    %p139 = scmp.lt.s32.totalorder %s9, 25
    %p140 = pnand %p138, %p139
    %p141 = pneg %p140
    // Predicated region
    $region9: #{resnet_generator_forward.23} parent=5 // pred_check
      _
    $region10: #{resnet_generator_forward.23} parent=5 // pred_check_branch
      %143 = sbr.rel (%p140) target = $region12
    $region11: #{resnet_generator_forward.23} parent=5 // pred_region
      %s144 = ssub.s32 %s9, 1
      // Predicated region
      $region13: #{resnet_generator_forward.23} parent=11 // pred_check
        %p145 = pneg %p81
      $region14: #{resnet_generator_forward.23} parent=11 // pred_check_branch
        %147 = sbr.rel (%p145) target = $region16
      $region15: #{resnet_generator_forward.23} parent=11 // pred_region
        _
      $region16: #{resnet_generator_forward.23} parent=11 // pred_fallthru
        _
      // Predicated region
      $region17: #{resnet_generator_forward.23} parent=11 // pred_check
        %p148 = pneg %p102
      $region18: #{resnet_generator_forward.23} parent=11 // pred_check_branch
        %150 = sbr.rel (%p148) target = $region20
      $region19: #{resnet_generator_forward.23} parent=11 // pred_region
        _
      $region20: #{resnet_generator_forward.23} parent=11 // pred_fallthru
        _
    $region12: #{resnet_generator_forward.23} parent=5 // pred_fallthru
      _
    %p151 = scmp.lt.s32.totalorder %s9, 24
    // Predicated region
    $region21: #{resnet_generator_forward.23} parent=5 // pred_check
      %p152 = pneg %p151
    $region22: #{resnet_generator_forward.23} parent=5 // pred_check_branch
      %154 = sbr.rel (%p152) target = $region24
    $region23: #{resnet_generator_forward.23} parent=5 // pred_region
      // Predicated region
      $region25: #{resnet_generator_forward.23} parent=23 // pred_check
        %p155 = pneg %p54
      $region26: #{resnet_generator_forward.23} parent=23 // pred_check_branch
        %157 = sbr.rel (%p155) target = $region28
      $region27: #{resnet_generator_forward.23} parent=23 // pred_region
        %s158 = smul.u32 %s17, 2
        %s159 = sadd.s32 %s158, %s18
        %p160 = scmp.lt.s32.totalorder %s16, 1
        %s161 = scalar_select %p160, %s16, 1
        %p162 = scmp.lt.s32.totalorder %s159, 9
        %s163 = scalar_select %p162, %s159, 9
        %s164 = smul.addr %s163, 2
        %s165 = smul.addr %s161, 20
        %s166 = sadd.s32 %s164, %s165
        %s167 = smul.addr %s166, 4
        %s168 = scalar_lea.vmem %s0, %s167
        %s169 = smul.u32 %s17, 2
        %s170 = sadd.s32 %s169, %s18
      $region28: #{resnet_generator_forward.23} parent=23 // pred_fallthru
        _
    $region24: #{resnet_generator_forward.23} parent=5 // pred_fallthru
      _
    %p171 = scmp.le.s32.totalorder 1, %s9
    %p172 = scmp.lt.s32.totalorder %s9, 25
    %p173 = pnand %p171, %p172
    %p174 = pneg %p173
    // Predicated region
    $region29: #{resnet_generator_forward.23} parent=5 // pred_check
      _
    $region30: #{resnet_generator_forward.23} parent=5 // pred_check_branch
      %176 = sbr.rel (%p173) target = $region32
    $region31: #{resnet_generator_forward.23} parent=5 // pred_region
      %s177 = ssub.s32 %s9, 1
      %s178 = smul.u32 %s20, 2
      %s179 = sadd.s32 %s178, %s21
      %p180 = scmp.lt.s32.totalorder %s19, 1
      %s181 = scalar_select %p180, %s19, 1
      %p182 = scmp.lt.s32.totalorder %s179, 9
      %s183 = scalar_select %p182, %s179, 9
      %s184 = smul.addr %s183, 2
      %s185 = smul.addr %s181, 20
      %s186 = sadd.s32 %s184, %s185
      %s187 = smul.addr %s186, 4
      %s188 = scalar_lea.vmem %s0, %s187
      %p189 = pneg %p60
      %p190 = pneg %p57
      %p191 = pneg %p81
      %p192 = pneg %p78
      %p193 = pneg %p102
      %p194 = pneg %p99
      %p195 = pneg %p130
      %p196 = pneg %p127
      %p197 = scmp.lt.s32.totalorder %s19, 1
      %s198 = scalar_select %p197, %s19, 1
      %p199 = scmp.lt.s32.totalorder %s20, 3
      %s200 = scalar_select %p199, %s20, 3
      %s201 = smul.addr %s198, 4
      %s202 = sadd.s32 %s200, %s201
      %s203 = smul.addr %s202, 2
      %s204 = scalar_lea.vmem %s3, %s203
      %s205 = smul.u32 %s20, 2
      %s206 = sadd.s32 %s205, %s21
      %p207 = scmp.lt.s32.totalorder %s19, 1
      %s208 = scalar_select %p207, %s19, 1
      %p209 = scmp.lt.s32.totalorder %s206, 9
      %s210 = scalar_select %p209, %s206, 9
      %s211 = smul.addr %s210, 2
      %s212 = smul.addr %s208, 20
      %s213 = sadd.s32 %s211, %s212
      %s214 = smul.addr %s213, 4
      %s215 = scalar_lea.vmem %s0, %s214
      %s216 = smul.u32 %s20, 2
      %s217 = sadd.s32 %s216, %s21
      %p218 = scmp.lt.s32.totalorder %s19, 1
      %s219 = scalar_select %p218, %s19, 1
      %p220 = scmp.lt.s32.totalorder %s20, 3
      %s221 = scalar_select %p220, %s20, 3
      %s222 = smul.addr %s219, 4
      %s223 = sadd.s32 %s221, %s222
      %s224 = smul.addr %s223, 2
      %s225 = scalar_lea.vmem %s3, %s224
      %p227 = scmp.eq.s32.totalorder %s21, 0
      // Predicated region
      $region33: #{resnet_generator_forward.23} parent=31 // pred_check
        %p228 = pneg %p227
      $region34: #{resnet_generator_forward.23} parent=31 // pred_check_branch
        %230 = sbr.rel (%p228) target = $region36
      $region35: #{resnet_generator_forward.23} parent=31 // pred_region
        %231 = vst [vmem:[#allocation2] sm:$0xf] 0.0
      $region36: #{resnet_generator_forward.23} parent=31 // pred_fallthru
        _
      %v232 = vld [vmem:[%s215] sm:$0xf]
      %v233 = vld [vmem:[%s215 + $0x4] sm:$0x1]
      %s234 = smul.u32 %s21, 48
      %s235 = smul.addr %s234, 4
      %s236 = scalar_lea.vmem %s1, %s235
      %v237 = vld [vmem:[%s236] sm:$0xf]
      %v238 = vld [vmem:[%s236 + $0x4] sm:$0xf]
      %v239 = vld [vmem:[%s236 + $0x8] sm:$0xf]
      %v240 = vld [vmem:[%s236 + $0xc] sm:$0xf]
      %v241 = vld [vmem:[%s236 + $0x10] sm:$0xf]
      %v242 = vld [vmem:[%s236 + $0x14] sm:$0xf]
      %v243 = vld [vmem:[%s236 + $0x18] sm:$0xf]
      %v244 = vld [vmem:[%s236 + $0x1c] sm:$0xf]
      %v245 = vld [vmem:[%s236 + $0x20] sm:$0xf]
      %v246 = vld [vmem:[%s236 + $0x24] sm:$0xf]
      %v247 = vld [vmem:[%s236 + $0x28] sm:$0xf]
      %v248 = vld [vmem:[%s236 + $0x2c] sm:$0xf]
      %v249 = vld [vmem:[%s236 + $0x30] sm:$0xf]
      %v250 = vld [vmem:[%s236 + $0x34] sm:$0xf]
      %v251 = vld [vmem:[%s236 + $0x38] sm:$0xf]
      %v252 = vld [vmem:[%s236 + $0x3c] sm:$0xf]
      %v253 = vld [vmem:[%s236 + $0x40] sm:$0xf]
      %v254 = vld [vmem:[%s236 + $0x44] sm:$0xf]
      %v255 = vld [vmem:[%s236 + $0x48] sm:$0xf]
      %v256 = vld [vmem:[%s236 + $0x4c] sm:$0xf]
      %v257 = vld [vmem:[%s236 + $0x50] sm:$0xf]
      %v258 = vld [vmem:[%s236 + $0x54] sm:$0xf]
      %v259 = vld [vmem:[%s236 + $0x58] sm:$0xf]
      %v260 = vld [vmem:[%s236 + $0x5c] sm:$0xf]
      %v261 = vld [vmem:[%s236 + $0x60] sm:$0xf]
      %v262 = vld [vmem:[%s236 + $0x64] sm:$0xf]
      %v263 = vld [vmem:[%s236 + $0x68] sm:$0xf]
      %v264 = vld [vmem:[%s236 + $0x6c] sm:$0xf]
      %v265 = vld [vmem:[%s236 + $0x70] sm:$0xf]
      %v266 = vld [vmem:[%s236 + $0x74] sm:$0xf]
      %v267 = vld [vmem:[%s236 + $0x78] sm:$0xf]
      %v268 = vld [vmem:[%s236 + $0x7c] sm:$0xf]
      %v269 = vld [vmem:[%s236 + $0x80] sm:$0xf]
      %v270 = vld [vmem:[%s236 + $0x84] sm:$0xf]
      %v271 = vld [vmem:[%s236 + $0x88] sm:$0xf]
      %v272 = vld [vmem:[%s236 + $0x8c] sm:$0xf]
      %v273 = vld [vmem:[%s236 + $0x90] sm:$0xf]
      %v274 = vld [vmem:[%s236 + $0x94] sm:$0xf]
      %v275 = vld [vmem:[%s236 + $0x98] sm:$0xf]
      %v276 = vld [vmem:[%s236 + $0x9c] sm:$0xf]
      %v277 = vld [vmem:[%s236 + $0xa0] sm:$0xf]
      %v278 = vld [vmem:[%s236 + $0xa4] sm:$0xf]
      %v279 = vld [vmem:[%s236 + $0xa8] sm:$0xf]
      %v280 = vld [vmem:[%s236 + $0xac] sm:$0xf]
      %v281 = vld [vmem:[%s236 + $0xb0] sm:$0xf]
      %v282 = vld [vmem:[%s236 + $0xb4] sm:$0xf]
      %v283 = vld [vmem:[%s236 + $0xb8] sm:$0xf]
      %v284 = vld [vmem:[%s236 + $0xbc] sm:$0xf]
      %v285 = vld [vmem:[#allocation2] sm:$0xf]
      %v302 = vunpack.c.l.b16 %v237
      %v303 = vunpack.c.l.b16 %v238
      %v304 = vunpack.c.l.b16 %v239
      %v305 = vunpack.c.l.b16 %v240
      %v306 = vunpack.c.l.b16 %v241
      %v307 = vunpack.c.l.b16 %v242
      %v308 = vunpack.c.l.b16 %v243
      %v309 = vunpack.c.l.b16 %v244
      %v310 = vunpack.c.l.b16 %v245
      %v311 = vunpack.c.l.b16 %v246
      %v312 = vunpack.c.l.b16 %v247
      %v313 = vunpack.c.l.b16 %v248
      %v314 = vunpack.c.l.b16 %v249
      %v315 = vunpack.c.l.b16 %v250
      %v316 = vunpack.c.l.b16 %v251
      %v317 = vunpack.c.l.b16 %v252
      %v318 = vpack.c.b16 %v303, %v302
      %v319 = vpack.c.b16 %v305, %v304
      %v320 = vpack.c.b16 %v307, %v306
      %v321 = vpack.c.b16 %v309, %v308
      %v322 = vpack.c.b16 %v311, %v310
      %v323 = vpack.c.b16 %v313, %v312
      %v324 = vpack.c.b16 %v315, %v314
      %v325 = vpack.c.b16 %v317, %v316
      %334 = vmatprep.subr.bf16.mxu0 0
      %335 = vmatpush1.bf16.msra.mxu0 %v325
      %336 = vmatprep.subr.bf16.mxu0 0
      %337 = vmatpush1.bf16.msra.mxu0 %v324
      %338 = vmatprep.subr.bf16.mxu0 0
      %339 = vmatpush1.bf16.msra.mxu0 %v323
      %340 = vmatprep.subr.bf16.mxu0 0
      %341 = vmatpush1.bf16.msra.mxu0 %v322
      %342 = vmatprep.subr.bf16.mxu0 0
      %343 = vmatpush1.bf16.msra.mxu0 %v321
      %344 = vmatprep.subr.bf16.mxu0 0
      %345 = vmatpush1.bf16.msra.mxu0 %v320
      %346 = vmatprep.subr.bf16.mxu0 0
      %347 = vmatpush1.bf16.msra.mxu0 %v319
      %348 = vmatprep.subr.bf16.mxu0 0
      %349 = vmatpush1.bf16.msra.mxu0 %v318
      %350 = vmatprep.subr.bf16.mxu0 0
      %351 = vmatpush2.bf16.msra.mxu0 0
      %352 = vmatprep.subr.bf16.mxu0 0
      %353 = vmatpush2.bf16.msra.mxu0 0
      %354 = vmatprep.subr.bf16.mxu0 0
      %355 = vmatpush2.bf16.msra.mxu0 0
      %356 = vmatprep.subr.bf16.mxu0 0
      %357 = vmatpush2.bf16.msra.mxu0 0
      %358 = vmatprep.subr.bf16.mxu0 0
      %359 = vmatpush2.bf16.msra.mxu0 0
      %360 = vmatprep.subr.bf16.mxu0 0
      %361 = vmatpush2.bf16.msra.mxu0 0
      %362 = vmatprep.subr.bf16.mxu0 0
      %363 = vmatpush2.bf16.msra.mxu0 0
      %364 = vmatprep.subr.bf16.mxu0 0
      %365 = vmatpush2.bf16.msra.mxu0 0
      %366 = vmatprep.mubr.bf16.mxu0 0
      %367 = vmatmul.mubr.bf16.gmra.mxu0 %v232
      %v368 = vpop.f32.mrf.mxu0
      %v369 = vadd.f32 0.0, %v368
      %v370 = vpop.f32.mrf.mxu0
      %v371 = vpop.f32.mrf.mxu0
      %v372 = vpop.f32.mrf.mxu0
      %373 = vdwg.mxu0
      %v374 = vadd.f32 %v285, %v369
      %v377 = vunpack.c.l.b16 %v232
      %v378 = vunpack.c.l.b16 %v233
      %v379 = vpack.c.b16 %v378, %v377
      %v381 = vshrl.u32 %v379, 16
      %v383 = vrot.slane %v381, 2
      %v384 = vshll.u32 %v379, 16
      %v386 = vrot.slane %v384, 3
      %v387 = vor.u32 %v383, %v386
      %v405 = vunpack.c.l.b16 %v253
      %v406 = vunpack.c.l.b16 %v254
      %v407 = vunpack.c.l.b16 %v255
      %v408 = vunpack.c.l.b16 %v256
      %v409 = vunpack.c.l.b16 %v257
      %v410 = vunpack.c.l.b16 %v258
      %v411 = vunpack.c.l.b16 %v259
      %v412 = vunpack.c.l.b16 %v260
      %v413 = vunpack.c.l.b16 %v261
      %v414 = vunpack.c.l.b16 %v262
      %v415 = vunpack.c.l.b16 %v263
      %v416 = vunpack.c.l.b16 %v264
      %v417 = vunpack.c.l.b16 %v265
      %v418 = vunpack.c.l.b16 %v266
      %v419 = vunpack.c.l.b16 %v267
      %v420 = vunpack.c.l.b16 %v268
      %v421 = vpack.c.b16 %v406, %v405
      %v422 = vpack.c.b16 %v408, %v407
      %v423 = vpack.c.b16 %v410, %v409
      %v424 = vpack.c.b16 %v412, %v411
      %v425 = vpack.c.b16 %v414, %v413
      %v426 = vpack.c.b16 %v416, %v415
      %v427 = vpack.c.b16 %v418, %v417
      %v428 = vpack.c.b16 %v420, %v419
      %437 = vmatprep.subr.bf16.mxu0 0
      %438 = vmatpush1.bf16.msra.mxu0 %v428
      %439 = vmatprep.subr.bf16.mxu0 0
      %440 = vmatpush1.bf16.msra.mxu0 %v427
      %441 = vmatprep.subr.bf16.mxu0 0
      %442 = vmatpush1.bf16.msra.mxu0 %v426
      %443 = vmatprep.subr.bf16.mxu0 0
      %444 = vmatpush1.bf16.msra.mxu0 %v425
      %445 = vmatprep.subr.bf16.mxu0 0
      %446 = vmatpush1.bf16.msra.mxu0 %v424
      %447 = vmatprep.subr.bf16.mxu0 0
      %448 = vmatpush1.bf16.msra.mxu0 %v423
      %449 = vmatprep.subr.bf16.mxu0 0
      %450 = vmatpush1.bf16.msra.mxu0 %v422
      %451 = vmatprep.subr.bf16.mxu0 0
      %452 = vmatpush1.bf16.msra.mxu0 %v421
      %453 = vmatprep.subr.bf16.mxu0 0
      %454 = vmatpush2.bf16.msra.mxu0 0
      %455 = vmatprep.subr.bf16.mxu0 0
      %456 = vmatpush2.bf16.msra.mxu0 0
      %457 = vmatprep.subr.bf16.mxu0 0
      %458 = vmatpush2.bf16.msra.mxu0 0
      %459 = vmatprep.subr.bf16.mxu0 0
      %460 = vmatpush2.bf16.msra.mxu0 0
      %461 = vmatprep.subr.bf16.mxu0 0
      %462 = vmatpush2.bf16.msra.mxu0 0
      %463 = vmatprep.subr.bf16.mxu0 0
      %464 = vmatpush2.bf16.msra.mxu0 0
      %465 = vmatprep.subr.bf16.mxu0 0
      %466 = vmatpush2.bf16.msra.mxu0 0
      %467 = vmatprep.subr.bf16.mxu0 0
      %468 = vmatpush2.bf16.msra.mxu0 0
      %469 = vmatprep.mubr.bf16.mxu0 0
      %470 = vmatmul.mubr.bf16.gmra.mxu0 %v387
      %v471 = vpop.f32.mrf.mxu0
      %v472 = vadd.f32 0.0, %v471
      %v473 = vpop.f32.mrf.mxu0
      %v474 = vpop.f32.mrf.mxu0
      %v475 = vpop.f32.mrf.mxu0
      %476 = vdwg.mxu0
      %v477 = vadd.f32 %v374, %v472
      %v478 = vpack.c.b16 %v377, %v377
      %v480 = vshrl.u32 %v478, 16
      %v482 = vshll.u32 %v478, 16
      %v484 = vrot.slane %v482, 1
      %v485 = vor.u32 %v480, %v484
      %v503 = vunpack.c.l.b16 %v269
      %v504 = vunpack.c.l.b16 %v270
      %v505 = vunpack.c.l.b16 %v271
      %v506 = vunpack.c.l.b16 %v272
      %v507 = vunpack.c.l.b16 %v273
      %v508 = vunpack.c.l.b16 %v274
      %v509 = vunpack.c.l.b16 %v275
      %v510 = vunpack.c.l.b16 %v276
      %v511 = vunpack.c.l.b16 %v277
      %v512 = vunpack.c.l.b16 %v278
      %v513 = vunpack.c.l.b16 %v279
      %v514 = vunpack.c.l.b16 %v280
      %v515 = vunpack.c.l.b16 %v281
      %v516 = vunpack.c.l.b16 %v282
      %v517 = vunpack.c.l.b16 %v283
      %v518 = vunpack.c.l.b16 %v284
      %v519 = vpack.c.b16 %v504, %v503
      %v520 = vpack.c.b16 %v506, %v505
      %v521 = vpack.c.b16 %v508, %v507
      %v522 = vpack.c.b16 %v510, %v509
      %v523 = vpack.c.b16 %v512, %v511
      %v524 = vpack.c.b16 %v514, %v513
      %v525 = vpack.c.b16 %v516, %v515
      %v526 = vpack.c.b16 %v518, %v517
      %535 = vmatprep.subr.bf16.mxu0 0
      %536 = vmatpush1.bf16.msra.mxu0 %v526
      %537 = vmatprep.subr.bf16.mxu0 0
      %538 = vmatpush1.bf16.msra.mxu0 %v525
      %539 = vmatprep.subr.bf16.mxu0 0
      %540 = vmatpush1.bf16.msra.mxu0 %v524
      %541 = vmatprep.subr.bf16.mxu0 0
      %542 = vmatpush1.bf16.msra.mxu0 %v523
      %543 = vmatprep.subr.bf16.mxu0 0
      %544 = vmatpush1.bf16.msra.mxu0 %v522
      %545 = vmatprep.subr.bf16.mxu0 0
      %546 = vmatpush1.bf16.msra.mxu0 %v521
      %547 = vmatprep.subr.bf16.mxu0 0
      %548 = vmatpush1.bf16.msra.mxu0 %v520
      %549 = vmatprep.subr.bf16.mxu0 0
      %550 = vmatpush1.bf16.msra.mxu0 %v519
      %551 = vmatprep.subr.bf16.mxu0 0
      %552 = vmatpush2.bf16.msra.mxu0 0
      %553 = vmatprep.subr.bf16.mxu0 0
      %554 = vmatpush2.bf16.msra.mxu0 0
      %555 = vmatprep.subr.bf16.mxu0 0
      %556 = vmatpush2.bf16.msra.mxu0 0
      %557 = vmatprep.subr.bf16.mxu0 0
      %558 = vmatpush2.bf16.msra.mxu0 0
      %559 = vmatprep.subr.bf16.mxu0 0
      %560 = vmatpush2.bf16.msra.mxu0 0
      %561 = vmatprep.subr.bf16.mxu0 0
      %562 = vmatpush2.bf16.msra.mxu0 0
      %563 = vmatprep.subr.bf16.mxu0 0
      %564 = vmatpush2.bf16.msra.mxu0 0
      %565 = vmatprep.subr.bf16.mxu0 0
      %566 = vmatpush2.bf16.msra.mxu0 0
      %567 = vmatprep.mubr.bf16.mxu0 0
      %568 = vmatmul.mubr.bf16.gmra.mxu0 %v485
      %v569 = vpop.f32.mrf.mxu0
      %v570 = vadd.f32 0.0, %v569
      %v571 = vpop.f32.mrf.mxu0
      %v572 = vpop.f32.mrf.mxu0
      %v573 = vpop.f32.mrf.mxu0
      %574 = vdwg.mxu0
      %v575 = vadd.f32 %v477, %v570
      %576 = vst [vmem:[#allocation2] sm:$0xf] %v575
      %p577 = scmp.eq.s32.totalorder %s21, 2
      // Predicated region
      $region37: #{resnet_generator_forward.23} parent=31 // pred_check
        %p578 = pneg %p577
      $region38: #{resnet_generator_forward.23} parent=31 // pred_check_branch
        %580 = sbr.rel (%p578) target = $region40
      $region39: #{resnet_generator_forward.23} parent=31 // pred_region
        %v581 = vld [vmem:[#allocation2] sm:$0xf]
        %v582 = vld [vmem:[%s2] sm:$0x1]
        %v584 = vlaneseq
        %v585 = vshrl.u32 %v584, 7
        %v586 = vsub.s32 0, %v585
        %v587 = vrot.slane %v582, %v586
        %v589 = vadd.f32 %v581, %v587
        %v590 = vpack.c.bf16 %v589, %v589
        %591 = vst [vmem:[%s225] sm:$0x3] %v590
      $region40: #{resnet_generator_forward.23} parent=31 // pred_fallthru
        _
      %p592 = scmp.lt.s32.totalorder %s19, 1
      %s593 = scalar_select %p592, %s19, 1
      %p594 = scmp.lt.s32.totalorder %s20, 3
      %s595 = scalar_select %p594, %s20, 3
      %s596 = smul.addr %s593, 4
      %s597 = sadd.s32 %s595, %s596
      %s598 = smul.addr %s597, 2
      %s599 = scalar_lea.vmem %s3, %s598
      // Predicated region
      $region41: #{resnet_generator_forward.23} parent=31 // pred_check
        %p600 = pneg %p127
      $region42: #{resnet_generator_forward.23} parent=31 // pred_check_branch
        %602 = sbr.rel (%p600) target = $region44
      $region43: #{resnet_generator_forward.23} parent=31 // pred_region
        _
      $region44: #{resnet_generator_forward.23} parent=31 // pred_fallthru
        _
    $region32: #{resnet_generator_forward.23} parent=5 // pred_fallthru
      _
    %p603 = scmp.le.s32.totalorder 2, %s9
    // Predicated region
    $region45: #{resnet_generator_forward.23} parent=5 // pred_check
      %p604 = pneg %p603
    $region46: #{resnet_generator_forward.23} parent=5 // pred_check_branch
      %606 = sbr.rel (%p604) target = $region48
    $region47: #{resnet_generator_forward.23} parent=5 // pred_region
      %s607 = ssub.s32 %s9, 2
      // Predicated region
      $region49: #{resnet_generator_forward.23} parent=47 // pred_check
        %p608 = pneg %p133
      $region50: #{resnet_generator_forward.23} parent=47 // pred_check_branch
        %610 = sbr.rel (%p608) target = $region52
      $region51: #{resnet_generator_forward.23} parent=47 // pred_region
        %p611 = scmp.lt.s32.totalorder %s22, 1
        %s612 = scalar_select %p611, %s22, 1
        %p613 = scmp.lt.s32.totalorder %s23, 3
        %s614 = scalar_select %p613, %s23, 3
        %s615 = smul.addr %s612, 4
        %s616 = sadd.s32 %s614, %s615
        %s617 = smul.addr %s616, 2
        %s618 = scalar_lea.vmem %s3, %s617
      $region52: #{resnet_generator_forward.23} parent=47 // pred_fallthru
        _
    $region48: #{resnet_generator_forward.23} parent=5 // pred_fallthru
      _
  $region6: #{resnet_generator_forward.23} parent=0 // loop_footer
    %s13 = sadd.s32 1, %s9
  $region7: #{resnet_generator_forward.23} parent=0 // loop_footer_branch
    %8 = sbr.rel target = $region3
  $region8: #{resnet_generator_forward.23} parent=0 // loop_exit
    _

// kernel: resnet_generator_forward.25
$region0: #{resnet_generator_forward.25}
  #allocation0 [shape = 'u32[]', space=smem, size = 0x4, offset = 0x4, fixed_abs, tag = 'smem constant byte address 0x4 - core index']
  #allocation1 [shape = 'u32[144,128]{1,0:T(1,128)}', space=vmem, size = 0x12000, scoped, tag = 'internal scratch']
  #allocation2 [shape = 'f32[4,128]{1,0:T(4,128)}', space=vmem, size = 0x800, scoped, tag = 'scratch operand']
  %s0 = inlined_call_operand.vmem [shape: bf16[2,6,6,128], index: 0, kind: input, shape index: {}]
  %s1 = inlined_call_operand.vmem [shape: bf16[3,384,128], index: 1, kind: input, shape index: {}]
  %s2 = inlined_call_operand.vmem [shape: f32[1,128], index: 2, kind: input, shape index: {}]
  %s3 = inlined_call_operand.vmem [shape: bf16[2,4,4,128], index: 3, kind: output, shape index: {}]
  %s4 = sld [smem:[#allocation0]]
  $region53: #{resnet_generator_forward.25} parent=0
    _
  %s6 = ssub.s32 1, %s4
  %s7 = scalar_select 0, %s6, %s4
  loop: start=0, step=1, limit=26
  $region2: #{resnet_generator_forward.25} parent=0 // loop_pre_header
    _
  $region3: #{resnet_generator_forward.25} parent=0 // loop_header
    %s9 = sphi 0, %s13
    %p10 = scmp.ge.s32.totalorder %s9, 26
    %s16 = sphi 0, %s35
    %s17 = sphi 0, %s31
    %s18 = sphi 0, %s27
    %s19 = sphi 0, %s16
    %s20 = sphi 0, %s17
    %s21 = sphi 0, %s18
    %s22 = sphi 0, %s19
    %s23 = sphi 0, %s20
    %s24 = sphi 0, %s21
    %s42 = sphi 0, %s44
    %s45 = sphi 0, %s42
    %s46 = sphi 0, %s45
    %s62 = sphi 0, %s46
    %s66 = sphi 0, %s66
    %s68 = sphi 0, %s66
    %s69 = sphi 0, %s68
    %s83 = sphi 0, %s69
    %s87 = sphi 0, %s87
    %s89 = sphi 0, %s87
    %s90 = sphi 0, %s89
    %s104 = sphi 0, %s90
    %s112 = sphi 0, %s114
    %s115 = sphi 0, %s112
    %s116 = sphi 0, %s115
    %s132 = sphi 0, %s116
  $region4: #{resnet_generator_forward.25} parent=0 // loop_header_branch
    %12 = sbr.rel (%p10) target = $region8
  $region5: #{resnet_generator_forward.25} parent=0 // loop_body
    %s14 = ssub.s32 %s9, 1
    %s15 = ssub.s32 %s9, 2
    %s25 = sadd.s32 1, %s18
    %p26 = scmp.ge.s32.totalorder %s25, 3
    %s27 = scalar_select %p26, 0, %s25
    %s28 = sadd.s32 1, %s17
    %s29 = scalar_select %p26, %s28, %s17
    %p30 = scmp.ge.s32.totalorder %s29, 4
    %s31 = scalar_select %p30, 0, %s29
    %s32 = sadd.s32 1, %s16
    %s33 = scalar_select %p30, %s32, %s16
    %p34 = scmp.ge.s32.totalorder %s33, 2
    %s35 = scalar_select %p34, 0, %s33
    %s36 = sadd.s32 %s17, %s18
    %s37 = sadd.s32 %s31, %s27
    %s38 = ssub.s32 %s16, %s35
    %s39 = ssub.s32 %s36, %s37
    %s40 = sor.u32 %s38, %s39
    %p41 = scmp.eq.s32.totalorder %s40, 0
    %s43 = sadd.s32 %s42, 1
    %s44 = scalar_select %p41, %s42, %s43
    %p47 = pneg %p41
    %p48 = scmp.eq.s32.totalorder %s9, 23
    %p49 = por %p47, %p48
    %p50 = scmp.ne.s32.totalorder %s42, %s45
    %p51 = scmp.eq.s32.totalorder %s9, 0
    %p52 = por %p50, %p51
    %p53 = scmp.ne.s32.totalorder %s42, %s45
    %p54 = scmp.eq.s32.totalorder %s14, 23
    %p55 = por %p53, %p54
    %p56 = scmp.ne.s32.totalorder %s45, %s46
    %p57 = scmp.eq.s32.totalorder %s14, 0
    %p58 = por %p56, %p57
    %p59 = scmp.ne.s32.totalorder %s45, %s46
    %p60 = scmp.eq.s32.totalorder %s15, 23
    %p61 = por %p59, %p60
    %p63 = scmp.ne.s32.totalorder %s46, %s62
    %p64 = scmp.eq.s32.totalorder %s15, 0
    %p65 = por %p63, %p64
    %s67 = sadd.s32 %s66, 1
    %p70 = scmp.eq.s32.totalorder %s9, 23
    %p71 = scmp.ne.s32.totalorder %s66, %s68
    %p72 = scmp.eq.s32.totalorder %s9, 0
    %p73 = por %p71, %p72
    %p74 = scmp.ne.s32.totalorder %s66, %s68
    %p75 = scmp.eq.s32.totalorder %s14, 23
    %p76 = por %p74, %p75
    %p77 = scmp.ne.s32.totalorder %s68, %s69
    %p78 = scmp.eq.s32.totalorder %s14, 0
    %p79 = por %p77, %p78
    %p80 = scmp.ne.s32.totalorder %s68, %s69
    %p81 = scmp.eq.s32.totalorder %s15, 23
    %p82 = por %p80, %p81
    %p84 = scmp.ne.s32.totalorder %s69, %s83
    %p85 = scmp.eq.s32.totalorder %s15, 0
    %p86 = por %p84, %p85
    %s88 = sadd.s32 %s87, 1
    %p91 = scmp.eq.s32.totalorder %s9, 23
    %p92 = scmp.ne.s32.totalorder %s87, %s89
    %p93 = scmp.eq.s32.totalorder %s9, 0
    %p94 = por %p92, %p93
    %p95 = scmp.ne.s32.totalorder %s87, %s89
    %p96 = scmp.eq.s32.totalorder %s14, 23
    %p97 = por %p95, %p96
    %p98 = scmp.ne.s32.totalorder %s89, %s90
    %p99 = scmp.eq.s32.totalorder %s14, 0
    %p100 = por %p98, %p99
    %p101 = scmp.ne.s32.totalorder %s89, %s90
    %p102 = scmp.eq.s32.totalorder %s15, 23
    %p103 = por %p101, %p102
    %p105 = scmp.ne.s32.totalorder %s90, %s104
    %p106 = scmp.eq.s32.totalorder %s15, 0
    %p107 = por %p105, %p106
    %s108 = ssub.s32 %s16, %s35
    %s109 = ssub.s32 %s17, %s31
    %s110 = sor.u32 %s108, %s109
    %p111 = scmp.eq.s32.totalorder %s110, 0
    %s113 = sadd.s32 %s112, 1
    %s114 = scalar_select %p111, %s112, %s113
    %p117 = pneg %p111
    %p118 = scmp.eq.s32.totalorder %s9, 23
    %p119 = por %p117, %p118
    %p120 = scmp.ne.s32.totalorder %s112, %s115
    %p121 = scmp.eq.s32.totalorder %s9, 0
    %p122 = por %p120, %p121
    %p123 = scmp.ne.s32.totalorder %s112, %s115
    %p124 = scmp.eq.s32.totalorder %s14, 23
    %p125 = por %p123, %p124
    %p126 = scmp.ne.s32.totalorder %s115, %s116
    %p127 = scmp.eq.s32.totalorder %s14, 0
    %p128 = por %p126, %p127
    %p129 = scmp.ne.s32.totalorder %s115, %s116
    %p130 = scmp.eq.s32.totalorder %s15, 23
    %p131 = por %p129, %p130
    %p133 = scmp.ne.s32.totalorder %s116, %s132
    %p134 = scmp.eq.s32.totalorder %s15, 0
    %p135 = por %p133, %p134
    %p136 = scmp.le.s32.totalorder 1, %s9
    %p137 = scmp.lt.s32.totalorder %s9, 25
    %p138 = pnand %p136, %p137
    %p139 = pneg %p138
    // Predicated region
    $region9: #{resnet_generator_forward.25} parent=5 // pred_check
      _
    $region10: #{resnet_generator_forward.25} parent=5 // pred_check_branch
      %141 = sbr.rel (%p138) target = $region12
    $region11: #{resnet_generator_forward.25} parent=5 // pred_region
      %s142 = ssub.s32 %s9, 1
      // Predicated region
      $region13: #{resnet_generator_forward.25} parent=11 // pred_check
        %p143 = pneg %p79
      $region14: #{resnet_generator_forward.25} parent=11 // pred_check_branch
        %145 = sbr.rel (%p143) target = $region16
      $region15: #{resnet_generator_forward.25} parent=11 // pred_region
        _
      $region16: #{resnet_generator_forward.25} parent=11 // pred_fallthru
        _
      // Predicated region
      $region17: #{resnet_generator_forward.25} parent=11 // pred_check
        %p146 = pneg %p100
      $region18: #{resnet_generator_forward.25} parent=11 // pred_check_branch
        %148 = sbr.rel (%p146) target = $region20
      $region19: #{resnet_generator_forward.25} parent=11 // pred_region
        _
      $region20: #{resnet_generator_forward.25} parent=11 // pred_fallthru
        _
    $region12: #{resnet_generator_forward.25} parent=5 // pred_fallthru
      _
    %p149 = scmp.lt.s32.totalorder %s9, 24
    // Predicated region
    $region21: #{resnet_generator_forward.25} parent=5 // pred_check
      %p150 = pneg %p149
    $region22: #{resnet_generator_forward.25} parent=5 // pred_check_branch
      %152 = sbr.rel (%p150) target = $region24
    $region23: #{resnet_generator_forward.25} parent=5 // pred_region
      // Predicated region
      $region25: #{resnet_generator_forward.25} parent=23 // pred_check
        %p153 = pneg %p52
      $region26: #{resnet_generator_forward.25} parent=23 // pred_check_branch
        %155 = sbr.rel (%p153) target = $region28
      $region27: #{resnet_generator_forward.25} parent=23 // pred_region
        %s156 = sadd.s32 %s17, %s18
        %p157 = scmp.lt.s32.totalorder %s16, 1
        %s158 = scalar_select %p157, %s16, 1
        %p159 = scmp.lt.s32.totalorder %s156, 5
        %s160 = scalar_select %p159, %s156, 5
        %s161 = smul.addr %s158, 6
        %s162 = sadd.s32 %s160, %s161
        %s163 = smul.addr %s162, 4
        %s164 = scalar_lea.vmem %s0, %s163
        %s165 = sadd.s32 %s17, %s18
      $region28: #{resnet_generator_forward.25} parent=23 // pred_fallthru
        _
    $region24: #{resnet_generator_forward.25} parent=5 // pred_fallthru
      _
    %p166 = scmp.le.s32.totalorder 1, %s9
    %p167 = scmp.lt.s32.totalorder %s9, 25
    %p168 = pnand %p166, %p167
    %p169 = pneg %p168
    // Predicated region
    $region29: #{resnet_generator_forward.25} parent=5 // pred_check
      _
    $region30: #{resnet_generator_forward.25} parent=5 // pred_check_branch
      %171 = sbr.rel (%p168) target = $region32
    $region31: #{resnet_generator_forward.25} parent=5 // pred_region
      %s172 = ssub.s32 %s9, 1
      %s173 = sadd.s32 %s20, %s21
      %p174 = scmp.lt.s32.totalorder %s19, 1
      %s175 = scalar_select %p174, %s19, 1
      %p176 = scmp.lt.s32.totalorder %s173, 5
      %s177 = scalar_select %p176, %s173, 5
      %s178 = smul.addr %s175, 6
      %s179 = sadd.s32 %s177, %s178
      %s180 = smul.addr %s179, 4
      %s181 = scalar_lea.vmem %s0, %s180
      %p182 = pneg %p58
      %p183 = pneg %p55
      %p184 = pneg %p79
      %p185 = pneg %p76
      %p186 = pneg %p100
      %p187 = pneg %p97
      %p188 = pneg %p128
      %p189 = pneg %p125
      %p190 = scmp.lt.s32.totalorder %s19, 1
      %s191 = scalar_select %p190, %s19, 1
      %p192 = scmp.lt.s32.totalorder %s20, 3
      %s193 = scalar_select %p192, %s20, 3
      %s194 = smul.addr %s191, 4
      %s195 = sadd.s32 %s193, %s194
      %s196 = smul.addr %s195, 2
      %s197 = scalar_lea.vmem %s3, %s196
      %s198 = sadd.s32 %s20, %s21
      %p199 = scmp.lt.s32.totalorder %s19, 1
      %s200 = scalar_select %p199, %s19, 1
      %p201 = scmp.lt.s32.totalorder %s198, 5
      %s202 = scalar_select %p201, %s198, 5
      %s203 = smul.addr %s200, 6
      %s204 = sadd.s32 %s202, %s203
      %s205 = smul.addr %s204, 4
      %s206 = scalar_lea.vmem %s0, %s205
      %s207 = sadd.s32 %s20, %s21
      %p208 = scmp.lt.s32.totalorder %s19, 1
      %s209 = scalar_select %p208, %s19, 1
      %p210 = scmp.lt.s32.totalorder %s20, 3
      %s211 = scalar_select %p210, %s20, 3
      %s212 = smul.addr %s209, 4
      %s213 = sadd.s32 %s211, %s212
      %s214 = smul.addr %s213, 2
      %s215 = scalar_lea.vmem %s3, %s214
      %p217 = scmp.eq.s32.totalorder %s21, 0
      // Predicated region
      $region33: #{resnet_generator_forward.25} parent=31 // pred_check
        %p218 = pneg %p217
      $region34: #{resnet_generator_forward.25} parent=31 // pred_check_branch
        %220 = sbr.rel (%p218) target = $region36
      $region35: #{resnet_generator_forward.25} parent=31 // pred_region
        %221 = vst [vmem:[#allocation2] sm:$0xf] 0.0
      $region36: #{resnet_generator_forward.25} parent=31 // pred_fallthru
        _
      %v222 = vld [vmem:[%s206] sm:$0x7]
      %s223 = smul.u32 %s21, 48
      %s224 = smul.addr %s223, 4
      %s225 = scalar_lea.vmem %s1, %s224
      %v226 = vld [vmem:[%s225] sm:$0xf]
      %v227 = vld [vmem:[%s225 + $0x4] sm:$0xf]
      %v228 = vld [vmem:[%s225 + $0x8] sm:$0xf]
      %v229 = vld [vmem:[%s225 + $0xc] sm:$0xf]
      %v230 = vld [vmem:[%s225 + $0x10] sm:$0xf]
      %v231 = vld [vmem:[%s225 + $0x14] sm:$0xf]
      %v232 = vld [vmem:[%s225 + $0x18] sm:$0xf]
      %v233 = vld [vmem:[%s225 + $0x1c] sm:$0xf]
      %v234 = vld [vmem:[%s225 + $0x20] sm:$0xf]
      %v235 = vld [vmem:[%s225 + $0x24] sm:$0xf]
      %v236 = vld [vmem:[%s225 + $0x28] sm:$0xf]
      %v237 = vld [vmem:[%s225 + $0x2c] sm:$0xf]
      %v238 = vld [vmem:[%s225 + $0x30] sm:$0xf]
      %v239 = vld [vmem:[%s225 + $0x34] sm:$0xf]
      %v240 = vld [vmem:[%s225 + $0x38] sm:$0xf]
      %v241 = vld [vmem:[%s225 + $0x3c] sm:$0xf]
      %v242 = vld [vmem:[%s225 + $0x40] sm:$0xf]
      %v243 = vld [vmem:[%s225 + $0x44] sm:$0xf]
      %v244 = vld [vmem:[%s225 + $0x48] sm:$0xf]
      %v245 = vld [vmem:[%s225 + $0x4c] sm:$0xf]
      %v246 = vld [vmem:[%s225 + $0x50] sm:$0xf]
      %v247 = vld [vmem:[%s225 + $0x54] sm:$0xf]
      %v248 = vld [vmem:[%s225 + $0x58] sm:$0xf]
      %v249 = vld [vmem:[%s225 + $0x5c] sm:$0xf]
      %v250 = vld [vmem:[%s225 + $0x60] sm:$0xf]
      %v251 = vld [vmem:[%s225 + $0x64] sm:$0xf]
      %v252 = vld [vmem:[%s225 + $0x68] sm:$0xf]
      %v253 = vld [vmem:[%s225 + $0x6c] sm:$0xf]
      %v254 = vld [vmem:[%s225 + $0x70] sm:$0xf]
      %v255 = vld [vmem:[%s225 + $0x74] sm:$0xf]
      %v256 = vld [vmem:[%s225 + $0x78] sm:$0xf]
      %v257 = vld [vmem:[%s225 + $0x7c] sm:$0xf]
      %v258 = vld [vmem:[%s225 + $0x80] sm:$0xf]
      %v259 = vld [vmem:[%s225 + $0x84] sm:$0xf]
      %v260 = vld [vmem:[%s225 + $0x88] sm:$0xf]
      %v261 = vld [vmem:[%s225 + $0x8c] sm:$0xf]
      %v262 = vld [vmem:[%s225 + $0x90] sm:$0xf]
      %v263 = vld [vmem:[%s225 + $0x94] sm:$0xf]
      %v264 = vld [vmem:[%s225 + $0x98] sm:$0xf]
      %v265 = vld [vmem:[%s225 + $0x9c] sm:$0xf]
      %v266 = vld [vmem:[%s225 + $0xa0] sm:$0xf]
      %v267 = vld [vmem:[%s225 + $0xa4] sm:$0xf]
      %v268 = vld [vmem:[%s225 + $0xa8] sm:$0xf]
      %v269 = vld [vmem:[%s225 + $0xac] sm:$0xf]
      %v270 = vld [vmem:[%s225 + $0xb0] sm:$0xf]
      %v271 = vld [vmem:[%s225 + $0xb4] sm:$0xf]
      %v272 = vld [vmem:[%s225 + $0xb8] sm:$0xf]
      %v273 = vld [vmem:[%s225 + $0xbc] sm:$0xf]
      %v274 = vld [vmem:[#allocation2] sm:$0xf]
      %v291 = vunpack.c.l.b16 %v226
      %v292 = vunpack.c.l.b16 %v227
      %v293 = vunpack.c.l.b16 %v228
      %v294 = vunpack.c.l.b16 %v229
      %v295 = vunpack.c.l.b16 %v230
      %v296 = vunpack.c.l.b16 %v231
      %v297 = vunpack.c.l.b16 %v232
      %v298 = vunpack.c.l.b16 %v233
      %v299 = vunpack.c.l.b16 %v234
      %v300 = vunpack.c.l.b16 %v235
      %v301 = vunpack.c.l.b16 %v236
      %v302 = vunpack.c.l.b16 %v237
      %v303 = vunpack.c.l.b16 %v238
      %v304 = vunpack.c.l.b16 %v239
      %v305 = vunpack.c.l.b16 %v240
      %v306 = vunpack.c.l.b16 %v241
      %v307 = vpack.c.b16 %v292, %v291
      %v308 = vpack.c.b16 %v294, %v293
      %v309 = vpack.c.b16 %v296, %v295
      %v310 = vpack.c.b16 %v298, %v297
      %v311 = vpack.c.b16 %v300, %v299
      %v312 = vpack.c.b16 %v302, %v301
      %v313 = vpack.c.b16 %v304, %v303
      %v314 = vpack.c.b16 %v306, %v305
      %323 = vmatprep.subr.bf16.mxu0 0
      %324 = vmatpush1.bf16.msra.mxu0 %v314
      %325 = vmatprep.subr.bf16.mxu0 0
      %326 = vmatpush1.bf16.msra.mxu0 %v313
      %327 = vmatprep.subr.bf16.mxu0 0
      %328 = vmatpush1.bf16.msra.mxu0 %v312
      %329 = vmatprep.subr.bf16.mxu0 0
      %330 = vmatpush1.bf16.msra.mxu0 %v311
      %331 = vmatprep.subr.bf16.mxu0 0
      %332 = vmatpush1.bf16.msra.mxu0 %v310
      %333 = vmatprep.subr.bf16.mxu0 0
      %334 = vmatpush1.bf16.msra.mxu0 %v309
      %335 = vmatprep.subr.bf16.mxu0 0
      %336 = vmatpush1.bf16.msra.mxu0 %v308
      %337 = vmatprep.subr.bf16.mxu0 0
      %338 = vmatpush1.bf16.msra.mxu0 %v307
      %339 = vmatprep.subr.bf16.mxu0 0
      %340 = vmatpush2.bf16.msra.mxu0 0
      %341 = vmatprep.subr.bf16.mxu0 0
      %342 = vmatpush2.bf16.msra.mxu0 0
      %343 = vmatprep.subr.bf16.mxu0 0
      %344 = vmatpush2.bf16.msra.mxu0 0
      %345 = vmatprep.subr.bf16.mxu0 0
      %346 = vmatpush2.bf16.msra.mxu0 0
      %347 = vmatprep.subr.bf16.mxu0 0
      %348 = vmatpush2.bf16.msra.mxu0 0
      %349 = vmatprep.subr.bf16.mxu0 0
      %350 = vmatpush2.bf16.msra.mxu0 0
      %351 = vmatprep.subr.bf16.mxu0 0
      %352 = vmatpush2.bf16.msra.mxu0 0
      %353 = vmatprep.subr.bf16.mxu0 0
      %354 = vmatpush2.bf16.msra.mxu0 0
      %355 = vmatprep.mubr.bf16.mxu0 0
      %356 = vmatmul.mubr.bf16.gmra.mxu0 %v222
      %v357 = vpop.f32.mrf.mxu0
      %v358 = vadd.f32 0.0, %v357
      %v359 = vpop.f32.mrf.mxu0
      %v360 = vpop.f32.mrf.mxu0
      %v361 = vpop.f32.mrf.mxu0
      %362 = vdwg.mxu0
      %v363 = vadd.f32 %v274, %v358
      %v365 = vunpack.c.l.b16 %v222
      %v366 = vpack.c.b16 %v365, %v365
      %v368 = vshrl.u32 %v366, 16
      %v370 = vshll.u32 %v366, 16
      %v372 = vrot.slane %v370, 1
      %v373 = vor.u32 %v368, %v372
      %v391 = vunpack.c.l.b16 %v242
      %v392 = vunpack.c.l.b16 %v243
      %v393 = vunpack.c.l.b16 %v244
      %v394 = vunpack.c.l.b16 %v245
      %v395 = vunpack.c.l.b16 %v246
      %v396 = vunpack.c.l.b16 %v247
      %v397 = vunpack.c.l.b16 %v248
      %v398 = vunpack.c.l.b16 %v249
      %v399 = vunpack.c.l.b16 %v250
      %v400 = vunpack.c.l.b16 %v251
      %v401 = vunpack.c.l.b16 %v252
      %v402 = vunpack.c.l.b16 %v253
      %v403 = vunpack.c.l.b16 %v254
      %v404 = vunpack.c.l.b16 %v255
      %v405 = vunpack.c.l.b16 %v256
      %v406 = vunpack.c.l.b16 %v257
      %v407 = vpack.c.b16 %v392, %v391
      %v408 = vpack.c.b16 %v394, %v393
      %v409 = vpack.c.b16 %v396, %v395
      %v410 = vpack.c.b16 %v398, %v397
      %v411 = vpack.c.b16 %v400, %v399
      %v412 = vpack.c.b16 %v402, %v401
      %v413 = vpack.c.b16 %v404, %v403
      %v414 = vpack.c.b16 %v406, %v405
      %423 = vmatprep.subr.bf16.mxu0 0
      %424 = vmatpush1.bf16.msra.mxu0 %v414
      %425 = vmatprep.subr.bf16.mxu0 0
      %426 = vmatpush1.bf16.msra.mxu0 %v413
      %427 = vmatprep.subr.bf16.mxu0 0
      %428 = vmatpush1.bf16.msra.mxu0 %v412
      %429 = vmatprep.subr.bf16.mxu0 0
      %430 = vmatpush1.bf16.msra.mxu0 %v411
      %431 = vmatprep.subr.bf16.mxu0 0
      %432 = vmatpush1.bf16.msra.mxu0 %v410
      %433 = vmatprep.subr.bf16.mxu0 0
      %434 = vmatpush1.bf16.msra.mxu0 %v409
      %435 = vmatprep.subr.bf16.mxu0 0
      %436 = vmatpush1.bf16.msra.mxu0 %v408
      %437 = vmatprep.subr.bf16.mxu0 0
      %438 = vmatpush1.bf16.msra.mxu0 %v407
      %439 = vmatprep.subr.bf16.mxu0 0
      %440 = vmatpush2.bf16.msra.mxu0 0
      %441 = vmatprep.subr.bf16.mxu0 0
      %442 = vmatpush2.bf16.msra.mxu0 0
      %443 = vmatprep.subr.bf16.mxu0 0
      %444 = vmatpush2.bf16.msra.mxu0 0
      %445 = vmatprep.subr.bf16.mxu0 0
      %446 = vmatpush2.bf16.msra.mxu0 0
      %447 = vmatprep.subr.bf16.mxu0 0
      %448 = vmatpush2.bf16.msra.mxu0 0
      %449 = vmatprep.subr.bf16.mxu0 0
      %450 = vmatpush2.bf16.msra.mxu0 0
      %451 = vmatprep.subr.bf16.mxu0 0
      %452 = vmatpush2.bf16.msra.mxu0 0
      %453 = vmatprep.subr.bf16.mxu0 0
      %454 = vmatpush2.bf16.msra.mxu0 0
      %455 = vmatprep.mubr.bf16.mxu0 0
      %456 = vmatmul.mubr.bf16.gmra.mxu0 %v373
      %v457 = vpop.f32.mrf.mxu0
      %v458 = vadd.f32 0.0, %v457
      %v459 = vpop.f32.mrf.mxu0
      %v460 = vpop.f32.mrf.mxu0
      %v461 = vpop.f32.mrf.mxu0
      %462 = vdwg.mxu0
      %v463 = vadd.f32 %v363, %v458
      %v464 = vrot.slane %v366, 1
      %v482 = vunpack.c.l.b16 %v258
      %v483 = vunpack.c.l.b16 %v259
      %v484 = vunpack.c.l.b16 %v260
      %v485 = vunpack.c.l.b16 %v261
      %v486 = vunpack.c.l.b16 %v262
      %v487 = vunpack.c.l.b16 %v263
      %v488 = vunpack.c.l.b16 %v264
      %v489 = vunpack.c.l.b16 %v265
      %v490 = vunpack.c.l.b16 %v266
      %v491 = vunpack.c.l.b16 %v267
      %v492 = vunpack.c.l.b16 %v268
      %v493 = vunpack.c.l.b16 %v269
      %v494 = vunpack.c.l.b16 %v270
      %v495 = vunpack.c.l.b16 %v271
      %v496 = vunpack.c.l.b16 %v272
      %v497 = vunpack.c.l.b16 %v273
      %v498 = vpack.c.b16 %v483, %v482
      %v499 = vpack.c.b16 %v485, %v484
      %v500 = vpack.c.b16 %v487, %v486
      %v501 = vpack.c.b16 %v489, %v488
      %v502 = vpack.c.b16 %v491, %v490
      %v503 = vpack.c.b16 %v493, %v492
      %v504 = vpack.c.b16 %v495, %v494
      %v505 = vpack.c.b16 %v497, %v496
      %514 = vmatprep.subr.bf16.mxu0 0
      %515 = vmatpush1.bf16.msra.mxu0 %v505
      %516 = vmatprep.subr.bf16.mxu0 0
      %517 = vmatpush1.bf16.msra.mxu0 %v504
      %518 = vmatprep.subr.bf16.mxu0 0
      %519 = vmatpush1.bf16.msra.mxu0 %v503
      %520 = vmatprep.subr.bf16.mxu0 0
      %521 = vmatpush1.bf16.msra.mxu0 %v502
      %522 = vmatprep.subr.bf16.mxu0 0
      %523 = vmatpush1.bf16.msra.mxu0 %v501
      %524 = vmatprep.subr.bf16.mxu0 0
      %525 = vmatpush1.bf16.msra.mxu0 %v500
      %526 = vmatprep.subr.bf16.mxu0 0
      %527 = vmatpush1.bf16.msra.mxu0 %v499
      %528 = vmatprep.subr.bf16.mxu0 0
      %529 = vmatpush1.bf16.msra.mxu0 %v498
      %530 = vmatprep.subr.bf16.mxu0 0
      %531 = vmatpush2.bf16.msra.mxu0 0
      %532 = vmatprep.subr.bf16.mxu0 0
      %533 = vmatpush2.bf16.msra.mxu0 0
      %534 = vmatprep.subr.bf16.mxu0 0
      %535 = vmatpush2.bf16.msra.mxu0 0
      %536 = vmatprep.subr.bf16.mxu0 0
      %537 = vmatpush2.bf16.msra.mxu0 0
      %538 = vmatprep.subr.bf16.mxu0 0
      %539 = vmatpush2.bf16.msra.mxu0 0
      %540 = vmatprep.subr.bf16.mxu0 0
      %541 = vmatpush2.bf16.msra.mxu0 0
      %542 = vmatprep.subr.bf16.mxu0 0
      %543 = vmatpush2.bf16.msra.mxu0 0
      %544 = vmatprep.subr.bf16.mxu0 0
      %545 = vmatpush2.bf16.msra.mxu0 0
      %546 = vmatprep.mubr.bf16.mxu0 0
      %547 = vmatmul.mubr.bf16.gmra.mxu0 %v464
      %v548 = vpop.f32.mrf.mxu0
      %v549 = vadd.f32 0.0, %v548
      %v550 = vpop.f32.mrf.mxu0
      %v551 = vpop.f32.mrf.mxu0
      %v552 = vpop.f32.mrf.mxu0
      %553 = vdwg.mxu0
      %v554 = vadd.f32 %v463, %v549
      %555 = vst [vmem:[#allocation2] sm:$0xf] %v554
      %p556 = scmp.eq.s32.totalorder %s21, 2
      // Predicated region
      $region37: #{resnet_generator_forward.25} parent=31 // pred_check
        %p557 = pneg %p556
      $region38: #{resnet_generator_forward.25} parent=31 // pred_check_branch
        %559 = sbr.rel (%p557) target = $region40
      $region39: #{resnet_generator_forward.25} parent=31 // pred_region
        %v560 = vld [vmem:[#allocation2] sm:$0xf]
        %v561 = vld [vmem:[%s2] sm:$0x1]
        %v563 = vlaneseq
        %v564 = vshrl.u32 %v563, 7
        %v565 = vsub.s32 0, %v564
        %v566 = vrot.slane %v561, %v565
        %v568 = vadd.f32 %v560, %v566
        %v569 = vpack.c.bf16 %v568, %v568
        %570 = vst [vmem:[%s215] sm:$0x3] %v569
      $region40: #{resnet_generator_forward.25} parent=31 // pred_fallthru
        _
      %p571 = scmp.lt.s32.totalorder %s19, 1
      %s572 = scalar_select %p571, %s19, 1
      %p573 = scmp.lt.s32.totalorder %s20, 3
      %s574 = scalar_select %p573, %s20, 3
      %s575 = smul.addr %s572, 4
      %s576 = sadd.s32 %s574, %s575
      %s577 = smul.addr %s576, 2
      %s578 = scalar_lea.vmem %s3, %s577
      // Predicated region
      $region41: #{resnet_generator_forward.25} parent=31 // pred_check
        %p579 = pneg %p125
      $region42: #{resnet_generator_forward.25} parent=31 // pred_check_branch
        %581 = sbr.rel (%p579) target = $region44
      $region43: #{resnet_generator_forward.25} parent=31 // pred_region
        _
      $region44: #{resnet_generator_forward.25} parent=31 // pred_fallthru
        _
    $region32: #{resnet_generator_forward.25} parent=5 // pred_fallthru
      _
    %p582 = scmp.le.s32.totalorder 2, %s9
    // Predicated region
    $region45: #{resnet_generator_forward.25} parent=5 // pred_check
      %p583 = pneg %p582
    $region46: #{resnet_generator_forward.25} parent=5 // pred_check_branch
      %585 = sbr.rel (%p583) target = $region48
    $region47: #{resnet_generator_forward.25} parent=5 // pred_region
      %s586 = ssub.s32 %s9, 2
      // Predicated region
      $region49: #{resnet_generator_forward.25} parent=47 // pred_check
        %p587 = pneg %p131
      $region50: #{resnet_generator_forward.25} parent=47 // pred_check_branch
        %589 = sbr.rel (%p587) target = $region52
      $region51: #{resnet_generator_forward.25} parent=47 // pred_region
        %p590 = scmp.lt.s32.totalorder %s22, 1
        %s591 = scalar_select %p590, %s22, 1
        %p592 = scmp.lt.s32.totalorder %s23, 3
        %s593 = scalar_select %p592, %s23, 3
        %s594 = smul.addr %s591, 4
        %s595 = sadd.s32 %s593, %s594
        %s596 = smul.addr %s595, 2
        %s597 = scalar_lea.vmem %s3, %s596
      $region52: #{resnet_generator_forward.25} parent=47 // pred_fallthru
        _
    $region48: #{resnet_generator_forward.25} parent=5 // pred_fallthru
      _
  $region6: #{resnet_generator_forward.25} parent=0 // loop_footer
    %s13 = sadd.s32 1, %s9
  $region7: #{resnet_generator_forward.25} parent=0 // loop_footer_branch
    %8 = sbr.rel target = $region3
  $region8: #{resnet_generator_forward.25} parent=0 // loop_exit
    _

// kernel: resnet_generator_forward.28
$region0: #{resnet_generator_forward.28}
  #allocation0 [shape = 'u32[]', space=smem, size = 0x4, offset = 0x4, fixed_abs, tag = 'smem constant byte address 0x4 - core index']
  #allocation1 [shape = 'u32[144,128]{1,0:T(1,128)}', space=vmem, size = 0x12000, scoped, tag = 'internal scratch']
  #allocation2 [shape = 'f32[1,128]{1,0:T(1,128)}', space=vmem, size = 0x200, scoped, tag = 'scratch operand']
  #allocation3 [shape = 'f32[1,128]{1,0:T(1,128)}', space=vmem, size = 0x200, scoped, tag = 'scratch operand']
  %s0 = inlined_call_operand.vmem [shape: bf16[2,16,128], index: 0, kind: input, shape index: {}]
  %s1 = inlined_call_operand.vmem [shape: bf16[2,16,128], index: 1, kind: input, shape index: {}]
  %s2 = inlined_call_operand.vmem [shape: bf16[2,16,128], index: 2, kind: output, shape index: {}]
  %s3 = sld [smem:[#allocation0]]
  $region57: #{resnet_generator_forward.28} parent=0
    _
  %s5 = ssub.s32 1, %s3
  %s6 = scalar_select 0, %s5, %s3
  loop: start=0, step=1, limit=6
  $region2: #{resnet_generator_forward.28} parent=0 // loop_pre_header
    _
  $region3: #{resnet_generator_forward.28} parent=0 // loop_header
    %s8 = sphi 0, %s12
    %p9 = scmp.ge.s32.totalorder %s8, 6
    %s15 = sphi 0, %s34
    %s16 = sphi 0, %s30
    %s17 = sphi 0, %s26
    %s18 = sphi 0, %s15
    %s19 = sphi 0, %s16
    %s20 = sphi 0, %s17
    %s21 = sphi 0, %s18
    %s22 = sphi 0, %s19
    %s23 = sphi 0, %s20
    %s39 = sphi 0, %s41
    %s42 = sphi 0, %s39
    %s43 = sphi 0, %s42
    %s59 = sphi 0, %s43
    %s69 = sphi 0, %s71
    %s72 = sphi 0, %s69
    %s73 = sphi 0, %s72
    %s89 = sphi 0, %s73
    %s99 = sphi 0, %s101
    %s102 = sphi 0, %s99
    %s103 = sphi 0, %s102
    %s119 = sphi 0, %s103
  $region4: #{resnet_generator_forward.28} parent=0 // loop_header_branch
    %11 = sbr.rel (%p9) target = $region8
  $region5: #{resnet_generator_forward.28} parent=0 // loop_body
    %s13 = ssub.s32 %s8, 1
    %s14 = ssub.s32 %s8, 2
    %s24 = sadd.s32 1, %s17
    %p25 = scmp.ge.s32.totalorder %s24, 1
    %s26 = scalar_select %p25, 0, %s24
    %s27 = sadd.s32 1, %s16
    %s28 = scalar_select %p25, %s27, %s16
    %p29 = scmp.ge.s32.totalorder %s28, 2
    %s30 = scalar_select %p29, 0, %s28
    %s31 = sadd.s32 1, %s15
    %s32 = scalar_select %p29, %s31, %s15
    %p33 = scmp.ge.s32.totalorder %s32, 2
    %s34 = scalar_select %p33, 0, %s32
    %s35 = ssub.s32 %s15, %s34
    %s36 = ssub.s32 %s17, %s26
    %s37 = sor.u32 %s35, %s36
    %p38 = scmp.eq.s32.totalorder %s37, 0
    %s40 = sadd.s32 %s39, 1
    %s41 = scalar_select %p38, %s39, %s40
    %p44 = pneg %p38
    %p45 = scmp.eq.s32.totalorder %s8, 3
    %p46 = por %p44, %p45
    %p47 = scmp.ne.s32.totalorder %s39, %s42
    %p48 = scmp.eq.s32.totalorder %s8, 0
    %p49 = por %p47, %p48
    %p50 = scmp.ne.s32.totalorder %s39, %s42
    %p51 = scmp.eq.s32.totalorder %s13, 3
    %p52 = por %p50, %p51
    %p53 = scmp.ne.s32.totalorder %s42, %s43
    %p54 = scmp.eq.s32.totalorder %s13, 0
    %p55 = por %p53, %p54
    %p56 = scmp.ne.s32.totalorder %s42, %s43
    %p57 = scmp.eq.s32.totalorder %s14, 3
    %p58 = por %p56, %p57
    %p60 = scmp.ne.s32.totalorder %s43, %s59
    %p61 = scmp.eq.s32.totalorder %s14, 0
    %p62 = por %p60, %p61
    %s63 = smul.u32 %s17, %s16
    %s64 = smul.u32 %s26, %s30
    %s65 = ssub.s32 %s15, %s34
    %s66 = ssub.s32 %s63, %s64
    %s67 = sor.u32 %s65, %s66
    %p68 = scmp.eq.s32.totalorder %s67, 0
    %s70 = sadd.s32 %s69, 1
    %s71 = scalar_select %p68, %s69, %s70
    %p74 = pneg %p68
    %p75 = scmp.eq.s32.totalorder %s8, 3
    %p76 = por %p74, %p75
    %p77 = scmp.ne.s32.totalorder %s69, %s72
    %p78 = scmp.eq.s32.totalorder %s8, 0
    %p79 = por %p77, %p78
    %p80 = scmp.ne.s32.totalorder %s69, %s72
    %p81 = scmp.eq.s32.totalorder %s13, 3
    %p82 = por %p80, %p81
    %p83 = scmp.ne.s32.totalorder %s72, %s73
    %p84 = scmp.eq.s32.totalorder %s13, 0
    %p85 = por %p83, %p84
    %p86 = scmp.ne.s32.totalorder %s72, %s73
    %p87 = scmp.eq.s32.totalorder %s14, 3
    %p88 = por %p86, %p87
    %p90 = scmp.ne.s32.totalorder %s73, %s89
    %p91 = scmp.eq.s32.totalorder %s14, 0
    %p92 = por %p90, %p91
    %s93 = smul.u32 %s17, %s16
    %s94 = smul.u32 %s26, %s30
    %s95 = ssub.s32 %s15, %s34
    %s96 = ssub.s32 %s93, %s94
    %s97 = sor.u32 %s95, %s96
    %p98 = scmp.eq.s32.totalorder %s97, 0
    %s100 = sadd.s32 %s99, 1
    %s101 = scalar_select %p98, %s99, %s100
    %p104 = pneg %p98
    %p105 = scmp.eq.s32.totalorder %s8, 3
    %p106 = por %p104, %p105
    %p107 = scmp.ne.s32.totalorder %s99, %s102
    %p108 = scmp.eq.s32.totalorder %s8, 0
    %p109 = por %p107, %p108
    %p110 = scmp.ne.s32.totalorder %s99, %s102
    %p111 = scmp.eq.s32.totalorder %s13, 3
    %p112 = por %p110, %p111
    %p113 = scmp.ne.s32.totalorder %s102, %s103
    %p114 = scmp.eq.s32.totalorder %s13, 0
    %p115 = por %p113, %p114
    %p116 = scmp.ne.s32.totalorder %s102, %s103
    %p117 = scmp.eq.s32.totalorder %s14, 3
    %p118 = por %p116, %p117
    %p120 = scmp.ne.s32.totalorder %s103, %s119
    %p121 = scmp.eq.s32.totalorder %s14, 0
    %p122 = por %p120, %p121
    %p123 = scmp.le.s32.totalorder 1, %s8
    %p124 = scmp.lt.s32.totalorder %s8, 5
    %p125 = pnand %p123, %p124
    %p126 = pneg %p125
    // Predicated region
    $region9: #{resnet_generator_forward.28} parent=5 // pred_check
      _
    $region10: #{resnet_generator_forward.28} parent=5 // pred_check_branch
      %128 = sbr.rel (%p125) target = $region12
    $region11: #{resnet_generator_forward.28} parent=5 // pred_region
      %s129 = ssub.s32 %s8, 1
    $region12: #{resnet_generator_forward.28} parent=5 // pred_fallthru
      _
    %p130 = scmp.lt.s32.totalorder %s8, 4
    // Predicated region
    $region13: #{resnet_generator_forward.28} parent=5 // pred_check
      %p131 = pneg %p130
    $region14: #{resnet_generator_forward.28} parent=5 // pred_check_branch
      %133 = sbr.rel (%p131) target = $region16
    $region15: #{resnet_generator_forward.28} parent=5 // pred_region
      // Predicated region
      $region17: #{resnet_generator_forward.28} parent=15 // pred_check
        %p134 = pneg %p49
      $region18: #{resnet_generator_forward.28} parent=15 // pred_check_branch
        %136 = sbr.rel (%p134) target = $region20
      $region19: #{resnet_generator_forward.28} parent=15 // pred_region
        %s137 = smul.u32 2, %s17
        %p138 = scmp.lt.s32.totalorder %s15, 1
        %s139 = scalar_select %p138, %s15, 1
        %p140 = scmp.lt.s32.totalorder %s137, 1
        %s141 = scalar_select %p140, %s137, 1
        %s142 = smul.addr %s139, 2
        %s143 = sadd.s32 %s141, %s142
        %s144 = smul.addr %s143, 4
        %s145 = scalar_lea.vmem %s0, %s144
        %s146 = smul.u32 2, %s17
      $region20: #{resnet_generator_forward.28} parent=15 // pred_fallthru
        _
      // Predicated region
      $region21: #{resnet_generator_forward.28} parent=15 // pred_check
        %p147 = pneg %p79
      $region22: #{resnet_generator_forward.28} parent=15 // pred_check_branch
        %149 = sbr.rel (%p147) target = $region24
      $region23: #{resnet_generator_forward.28} parent=15 // pred_region
        %s150 = smul.u32 %s17, %s16
        %s151 = smul.u32 2, %s150
        %p152 = scmp.lt.s32.totalorder %s15, 1
        %s153 = scalar_select %p152, %s15, 1
        %p154 = scmp.lt.s32.totalorder %s151, 1
        %s155 = scalar_select %p154, %s151, 1
        %s156 = smul.addr %s153, 2
        %s157 = sadd.s32 %s155, %s156
        %s158 = smul.addr %s157, 4
        %s159 = scalar_lea.vmem %s1, %s158
        %s160 = smul.u32 %s17, %s16
        %s161 = smul.u32 2, %s160
      $region24: #{resnet_generator_forward.28} parent=15 // pred_fallthru
        _
    $region16: #{resnet_generator_forward.28} parent=5 // pred_fallthru
      _
    %p162 = scmp.le.s32.totalorder 1, %s8
    %p163 = scmp.lt.s32.totalorder %s8, 5
    %p164 = pnand %p162, %p163
    %p165 = pneg %p164
    // Predicated region
    $region25: #{resnet_generator_forward.28} parent=5 // pred_check
      _
    $region26: #{resnet_generator_forward.28} parent=5 // pred_check_branch
      %167 = sbr.rel (%p164) target = $region28
    $region27: #{resnet_generator_forward.28} parent=5 // pred_region
      %s168 = ssub.s32 %s8, 1
      %s169 = smul.u32 2, %s20
      %p170 = scmp.lt.s32.totalorder %s18, 1
      %s171 = scalar_select %p170, %s18, 1
      %p172 = scmp.lt.s32.totalorder %s169, 1
      %s173 = scalar_select %p172, %s169, 1
      %s174 = smul.addr %s171, 2
      %s175 = sadd.s32 %s173, %s174
      %s176 = smul.addr %s175, 4
      %s177 = scalar_lea.vmem %s0, %s176
      %p178 = pneg %p55
      %p179 = pneg %p52
      %s180 = smul.u32 %s20, %s19
      %s181 = smul.u32 2, %s180
      %p182 = scmp.lt.s32.totalorder %s18, 1
      %s183 = scalar_select %p182, %s18, 1
      %p184 = scmp.lt.s32.totalorder %s181, 1
      %s185 = scalar_select %p184, %s181, 1
      %s186 = smul.addr %s183, 2
      %s187 = sadd.s32 %s185, %s186
      %s188 = smul.addr %s187, 4
      %s189 = scalar_lea.vmem %s1, %s188
      %p190 = pneg %p85
      %p191 = pneg %p82
      %p192 = pneg %p115
      %p193 = pneg %p112
      %s194 = smul.u32 %s20, %s19
      %s195 = smul.u32 2, %s194
      %p196 = scmp.lt.s32.totalorder %s18, 1
      %s197 = scalar_select %p196, %s18, 1
      %p198 = scmp.lt.s32.totalorder %s195, 1
      %s199 = scalar_select %p198, %s195, 1
      %s200 = smul.addr %s197, 2
      %s201 = sadd.s32 %s199, %s200
      %s202 = smul.addr %s201, 4
      %s203 = scalar_lea.vmem %s2, %s202
      %s204 = smul.u32 2, %s20
      %p205 = scmp.lt.s32.totalorder %s18, 1
      %s206 = scalar_select %p205, %s18, 1
      %p207 = scmp.lt.s32.totalorder %s204, 1
      %s208 = scalar_select %p207, %s204, 1
      %s209 = smul.addr %s206, 2
      %s210 = sadd.s32 %s208, %s209
      %s211 = smul.addr %s210, 4
      %s212 = scalar_lea.vmem %s0, %s211
      %s213 = smul.u32 2, %s20
      %s214 = smul.u32 %s20, %s19
      %s215 = smul.u32 2, %s214
      %p216 = scmp.lt.s32.totalorder %s18, 1
      %s217 = scalar_select %p216, %s18, 1
      %p218 = scmp.lt.s32.totalorder %s215, 1
      %s219 = scalar_select %p218, %s215, 1
      %s220 = smul.addr %s217, 2
      %s221 = sadd.s32 %s219, %s220
      %s222 = smul.addr %s221, 4
      %s223 = scalar_lea.vmem %s1, %s222
      %s224 = smul.u32 %s20, %s19
      %s225 = smul.u32 2, %s224
      %s226 = smul.u32 %s20, %s19
      %s227 = smul.u32 2, %s226
      %p228 = scmp.lt.s32.totalorder %s18, 1
      %s229 = scalar_select %p228, %s18, 1
      %p230 = scmp.lt.s32.totalorder %s227, 1
      %s231 = scalar_select %p230, %s227, 1
      %s232 = smul.addr %s229, 2
      %s233 = sadd.s32 %s231, %s232
      %s234 = smul.addr %s233, 4
      %s235 = scalar_lea.vmem %s2, %s234
      %s236 = smul.u32 %s20, %s19
      %s237 = smul.u32 2, %s236
      %p238 = scmp.eq.s32.totalorder %s19, 0
      %p239 = scmp.eq.s32.totalorder %s20, 0
      %p240 = pnand %p238, %p239
      %p241 = pneg %p240
      // Predicated region
      $region29: #{resnet_generator_forward.28} parent=27 // pred_check
        _
      $region30: #{resnet_generator_forward.28} parent=27 // pred_check_branch
        %243 = sbr.rel (%p240) target = $region32
      $region31: #{resnet_generator_forward.28} parent=27 // pred_region
        %244 = vst [vmem:[#allocation2] sm:$0x1] 0.0
        %245 = vst [vmem:[#allocation3] sm:$0x1] 0.0
      $region32: #{resnet_generator_forward.28} parent=27 // pred_fallthru
        _
      %v246 = vld [vmem:[%s212] sm:$0xf]
      %v247 = vld [vmem:[%s212 + $0x4] sm:$0xf]
      %v248 = vunpack.c.l.bf16 %v246
      %v249 = vunpack.c.l.bf16 %v247
      // Predicated region
      $region33: #{resnet_generator_forward.28} parent=27 // pred_check
        %p250 = pneg %p238
      $region34: #{resnet_generator_forward.28} parent=27 // pred_check_branch
        %252 = sbr.rel (%p250) target = $region36
      $region35: #{resnet_generator_forward.28} parent=27 // pred_region
        %v253 = vld [vmem:[#allocation2] sm:$0x1]
        %v254 = vadd.f32 %v248, %v249
        %v255 = vrot.slane %v254, 4
        %v256 = vadd.f32 %v254, %v255
        %v257 = vrot.slane %v256, 2
        %v258 = vadd.f32 %v256, %v257
        %v259 = vrot.slane %v258, 1
        %v260 = vadd.f32 %v258, %v259
        %v261 = vadd.f32 %v253, %v260
        %262 = vst [vmem:[#allocation2] sm:$0x1] %v261
        %v263 = vld [vmem:[#allocation3] sm:$0x1]
        %v264 = vmul.f32 %v248, %v248
        %v265 = vmul.f32 %v249, %v249
        %v266 = vadd.f32 %v264, %v265
        %v267 = vrot.slane %v266, 4
        %v268 = vadd.f32 %v266, %v267
        %v269 = vrot.slane %v268, 2
        %v270 = vadd.f32 %v268, %v269
        %v271 = vrot.slane %v270, 1
        %v272 = vadd.f32 %v270, %v271
        %v273 = vadd.f32 %v263, %v272
        %274 = vst [vmem:[#allocation3] sm:$0x1] %v273
      $region36: #{resnet_generator_forward.28} parent=27 // pred_fallthru
        _
      // Predicated region
      $region37: #{resnet_generator_forward.28} parent=27 // pred_check
        _
      $region38: #{resnet_generator_forward.28} parent=27 // pred_check_branch
        %276 = sbr.rel (%p240) target = $region40
      $region39: #{resnet_generator_forward.28} parent=27 // pred_region
        %v277 = vld [vmem:[#allocation2] sm:$0x1]
        %v278 = vrcp.pop 16.0
        %v279 = vmul.f32 %v277, %v278
        %v280 = vld [vmem:[#allocation3] sm:$0x1]
        %v281 = vmul.f32 %v280, %v278
        %v282 = vmul.f32 %v279, %v279
        %v283 = vsub.f32 %v281, %v282
        %284 = vst [vmem:[#allocation2] sm:$0x1] %v279
        %v285 = vmax.f32 %v283, 0.0
        %v286 = vadd.f32 %v285, 1e-05
        %v287 = vrsqrt.pop %v286
        %288 = vst [vmem:[#allocation3] sm:$0x1] %v287
      $region40: #{resnet_generator_forward.28} parent=27 // pred_fallthru
        _
      %p289 = scmp.eq.s32.totalorder %s19, 1
      // Predicated region
      $region41: #{resnet_generator_forward.28} parent=27 // pred_check
        %p290 = pneg %p289
      $region42: #{resnet_generator_forward.28} parent=27 // pred_check_branch
        %292 = sbr.rel (%p290) target = $region44
      $region43: #{resnet_generator_forward.28} parent=27 // pred_region
        %v293 = vld [vmem:[#allocation2] sm:$0x1]
        %v295 = vlaneseq
        %v296 = vshrl.u32 %v295, 7
        %v297 = vsub.s32 0, %v296
        %v298 = vrot.slane %v293, %v297
        %v300 = vsub.f32 %v248, %v298
        %v301 = vsub.f32 %v249, %v298
        %v302 = vld [vmem:[#allocation3] sm:$0x1]
        %v304 = vlaneseq
        %v305 = vshrl.u32 %v304, 7
        %v306 = vsub.s32 0, %v305
        %v307 = vrot.slane %v302, %v306
        %v309 = vmul.f32 %v300, %v307
        %v310 = vmul.f32 %v301, %v307
        %v311 = vld [vmem:[%s223] sm:$0xf]
        %v312 = vld [vmem:[%s223 + $0x4] sm:$0xf]
        %v313 = vunpack.c.l.bf16 %v311
        %v314 = vunpack.c.l.bf16 %v312
        %v315 = vadd.f32 %v309, %v313
        %v316 = vadd.f32 %v310, %v314
        %v317 = vpack.c.bf16 %v316, %v315
        %v319 = vunpack.c.l.b16 %v317
        %v320 = vunpack.c.h.b16 %v317
        %v321 = vpack.c.b16 %v319, %v319
        %v322 = vpack.c.b16 %v320, %v320
        %325 = vst [vmem:[%s235] sm:$0xf] %v321
        %326 = vst [vmem:[%s235 + $0x4] sm:$0xf] %v322
      $region44: #{resnet_generator_forward.28} parent=27 // pred_fallthru
        _
      %s327 = smul.u32 %s20, %s19
      %s328 = smul.u32 2, %s327
      %p329 = scmp.lt.s32.totalorder %s18, 1
      %s330 = scalar_select %p329, %s18, 1
      %p331 = scmp.lt.s32.totalorder %s328, 1
      %s332 = scalar_select %p331, %s328, 1
      %s333 = smul.addr %s330, 2
      %s334 = sadd.s32 %s332, %s333
      %s335 = smul.addr %s334, 4
      %s336 = scalar_lea.vmem %s2, %s335
      // Predicated region
      $region45: #{resnet_generator_forward.28} parent=27 // pred_check
        %p337 = pneg %p112
      $region46: #{resnet_generator_forward.28} parent=27 // pred_check_branch
        %339 = sbr.rel (%p337) target = $region48
      $region47: #{resnet_generator_forward.28} parent=27 // pred_region
        %s340 = smul.u32 %s20, %s19
        %s341 = smul.u32 2, %s340
      $region48: #{resnet_generator_forward.28} parent=27 // pred_fallthru
        _
    $region28: #{resnet_generator_forward.28} parent=5 // pred_fallthru
      _
    %p342 = scmp.le.s32.totalorder 2, %s8
    // Predicated region
    $region49: #{resnet_generator_forward.28} parent=5 // pred_check
      %p343 = pneg %p342
    $region50: #{resnet_generator_forward.28} parent=5 // pred_check_branch
      %345 = sbr.rel (%p343) target = $region52
    $region51: #{resnet_generator_forward.28} parent=5 // pred_region
      %s346 = ssub.s32 %s8, 2
      // Predicated region
      $region53: #{resnet_generator_forward.28} parent=51 // pred_check
        %p347 = pneg %p118
      $region54: #{resnet_generator_forward.28} parent=51 // pred_check_branch
        %349 = sbr.rel (%p347) target = $region56
      $region55: #{resnet_generator_forward.28} parent=51 // pred_region
        %s350 = smul.u32 %s23, %s22
        %s351 = smul.u32 2, %s350
        %p352 = scmp.lt.s32.totalorder %s21, 1
        %s353 = scalar_select %p352, %s21, 1
        %p354 = scmp.lt.s32.totalorder %s351, 1
        %s355 = scalar_select %p354, %s351, 1
        %s356 = smul.addr %s353, 2
        %s357 = sadd.s32 %s355, %s356
        %s358 = smul.addr %s357, 4
        %s359 = scalar_lea.vmem %s2, %s358
      $region56: #{resnet_generator_forward.28} parent=51 // pred_fallthru
        _
    $region52: #{resnet_generator_forward.28} parent=5 // pred_fallthru
      _
  $region6: #{resnet_generator_forward.28} parent=0 // loop_footer
    %s12 = sadd.s32 1, %s8
  $region7: #{resnet_generator_forward.28} parent=0 // loop_footer_branch
    %7 = sbr.rel target = $region3
  $region8: #{resnet_generator_forward.28} parent=0 // loop_exit
    _

// kernel: resnet_generator_forward.33
$region0: #{resnet_generator_forward.33}
  #allocation0 [shape = 'u32[]', space=smem, size = 0x4, offset = 0x4, fixed_abs, tag = 'smem constant byte address 0x4 - core index']
  #allocation1 [shape = 'u32[144,128]{1,0:T(1,128)}', space=vmem, size = 0x12000, scoped, tag = 'internal scratch']
  #allocation2 [shape = 'f32[8,128]{1,0:T(8,128)}', space=vmem, size = 0x1000, scoped, tag = 'scratch operand']
  %s0 = inlined_call_operand.vmem [shape: bf16[2,10,10,128], index: 0, kind: input, shape index: {}]
  %s1 = inlined_call_operand.vmem [shape: bf16[3,384,128], index: 1, kind: input, shape index: {}]
  %s2 = inlined_call_operand.vmem [shape: f32[1,128], index: 2, kind: input, shape index: {}]
  %s3 = inlined_call_operand.vmem [shape: bf16[2,8,8,128], index: 3, kind: output, shape index: {}]
  %s4 = sld [smem:[#allocation0]]
  $region53: #{resnet_generator_forward.33} parent=0
    _
  %s6 = ssub.s32 1, %s4
  %s7 = scalar_select 0, %s6, %s4
  loop: start=0, step=1, limit=50
  $region2: #{resnet_generator_forward.33} parent=0 // loop_pre_header
    _
  $region3: #{resnet_generator_forward.33} parent=0 // loop_header
    %s9 = sphi 0, %s13
    %p10 = scmp.ge.s32.totalorder %s9, 50
    %s16 = sphi 0, %s35
    %s17 = sphi 0, %s31
    %s18 = sphi 0, %s27
    %s19 = sphi 0, %s16
    %s20 = sphi 0, %s17
    %s21 = sphi 0, %s18
    %s22 = sphi 0, %s19
    %s23 = sphi 0, %s20
    %s24 = sphi 0, %s21
    %s42 = sphi 0, %s44
    %s45 = sphi 0, %s42
    %s46 = sphi 0, %s45
    %s62 = sphi 0, %s46
    %s66 = sphi 0, %s66
    %s68 = sphi 0, %s66
    %s69 = sphi 0, %s68
    %s83 = sphi 0, %s69
    %s87 = sphi 0, %s87
    %s89 = sphi 0, %s87
    %s90 = sphi 0, %s89
    %s104 = sphi 0, %s90
    %s112 = sphi 0, %s114
    %s115 = sphi 0, %s112
    %s116 = sphi 0, %s115
    %s132 = sphi 0, %s116
  $region4: #{resnet_generator_forward.33} parent=0 // loop_header_branch
    %12 = sbr.rel (%p10) target = $region8
  $region5: #{resnet_generator_forward.33} parent=0 // loop_body
    %s14 = ssub.s32 %s9, 1
    %s15 = ssub.s32 %s9, 2
    %s25 = sadd.s32 1, %s18
    %p26 = scmp.ge.s32.totalorder %s25, 3
    %s27 = scalar_select %p26, 0, %s25
    %s28 = sadd.s32 1, %s17
    %s29 = scalar_select %p26, %s28, %s17
    %p30 = scmp.ge.s32.totalorder %s29, 8
    %s31 = scalar_select %p30, 0, %s29
    %s32 = sadd.s32 1, %s16
    %s33 = scalar_select %p30, %s32, %s16
    %p34 = scmp.ge.s32.totalorder %s33, 2
    %s35 = scalar_select %p34, 0, %s33
    %s36 = sadd.s32 %s17, %s18
    %s37 = sadd.s32 %s31, %s27
    %s38 = ssub.s32 %s16, %s35
    %s39 = ssub.s32 %s36, %s37
    %s40 = sor.u32 %s38, %s39
    %p41 = scmp.eq.s32.totalorder %s40, 0
    %s43 = sadd.s32 %s42, 1
    %s44 = scalar_select %p41, %s42, %s43
    %p47 = pneg %p41
    %p48 = scmp.eq.s32.totalorder %s9, 47
    %p49 = por %p47, %p48
    %p50 = scmp.ne.s32.totalorder %s42, %s45
    %p51 = scmp.eq.s32.totalorder %s9, 0
    %p52 = por %p50, %p51
    %p53 = scmp.ne.s32.totalorder %s42, %s45
    %p54 = scmp.eq.s32.totalorder %s14, 47
    %p55 = por %p53, %p54
    %p56 = scmp.ne.s32.totalorder %s45, %s46
    %p57 = scmp.eq.s32.totalorder %s14, 0
    %p58 = por %p56, %p57
    %p59 = scmp.ne.s32.totalorder %s45, %s46
    %p60 = scmp.eq.s32.totalorder %s15, 47
    %p61 = por %p59, %p60
    %p63 = scmp.ne.s32.totalorder %s46, %s62
    %p64 = scmp.eq.s32.totalorder %s15, 0
    %p65 = por %p63, %p64
    %s67 = sadd.s32 %s66, 1
    %p70 = scmp.eq.s32.totalorder %s9, 47
    %p71 = scmp.ne.s32.totalorder %s66, %s68
    %p72 = scmp.eq.s32.totalorder %s9, 0
    %p73 = por %p71, %p72
    %p74 = scmp.ne.s32.totalorder %s66, %s68
    %p75 = scmp.eq.s32.totalorder %s14, 47
    %p76 = por %p74, %p75
    %p77 = scmp.ne.s32.totalorder %s68, %s69
    %p78 = scmp.eq.s32.totalorder %s14, 0
    %p79 = por %p77, %p78
    %p80 = scmp.ne.s32.totalorder %s68, %s69
    %p81 = scmp.eq.s32.totalorder %s15, 47
    %p82 = por %p80, %p81
    %p84 = scmp.ne.s32.totalorder %s69, %s83
    %p85 = scmp.eq.s32.totalorder %s15, 0
    %p86 = por %p84, %p85
    %s88 = sadd.s32 %s87, 1
    %p91 = scmp.eq.s32.totalorder %s9, 47
    %p92 = scmp.ne.s32.totalorder %s87, %s89
    %p93 = scmp.eq.s32.totalorder %s9, 0
    %p94 = por %p92, %p93
    %p95 = scmp.ne.s32.totalorder %s87, %s89
    %p96 = scmp.eq.s32.totalorder %s14, 47
    %p97 = por %p95, %p96
    %p98 = scmp.ne.s32.totalorder %s89, %s90
    %p99 = scmp.eq.s32.totalorder %s14, 0
    %p100 = por %p98, %p99
    %p101 = scmp.ne.s32.totalorder %s89, %s90
    %p102 = scmp.eq.s32.totalorder %s15, 47
    %p103 = por %p101, %p102
    %p105 = scmp.ne.s32.totalorder %s90, %s104
    %p106 = scmp.eq.s32.totalorder %s15, 0
    %p107 = por %p105, %p106
    %s108 = ssub.s32 %s16, %s35
    %s109 = ssub.s32 %s17, %s31
    %s110 = sor.u32 %s108, %s109
    %p111 = scmp.eq.s32.totalorder %s110, 0
    %s113 = sadd.s32 %s112, 1
    %s114 = scalar_select %p111, %s112, %s113
    %p117 = pneg %p111
    %p118 = scmp.eq.s32.totalorder %s9, 47
    %p119 = por %p117, %p118
    %p120 = scmp.ne.s32.totalorder %s112, %s115
    %p121 = scmp.eq.s32.totalorder %s9, 0
    %p122 = por %p120, %p121
    %p123 = scmp.ne.s32.totalorder %s112, %s115
    %p124 = scmp.eq.s32.totalorder %s14, 47
    %p125 = por %p123, %p124
    %p126 = scmp.ne.s32.totalorder %s115, %s116
    %p127 = scmp.eq.s32.totalorder %s14, 0
    %p128 = por %p126, %p127
    %p129 = scmp.ne.s32.totalorder %s115, %s116
    %p130 = scmp.eq.s32.totalorder %s15, 47
    %p131 = por %p129, %p130
    %p133 = scmp.ne.s32.totalorder %s116, %s132
    %p134 = scmp.eq.s32.totalorder %s15, 0
    %p135 = por %p133, %p134
    %p136 = scmp.le.s32.totalorder 1, %s9
    %p137 = scmp.lt.s32.totalorder %s9, 49
    %p138 = pnand %p136, %p137
    %p139 = pneg %p138
    // Predicated region
    $region9: #{resnet_generator_forward.33} parent=5 // pred_check
      _
    $region10: #{resnet_generator_forward.33} parent=5 // pred_check_branch
      %141 = sbr.rel (%p138) target = $region12
    $region11: #{resnet_generator_forward.33} parent=5 // pred_region
      %s142 = ssub.s32 %s9, 1
      // Predicated region
      $region13: #{resnet_generator_forward.33} parent=11 // pred_check
        %p143 = pneg %p79
      $region14: #{resnet_generator_forward.33} parent=11 // pred_check_branch
        %145 = sbr.rel (%p143) target = $region16
      $region15: #{resnet_generator_forward.33} parent=11 // pred_region
        _
      $region16: #{resnet_generator_forward.33} parent=11 // pred_fallthru
        _
      // Predicated region
      $region17: #{resnet_generator_forward.33} parent=11 // pred_check
        %p146 = pneg %p100
      $region18: #{resnet_generator_forward.33} parent=11 // pred_check_branch
        %148 = sbr.rel (%p146) target = $region20
      $region19: #{resnet_generator_forward.33} parent=11 // pred_region
        _
      $region20: #{resnet_generator_forward.33} parent=11 // pred_fallthru
        _
    $region12: #{resnet_generator_forward.33} parent=5 // pred_fallthru
      _
    %p149 = scmp.lt.s32.totalorder %s9, 48
    // Predicated region
    $region21: #{resnet_generator_forward.33} parent=5 // pred_check
      %p150 = pneg %p149
    $region22: #{resnet_generator_forward.33} parent=5 // pred_check_branch
      %152 = sbr.rel (%p150) target = $region24
    $region23: #{resnet_generator_forward.33} parent=5 // pred_region
      // Predicated region
      $region25: #{resnet_generator_forward.33} parent=23 // pred_check
        %p153 = pneg %p52
      $region26: #{resnet_generator_forward.33} parent=23 // pred_check_branch
        %155 = sbr.rel (%p153) target = $region28
      $region27: #{resnet_generator_forward.33} parent=23 // pred_region
        %s156 = sadd.s32 %s17, %s18
        %p157 = scmp.lt.s32.totalorder %s16, 1
        %s158 = scalar_select %p157, %s16, 1
        %p159 = scmp.lt.s32.totalorder %s156, 9
        %s160 = scalar_select %p159, %s156, 9
        %s161 = smul.addr %s160, 2
        %s162 = smul.addr %s158, 20
        %s163 = sadd.s32 %s161, %s162
        %s164 = smul.addr %s163, 4
        %s165 = scalar_lea.vmem %s0, %s164
        %s166 = sadd.s32 %s17, %s18
      $region28: #{resnet_generator_forward.33} parent=23 // pred_fallthru
        _
    $region24: #{resnet_generator_forward.33} parent=5 // pred_fallthru
      _
    %p167 = scmp.le.s32.totalorder 1, %s9
    %p168 = scmp.lt.s32.totalorder %s9, 49
    %p169 = pnand %p167, %p168
    %p170 = pneg %p169
    // Predicated region
    $region29: #{resnet_generator_forward.33} parent=5 // pred_check
      _
    $region30: #{resnet_generator_forward.33} parent=5 // pred_check_branch
      %172 = sbr.rel (%p169) target = $region32
    $region31: #{resnet_generator_forward.33} parent=5 // pred_region
      %s173 = ssub.s32 %s9, 1
      %s174 = sadd.s32 %s20, %s21
      %p175 = scmp.lt.s32.totalorder %s19, 1
      %s176 = scalar_select %p175, %s19, 1
      %p177 = scmp.lt.s32.totalorder %s174, 9
      %s178 = scalar_select %p177, %s174, 9
      %s179 = smul.addr %s178, 2
      %s180 = smul.addr %s176, 20
      %s181 = sadd.s32 %s179, %s180
      %s182 = smul.addr %s181, 4
      %s183 = scalar_lea.vmem %s0, %s182
      %p184 = pneg %p58
      %p185 = pneg %p55
      %p186 = pneg %p79
      %p187 = pneg %p76
      %p188 = pneg %p100
      %p189 = pneg %p97
      %p190 = pneg %p128
      %p191 = pneg %p125
      %p192 = scmp.lt.s32.totalorder %s19, 1
      %s193 = scalar_select %p192, %s19, 1
      %p194 = scmp.lt.s32.totalorder %s20, 7
      %s195 = scalar_select %p194, %s20, 7
      %s196 = smul.addr %s193, 8
      %s197 = sadd.s32 %s195, %s196
      %s198 = smul.addr %s197, 4
      %s199 = scalar_lea.vmem %s3, %s198
      %s200 = sadd.s32 %s20, %s21
      %p201 = scmp.lt.s32.totalorder %s19, 1
      %s202 = scalar_select %p201, %s19, 1
      %p203 = scmp.lt.s32.totalorder %s200, 9
      %s204 = scalar_select %p203, %s200, 9
      %s205 = smul.addr %s204, 2
      %s206 = smul.addr %s202, 20
      %s207 = sadd.s32 %s205, %s206
      %s208 = smul.addr %s207, 4
      %s209 = scalar_lea.vmem %s0, %s208
      %s210 = sadd.s32 %s20, %s21
      %p211 = scmp.lt.s32.totalorder %s19, 1
      %s212 = scalar_select %p211, %s19, 1
      %p213 = scmp.lt.s32.totalorder %s20, 7
      %s214 = scalar_select %p213, %s20, 7
      %s215 = smul.addr %s212, 8
      %s216 = sadd.s32 %s214, %s215
      %s217 = smul.addr %s216, 4
      %s218 = scalar_lea.vmem %s3, %s217
      %p220 = scmp.eq.s32.totalorder %s21, 0
      // Predicated region
      $region33: #{resnet_generator_forward.33} parent=31 // pred_check
        %p221 = pneg %p220
      $region34: #{resnet_generator_forward.33} parent=31 // pred_check_branch
        %223 = sbr.rel (%p221) target = $region36
      $region35: #{resnet_generator_forward.33} parent=31 // pred_region
        %224 = vst [vmem:[#allocation2] sm:$0xff] 0.0
      $region36: #{resnet_generator_forward.33} parent=31 // pred_fallthru
        _
      %v225 = vld [vmem:[%s209] sm:$0xf]
      %v226 = vld [vmem:[%s209 + $0x4] sm:$0x1]
      %s227 = smul.u32 %s21, 48
      %s228 = smul.addr %s227, 4
      %s229 = scalar_lea.vmem %s1, %s228
      %v230 = vld [vmem:[%s229] sm:$0xf]
      %v231 = vld [vmem:[%s229 + $0x4] sm:$0xf]
      %v232 = vld [vmem:[%s229 + $0x8] sm:$0xf]
      %v233 = vld [vmem:[%s229 + $0xc] sm:$0xf]
      %v234 = vld [vmem:[%s229 + $0x10] sm:$0xf]
      %v235 = vld [vmem:[%s229 + $0x14] sm:$0xf]
      %v236 = vld [vmem:[%s229 + $0x18] sm:$0xf]
      %v237 = vld [vmem:[%s229 + $0x1c] sm:$0xf]
      %v238 = vld [vmem:[%s229 + $0x20] sm:$0xf]
      %v239 = vld [vmem:[%s229 + $0x24] sm:$0xf]
      %v240 = vld [vmem:[%s229 + $0x28] sm:$0xf]
      %v241 = vld [vmem:[%s229 + $0x2c] sm:$0xf]
      %v242 = vld [vmem:[%s229 + $0x30] sm:$0xf]
      %v243 = vld [vmem:[%s229 + $0x34] sm:$0xf]
      %v244 = vld [vmem:[%s229 + $0x38] sm:$0xf]
      %v245 = vld [vmem:[%s229 + $0x3c] sm:$0xf]
      %v246 = vld [vmem:[%s229 + $0x40] sm:$0xf]
      %v247 = vld [vmem:[%s229 + $0x44] sm:$0xf]
      %v248 = vld [vmem:[%s229 + $0x48] sm:$0xf]
      %v249 = vld [vmem:[%s229 + $0x4c] sm:$0xf]
      %v250 = vld [vmem:[%s229 + $0x50] sm:$0xf]
      %v251 = vld [vmem:[%s229 + $0x54] sm:$0xf]
      %v252 = vld [vmem:[%s229 + $0x58] sm:$0xf]
      %v253 = vld [vmem:[%s229 + $0x5c] sm:$0xf]
      %v254 = vld [vmem:[%s229 + $0x60] sm:$0xf]
      %v255 = vld [vmem:[%s229 + $0x64] sm:$0xf]
      %v256 = vld [vmem:[%s229 + $0x68] sm:$0xf]
      %v257 = vld [vmem:[%s229 + $0x6c] sm:$0xf]
      %v258 = vld [vmem:[%s229 + $0x70] sm:$0xf]
      %v259 = vld [vmem:[%s229 + $0x74] sm:$0xf]
      %v260 = vld [vmem:[%s229 + $0x78] sm:$0xf]
      %v261 = vld [vmem:[%s229 + $0x7c] sm:$0xf]
      %v262 = vld [vmem:[%s229 + $0x80] sm:$0xf]
      %v263 = vld [vmem:[%s229 + $0x84] sm:$0xf]
      %v264 = vld [vmem:[%s229 + $0x88] sm:$0xf]
      %v265 = vld [vmem:[%s229 + $0x8c] sm:$0xf]
      %v266 = vld [vmem:[%s229 + $0x90] sm:$0xf]
      %v267 = vld [vmem:[%s229 + $0x94] sm:$0xf]
      %v268 = vld [vmem:[%s229 + $0x98] sm:$0xf]
      %v269 = vld [vmem:[%s229 + $0x9c] sm:$0xf]
      %v270 = vld [vmem:[%s229 + $0xa0] sm:$0xf]
      %v271 = vld [vmem:[%s229 + $0xa4] sm:$0xf]
      %v272 = vld [vmem:[%s229 + $0xa8] sm:$0xf]
      %v273 = vld [vmem:[%s229 + $0xac] sm:$0xf]
      %v274 = vld [vmem:[%s229 + $0xb0] sm:$0xf]
      %v275 = vld [vmem:[%s229 + $0xb4] sm:$0xf]
      %v276 = vld [vmem:[%s229 + $0xb8] sm:$0xf]
      %v277 = vld [vmem:[%s229 + $0xbc] sm:$0xf]
      %v278 = vld [vmem:[#allocation2] sm:$0xff]
      %v295 = vunpack.c.l.b16 %v230
      %v296 = vunpack.c.l.b16 %v231
      %v297 = vunpack.c.l.b16 %v232
      %v298 = vunpack.c.l.b16 %v233
      %v299 = vunpack.c.l.b16 %v234
      %v300 = vunpack.c.l.b16 %v235
      %v301 = vunpack.c.l.b16 %v236
      %v302 = vunpack.c.l.b16 %v237
      %v303 = vunpack.c.l.b16 %v238
      %v304 = vunpack.c.l.b16 %v239
      %v305 = vunpack.c.l.b16 %v240
      %v306 = vunpack.c.l.b16 %v241
      %v307 = vunpack.c.l.b16 %v242
      %v308 = vunpack.c.l.b16 %v243
      %v309 = vunpack.c.l.b16 %v244
      %v310 = vunpack.c.l.b16 %v245
      %v311 = vpack.c.b16 %v296, %v295
      %v312 = vpack.c.b16 %v298, %v297
      %v313 = vpack.c.b16 %v300, %v299
      %v314 = vpack.c.b16 %v302, %v301
      %v315 = vpack.c.b16 %v304, %v303
      %v316 = vpack.c.b16 %v306, %v305
      %v317 = vpack.c.b16 %v308, %v307
      %v318 = vpack.c.b16 %v310, %v309
      %327 = vmatprep.subr.bf16.mxu0 0
      %328 = vmatpush1.bf16.msra.mxu0 %v318
      %329 = vmatprep.subr.bf16.mxu0 0
      %330 = vmatpush1.bf16.msra.mxu0 %v317
      %331 = vmatprep.subr.bf16.mxu0 0
      %332 = vmatpush1.bf16.msra.mxu0 %v316
      %333 = vmatprep.subr.bf16.mxu0 0
      %334 = vmatpush1.bf16.msra.mxu0 %v315
      %335 = vmatprep.subr.bf16.mxu0 0
      %336 = vmatpush1.bf16.msra.mxu0 %v314
      %337 = vmatprep.subr.bf16.mxu0 0
      %338 = vmatpush1.bf16.msra.mxu0 %v313
      %339 = vmatprep.subr.bf16.mxu0 0
      %340 = vmatpush1.bf16.msra.mxu0 %v312
      %341 = vmatprep.subr.bf16.mxu0 0
      %342 = vmatpush1.bf16.msra.mxu0 %v311
      %343 = vmatprep.subr.bf16.mxu0 0
      %344 = vmatpush2.bf16.msra.mxu0 0
      %345 = vmatprep.subr.bf16.mxu0 0
      %346 = vmatpush2.bf16.msra.mxu0 0
      %347 = vmatprep.subr.bf16.mxu0 0
      %348 = vmatpush2.bf16.msra.mxu0 0
      %349 = vmatprep.subr.bf16.mxu0 0
      %350 = vmatpush2.bf16.msra.mxu0 0
      %351 = vmatprep.subr.bf16.mxu0 0
      %352 = vmatpush2.bf16.msra.mxu0 0
      %353 = vmatprep.subr.bf16.mxu0 0
      %354 = vmatpush2.bf16.msra.mxu0 0
      %355 = vmatprep.subr.bf16.mxu0 0
      %356 = vmatpush2.bf16.msra.mxu0 0
      %357 = vmatprep.subr.bf16.mxu0 0
      %358 = vmatpush2.bf16.msra.mxu0 0
      %359 = vmatprep.mubr.bf16.mxu0 0
      %360 = vmatmul.mubr.bf16.gmra.mxu0 %v225
      %v361 = vpop.f32.mrf.mxu0
      %v362 = vadd.f32 0.0, %v361
      %v363 = vpop.f32.mrf.mxu0
      %v364 = vpop.f32.mrf.mxu0
      %v365 = vpop.f32.mrf.mxu0
      %366 = vdwg.mxu0
      %v367 = vadd.f32 %v278, %v362
      %v370 = vunpack.c.l.b16 %v225
      %v371 = vunpack.c.l.b16 %v226
      %v372 = vpack.c.b16 %v371, %v370
      %v374 = vshrl.u32 %v372, 16
      %v376 = vshll.u32 %v372, 16
      %v378 = vrot.slane %v376, 1
      %v379 = vor.u32 %v374, %v378
      %v397 = vunpack.c.l.b16 %v246
      %v398 = vunpack.c.l.b16 %v247
      %v399 = vunpack.c.l.b16 %v248
      %v400 = vunpack.c.l.b16 %v249
      %v401 = vunpack.c.l.b16 %v250
      %v402 = vunpack.c.l.b16 %v251
      %v403 = vunpack.c.l.b16 %v252
      %v404 = vunpack.c.l.b16 %v253
      %v405 = vunpack.c.l.b16 %v254
      %v406 = vunpack.c.l.b16 %v255
      %v407 = vunpack.c.l.b16 %v256
      %v408 = vunpack.c.l.b16 %v257
      %v409 = vunpack.c.l.b16 %v258
      %v410 = vunpack.c.l.b16 %v259
      %v411 = vunpack.c.l.b16 %v260
      %v412 = vunpack.c.l.b16 %v261
      %v413 = vpack.c.b16 %v398, %v397
      %v414 = vpack.c.b16 %v400, %v399
      %v415 = vpack.c.b16 %v402, %v401
      %v416 = vpack.c.b16 %v404, %v403
      %v417 = vpack.c.b16 %v406, %v405
      %v418 = vpack.c.b16 %v408, %v407
      %v419 = vpack.c.b16 %v410, %v409
      %v420 = vpack.c.b16 %v412, %v411
      %429 = vmatprep.subr.bf16.mxu0 0
      %430 = vmatpush1.bf16.msra.mxu0 %v420
      %431 = vmatprep.subr.bf16.mxu0 0
      %432 = vmatpush1.bf16.msra.mxu0 %v419
      %433 = vmatprep.subr.bf16.mxu0 0
      %434 = vmatpush1.bf16.msra.mxu0 %v418
      %435 = vmatprep.subr.bf16.mxu0 0
      %436 = vmatpush1.bf16.msra.mxu0 %v417
      %437 = vmatprep.subr.bf16.mxu0 0
      %438 = vmatpush1.bf16.msra.mxu0 %v416
      %439 = vmatprep.subr.bf16.mxu0 0
      %440 = vmatpush1.bf16.msra.mxu0 %v415
      %441 = vmatprep.subr.bf16.mxu0 0
      %442 = vmatpush1.bf16.msra.mxu0 %v414
      %443 = vmatprep.subr.bf16.mxu0 0
      %444 = vmatpush1.bf16.msra.mxu0 %v413
      %445 = vmatprep.subr.bf16.mxu0 0
      %446 = vmatpush2.bf16.msra.mxu0 0
      %447 = vmatprep.subr.bf16.mxu0 0
      %448 = vmatpush2.bf16.msra.mxu0 0
      %449 = vmatprep.subr.bf16.mxu0 0
      %450 = vmatpush2.bf16.msra.mxu0 0
      %451 = vmatprep.subr.bf16.mxu0 0
      %452 = vmatpush2.bf16.msra.mxu0 0
      %453 = vmatprep.subr.bf16.mxu0 0
      %454 = vmatpush2.bf16.msra.mxu0 0
      %455 = vmatprep.subr.bf16.mxu0 0
      %456 = vmatpush2.bf16.msra.mxu0 0
      %457 = vmatprep.subr.bf16.mxu0 0
      %458 = vmatpush2.bf16.msra.mxu0 0
      %459 = vmatprep.subr.bf16.mxu0 0
      %460 = vmatpush2.bf16.msra.mxu0 0
      %461 = vmatprep.mubr.bf16.mxu0 0
      %462 = vmatmul.mubr.bf16.gmra.mxu0 %v379
      %v463 = vpop.f32.mrf.mxu0
      %v464 = vadd.f32 0.0, %v463
      %v465 = vpop.f32.mrf.mxu0
      %v466 = vpop.f32.mrf.mxu0
      %v467 = vpop.f32.mrf.mxu0
      %468 = vdwg.mxu0
      %v469 = vadd.f32 %v367, %v464
      %v470 = vrot.slane %v372, 1
      %v488 = vunpack.c.l.b16 %v262
      %v489 = vunpack.c.l.b16 %v263
      %v490 = vunpack.c.l.b16 %v264
      %v491 = vunpack.c.l.b16 %v265
      %v492 = vunpack.c.l.b16 %v266
      %v493 = vunpack.c.l.b16 %v267
      %v494 = vunpack.c.l.b16 %v268
      %v495 = vunpack.c.l.b16 %v269
      %v496 = vunpack.c.l.b16 %v270
      %v497 = vunpack.c.l.b16 %v271
      %v498 = vunpack.c.l.b16 %v272
      %v499 = vunpack.c.l.b16 %v273
      %v500 = vunpack.c.l.b16 %v274
      %v501 = vunpack.c.l.b16 %v275
      %v502 = vunpack.c.l.b16 %v276
      %v503 = vunpack.c.l.b16 %v277
      %v504 = vpack.c.b16 %v489, %v488
      %v505 = vpack.c.b16 %v491, %v490
      %v506 = vpack.c.b16 %v493, %v492
      %v507 = vpack.c.b16 %v495, %v494
      %v508 = vpack.c.b16 %v497, %v496
      %v509 = vpack.c.b16 %v499, %v498
      %v510 = vpack.c.b16 %v501, %v500
      %v511 = vpack.c.b16 %v503, %v502
      %520 = vmatprep.subr.bf16.mxu0 0
      %521 = vmatpush1.bf16.msra.mxu0 %v511
      %522 = vmatprep.subr.bf16.mxu0 0
      %523 = vmatpush1.bf16.msra.mxu0 %v510
      %524 = vmatprep.subr.bf16.mxu0 0
      %525 = vmatpush1.bf16.msra.mxu0 %v509
      %526 = vmatprep.subr.bf16.mxu0 0
      %527 = vmatpush1.bf16.msra.mxu0 %v508
      %528 = vmatprep.subr.bf16.mxu0 0
      %529 = vmatpush1.bf16.msra.mxu0 %v507
      %530 = vmatprep.subr.bf16.mxu0 0
      %531 = vmatpush1.bf16.msra.mxu0 %v506
      %532 = vmatprep.subr.bf16.mxu0 0
      %533 = vmatpush1.bf16.msra.mxu0 %v505
      %534 = vmatprep.subr.bf16.mxu0 0
      %535 = vmatpush1.bf16.msra.mxu0 %v504
      %536 = vmatprep.subr.bf16.mxu0 0
      %537 = vmatpush2.bf16.msra.mxu0 0
      %538 = vmatprep.subr.bf16.mxu0 0
      %539 = vmatpush2.bf16.msra.mxu0 0
      %540 = vmatprep.subr.bf16.mxu0 0
      %541 = vmatpush2.bf16.msra.mxu0 0
      %542 = vmatprep.subr.bf16.mxu0 0
      %543 = vmatpush2.bf16.msra.mxu0 0
      %544 = vmatprep.subr.bf16.mxu0 0
      %545 = vmatpush2.bf16.msra.mxu0 0
      %546 = vmatprep.subr.bf16.mxu0 0
      %547 = vmatpush2.bf16.msra.mxu0 0
      %548 = vmatprep.subr.bf16.mxu0 0
      %549 = vmatpush2.bf16.msra.mxu0 0
      %550 = vmatprep.subr.bf16.mxu0 0
      %551 = vmatpush2.bf16.msra.mxu0 0
      %552 = vmatprep.mubr.bf16.mxu0 0
      %553 = vmatmul.mubr.bf16.gmra.mxu0 %v470
      %v554 = vpop.f32.mrf.mxu0
      %v555 = vadd.f32 0.0, %v554
      %v556 = vpop.f32.mrf.mxu0
      %v557 = vpop.f32.mrf.mxu0
      %v558 = vpop.f32.mrf.mxu0
      %559 = vdwg.mxu0
      %v560 = vadd.f32 %v469, %v555
      %561 = vst [vmem:[#allocation2] sm:$0xff] %v560
      %p562 = scmp.eq.s32.totalorder %s21, 2
      // Predicated region
      $region37: #{resnet_generator_forward.33} parent=31 // pred_check
        %p563 = pneg %p562
      $region38: #{resnet_generator_forward.33} parent=31 // pred_check_branch
        %565 = sbr.rel (%p563) target = $region40
      $region39: #{resnet_generator_forward.33} parent=31 // pred_region
        %v566 = vld [vmem:[#allocation2] sm:$0xff]
        %v567 = vld [vmem:[%s2] sm:$0x1]
        %v569 = vlaneseq
        %v570 = vshrl.u32 %v569, 7
        %v571 = vsub.s32 0, %v570
        %v572 = vrot.slane %v567, %v571
        %v574 = vadd.f32 %v566, %v572
        %v575 = vpack.c.bf16 %v574, %v574
        %576 = vst [vmem:[%s218] sm:$0xf] %v575
      $region40: #{resnet_generator_forward.33} parent=31 // pred_fallthru
        _
      %p577 = scmp.lt.s32.totalorder %s19, 1
      %s578 = scalar_select %p577, %s19, 1
      %p579 = scmp.lt.s32.totalorder %s20, 7
      %s580 = scalar_select %p579, %s20, 7
      %s581 = smul.addr %s578, 8
      %s582 = sadd.s32 %s580, %s581
      %s583 = smul.addr %s582, 4
      %s584 = scalar_lea.vmem %s3, %s583
      // Predicated region
      $region41: #{resnet_generator_forward.33} parent=31 // pred_check
        %p585 = pneg %p125
      $region42: #{resnet_generator_forward.33} parent=31 // pred_check_branch
        %587 = sbr.rel (%p585) target = $region44
      $region43: #{resnet_generator_forward.33} parent=31 // pred_region
        _
      $region44: #{resnet_generator_forward.33} parent=31 // pred_fallthru
        _
    $region32: #{resnet_generator_forward.33} parent=5 // pred_fallthru
      _
    %p588 = scmp.le.s32.totalorder 2, %s9
    // Predicated region
    $region45: #{resnet_generator_forward.33} parent=5 // pred_check
      %p589 = pneg %p588
    $region46: #{resnet_generator_forward.33} parent=5 // pred_check_branch
      %591 = sbr.rel (%p589) target = $region48
    $region47: #{resnet_generator_forward.33} parent=5 // pred_region
      %s592 = ssub.s32 %s9, 2
      // Predicated region
      $region49: #{resnet_generator_forward.33} parent=47 // pred_check
        %p593 = pneg %p131
      $region50: #{resnet_generator_forward.33} parent=47 // pred_check_branch
        %595 = sbr.rel (%p593) target = $region52
      $region51: #{resnet_generator_forward.33} parent=47 // pred_region
        %p596 = scmp.lt.s32.totalorder %s22, 1
        %s597 = scalar_select %p596, %s22, 1
        %p598 = scmp.lt.s32.totalorder %s23, 7
        %s599 = scalar_select %p598, %s23, 7
        %s600 = smul.addr %s597, 8
        %s601 = sadd.s32 %s599, %s600
        %s602 = smul.addr %s601, 4
        %s603 = scalar_lea.vmem %s3, %s602
      $region52: #{resnet_generator_forward.33} parent=47 // pred_fallthru
        _
    $region48: #{resnet_generator_forward.33} parent=5 // pred_fallthru
      _
  $region6: #{resnet_generator_forward.33} parent=0 // loop_footer
    %s13 = sadd.s32 1, %s9
  $region7: #{resnet_generator_forward.33} parent=0 // loop_footer_branch
    %8 = sbr.rel target = $region3
  $region8: #{resnet_generator_forward.33} parent=0 // loop_exit
    _

// kernel: resnet_generator_forward.35
$region0: #{resnet_generator_forward.35}
  #allocation0 [shape = 'u32[]', space=smem, size = 0x4, offset = 0x4, fixed_abs, tag = 'smem constant byte address 0x4 - core index']
  #allocation1 [shape = 'u32[144,128]{1,0:T(1,128)}', space=vmem, size = 0x12000, scoped, tag = 'internal scratch']
  #allocation2 [shape = 'f32[16,128]{1,0:T(8,128)}', space=vmem, size = 0x2000, scoped, tag = 'scratch operand']
  %s0 = inlined_call_operand.vmem [shape: bf16[2,18,18,128], index: 0, kind: input, shape index: {}]
  %s1 = inlined_call_operand.vmem [shape: bf16[3,384,128], index: 1, kind: input, shape index: {}]
  %s2 = inlined_call_operand.vmem [shape: f32[1,128], index: 2, kind: input, shape index: {}]
  %s3 = inlined_call_operand.vmem [shape: bf16[2,16,16,128], index: 3, kind: output, shape index: {}]
  %s4 = sld [smem:[#allocation0]]
  $region53: #{resnet_generator_forward.35} parent=0
    _
  %s6 = ssub.s32 1, %s4
  %s7 = scalar_select 0, %s6, %s4
  loop: start=0, step=1, limit=98
  $region2: #{resnet_generator_forward.35} parent=0 // loop_pre_header
    _
  $region3: #{resnet_generator_forward.35} parent=0 // loop_header
    %s9 = sphi 0, %s13
    %p10 = scmp.ge.s32.totalorder %s9, 98
    %s16 = sphi 0, %s35
    %s17 = sphi 0, %s31
    %s18 = sphi 0, %s27
    %s19 = sphi 0, %s16
    %s20 = sphi 0, %s17
    %s21 = sphi 0, %s18
    %s22 = sphi 0, %s19
    %s23 = sphi 0, %s20
    %s24 = sphi 0, %s21
    %s42 = sphi 0, %s44
    %s45 = sphi 0, %s42
    %s46 = sphi 0, %s45
    %s62 = sphi 0, %s46
    %s66 = sphi 0, %s66
    %s68 = sphi 0, %s66
    %s69 = sphi 0, %s68
    %s83 = sphi 0, %s69
    %s87 = sphi 0, %s87
    %s89 = sphi 0, %s87
    %s90 = sphi 0, %s89
    %s104 = sphi 0, %s90
    %s112 = sphi 0, %s114
    %s115 = sphi 0, %s112
    %s116 = sphi 0, %s115
    %s132 = sphi 0, %s116
  $region4: #{resnet_generator_forward.35} parent=0 // loop_header_branch
    %12 = sbr.rel (%p10) target = $region8
  $region5: #{resnet_generator_forward.35} parent=0 // loop_body
    %s14 = ssub.s32 %s9, 1
    %s15 = ssub.s32 %s9, 2
    %s25 = sadd.s32 1, %s18
    %p26 = scmp.ge.s32.totalorder %s25, 3
    %s27 = scalar_select %p26, 0, %s25
    %s28 = sadd.s32 1, %s17
    %s29 = scalar_select %p26, %s28, %s17
    %p30 = scmp.ge.s32.totalorder %s29, 16
    %s31 = scalar_select %p30, 0, %s29
    %s32 = sadd.s32 1, %s16
    %s33 = scalar_select %p30, %s32, %s16
    %p34 = scmp.ge.s32.totalorder %s33, 2
    %s35 = scalar_select %p34, 0, %s33
    %s36 = sadd.s32 %s17, %s18
    %s37 = sadd.s32 %s31, %s27
    %s38 = ssub.s32 %s16, %s35
    %s39 = ssub.s32 %s36, %s37
    %s40 = sor.u32 %s38, %s39
    %p41 = scmp.eq.s32.totalorder %s40, 0
    %s43 = sadd.s32 %s42, 1
    %s44 = scalar_select %p41, %s42, %s43
    %p47 = pneg %p41
    %p48 = scmp.eq.s32.totalorder %s9, 95
    %p49 = por %p47, %p48
    %p50 = scmp.ne.s32.totalorder %s42, %s45
    %p51 = scmp.eq.s32.totalorder %s9, 0
    %p52 = por %p50, %p51
    %p53 = scmp.ne.s32.totalorder %s42, %s45
    %p54 = scmp.eq.s32.totalorder %s14, 95
    %p55 = por %p53, %p54
    %p56 = scmp.ne.s32.totalorder %s45, %s46
    %p57 = scmp.eq.s32.totalorder %s14, 0
    %p58 = por %p56, %p57
    %p59 = scmp.ne.s32.totalorder %s45, %s46
    %p60 = scmp.eq.s32.totalorder %s15, 95
    %p61 = por %p59, %p60
    %p63 = scmp.ne.s32.totalorder %s46, %s62
    %p64 = scmp.eq.s32.totalorder %s15, 0
    %p65 = por %p63, %p64
    %s67 = sadd.s32 %s66, 1
    %p70 = scmp.eq.s32.totalorder %s9, 95
    %p71 = scmp.ne.s32.totalorder %s66, %s68
    %p72 = scmp.eq.s32.totalorder %s9, 0
    %p73 = por %p71, %p72
    %p74 = scmp.ne.s32.totalorder %s66, %s68
    %p75 = scmp.eq.s32.totalorder %s14, 95
    %p76 = por %p74, %p75
    %p77 = scmp.ne.s32.totalorder %s68, %s69
    %p78 = scmp.eq.s32.totalorder %s14, 0
    %p79 = por %p77, %p78
    %p80 = scmp.ne.s32.totalorder %s68, %s69
    %p81 = scmp.eq.s32.totalorder %s15, 95
    %p82 = por %p80, %p81
    %p84 = scmp.ne.s32.totalorder %s69, %s83
    %p85 = scmp.eq.s32.totalorder %s15, 0
    %p86 = por %p84, %p85
    %s88 = sadd.s32 %s87, 1
    %p91 = scmp.eq.s32.totalorder %s9, 95
    %p92 = scmp.ne.s32.totalorder %s87, %s89
    %p93 = scmp.eq.s32.totalorder %s9, 0
    %p94 = por %p92, %p93
    %p95 = scmp.ne.s32.totalorder %s87, %s89
    %p96 = scmp.eq.s32.totalorder %s14, 95
    %p97 = por %p95, %p96
    %p98 = scmp.ne.s32.totalorder %s89, %s90
    %p99 = scmp.eq.s32.totalorder %s14, 0
    %p100 = por %p98, %p99
    %p101 = scmp.ne.s32.totalorder %s89, %s90
    %p102 = scmp.eq.s32.totalorder %s15, 95
    %p103 = por %p101, %p102
    %p105 = scmp.ne.s32.totalorder %s90, %s104
    %p106 = scmp.eq.s32.totalorder %s15, 0
    %p107 = por %p105, %p106
    %s108 = ssub.s32 %s16, %s35
    %s109 = ssub.s32 %s17, %s31
    %s110 = sor.u32 %s108, %s109
    %p111 = scmp.eq.s32.totalorder %s110, 0
    %s113 = sadd.s32 %s112, 1
    %s114 = scalar_select %p111, %s112, %s113
    %p117 = pneg %p111
    %p118 = scmp.eq.s32.totalorder %s9, 95
    %p119 = por %p117, %p118
    %p120 = scmp.ne.s32.totalorder %s112, %s115
    %p121 = scmp.eq.s32.totalorder %s9, 0
    %p122 = por %p120, %p121
    %p123 = scmp.ne.s32.totalorder %s112, %s115
    %p124 = scmp.eq.s32.totalorder %s14, 95
    %p125 = por %p123, %p124
    %p126 = scmp.ne.s32.totalorder %s115, %s116
    %p127 = scmp.eq.s32.totalorder %s14, 0
    %p128 = por %p126, %p127
    %p129 = scmp.ne.s32.totalorder %s115, %s116
    %p130 = scmp.eq.s32.totalorder %s15, 95
    %p131 = por %p129, %p130
    %p133 = scmp.ne.s32.totalorder %s116, %s132
    %p134 = scmp.eq.s32.totalorder %s15, 0
    %p135 = por %p133, %p134
    %p136 = scmp.le.s32.totalorder 1, %s9
    %p137 = scmp.lt.s32.totalorder %s9, 97
    %p138 = pnand %p136, %p137
    %p139 = pneg %p138
    // Predicated region
    $region9: #{resnet_generator_forward.35} parent=5 // pred_check
      _
    $region10: #{resnet_generator_forward.35} parent=5 // pred_check_branch
      %141 = sbr.rel (%p138) target = $region12
    $region11: #{resnet_generator_forward.35} parent=5 // pred_region
      %s142 = ssub.s32 %s9, 1
      // Predicated region
      $region13: #{resnet_generator_forward.35} parent=11 // pred_check
        %p143 = pneg %p79
      $region14: #{resnet_generator_forward.35} parent=11 // pred_check_branch
        %145 = sbr.rel (%p143) target = $region16
      $region15: #{resnet_generator_forward.35} parent=11 // pred_region
        _
      $region16: #{resnet_generator_forward.35} parent=11 // pred_fallthru
        _
      // Predicated region
      $region17: #{resnet_generator_forward.35} parent=11 // pred_check
        %p146 = pneg %p100
      $region18: #{resnet_generator_forward.35} parent=11 // pred_check_branch
        %148 = sbr.rel (%p146) target = $region20
      $region19: #{resnet_generator_forward.35} parent=11 // pred_region
        _
      $region20: #{resnet_generator_forward.35} parent=11 // pred_fallthru
        _
    $region12: #{resnet_generator_forward.35} parent=5 // pred_fallthru
      _
    %p149 = scmp.lt.s32.totalorder %s9, 96
    // Predicated region
    $region21: #{resnet_generator_forward.35} parent=5 // pred_check
      %p150 = pneg %p149
    $region22: #{resnet_generator_forward.35} parent=5 // pred_check_branch
      %152 = sbr.rel (%p150) target = $region24
    $region23: #{resnet_generator_forward.35} parent=5 // pred_region
      // Predicated region
      $region25: #{resnet_generator_forward.35} parent=23 // pred_check
        %p153 = pneg %p52
      $region26: #{resnet_generator_forward.35} parent=23 // pred_check_branch
        %155 = sbr.rel (%p153) target = $region28
      $region27: #{resnet_generator_forward.35} parent=23 // pred_region
        %s156 = sadd.s32 %s17, %s18
        %p157 = scmp.lt.s32.totalorder %s16, 1
        %s158 = scalar_select %p157, %s16, 1
        %p159 = scmp.lt.s32.totalorder %s156, 17
        %s160 = scalar_select %p159, %s156, 17
        %s161 = smul.addr %s160, 3
        %s162 = smul.addr %s158, 54
        %s163 = sadd.s32 %s161, %s162
        %s164 = smul.addr %s163, 4
        %s165 = scalar_lea.vmem %s0, %s164
        %s166 = sadd.s32 %s17, %s18
      $region28: #{resnet_generator_forward.35} parent=23 // pred_fallthru
        _
    $region24: #{resnet_generator_forward.35} parent=5 // pred_fallthru
      _
    %p167 = scmp.le.s32.totalorder 1, %s9
    %p168 = scmp.lt.s32.totalorder %s9, 97
    %p169 = pnand %p167, %p168
    %p170 = pneg %p169
    // Predicated region
    $region29: #{resnet_generator_forward.35} parent=5 // pred_check
      _
    $region30: #{resnet_generator_forward.35} parent=5 // pred_check_branch
      %172 = sbr.rel (%p169) target = $region32
    $region31: #{resnet_generator_forward.35} parent=5 // pred_region
      %s173 = ssub.s32 %s9, 1
      %s174 = sadd.s32 %s20, %s21
      %p175 = scmp.lt.s32.totalorder %s19, 1
      %s176 = scalar_select %p175, %s19, 1
      %p177 = scmp.lt.s32.totalorder %s174, 17
      %s178 = scalar_select %p177, %s174, 17
      %s179 = smul.addr %s178, 3
      %s180 = smul.addr %s176, 54
      %s181 = sadd.s32 %s179, %s180
      %s182 = smul.addr %s181, 4
      %s183 = scalar_lea.vmem %s0, %s182
      %p184 = pneg %p58
      %p185 = pneg %p55
      %p186 = pneg %p79
      %p187 = pneg %p76
      %p188 = pneg %p100
      %p189 = pneg %p97
      %p190 = pneg %p128
      %p191 = pneg %p125
      %p192 = scmp.lt.s32.totalorder %s19, 1
      %s193 = scalar_select %p192, %s19, 1
      %p194 = scmp.lt.s32.totalorder %s20, 15
      %s195 = scalar_select %p194, %s20, 15
      %s196 = smul.addr %s195, 2
      %s197 = smul.addr %s193, 32
      %s198 = sadd.s32 %s196, %s197
      %s199 = smul.addr %s198, 4
      %s200 = scalar_lea.vmem %s3, %s199
      %s201 = sadd.s32 %s20, %s21
      %p202 = scmp.lt.s32.totalorder %s19, 1
      %s203 = scalar_select %p202, %s19, 1
      %p204 = scmp.lt.s32.totalorder %s201, 17
      %s205 = scalar_select %p204, %s201, 17
      %s206 = smul.addr %s205, 3
      %s207 = smul.addr %s203, 54
      %s208 = sadd.s32 %s206, %s207
      %s209 = smul.addr %s208, 4
      %s210 = scalar_lea.vmem %s0, %s209
      %s211 = sadd.s32 %s20, %s21
      %p212 = scmp.lt.s32.totalorder %s19, 1
      %s213 = scalar_select %p212, %s19, 1
      %p214 = scmp.lt.s32.totalorder %s20, 15
      %s215 = scalar_select %p214, %s20, 15
      %s216 = smul.addr %s215, 2
      %s217 = smul.addr %s213, 32
      %s218 = sadd.s32 %s216, %s217
      %s219 = smul.addr %s218, 4
      %s220 = scalar_lea.vmem %s3, %s219
      %p222 = scmp.eq.s32.totalorder %s21, 0
      // Predicated region
      $region33: #{resnet_generator_forward.35} parent=31 // pred_check
        %p223 = pneg %p222
      $region34: #{resnet_generator_forward.35} parent=31 // pred_check_branch
        %225 = sbr.rel (%p223) target = $region36
      $region35: #{resnet_generator_forward.35} parent=31 // pred_region
        %226 = vst [vmem:[#allocation2] sm:$0xff] 0.0
        %227 = vst [vmem:[#allocation2 + $0x8] sm:$0xff] 0.0
      $region36: #{resnet_generator_forward.35} parent=31 // pred_fallthru
        _
      %v228 = vld [vmem:[%s210] sm:$0xf]
      %v229 = vld [vmem:[%s210 + $0x4] sm:$0xf]
      %v230 = vld [vmem:[%s210 + $0x8] sm:$0x1]
      %s231 = smul.u32 %s21, 48
      %s232 = smul.addr %s231, 4
      %s233 = scalar_lea.vmem %s1, %s232
      %v234 = vld [vmem:[%s233] sm:$0xf]
      %v235 = vld [vmem:[%s233 + $0x4] sm:$0xf]
      %v236 = vld [vmem:[%s233 + $0x8] sm:$0xf]
      %v237 = vld [vmem:[%s233 + $0xc] sm:$0xf]
      %v238 = vld [vmem:[%s233 + $0x10] sm:$0xf]
      %v239 = vld [vmem:[%s233 + $0x14] sm:$0xf]
      %v240 = vld [vmem:[%s233 + $0x18] sm:$0xf]
      %v241 = vld [vmem:[%s233 + $0x1c] sm:$0xf]
      %v242 = vld [vmem:[%s233 + $0x20] sm:$0xf]
      %v243 = vld [vmem:[%s233 + $0x24] sm:$0xf]
      %v244 = vld [vmem:[%s233 + $0x28] sm:$0xf]
      %v245 = vld [vmem:[%s233 + $0x2c] sm:$0xf]
      %v246 = vld [vmem:[%s233 + $0x30] sm:$0xf]
      %v247 = vld [vmem:[%s233 + $0x34] sm:$0xf]
      %v248 = vld [vmem:[%s233 + $0x38] sm:$0xf]
      %v249 = vld [vmem:[%s233 + $0x3c] sm:$0xf]
      %v250 = vld [vmem:[%s233 + $0x40] sm:$0xf]
      %v251 = vld [vmem:[%s233 + $0x44] sm:$0xf]
      %v252 = vld [vmem:[%s233 + $0x48] sm:$0xf]
      %v253 = vld [vmem:[%s233 + $0x4c] sm:$0xf]
      %v254 = vld [vmem:[%s233 + $0x50] sm:$0xf]
      %v255 = vld [vmem:[%s233 + $0x54] sm:$0xf]
      %v256 = vld [vmem:[%s233 + $0x58] sm:$0xf]
      %v257 = vld [vmem:[%s233 + $0x5c] sm:$0xf]
      %v258 = vld [vmem:[%s233 + $0x60] sm:$0xf]
      %v259 = vld [vmem:[%s233 + $0x64] sm:$0xf]
      %v260 = vld [vmem:[%s233 + $0x68] sm:$0xf]
      %v261 = vld [vmem:[%s233 + $0x6c] sm:$0xf]
      %v262 = vld [vmem:[%s233 + $0x70] sm:$0xf]
      %v263 = vld [vmem:[%s233 + $0x74] sm:$0xf]
      %v264 = vld [vmem:[%s233 + $0x78] sm:$0xf]
      %v265 = vld [vmem:[%s233 + $0x7c] sm:$0xf]
      %v266 = vld [vmem:[%s233 + $0x80] sm:$0xf]
      %v267 = vld [vmem:[%s233 + $0x84] sm:$0xf]
      %v268 = vld [vmem:[%s233 + $0x88] sm:$0xf]
      %v269 = vld [vmem:[%s233 + $0x8c] sm:$0xf]
      %v270 = vld [vmem:[%s233 + $0x90] sm:$0xf]
      %v271 = vld [vmem:[%s233 + $0x94] sm:$0xf]
      %v272 = vld [vmem:[%s233 + $0x98] sm:$0xf]
      %v273 = vld [vmem:[%s233 + $0x9c] sm:$0xf]
      %v274 = vld [vmem:[%s233 + $0xa0] sm:$0xf]
      %v275 = vld [vmem:[%s233 + $0xa4] sm:$0xf]
      %v276 = vld [vmem:[%s233 + $0xa8] sm:$0xf]
      %v277 = vld [vmem:[%s233 + $0xac] sm:$0xf]
      %v278 = vld [vmem:[%s233 + $0xb0] sm:$0xf]
      %v279 = vld [vmem:[%s233 + $0xb4] sm:$0xf]
      %v280 = vld [vmem:[%s233 + $0xb8] sm:$0xf]
      %v281 = vld [vmem:[%s233 + $0xbc] sm:$0xf]
      %v282 = vld [vmem:[#allocation2] sm:$0xff]
      %v283 = vld [vmem:[#allocation2 + $0x8] sm:$0xff]
      %v286 = vunpack.c.l.b16 %v228
      %v287 = vunpack.c.l.b16 %v229
      %v288 = vpack.c.b16 %v287, %v286
      %v306 = vunpack.c.l.b16 %v234
      %v307 = vunpack.c.l.b16 %v235
      %v308 = vunpack.c.l.b16 %v236
      %v309 = vunpack.c.l.b16 %v237
      %v310 = vunpack.c.l.b16 %v238
      %v311 = vunpack.c.l.b16 %v239
      %v312 = vunpack.c.l.b16 %v240
      %v313 = vunpack.c.l.b16 %v241
      %v314 = vunpack.c.l.b16 %v242
      %v315 = vunpack.c.l.b16 %v243
      %v316 = vunpack.c.l.b16 %v244
      %v317 = vunpack.c.l.b16 %v245
      %v318 = vunpack.c.l.b16 %v246
      %v319 = vunpack.c.l.b16 %v247
      %v320 = vunpack.c.l.b16 %v248
      %v321 = vunpack.c.l.b16 %v249
      %v322 = vpack.c.b16 %v307, %v306
      %v323 = vpack.c.b16 %v309, %v308
      %v324 = vpack.c.b16 %v311, %v310
      %v325 = vpack.c.b16 %v313, %v312
      %v326 = vpack.c.b16 %v315, %v314
      %v327 = vpack.c.b16 %v317, %v316
      %v328 = vpack.c.b16 %v319, %v318
      %v329 = vpack.c.b16 %v321, %v320
      %338 = vmatprep.subr.bf16.mxu0 0
      %339 = vmatpush1.bf16.msra.mxu0 %v329
      %340 = vmatprep.subr.bf16.mxu0 0
      %341 = vmatpush1.bf16.msra.mxu0 %v328
      %342 = vmatprep.subr.bf16.mxu0 0
      %343 = vmatpush1.bf16.msra.mxu0 %v327
      %344 = vmatprep.subr.bf16.mxu0 0
      %345 = vmatpush1.bf16.msra.mxu0 %v326
      %346 = vmatprep.subr.bf16.mxu0 0
      %347 = vmatpush1.bf16.msra.mxu0 %v325
      %348 = vmatprep.subr.bf16.mxu0 0
      %349 = vmatpush1.bf16.msra.mxu0 %v324
      %350 = vmatprep.subr.bf16.mxu0 0
      %351 = vmatpush1.bf16.msra.mxu0 %v323
      %352 = vmatprep.subr.bf16.mxu0 0
      %353 = vmatpush1.bf16.msra.mxu0 %v322
      %354 = vmatprep.subr.bf16.mxu0 0
      %355 = vmatpush2.bf16.msra.mxu0 0
      %356 = vmatprep.subr.bf16.mxu0 0
      %357 = vmatpush2.bf16.msra.mxu0 0
      %358 = vmatprep.subr.bf16.mxu0 0
      %359 = vmatpush2.bf16.msra.mxu0 0
      %360 = vmatprep.subr.bf16.mxu0 0
      %361 = vmatpush2.bf16.msra.mxu0 0
      %362 = vmatprep.subr.bf16.mxu0 0
      %363 = vmatpush2.bf16.msra.mxu0 0
      %364 = vmatprep.subr.bf16.mxu0 0
      %365 = vmatpush2.bf16.msra.mxu0 0
      %366 = vmatprep.subr.bf16.mxu0 0
      %367 = vmatpush2.bf16.msra.mxu0 0
      %368 = vmatprep.subr.bf16.mxu0 0
      %369 = vmatpush2.bf16.msra.mxu0 0
      %370 = vmatprep.mubr.bf16.mxu0 0
      %371 = vmatmul.mubr.bf16.gmra.mxu0 %v288
      %v372 = vpop.f32.mrf.mxu0
      %v373 = vadd.f32 0.0, %v372
      %v374 = vpop.f32.mrf.mxu0
      %v375 = vpop.f32.mrf.mxu0
      %v376 = vadd.f32 0.0, %v375
      %v377 = vpop.f32.mrf.mxu0
      %378 = vdwg.mxu0
      %v379 = vadd.f32 %v282, %v373
      %v380 = vadd.f32 %v283, %v376
      %v382 = vunpack.c.l.b16 %v230
      %v383 = vpack.c.b16 %v382, %v382
      %vm384 = vsmask.f32 7424
      %v386 = vshrl.u32 %v288, 16
      %v388 = vshll.u32 %v288, 16
      %v390 = vrot.slane %v388, 1
      %v391 = vor.u32 %v386, %v390
      %v393 = vshll.u32 %v383, 16
      %v395 = vrot.slane %v393, 1
      %v396 = vsel %vm384, %v391, %v395
      %v414 = vunpack.c.l.b16 %v250
      %v415 = vunpack.c.l.b16 %v251
      %v416 = vunpack.c.l.b16 %v252
      %v417 = vunpack.c.l.b16 %v253
      %v418 = vunpack.c.l.b16 %v254
      %v419 = vunpack.c.l.b16 %v255
      %v420 = vunpack.c.l.b16 %v256
      %v421 = vunpack.c.l.b16 %v257
      %v422 = vunpack.c.l.b16 %v258
      %v423 = vunpack.c.l.b16 %v259
      %v424 = vunpack.c.l.b16 %v260
      %v425 = vunpack.c.l.b16 %v261
      %v426 = vunpack.c.l.b16 %v262
      %v427 = vunpack.c.l.b16 %v263
      %v428 = vunpack.c.l.b16 %v264
      %v429 = vunpack.c.l.b16 %v265
      %v430 = vpack.c.b16 %v415, %v414
      %v431 = vpack.c.b16 %v417, %v416
      %v432 = vpack.c.b16 %v419, %v418
      %v433 = vpack.c.b16 %v421, %v420
      %v434 = vpack.c.b16 %v423, %v422
      %v435 = vpack.c.b16 %v425, %v424
      %v436 = vpack.c.b16 %v427, %v426
      %v437 = vpack.c.b16 %v429, %v428
      %446 = vmatprep.subr.bf16.mxu0 0
      %447 = vmatpush1.bf16.msra.mxu0 %v437
      %448 = vmatprep.subr.bf16.mxu0 0
      %449 = vmatpush1.bf16.msra.mxu0 %v436
      %450 = vmatprep.subr.bf16.mxu0 0
      %451 = vmatpush1.bf16.msra.mxu0 %v435
      %452 = vmatprep.subr.bf16.mxu0 0
      %453 = vmatpush1.bf16.msra.mxu0 %v434
      %454 = vmatprep.subr.bf16.mxu0 0
      %455 = vmatpush1.bf16.msra.mxu0 %v433
      %456 = vmatprep.subr.bf16.mxu0 0
      %457 = vmatpush1.bf16.msra.mxu0 %v432
      %458 = vmatprep.subr.bf16.mxu0 0
      %459 = vmatpush1.bf16.msra.mxu0 %v431
      %460 = vmatprep.subr.bf16.mxu0 0
      %461 = vmatpush1.bf16.msra.mxu0 %v430
      %462 = vmatprep.subr.bf16.mxu0 0
      %463 = vmatpush2.bf16.msra.mxu0 0
      %464 = vmatprep.subr.bf16.mxu0 0
      %465 = vmatpush2.bf16.msra.mxu0 0
      %466 = vmatprep.subr.bf16.mxu0 0
      %467 = vmatpush2.bf16.msra.mxu0 0
      %468 = vmatprep.subr.bf16.mxu0 0
      %469 = vmatpush2.bf16.msra.mxu0 0
      %470 = vmatprep.subr.bf16.mxu0 0
      %471 = vmatpush2.bf16.msra.mxu0 0
      %472 = vmatprep.subr.bf16.mxu0 0
      %473 = vmatpush2.bf16.msra.mxu0 0
      %474 = vmatprep.subr.bf16.mxu0 0
      %475 = vmatpush2.bf16.msra.mxu0 0
      %476 = vmatprep.subr.bf16.mxu0 0
      %477 = vmatpush2.bf16.msra.mxu0 0
      %478 = vmatprep.mubr.bf16.mxu0 0
      %479 = vmatmul.mubr.bf16.gmra.mxu0 %v396
      %v480 = vpop.f32.mrf.mxu0
      %v481 = vadd.f32 0.0, %v480
      %v482 = vpop.f32.mrf.mxu0
      %v483 = vpop.f32.mrf.mxu0
      %v484 = vadd.f32 0.0, %v483
      %v485 = vpop.f32.mrf.mxu0
      %486 = vdwg.mxu0
      %v487 = vadd.f32 %v379, %v481
      %v488 = vadd.f32 %v380, %v484
      %vm489 = vcmask 1046528
      %v490 = vrot.slane %v288, 1
      %v491 = vrot.slane %v383, 1
      %v492 = vsel %vm489, %v490, %v491
      %v510 = vunpack.c.l.b16 %v266
      %v511 = vunpack.c.l.b16 %v267
      %v512 = vunpack.c.l.b16 %v268
      %v513 = vunpack.c.l.b16 %v269
      %v514 = vunpack.c.l.b16 %v270
      %v515 = vunpack.c.l.b16 %v271
      %v516 = vunpack.c.l.b16 %v272
      %v517 = vunpack.c.l.b16 %v273
      %v518 = vunpack.c.l.b16 %v274
      %v519 = vunpack.c.l.b16 %v275
      %v520 = vunpack.c.l.b16 %v276
      %v521 = vunpack.c.l.b16 %v277
      %v522 = vunpack.c.l.b16 %v278
      %v523 = vunpack.c.l.b16 %v279
      %v524 = vunpack.c.l.b16 %v280
      %v525 = vunpack.c.l.b16 %v281
      %v526 = vpack.c.b16 %v511, %v510
      %v527 = vpack.c.b16 %v513, %v512
      %v528 = vpack.c.b16 %v515, %v514
      %v529 = vpack.c.b16 %v517, %v516
      %v530 = vpack.c.b16 %v519, %v518
      %v531 = vpack.c.b16 %v521, %v520
      %v532 = vpack.c.b16 %v523, %v522
      %v533 = vpack.c.b16 %v525, %v524
      %542 = vmatprep.subr.bf16.mxu0 0
      %543 = vmatpush1.bf16.msra.mxu0 %v533
      %544 = vmatprep.subr.bf16.mxu0 0
      %545 = vmatpush1.bf16.msra.mxu0 %v532
      %546 = vmatprep.subr.bf16.mxu0 0
      %547 = vmatpush1.bf16.msra.mxu0 %v531
      %548 = vmatprep.subr.bf16.mxu0 0
      %549 = vmatpush1.bf16.msra.mxu0 %v530
      %550 = vmatprep.subr.bf16.mxu0 0
      %551 = vmatpush1.bf16.msra.mxu0 %v529
      %552 = vmatprep.subr.bf16.mxu0 0
      %553 = vmatpush1.bf16.msra.mxu0 %v528
      %554 = vmatprep.subr.bf16.mxu0 0
      %555 = vmatpush1.bf16.msra.mxu0 %v527
      %556 = vmatprep.subr.bf16.mxu0 0
      %557 = vmatpush1.bf16.msra.mxu0 %v526
      %558 = vmatprep.subr.bf16.mxu0 0
      %559 = vmatpush2.bf16.msra.mxu0 0
      %560 = vmatprep.subr.bf16.mxu0 0
      %561 = vmatpush2.bf16.msra.mxu0 0
      %562 = vmatprep.subr.bf16.mxu0 0
      %563 = vmatpush2.bf16.msra.mxu0 0
      %564 = vmatprep.subr.bf16.mxu0 0
      %565 = vmatpush2.bf16.msra.mxu0 0
      %566 = vmatprep.subr.bf16.mxu0 0
      %567 = vmatpush2.bf16.msra.mxu0 0
      %568 = vmatprep.subr.bf16.mxu0 0
      %569 = vmatpush2.bf16.msra.mxu0 0
      %570 = vmatprep.subr.bf16.mxu0 0
      %571 = vmatpush2.bf16.msra.mxu0 0
      %572 = vmatprep.subr.bf16.mxu0 0
      %573 = vmatpush2.bf16.msra.mxu0 0
      %574 = vmatprep.mubr.bf16.mxu0 0
      %575 = vmatmul.mubr.bf16.gmra.mxu0 %v492
      %v576 = vpop.f32.mrf.mxu0
      %v577 = vadd.f32 0.0, %v576
      %v578 = vpop.f32.mrf.mxu0
      %v579 = vpop.f32.mrf.mxu0
      %v580 = vadd.f32 0.0, %v579
      %v581 = vpop.f32.mrf.mxu0
      %582 = vdwg.mxu0
      %v583 = vadd.f32 %v487, %v577
      %v584 = vadd.f32 %v488, %v580
      %585 = vst [vmem:[#allocation2] sm:$0xff] %v583
      %586 = vst [vmem:[#allocation2 + $0x8] sm:$0xff] %v584
      %p587 = scmp.eq.s32.totalorder %s21, 2
      // Predicated region
      $region37: #{resnet_generator_forward.35} parent=31 // pred_check
        %p588 = pneg %p587
      $region38: #{resnet_generator_forward.35} parent=31 // pred_check_branch
        %590 = sbr.rel (%p588) target = $region40
      $region39: #{resnet_generator_forward.35} parent=31 // pred_region
        %v591 = vld [vmem:[#allocation2] sm:$0xff]
        %v592 = vld [vmem:[#allocation2 + $0x8] sm:$0xff]
        %v593 = vld [vmem:[%s2] sm:$0x1]
        %v595 = vlaneseq
        %v596 = vshrl.u32 %v595, 7
        %v597 = vsub.s32 0, %v596
        %v598 = vrot.slane %v593, %v597
        %v600 = vadd.f32 %v591, %v598
        %v601 = vadd.f32 %v592, %v598
        %v602 = vpack.c.bf16 %v601, %v600
        %v604 = vunpack.c.l.b16 %v602
        %v605 = vunpack.c.h.b16 %v602
        %v606 = vpack.c.b16 %v604, %v604
        %v607 = vpack.c.b16 %v605, %v605
        %610 = vst [vmem:[%s220] sm:$0xf] %v606
        %611 = vst [vmem:[%s220 + $0x4] sm:$0xf] %v607
      $region40: #{resnet_generator_forward.35} parent=31 // pred_fallthru
        _
      %p612 = scmp.lt.s32.totalorder %s19, 1
      %s613 = scalar_select %p612, %s19, 1
      %p614 = scmp.lt.s32.totalorder %s20, 15
      %s615 = scalar_select %p614, %s20, 15
      %s616 = smul.addr %s615, 2
      %s617 = smul.addr %s613, 32
      %s618 = sadd.s32 %s616, %s617
      %s619 = smul.addr %s618, 4
      %s620 = scalar_lea.vmem %s3, %s619
      // Predicated region
      $region41: #{resnet_generator_forward.35} parent=31 // pred_check
        %p621 = pneg %p125
      $region42: #{resnet_generator_forward.35} parent=31 // pred_check_branch
        %623 = sbr.rel (%p621) target = $region44
      $region43: #{resnet_generator_forward.35} parent=31 // pred_region
        _
      $region44: #{resnet_generator_forward.35} parent=31 // pred_fallthru
        _
    $region32: #{resnet_generator_forward.35} parent=5 // pred_fallthru
      _
    %p624 = scmp.le.s32.totalorder 2, %s9
    // Predicated region
    $region45: #{resnet_generator_forward.35} parent=5 // pred_check
      %p625 = pneg %p624
    $region46: #{resnet_generator_forward.35} parent=5 // pred_check_branch
      %627 = sbr.rel (%p625) target = $region48
    $region47: #{resnet_generator_forward.35} parent=5 // pred_region
      %s628 = ssub.s32 %s9, 2
      // Predicated region
      $region49: #{resnet_generator_forward.35} parent=47 // pred_check
        %p629 = pneg %p131
      $region50: #{resnet_generator_forward.35} parent=47 // pred_check_branch
        %631 = sbr.rel (%p629) target = $region52
      $region51: #{resnet_generator_forward.35} parent=47 // pred_region
        %p632 = scmp.lt.s32.totalorder %s22, 1
        %s633 = scalar_select %p632, %s22, 1
        %p634 = scmp.lt.s32.totalorder %s23, 15
        %s635 = scalar_select %p634, %s23, 15
        %s636 = smul.addr %s635, 2
        %s637 = smul.addr %s633, 32
        %s638 = sadd.s32 %s636, %s637
        %s639 = smul.addr %s638, 4
        %s640 = scalar_lea.vmem %s3, %s639
      $region52: #{resnet_generator_forward.35} parent=47 // pred_fallthru
        _
    $region48: #{resnet_generator_forward.35} parent=5 // pred_fallthru
      _
  $region6: #{resnet_generator_forward.35} parent=0 // loop_footer
    %s13 = sadd.s32 1, %s9
  $region7: #{resnet_generator_forward.35} parent=0 // loop_footer_branch
    %8 = sbr.rel target = $region3
  $region8: #{resnet_generator_forward.35} parent=0 // loop_exit
    _

// kernel: resnet_generator_forward.37
$region0: #{resnet_generator_forward.37}
  #allocation0 [shape = 'u32[]', space=smem, size = 0x4, offset = 0x4, fixed_abs, tag = 'smem constant byte address 0x4 - core index']
  #allocation1 [shape = 'u32[144,128]{1,0:T(1,128)}', space=vmem, size = 0x12000, scoped, tag = 'internal scratch']
  #allocation2 [shape = 'f32[16,128]{1,0:T(8,128)}', space=vmem, size = 0x2000, scoped, tag = 'scratch operand']
  %s0 = inlined_call_operand.vmem [shape: bf16[2,22,22,128], index: 0, kind: input, shape index: {}]
  %s1 = inlined_call_operand.vmem [shape: bf16[7,896,128], index: 1, kind: input, shape index: {}]
  %s2 = inlined_call_operand.vmem [shape: f32[1,128], index: 2, kind: input, shape index: {}]
  %s3 = inlined_call_operand.vmem [shape: f32[2,16,16,128], index: 3, kind: output, shape index: {}]
  %s4 = sld [smem:[#allocation0]]
  $region53: #{resnet_generator_forward.37} parent=0
    _
  %s6 = ssub.s32 1, %s4
  %s7 = scalar_select 0, %s6, %s4
  loop: start=0, step=1, limit=226
  $region2: #{resnet_generator_forward.37} parent=0 // loop_pre_header
    _
  $region3: #{resnet_generator_forward.37} parent=0 // loop_header
    %s9 = sphi 0, %s13
    %p10 = scmp.ge.s32.totalorder %s9, 226
    %s16 = sphi 0, %s35
    %s17 = sphi 0, %s31
    %s18 = sphi 0, %s27
    %s19 = sphi 0, %s16
    %s20 = sphi 0, %s17
    %s21 = sphi 0, %s18
    %s22 = sphi 0, %s19
    %s23 = sphi 0, %s20
    %s24 = sphi 0, %s21
    %s42 = sphi 0, %s44
    %s45 = sphi 0, %s42
    %s46 = sphi 0, %s45
    %s62 = sphi 0, %s46
    %s66 = sphi 0, %s66
    %s68 = sphi 0, %s66
    %s69 = sphi 0, %s68
    %s83 = sphi 0, %s69
    %s87 = sphi 0, %s87
    %s89 = sphi 0, %s87
    %s90 = sphi 0, %s89
    %s104 = sphi 0, %s90
    %s112 = sphi 0, %s114
    %s115 = sphi 0, %s112
    %s116 = sphi 0, %s115
    %s132 = sphi 0, %s116
  $region4: #{resnet_generator_forward.37} parent=0 // loop_header_branch
    %12 = sbr.rel (%p10) target = $region8
  $region5: #{resnet_generator_forward.37} parent=0 // loop_body
    %s14 = ssub.s32 %s9, 1
    %s15 = ssub.s32 %s9, 2
    %s25 = sadd.s32 1, %s18
    %p26 = scmp.ge.s32.totalorder %s25, 7
    %s27 = scalar_select %p26, 0, %s25
    %s28 = sadd.s32 1, %s17
    %s29 = scalar_select %p26, %s28, %s17
    %p30 = scmp.ge.s32.totalorder %s29, 16
    %s31 = scalar_select %p30, 0, %s29
    %s32 = sadd.s32 1, %s16
    %s33 = scalar_select %p30, %s32, %s16
    %p34 = scmp.ge.s32.totalorder %s33, 2
    %s35 = scalar_select %p34, 0, %s33
    %s36 = sadd.s32 %s17, %s18
    %s37 = sadd.s32 %s31, %s27
    %s38 = ssub.s32 %s16, %s35
    %s39 = ssub.s32 %s36, %s37
    %s40 = sor.u32 %s38, %s39
    %p41 = scmp.eq.s32.totalorder %s40, 0
    %s43 = sadd.s32 %s42, 1
    %s44 = scalar_select %p41, %s42, %s43
    %p47 = pneg %p41
    %p48 = scmp.eq.s32.totalorder %s9, 223
    %p49 = por %p47, %p48
    %p50 = scmp.ne.s32.totalorder %s42, %s45
    %p51 = scmp.eq.s32.totalorder %s9, 0
    %p52 = por %p50, %p51
    %p53 = scmp.ne.s32.totalorder %s42, %s45
    %p54 = scmp.eq.s32.totalorder %s14, 223
    %p55 = por %p53, %p54
    %p56 = scmp.ne.s32.totalorder %s45, %s46
    %p57 = scmp.eq.s32.totalorder %s14, 0
    %p58 = por %p56, %p57
    %p59 = scmp.ne.s32.totalorder %s45, %s46
    %p60 = scmp.eq.s32.totalorder %s15, 223
    %p61 = por %p59, %p60
    %p63 = scmp.ne.s32.totalorder %s46, %s62
    %p64 = scmp.eq.s32.totalorder %s15, 0
    %p65 = por %p63, %p64
    %s67 = sadd.s32 %s66, 1
    %p70 = scmp.eq.s32.totalorder %s9, 223
    %p71 = scmp.ne.s32.totalorder %s66, %s68
    %p72 = scmp.eq.s32.totalorder %s9, 0
    %p73 = por %p71, %p72
    %p74 = scmp.ne.s32.totalorder %s66, %s68
    %p75 = scmp.eq.s32.totalorder %s14, 223
    %p76 = por %p74, %p75
    %p77 = scmp.ne.s32.totalorder %s68, %s69
    %p78 = scmp.eq.s32.totalorder %s14, 0
    %p79 = por %p77, %p78
    %p80 = scmp.ne.s32.totalorder %s68, %s69
    %p81 = scmp.eq.s32.totalorder %s15, 223
    %p82 = por %p80, %p81
    %p84 = scmp.ne.s32.totalorder %s69, %s83
    %p85 = scmp.eq.s32.totalorder %s15, 0
    %p86 = por %p84, %p85
    %s88 = sadd.s32 %s87, 1
    %p91 = scmp.eq.s32.totalorder %s9, 223
    %p92 = scmp.ne.s32.totalorder %s87, %s89
    %p93 = scmp.eq.s32.totalorder %s9, 0
    %p94 = por %p92, %p93
    %p95 = scmp.ne.s32.totalorder %s87, %s89
    %p96 = scmp.eq.s32.totalorder %s14, 223
    %p97 = por %p95, %p96
    %p98 = scmp.ne.s32.totalorder %s89, %s90
    %p99 = scmp.eq.s32.totalorder %s14, 0
    %p100 = por %p98, %p99
    %p101 = scmp.ne.s32.totalorder %s89, %s90
    %p102 = scmp.eq.s32.totalorder %s15, 223
    %p103 = por %p101, %p102
    %p105 = scmp.ne.s32.totalorder %s90, %s104
    %p106 = scmp.eq.s32.totalorder %s15, 0
    %p107 = por %p105, %p106
    %s108 = ssub.s32 %s16, %s35
    %s109 = ssub.s32 %s17, %s31
    %s110 = sor.u32 %s108, %s109
    %p111 = scmp.eq.s32.totalorder %s110, 0
    %s113 = sadd.s32 %s112, 1
    %s114 = scalar_select %p111, %s112, %s113
    %p117 = pneg %p111
    %p118 = scmp.eq.s32.totalorder %s9, 223
    %p119 = por %p117, %p118
    %p120 = scmp.ne.s32.totalorder %s112, %s115
    %p121 = scmp.eq.s32.totalorder %s9, 0
    %p122 = por %p120, %p121
    %p123 = scmp.ne.s32.totalorder %s112, %s115
    %p124 = scmp.eq.s32.totalorder %s14, 223
    %p125 = por %p123, %p124
    %p126 = scmp.ne.s32.totalorder %s115, %s116
    %p127 = scmp.eq.s32.totalorder %s14, 0
    %p128 = por %p126, %p127
    %p129 = scmp.ne.s32.totalorder %s115, %s116
    %p130 = scmp.eq.s32.totalorder %s15, 223
    %p131 = por %p129, %p130
    %p133 = scmp.ne.s32.totalorder %s116, %s132
    %p134 = scmp.eq.s32.totalorder %s15, 0
    %p135 = por %p133, %p134
    %p136 = scmp.le.s32.totalorder 1, %s9
    %p137 = scmp.lt.s32.totalorder %s9, 225
    %p138 = pnand %p136, %p137
    %p139 = pneg %p138
    // Predicated region
    $region9: #{resnet_generator_forward.37} parent=5 // pred_check
      _
    $region10: #{resnet_generator_forward.37} parent=5 // pred_check_branch
      %141 = sbr.rel (%p138) target = $region12
    $region11: #{resnet_generator_forward.37} parent=5 // pred_region
      %s142 = ssub.s32 %s9, 1
      // Predicated region
      $region13: #{resnet_generator_forward.37} parent=11 // pred_check
        %p143 = pneg %p79
      $region14: #{resnet_generator_forward.37} parent=11 // pred_check_branch
        %145 = sbr.rel (%p143) target = $region16
      $region15: #{resnet_generator_forward.37} parent=11 // pred_region
        _
      $region16: #{resnet_generator_forward.37} parent=11 // pred_fallthru
        _
      // Predicated region
      $region17: #{resnet_generator_forward.37} parent=11 // pred_check
        %p146 = pneg %p100
      $region18: #{resnet_generator_forward.37} parent=11 // pred_check_branch
        %148 = sbr.rel (%p146) target = $region20
      $region19: #{resnet_generator_forward.37} parent=11 // pred_region
        _
      $region20: #{resnet_generator_forward.37} parent=11 // pred_fallthru
        _
    $region12: #{resnet_generator_forward.37} parent=5 // pred_fallthru
      _
    %p149 = scmp.lt.s32.totalorder %s9, 224
    // Predicated region
    $region21: #{resnet_generator_forward.37} parent=5 // pred_check
      %p150 = pneg %p149
    $region22: #{resnet_generator_forward.37} parent=5 // pred_check_branch
      %152 = sbr.rel (%p150) target = $region24
    $region23: #{resnet_generator_forward.37} parent=5 // pred_region
      // Predicated region
      $region25: #{resnet_generator_forward.37} parent=23 // pred_check
        %p153 = pneg %p52
      $region26: #{resnet_generator_forward.37} parent=23 // pred_check_branch
        %155 = sbr.rel (%p153) target = $region28
      $region27: #{resnet_generator_forward.37} parent=23 // pred_region
        %s156 = sadd.s32 %s17, %s18
        %p157 = scmp.lt.s32.totalorder %s16, 1
        %s158 = scalar_select %p157, %s16, 1
        %p159 = scmp.lt.s32.totalorder %s156, 21
        %s160 = scalar_select %p159, %s156, 21
        %s161 = smul.addr %s160, 3
        %s162 = smul.addr %s158, 66
        %s163 = sadd.s32 %s161, %s162
        %s164 = smul.addr %s163, 4
        %s165 = scalar_lea.vmem %s0, %s164
        %s166 = sadd.s32 %s17, %s18
      $region28: #{resnet_generator_forward.37} parent=23 // pred_fallthru
        _
    $region24: #{resnet_generator_forward.37} parent=5 // pred_fallthru
      _
    %p167 = scmp.le.s32.totalorder 1, %s9
    %p168 = scmp.lt.s32.totalorder %s9, 225
    %p169 = pnand %p167, %p168
    %p170 = pneg %p169
    // Predicated region
    $region29: #{resnet_generator_forward.37} parent=5 // pred_check
      _
    $region30: #{resnet_generator_forward.37} parent=5 // pred_check_branch
      %172 = sbr.rel (%p169) target = $region32
    $region31: #{resnet_generator_forward.37} parent=5 // pred_region
      %s173 = ssub.s32 %s9, 1
      %s174 = sadd.s32 %s20, %s21
      %p175 = scmp.lt.s32.totalorder %s19, 1
      %s176 = scalar_select %p175, %s19, 1
      %p177 = scmp.lt.s32.totalorder %s174, 21
      %s178 = scalar_select %p177, %s174, 21
      %s179 = smul.addr %s178, 3
      %s180 = smul.addr %s176, 66
      %s181 = sadd.s32 %s179, %s180
      %s182 = smul.addr %s181, 4
      %s183 = scalar_lea.vmem %s0, %s182
      %p184 = pneg %p58
      %p185 = pneg %p55
      %p186 = pneg %p79
      %p187 = pneg %p76
      %p188 = pneg %p100
      %p189 = pneg %p97
      %p190 = pneg %p128
      %p191 = pneg %p125
      %p192 = scmp.lt.s32.totalorder %s19, 1
      %s193 = scalar_select %p192, %s19, 1
      %p194 = scmp.lt.s32.totalorder %s20, 15
      %s195 = scalar_select %p194, %s20, 15
      %s196 = smul.addr %s195, 2
      %s197 = smul.addr %s193, 32
      %s198 = sadd.s32 %s196, %s197
      %s199 = smul.addr %s198, 8
      %s200 = scalar_lea.vmem %s3, %s199
      %s201 = sadd.s32 %s20, %s21
      %p202 = scmp.lt.s32.totalorder %s19, 1
      %s203 = scalar_select %p202, %s19, 1
      %p204 = scmp.lt.s32.totalorder %s201, 21
      %s205 = scalar_select %p204, %s201, 21
      %s206 = smul.addr %s205, 3
      %s207 = smul.addr %s203, 66
      %s208 = sadd.s32 %s206, %s207
      %s209 = smul.addr %s208, 4
      %s210 = scalar_lea.vmem %s0, %s209
      %s211 = sadd.s32 %s20, %s21
      %p212 = scmp.lt.s32.totalorder %s19, 1
      %s213 = scalar_select %p212, %s19, 1
      %p214 = scmp.lt.s32.totalorder %s20, 15
      %s215 = scalar_select %p214, %s20, 15
      %s216 = smul.addr %s215, 2
      %s217 = smul.addr %s213, 32
      %s218 = sadd.s32 %s216, %s217
      %s219 = smul.addr %s218, 8
      %s220 = scalar_lea.vmem %s3, %s219
      %p222 = scmp.eq.s32.totalorder %s21, 0
      // Predicated region
      $region33: #{resnet_generator_forward.37} parent=31 // pred_check
        %p223 = pneg %p222
      $region34: #{resnet_generator_forward.37} parent=31 // pred_check_branch
        %225 = sbr.rel (%p223) target = $region36
      $region35: #{resnet_generator_forward.37} parent=31 // pred_region
        %226 = vst [vmem:[#allocation2] sm:$0xff] 0.0
        %227 = vst [vmem:[#allocation2 + $0x8] sm:$0xff] 0.0
      $region36: #{resnet_generator_forward.37} parent=31 // pred_fallthru
        _
      %v228 = vld [vmem:[%s210] sm:$0xf]
      %v229 = vld [vmem:[%s210 + $0x4] sm:$0xf]
      %v230 = vld [vmem:[%s210 + $0x8] sm:$0x7]
      %s231 = smul.u32 %s21, 112
      %s232 = smul.addr %s231, 4
      %s233 = scalar_lea.vmem %s1, %s232
      %v234 = vld [vmem:[%s233] sm:$0xf]
      %v235 = vld [vmem:[%s233 + $0x4] sm:$0xf]
      %v236 = vld [vmem:[%s233 + $0x8] sm:$0xf]
      %v237 = vld [vmem:[%s233 + $0xc] sm:$0xf]
      %v238 = vld [vmem:[%s233 + $0x10] sm:$0xf]
      %v239 = vld [vmem:[%s233 + $0x14] sm:$0xf]
      %v240 = vld [vmem:[%s233 + $0x18] sm:$0xf]
      %v241 = vld [vmem:[%s233 + $0x1c] sm:$0xf]
      %v242 = vld [vmem:[%s233 + $0x20] sm:$0xf]
      %v243 = vld [vmem:[%s233 + $0x24] sm:$0xf]
      %v244 = vld [vmem:[%s233 + $0x28] sm:$0xf]
      %v245 = vld [vmem:[%s233 + $0x2c] sm:$0xf]
      %v246 = vld [vmem:[%s233 + $0x30] sm:$0xf]
      %v247 = vld [vmem:[%s233 + $0x34] sm:$0xf]
      %v248 = vld [vmem:[%s233 + $0x38] sm:$0xf]
      %v249 = vld [vmem:[%s233 + $0x3c] sm:$0xf]
      %v250 = vld [vmem:[%s233 + $0x40] sm:$0xf]
      %v251 = vld [vmem:[%s233 + $0x44] sm:$0xf]
      %v252 = vld [vmem:[%s233 + $0x48] sm:$0xf]
      %v253 = vld [vmem:[%s233 + $0x4c] sm:$0xf]
      %v254 = vld [vmem:[%s233 + $0x50] sm:$0xf]
      %v255 = vld [vmem:[%s233 + $0x54] sm:$0xf]
      %v256 = vld [vmem:[%s233 + $0x58] sm:$0xf]
      %v257 = vld [vmem:[%s233 + $0x5c] sm:$0xf]
      %v258 = vld [vmem:[%s233 + $0x60] sm:$0xf]
      %v259 = vld [vmem:[%s233 + $0x64] sm:$0xf]
      %v260 = vld [vmem:[%s233 + $0x68] sm:$0xf]
      %v261 = vld [vmem:[%s233 + $0x6c] sm:$0xf]
      %v262 = vld [vmem:[%s233 + $0x70] sm:$0xf]
      %v263 = vld [vmem:[%s233 + $0x74] sm:$0xf]
      %v264 = vld [vmem:[%s233 + $0x78] sm:$0xf]
      %v265 = vld [vmem:[%s233 + $0x7c] sm:$0xf]
      %v266 = vld [vmem:[%s233 + $0x80] sm:$0xf]
      %v267 = vld [vmem:[%s233 + $0x84] sm:$0xf]
      %v268 = vld [vmem:[%s233 + $0x88] sm:$0xf]
      %v269 = vld [vmem:[%s233 + $0x8c] sm:$0xf]
      %v270 = vld [vmem:[%s233 + $0x90] sm:$0xf]
      %v271 = vld [vmem:[%s233 + $0x94] sm:$0xf]
      %v272 = vld [vmem:[%s233 + $0x98] sm:$0xf]
      %v273 = vld [vmem:[%s233 + $0x9c] sm:$0xf]
      %v274 = vld [vmem:[%s233 + $0xa0] sm:$0xf]
      %v275 = vld [vmem:[%s233 + $0xa4] sm:$0xf]
      %v276 = vld [vmem:[%s233 + $0xa8] sm:$0xf]
      %v277 = vld [vmem:[%s233 + $0xac] sm:$0xf]
      %v278 = vld [vmem:[%s233 + $0xb0] sm:$0xf]
      %v279 = vld [vmem:[%s233 + $0xb4] sm:$0xf]
      %v280 = vld [vmem:[%s233 + $0xb8] sm:$0xf]
      %v281 = vld [vmem:[%s233 + $0xbc] sm:$0xf]
      %v282 = vld [vmem:[%s233 + $0xc0] sm:$0xf]
      %v283 = vld [vmem:[%s233 + $0xc4] sm:$0xf]
      %v284 = vld [vmem:[%s233 + $0xc8] sm:$0xf]
      %v285 = vld [vmem:[%s233 + $0xcc] sm:$0xf]
      %v286 = vld [vmem:[%s233 + $0xd0] sm:$0xf]
      %v287 = vld [vmem:[%s233 + $0xd4] sm:$0xf]
      %v288 = vld [vmem:[%s233 + $0xd8] sm:$0xf]
      %v289 = vld [vmem:[%s233 + $0xdc] sm:$0xf]
      %v290 = vld [vmem:[%s233 + $0xe0] sm:$0xf]
      %v291 = vld [vmem:[%s233 + $0xe4] sm:$0xf]
      %v292 = vld [vmem:[%s233 + $0xe8] sm:$0xf]
      %v293 = vld [vmem:[%s233 + $0xec] sm:$0xf]
      %v294 = vld [vmem:[%s233 + $0xf0] sm:$0xf]
      %v295 = vld [vmem:[%s233 + $0xf4] sm:$0xf]
      %v296 = vld [vmem:[%s233 + $0xf8] sm:$0xf]
      %v297 = vld [vmem:[%s233 + $0xfc] sm:$0xf]
      %v298 = vld [vmem:[%s233 + $0x100] sm:$0xf]
      %v299 = vld [vmem:[%s233 + $0x104] sm:$0xf]
      %v300 = vld [vmem:[%s233 + $0x108] sm:$0xf]
      %v301 = vld [vmem:[%s233 + $0x10c] sm:$0xf]
      %v302 = vld [vmem:[%s233 + $0x110] sm:$0xf]
      %v303 = vld [vmem:[%s233 + $0x114] sm:$0xf]
      %v304 = vld [vmem:[%s233 + $0x118] sm:$0xf]
      %v305 = vld [vmem:[%s233 + $0x11c] sm:$0xf]
      %v306 = vld [vmem:[%s233 + $0x120] sm:$0xf]
      %v307 = vld [vmem:[%s233 + $0x124] sm:$0xf]
      %v308 = vld [vmem:[%s233 + $0x128] sm:$0xf]
      %v309 = vld [vmem:[%s233 + $0x12c] sm:$0xf]
      %v310 = vld [vmem:[%s233 + $0x130] sm:$0xf]
      %v311 = vld [vmem:[%s233 + $0x134] sm:$0xf]
      %v312 = vld [vmem:[%s233 + $0x138] sm:$0xf]
      %v313 = vld [vmem:[%s233 + $0x13c] sm:$0xf]
      %v314 = vld [vmem:[%s233 + $0x140] sm:$0xf]
      %v315 = vld [vmem:[%s233 + $0x144] sm:$0xf]
      %v316 = vld [vmem:[%s233 + $0x148] sm:$0xf]
      %v317 = vld [vmem:[%s233 + $0x14c] sm:$0xf]
      %v318 = vld [vmem:[%s233 + $0x150] sm:$0xf]
      %v319 = vld [vmem:[%s233 + $0x154] sm:$0xf]
      %v320 = vld [vmem:[%s233 + $0x158] sm:$0xf]
      %v321 = vld [vmem:[%s233 + $0x15c] sm:$0xf]
      %v322 = vld [vmem:[%s233 + $0x160] sm:$0xf]
      %v323 = vld [vmem:[%s233 + $0x164] sm:$0xf]
      %v324 = vld [vmem:[%s233 + $0x168] sm:$0xf]
      %v325 = vld [vmem:[%s233 + $0x16c] sm:$0xf]
      %v326 = vld [vmem:[%s233 + $0x170] sm:$0xf]
      %v327 = vld [vmem:[%s233 + $0x174] sm:$0xf]
      %v328 = vld [vmem:[%s233 + $0x178] sm:$0xf]
      %v329 = vld [vmem:[%s233 + $0x17c] sm:$0xf]
      %v330 = vld [vmem:[%s233 + $0x180] sm:$0xf]
      %v331 = vld [vmem:[%s233 + $0x184] sm:$0xf]
      %v332 = vld [vmem:[%s233 + $0x188] sm:$0xf]
      %v333 = vld [vmem:[%s233 + $0x18c] sm:$0xf]
      %v334 = vld [vmem:[%s233 + $0x190] sm:$0xf]
      %v335 = vld [vmem:[%s233 + $0x194] sm:$0xf]
      %v336 = vld [vmem:[%s233 + $0x198] sm:$0xf]
      %v337 = vld [vmem:[%s233 + $0x19c] sm:$0xf]
      %v338 = vld [vmem:[%s233 + $0x1a0] sm:$0xf]
      %v339 = vld [vmem:[%s233 + $0x1a4] sm:$0xf]
      %v340 = vld [vmem:[%s233 + $0x1a8] sm:$0xf]
      %v341 = vld [vmem:[%s233 + $0x1ac] sm:$0xf]
      %v342 = vld [vmem:[%s233 + $0x1b0] sm:$0xf]
      %v343 = vld [vmem:[%s233 + $0x1b4] sm:$0xf]
      %v344 = vld [vmem:[%s233 + $0x1b8] sm:$0xf]
      %v345 = vld [vmem:[%s233 + $0x1bc] sm:$0xf]
      %v346 = vld [vmem:[#allocation2] sm:$0xff]
      %v347 = vld [vmem:[#allocation2 + $0x8] sm:$0xff]
      %v350 = vunpack.c.l.b16 %v228
      %v351 = vunpack.c.l.b16 %v229
      %v352 = vpack.c.b16 %v351, %v350
      %v370 = vunpack.c.l.b16 %v234
      %v371 = vunpack.c.l.b16 %v235
      %v372 = vunpack.c.l.b16 %v236
      %v373 = vunpack.c.l.b16 %v237
      %v374 = vunpack.c.l.b16 %v238
      %v375 = vunpack.c.l.b16 %v239
      %v376 = vunpack.c.l.b16 %v240
      %v377 = vunpack.c.l.b16 %v241
      %v378 = vunpack.c.l.b16 %v242
      %v379 = vunpack.c.l.b16 %v243
      %v380 = vunpack.c.l.b16 %v244
      %v381 = vunpack.c.l.b16 %v245
      %v382 = vunpack.c.l.b16 %v246
      %v383 = vunpack.c.l.b16 %v247
      %v384 = vunpack.c.l.b16 %v248
      %v385 = vunpack.c.l.b16 %v249
      %v386 = vpack.c.b16 %v371, %v370
      %v387 = vpack.c.b16 %v373, %v372
      %v388 = vpack.c.b16 %v375, %v374
      %v389 = vpack.c.b16 %v377, %v376
      %v390 = vpack.c.b16 %v379, %v378
      %v391 = vpack.c.b16 %v381, %v380
      %v392 = vpack.c.b16 %v383, %v382
      %v393 = vpack.c.b16 %v385, %v384
      %402 = vmatprep.subr.bf16.mxu0 0
      %403 = vmatpush1.bf16.msra.mxu0 %v393
      %404 = vmatprep.subr.bf16.mxu0 0
      %405 = vmatpush1.bf16.msra.mxu0 %v392
      %406 = vmatprep.subr.bf16.mxu0 0
      %407 = vmatpush1.bf16.msra.mxu0 %v391
      %408 = vmatprep.subr.bf16.mxu0 0
      %409 = vmatpush1.bf16.msra.mxu0 %v390
      %410 = vmatprep.subr.bf16.mxu0 0
      %411 = vmatpush1.bf16.msra.mxu0 %v389
      %412 = vmatprep.subr.bf16.mxu0 0
      %413 = vmatpush1.bf16.msra.mxu0 %v388
      %414 = vmatprep.subr.bf16.mxu0 0
      %415 = vmatpush1.bf16.msra.mxu0 %v387
      %416 = vmatprep.subr.bf16.mxu0 0
      %417 = vmatpush1.bf16.msra.mxu0 %v386
      %418 = vmatprep.subr.bf16.mxu0 0
      %419 = vmatpush2.bf16.msra.mxu0 0
      %420 = vmatprep.subr.bf16.mxu0 0
      %421 = vmatpush2.bf16.msra.mxu0 0
      %422 = vmatprep.subr.bf16.mxu0 0
      %423 = vmatpush2.bf16.msra.mxu0 0
      %424 = vmatprep.subr.bf16.mxu0 0
      %425 = vmatpush2.bf16.msra.mxu0 0
      %426 = vmatprep.subr.bf16.mxu0 0
      %427 = vmatpush2.bf16.msra.mxu0 0
      %428 = vmatprep.subr.bf16.mxu0 0
      %429 = vmatpush2.bf16.msra.mxu0 0
      %430 = vmatprep.subr.bf16.mxu0 0
      %431 = vmatpush2.bf16.msra.mxu0 0
      %432 = vmatprep.subr.bf16.mxu0 0
      %433 = vmatpush2.bf16.msra.mxu0 0
      %434 = vmatprep.mubr.bf16.mxu0 0
      %435 = vmatmul.mubr.bf16.gmra.mxu0 %v352
      %v436 = vpop.f32.mrf.mxu0
      %v437 = vadd.f32 0.0, %v436
      %v438 = vpop.f32.mrf.mxu0
      %v439 = vpop.f32.mrf.mxu0
      %v440 = vadd.f32 0.0, %v439
      %v441 = vpop.f32.mrf.mxu0
      %442 = vdwg.mxu0
      %v443 = vadd.f32 %v346, %v437
      %v444 = vadd.f32 %v347, %v440
      %v446 = vunpack.c.l.b16 %v230
      %v447 = vpack.c.b16 %v446, %v446
      %vm448 = vsmask.f32 7424
      %v450 = vshrl.u32 %v352, 16
      %v452 = vshll.u32 %v352, 16
      %v454 = vrot.slane %v452, 1
      %v455 = vor.u32 %v450, %v454
      %v457 = vshll.u32 %v447, 16
      %v459 = vrot.slane %v457, 1
      %v460 = vsel %vm448, %v455, %v459
      %v478 = vunpack.c.l.b16 %v250
      %v479 = vunpack.c.l.b16 %v251
      %v480 = vunpack.c.l.b16 %v252
      %v481 = vunpack.c.l.b16 %v253
      %v482 = vunpack.c.l.b16 %v254
      %v483 = vunpack.c.l.b16 %v255
      %v484 = vunpack.c.l.b16 %v256
      %v485 = vunpack.c.l.b16 %v257
      %v486 = vunpack.c.l.b16 %v258
      %v487 = vunpack.c.l.b16 %v259
      %v488 = vunpack.c.l.b16 %v260
      %v489 = vunpack.c.l.b16 %v261
      %v490 = vunpack.c.l.b16 %v262
      %v491 = vunpack.c.l.b16 %v263
      %v492 = vunpack.c.l.b16 %v264
      %v493 = vunpack.c.l.b16 %v265
      %v494 = vpack.c.b16 %v479, %v478
      %v495 = vpack.c.b16 %v481, %v480
      %v496 = vpack.c.b16 %v483, %v482
      %v497 = vpack.c.b16 %v485, %v484
      %v498 = vpack.c.b16 %v487, %v486
      %v499 = vpack.c.b16 %v489, %v488
      %v500 = vpack.c.b16 %v491, %v490
      %v501 = vpack.c.b16 %v493, %v492
      %510 = vmatprep.subr.bf16.mxu0 0
      %511 = vmatpush1.bf16.msra.mxu0 %v501
      %512 = vmatprep.subr.bf16.mxu0 0
      %513 = vmatpush1.bf16.msra.mxu0 %v500
      %514 = vmatprep.subr.bf16.mxu0 0
      %515 = vmatpush1.bf16.msra.mxu0 %v499
      %516 = vmatprep.subr.bf16.mxu0 0
      %517 = vmatpush1.bf16.msra.mxu0 %v498
      %518 = vmatprep.subr.bf16.mxu0 0
      %519 = vmatpush1.bf16.msra.mxu0 %v497
      %520 = vmatprep.subr.bf16.mxu0 0
      %521 = vmatpush1.bf16.msra.mxu0 %v496
      %522 = vmatprep.subr.bf16.mxu0 0
      %523 = vmatpush1.bf16.msra.mxu0 %v495
      %524 = vmatprep.subr.bf16.mxu0 0
      %525 = vmatpush1.bf16.msra.mxu0 %v494
      %526 = vmatprep.subr.bf16.mxu0 0
      %527 = vmatpush2.bf16.msra.mxu0 0
      %528 = vmatprep.subr.bf16.mxu0 0
      %529 = vmatpush2.bf16.msra.mxu0 0
      %530 = vmatprep.subr.bf16.mxu0 0
      %531 = vmatpush2.bf16.msra.mxu0 0
      %532 = vmatprep.subr.bf16.mxu0 0
      %533 = vmatpush2.bf16.msra.mxu0 0
      %534 = vmatprep.subr.bf16.mxu0 0
      %535 = vmatpush2.bf16.msra.mxu0 0
      %536 = vmatprep.subr.bf16.mxu0 0
      %537 = vmatpush2.bf16.msra.mxu0 0
      %538 = vmatprep.subr.bf16.mxu0 0
      %539 = vmatpush2.bf16.msra.mxu0 0
      %540 = vmatprep.subr.bf16.mxu0 0
      %541 = vmatpush2.bf16.msra.mxu0 0
      %542 = vmatprep.mubr.bf16.mxu0 0
      %543 = vmatmul.mubr.bf16.gmra.mxu0 %v460
      %v544 = vpop.f32.mrf.mxu0
      %v545 = vadd.f32 0.0, %v544
      %v546 = vpop.f32.mrf.mxu0
      %v547 = vpop.f32.mrf.mxu0
      %v548 = vadd.f32 0.0, %v547
      %v549 = vpop.f32.mrf.mxu0
      %550 = vdwg.mxu0
      %v551 = vadd.f32 %v443, %v545
      %v552 = vadd.f32 %v444, %v548
      %vm553 = vcmask 1046528
      %v554 = vrot.slane %v352, 1
      %v555 = vrot.slane %v447, 1
      %v556 = vsel %vm553, %v554, %v555
      %v574 = vunpack.c.l.b16 %v266
      %v575 = vunpack.c.l.b16 %v267
      %v576 = vunpack.c.l.b16 %v268
      %v577 = vunpack.c.l.b16 %v269
      %v578 = vunpack.c.l.b16 %v270
      %v579 = vunpack.c.l.b16 %v271
      %v580 = vunpack.c.l.b16 %v272
      %v581 = vunpack.c.l.b16 %v273
      %v582 = vunpack.c.l.b16 %v274
      %v583 = vunpack.c.l.b16 %v275
      %v584 = vunpack.c.l.b16 %v276
      %v585 = vunpack.c.l.b16 %v277
      %v586 = vunpack.c.l.b16 %v278
      %v587 = vunpack.c.l.b16 %v279
      %v588 = vunpack.c.l.b16 %v280
      %v589 = vunpack.c.l.b16 %v281
      %v590 = vpack.c.b16 %v575, %v574
      %v591 = vpack.c.b16 %v577, %v576
      %v592 = vpack.c.b16 %v579, %v578
      %v593 = vpack.c.b16 %v581, %v580
      %v594 = vpack.c.b16 %v583, %v582
      %v595 = vpack.c.b16 %v585, %v584
      %v596 = vpack.c.b16 %v587, %v586
      %v597 = vpack.c.b16 %v589, %v588
      %606 = vmatprep.subr.bf16.mxu0 0
      %607 = vmatpush1.bf16.msra.mxu0 %v597
      %608 = vmatprep.subr.bf16.mxu0 0
      %609 = vmatpush1.bf16.msra.mxu0 %v596
      %610 = vmatprep.subr.bf16.mxu0 0
      %611 = vmatpush1.bf16.msra.mxu0 %v595
      %612 = vmatprep.subr.bf16.mxu0 0
      %613 = vmatpush1.bf16.msra.mxu0 %v594
      %614 = vmatprep.subr.bf16.mxu0 0
      %615 = vmatpush1.bf16.msra.mxu0 %v593
      %616 = vmatprep.subr.bf16.mxu0 0
      %617 = vmatpush1.bf16.msra.mxu0 %v592
      %618 = vmatprep.subr.bf16.mxu0 0
      %619 = vmatpush1.bf16.msra.mxu0 %v591
      %620 = vmatprep.subr.bf16.mxu0 0
      %621 = vmatpush1.bf16.msra.mxu0 %v590
      %622 = vmatprep.subr.bf16.mxu0 0
      %623 = vmatpush2.bf16.msra.mxu0 0
      %624 = vmatprep.subr.bf16.mxu0 0
      %625 = vmatpush2.bf16.msra.mxu0 0
      %626 = vmatprep.subr.bf16.mxu0 0
      %627 = vmatpush2.bf16.msra.mxu0 0
      %628 = vmatprep.subr.bf16.mxu0 0
      %629 = vmatpush2.bf16.msra.mxu0 0
      %630 = vmatprep.subr.bf16.mxu0 0
      %631 = vmatpush2.bf16.msra.mxu0 0
      %632 = vmatprep.subr.bf16.mxu0 0
      %633 = vmatpush2.bf16.msra.mxu0 0
      %634 = vmatprep.subr.bf16.mxu0 0
      %635 = vmatpush2.bf16.msra.mxu0 0
      %636 = vmatprep.subr.bf16.mxu0 0
      %637 = vmatpush2.bf16.msra.mxu0 0
      %638 = vmatprep.mubr.bf16.mxu0 0
      %639 = vmatmul.mubr.bf16.gmra.mxu0 %v556
      %v640 = vpop.f32.mrf.mxu0
      %v641 = vadd.f32 0.0, %v640
      %v642 = vpop.f32.mrf.mxu0
      %v643 = vpop.f32.mrf.mxu0
      %v644 = vadd.f32 0.0, %v643
      %v645 = vpop.f32.mrf.mxu0
      %646 = vdwg.mxu0
      %v647 = vadd.f32 %v551, %v641
      %v648 = vadd.f32 %v552, %v644
      %vm649 = vsmask.f32 6400
      %v650 = vrot.slane %v450, 1
      %v651 = vrot.slane %v452, 2
      %v652 = vor.u32 %v650, %v651
      %v653 = vshrl.u32 %v447, 16
      %v655 = vrot.slane %v653, 1
      %v656 = vrot.slane %v457, 2
      %v657 = vor.u32 %v655, %v656
      %v658 = vsel %vm649, %v652, %v657
      %v676 = vunpack.c.l.b16 %v282
      %v677 = vunpack.c.l.b16 %v283
      %v678 = vunpack.c.l.b16 %v284
      %v679 = vunpack.c.l.b16 %v285
      %v680 = vunpack.c.l.b16 %v286
      %v681 = vunpack.c.l.b16 %v287
      %v682 = vunpack.c.l.b16 %v288
      %v683 = vunpack.c.l.b16 %v289
      %v684 = vunpack.c.l.b16 %v290
      %v685 = vunpack.c.l.b16 %v291
      %v686 = vunpack.c.l.b16 %v292
      %v687 = vunpack.c.l.b16 %v293
      %v688 = vunpack.c.l.b16 %v294
      %v689 = vunpack.c.l.b16 %v295
      %v690 = vunpack.c.l.b16 %v296
      %v691 = vunpack.c.l.b16 %v297
      %v692 = vpack.c.b16 %v677, %v676
      %v693 = vpack.c.b16 %v679, %v678
      %v694 = vpack.c.b16 %v681, %v680
      %v695 = vpack.c.b16 %v683, %v682
      %v696 = vpack.c.b16 %v685, %v684
      %v697 = vpack.c.b16 %v687, %v686
      %v698 = vpack.c.b16 %v689, %v688
      %v699 = vpack.c.b16 %v691, %v690
      %708 = vmatprep.subr.bf16.mxu0 0
      %709 = vmatpush1.bf16.msra.mxu0 %v699
      %710 = vmatprep.subr.bf16.mxu0 0
      %711 = vmatpush1.bf16.msra.mxu0 %v698
      %712 = vmatprep.subr.bf16.mxu0 0
      %713 = vmatpush1.bf16.msra.mxu0 %v697
      %714 = vmatprep.subr.bf16.mxu0 0
      %715 = vmatpush1.bf16.msra.mxu0 %v696
      %716 = vmatprep.subr.bf16.mxu0 0
      %717 = vmatpush1.bf16.msra.mxu0 %v695
      %718 = vmatprep.subr.bf16.mxu0 0
      %719 = vmatpush1.bf16.msra.mxu0 %v694
      %720 = vmatprep.subr.bf16.mxu0 0
      %721 = vmatpush1.bf16.msra.mxu0 %v693
      %722 = vmatprep.subr.bf16.mxu0 0
      %723 = vmatpush1.bf16.msra.mxu0 %v692
      %724 = vmatprep.subr.bf16.mxu0 0
      %725 = vmatpush2.bf16.msra.mxu0 0
      %726 = vmatprep.subr.bf16.mxu0 0
      %727 = vmatpush2.bf16.msra.mxu0 0
      %728 = vmatprep.subr.bf16.mxu0 0
      %729 = vmatpush2.bf16.msra.mxu0 0
      %730 = vmatprep.subr.bf16.mxu0 0
      %731 = vmatpush2.bf16.msra.mxu0 0
      %732 = vmatprep.subr.bf16.mxu0 0
      %733 = vmatpush2.bf16.msra.mxu0 0
      %734 = vmatprep.subr.bf16.mxu0 0
      %735 = vmatpush2.bf16.msra.mxu0 0
      %736 = vmatprep.subr.bf16.mxu0 0
      %737 = vmatpush2.bf16.msra.mxu0 0
      %738 = vmatprep.subr.bf16.mxu0 0
      %739 = vmatpush2.bf16.msra.mxu0 0
      %740 = vmatprep.mubr.bf16.mxu0 0
      %741 = vmatmul.mubr.bf16.gmra.mxu0 %v658
      %v742 = vpop.f32.mrf.mxu0
      %v743 = vadd.f32 0.0, %v742
      %v744 = vpop.f32.mrf.mxu0
      %v745 = vpop.f32.mrf.mxu0
      %v746 = vadd.f32 0.0, %v745
      %v747 = vpop.f32.mrf.mxu0
      %748 = vdwg.mxu0
      %v749 = vadd.f32 %v647, %v743
      %v750 = vadd.f32 %v648, %v746
      %vm751 = vcmask 1045504
      %v752 = vrot.slane %v352, 2
      %v753 = vrot.slane %v447, 2
      %v754 = vsel %vm751, %v752, %v753
      %v772 = vunpack.c.l.b16 %v298
      %v773 = vunpack.c.l.b16 %v299
      %v774 = vunpack.c.l.b16 %v300
      %v775 = vunpack.c.l.b16 %v301
      %v776 = vunpack.c.l.b16 %v302
      %v777 = vunpack.c.l.b16 %v303
      %v778 = vunpack.c.l.b16 %v304
      %v779 = vunpack.c.l.b16 %v305
      %v780 = vunpack.c.l.b16 %v306
      %v781 = vunpack.c.l.b16 %v307
      %v782 = vunpack.c.l.b16 %v308
      %v783 = vunpack.c.l.b16 %v309
      %v784 = vunpack.c.l.b16 %v310
      %v785 = vunpack.c.l.b16 %v311
      %v786 = vunpack.c.l.b16 %v312
      %v787 = vunpack.c.l.b16 %v313
      %v788 = vpack.c.b16 %v773, %v772
      %v789 = vpack.c.b16 %v775, %v774
      %v790 = vpack.c.b16 %v777, %v776
      %v791 = vpack.c.b16 %v779, %v778
      %v792 = vpack.c.b16 %v781, %v780
      %v793 = vpack.c.b16 %v783, %v782
      %v794 = vpack.c.b16 %v785, %v784
      %v795 = vpack.c.b16 %v787, %v786
      %804 = vmatprep.subr.bf16.mxu0 0
      %805 = vmatpush1.bf16.msra.mxu0 %v795
      %806 = vmatprep.subr.bf16.mxu0 0
      %807 = vmatpush1.bf16.msra.mxu0 %v794
      %808 = vmatprep.subr.bf16.mxu0 0
      %809 = vmatpush1.bf16.msra.mxu0 %v793
      %810 = vmatprep.subr.bf16.mxu0 0
      %811 = vmatpush1.bf16.msra.mxu0 %v792
      %812 = vmatprep.subr.bf16.mxu0 0
      %813 = vmatpush1.bf16.msra.mxu0 %v791
      %814 = vmatprep.subr.bf16.mxu0 0
      %815 = vmatpush1.bf16.msra.mxu0 %v790
      %816 = vmatprep.subr.bf16.mxu0 0
      %817 = vmatpush1.bf16.msra.mxu0 %v789
      %818 = vmatprep.subr.bf16.mxu0 0
      %819 = vmatpush1.bf16.msra.mxu0 %v788
      %820 = vmatprep.subr.bf16.mxu0 0
      %821 = vmatpush2.bf16.msra.mxu0 0
      %822 = vmatprep.subr.bf16.mxu0 0
      %823 = vmatpush2.bf16.msra.mxu0 0
      %824 = vmatprep.subr.bf16.mxu0 0
      %825 = vmatpush2.bf16.msra.mxu0 0
      %826 = vmatprep.subr.bf16.mxu0 0
      %827 = vmatpush2.bf16.msra.mxu0 0
      %828 = vmatprep.subr.bf16.mxu0 0
      %829 = vmatpush2.bf16.msra.mxu0 0
      %830 = vmatprep.subr.bf16.mxu0 0
      %831 = vmatpush2.bf16.msra.mxu0 0
      %832 = vmatprep.subr.bf16.mxu0 0
      %833 = vmatpush2.bf16.msra.mxu0 0
      %834 = vmatprep.subr.bf16.mxu0 0
      %835 = vmatpush2.bf16.msra.mxu0 0
      %836 = vmatprep.mubr.bf16.mxu0 0
      %837 = vmatmul.mubr.bf16.gmra.mxu0 %v754
      %v838 = vpop.f32.mrf.mxu0
      %v839 = vadd.f32 0.0, %v838
      %v840 = vpop.f32.mrf.mxu0
      %v841 = vpop.f32.mrf.mxu0
      %v842 = vadd.f32 0.0, %v841
      %v843 = vpop.f32.mrf.mxu0
      %844 = vdwg.mxu0
      %v845 = vadd.f32 %v749, %v839
      %v846 = vadd.f32 %v750, %v842
      %vm847 = vsmask.f32 5376
      %v848 = vrot.slane %v450, 2
      %v849 = vrot.slane %v452, 3
      %v850 = vor.u32 %v848, %v849
      %v851 = vrot.slane %v653, 2
      %v852 = vrot.slane %v457, 3
      %v853 = vor.u32 %v851, %v852
      %v854 = vsel %vm847, %v850, %v853
      %v872 = vunpack.c.l.b16 %v314
      %v873 = vunpack.c.l.b16 %v315
      %v874 = vunpack.c.l.b16 %v316
      %v875 = vunpack.c.l.b16 %v317
      %v876 = vunpack.c.l.b16 %v318
      %v877 = vunpack.c.l.b16 %v319
      %v878 = vunpack.c.l.b16 %v320
      %v879 = vunpack.c.l.b16 %v321
      %v880 = vunpack.c.l.b16 %v322
      %v881 = vunpack.c.l.b16 %v323
      %v882 = vunpack.c.l.b16 %v324
      %v883 = vunpack.c.l.b16 %v325
      %v884 = vunpack.c.l.b16 %v326
      %v885 = vunpack.c.l.b16 %v327
      %v886 = vunpack.c.l.b16 %v328
      %v887 = vunpack.c.l.b16 %v329
      %v888 = vpack.c.b16 %v873, %v872
      %v889 = vpack.c.b16 %v875, %v874
      %v890 = vpack.c.b16 %v877, %v876
      %v891 = vpack.c.b16 %v879, %v878
      %v892 = vpack.c.b16 %v881, %v880
      %v893 = vpack.c.b16 %v883, %v882
      %v894 = vpack.c.b16 %v885, %v884
      %v895 = vpack.c.b16 %v887, %v886
      %904 = vmatprep.subr.bf16.mxu0 0
      %905 = vmatpush1.bf16.msra.mxu0 %v895
      %906 = vmatprep.subr.bf16.mxu0 0
      %907 = vmatpush1.bf16.msra.mxu0 %v894
      %908 = vmatprep.subr.bf16.mxu0 0
      %909 = vmatpush1.bf16.msra.mxu0 %v893
      %910 = vmatprep.subr.bf16.mxu0 0
      %911 = vmatpush1.bf16.msra.mxu0 %v892
      %912 = vmatprep.subr.bf16.mxu0 0
      %913 = vmatpush1.bf16.msra.mxu0 %v891
      %914 = vmatprep.subr.bf16.mxu0 0
      %915 = vmatpush1.bf16.msra.mxu0 %v890
      %916 = vmatprep.subr.bf16.mxu0 0
      %917 = vmatpush1.bf16.msra.mxu0 %v889
      %918 = vmatprep.subr.bf16.mxu0 0
      %919 = vmatpush1.bf16.msra.mxu0 %v888
      %920 = vmatprep.subr.bf16.mxu0 0
      %921 = vmatpush2.bf16.msra.mxu0 0
      %922 = vmatprep.subr.bf16.mxu0 0
      %923 = vmatpush2.bf16.msra.mxu0 0
      %924 = vmatprep.subr.bf16.mxu0 0
      %925 = vmatpush2.bf16.msra.mxu0 0
      %926 = vmatprep.subr.bf16.mxu0 0
      %927 = vmatpush2.bf16.msra.mxu0 0
      %928 = vmatprep.subr.bf16.mxu0 0
      %929 = vmatpush2.bf16.msra.mxu0 0
      %930 = vmatprep.subr.bf16.mxu0 0
      %931 = vmatpush2.bf16.msra.mxu0 0
      %932 = vmatprep.subr.bf16.mxu0 0
      %933 = vmatpush2.bf16.msra.mxu0 0
      %934 = vmatprep.subr.bf16.mxu0 0
      %935 = vmatpush2.bf16.msra.mxu0 0
      %936 = vmatprep.mubr.bf16.mxu0 0
      %937 = vmatmul.mubr.bf16.gmra.mxu0 %v854
      %v938 = vpop.f32.mrf.mxu0
      %v939 = vadd.f32 0.0, %v938
      %v940 = vpop.f32.mrf.mxu0
      %v941 = vpop.f32.mrf.mxu0
      %v942 = vadd.f32 0.0, %v941
      %v943 = vpop.f32.mrf.mxu0
      %944 = vdwg.mxu0
      %v945 = vadd.f32 %v845, %v939
      %v946 = vadd.f32 %v846, %v942
      %vm947 = vcmask 1044480
      %v948 = vrot.slane %v352, 3
      %v949 = vrot.slane %v447, 3
      %v950 = vsel %vm947, %v948, %v949
      %v968 = vunpack.c.l.b16 %v330
      %v969 = vunpack.c.l.b16 %v331
      %v970 = vunpack.c.l.b16 %v332
      %v971 = vunpack.c.l.b16 %v333
      %v972 = vunpack.c.l.b16 %v334
      %v973 = vunpack.c.l.b16 %v335
      %v974 = vunpack.c.l.b16 %v336
      %v975 = vunpack.c.l.b16 %v337
      %v976 = vunpack.c.l.b16 %v338
      %v977 = vunpack.c.l.b16 %v339
      %v978 = vunpack.c.l.b16 %v340
      %v979 = vunpack.c.l.b16 %v341
      %v980 = vunpack.c.l.b16 %v342
      %v981 = vunpack.c.l.b16 %v343
      %v982 = vunpack.c.l.b16 %v344
      %v983 = vunpack.c.l.b16 %v345
      %v984 = vpack.c.b16 %v969, %v968
      %v985 = vpack.c.b16 %v971, %v970
      %v986 = vpack.c.b16 %v973, %v972
      %v987 = vpack.c.b16 %v975, %v974
      %v988 = vpack.c.b16 %v977, %v976
      %v989 = vpack.c.b16 %v979, %v978
      %v990 = vpack.c.b16 %v981, %v980
      %v991 = vpack.c.b16 %v983, %v982
      %1000 = vmatprep.subr.bf16.mxu0 0
      %1001 = vmatpush1.bf16.msra.mxu0 %v991
      %1002 = vmatprep.subr.bf16.mxu0 0
      %1003 = vmatpush1.bf16.msra.mxu0 %v990
      %1004 = vmatprep.subr.bf16.mxu0 0
      %1005 = vmatpush1.bf16.msra.mxu0 %v989
      %1006 = vmatprep.subr.bf16.mxu0 0
      %1007 = vmatpush1.bf16.msra.mxu0 %v988
      %1008 = vmatprep.subr.bf16.mxu0 0
      %1009 = vmatpush1.bf16.msra.mxu0 %v987
      %1010 = vmatprep.subr.bf16.mxu0 0
      %1011 = vmatpush1.bf16.msra.mxu0 %v986
      %1012 = vmatprep.subr.bf16.mxu0 0
      %1013 = vmatpush1.bf16.msra.mxu0 %v985
      %1014 = vmatprep.subr.bf16.mxu0 0
      %1015 = vmatpush1.bf16.msra.mxu0 %v984
      %1016 = vmatprep.subr.bf16.mxu0 0
      %1017 = vmatpush2.bf16.msra.mxu0 0
      %1018 = vmatprep.subr.bf16.mxu0 0
      %1019 = vmatpush2.bf16.msra.mxu0 0
      %1020 = vmatprep.subr.bf16.mxu0 0
      %1021 = vmatpush2.bf16.msra.mxu0 0
      %1022 = vmatprep.subr.bf16.mxu0 0
      %1023 = vmatpush2.bf16.msra.mxu0 0
      %1024 = vmatprep.subr.bf16.mxu0 0
      %1025 = vmatpush2.bf16.msra.mxu0 0
      %1026 = vmatprep.subr.bf16.mxu0 0
      %1027 = vmatpush2.bf16.msra.mxu0 0
      %1028 = vmatprep.subr.bf16.mxu0 0
      %1029 = vmatpush2.bf16.msra.mxu0 0
      %1030 = vmatprep.subr.bf16.mxu0 0
      %1031 = vmatpush2.bf16.msra.mxu0 0
      %1032 = vmatprep.mubr.bf16.mxu0 0
      %1033 = vmatmul.mubr.bf16.gmra.mxu0 %v950
      %v1034 = vpop.f32.mrf.mxu0
      %v1035 = vadd.f32 0.0, %v1034
      %v1036 = vpop.f32.mrf.mxu0
      %v1037 = vpop.f32.mrf.mxu0
      %v1038 = vadd.f32 0.0, %v1037
      %v1039 = vpop.f32.mrf.mxu0
      %1040 = vdwg.mxu0
      %v1041 = vadd.f32 %v945, %v1035
      %v1042 = vadd.f32 %v946, %v1038
      %1043 = vst [vmem:[#allocation2] sm:$0xff] %v1041
      %1044 = vst [vmem:[#allocation2 + $0x8] sm:$0xff] %v1042
      %p1045 = scmp.eq.s32.totalorder %s21, 6
      // Predicated region
      $region37: #{resnet_generator_forward.37} parent=31 // pred_check
        %p1046 = pneg %p1045
      $region38: #{resnet_generator_forward.37} parent=31 // pred_check_branch
        %1048 = sbr.rel (%p1046) target = $region40
      $region39: #{resnet_generator_forward.37} parent=31 // pred_region
        %v1049 = vld [vmem:[#allocation2] sm:$0xff]
        %v1050 = vld [vmem:[#allocation2 + $0x8] sm:$0xff]
        %v1051 = vld [vmem:[%s2] sm:$0x1]
        %v1053 = vlaneseq
        %v1054 = vshrl.u32 %v1053, 7
        %v1055 = vsub.s32 0, %v1054
        %v1056 = vrot.slane %v1051, %v1055
        %v1058 = vadd.f32 %v1049, %v1056
        %v1059 = vadd.f32 %v1050, %v1056
        %v1060 = vtanh.pop %v1058
        %v1061 = vtanh.pop %v1059
        %1062 = vst [vmem:[%s220] sm:$0xff] %v1060
        %1063 = vst [vmem:[%s220 + $0x8] sm:$0xff] %v1061
      $region40: #{resnet_generator_forward.37} parent=31 // pred_fallthru
        _
      %p1064 = scmp.lt.s32.totalorder %s19, 1
      %s1065 = scalar_select %p1064, %s19, 1
      %p1066 = scmp.lt.s32.totalorder %s20, 15
      %s1067 = scalar_select %p1066, %s20, 15
      %s1068 = smul.addr %s1067, 2
      %s1069 = smul.addr %s1065, 32
      %s1070 = sadd.s32 %s1068, %s1069
      %s1071 = smul.addr %s1070, 8
      %s1072 = scalar_lea.vmem %s3, %s1071
      // Predicated region
      $region41: #{resnet_generator_forward.37} parent=31 // pred_check
        %p1073 = pneg %p125
      $region42: #{resnet_generator_forward.37} parent=31 // pred_check_branch
        %1075 = sbr.rel (%p1073) target = $region44
      $region43: #{resnet_generator_forward.37} parent=31 // pred_region
        _
      $region44: #{resnet_generator_forward.37} parent=31 // pred_fallthru
        _
    $region32: #{resnet_generator_forward.37} parent=5 // pred_fallthru
      _
    %p1076 = scmp.le.s32.totalorder 2, %s9
    // Predicated region
    $region45: #{resnet_generator_forward.37} parent=5 // pred_check
      %p1077 = pneg %p1076
    $region46: #{resnet_generator_forward.37} parent=5 // pred_check_branch
      %1079 = sbr.rel (%p1077) target = $region48
    $region47: #{resnet_generator_forward.37} parent=5 // pred_region
      %s1080 = ssub.s32 %s9, 2
      // Predicated region
      $region49: #{resnet_generator_forward.37} parent=47 // pred_check
        %p1081 = pneg %p131
      $region50: #{resnet_generator_forward.37} parent=47 // pred_check_branch
        %1083 = sbr.rel (%p1081) target = $region52
      $region51: #{resnet_generator_forward.37} parent=47 // pred_region
        %p1084 = scmp.lt.s32.totalorder %s22, 1
        %s1085 = scalar_select %p1084, %s22, 1
        %p1086 = scmp.lt.s32.totalorder %s23, 15
        %s1087 = scalar_select %p1086, %s23, 15
        %s1088 = smul.addr %s1087, 2
        %s1089 = smul.addr %s1085, 32
        %s1090 = sadd.s32 %s1088, %s1089
        %s1091 = smul.addr %s1090, 8
        %s1092 = scalar_lea.vmem %s3, %s1091
      $region52: #{resnet_generator_forward.37} parent=47 // pred_fallthru
        _
    $region48: #{resnet_generator_forward.37} parent=5 // pred_fallthru
      _
  $region6: #{resnet_generator_forward.37} parent=0 // loop_footer
    %s13 = sadd.s32 1, %s9
  $region7: #{resnet_generator_forward.37} parent=0 // loop_footer_branch
    %8 = sbr.rel target = $region3
  $region8: #{resnet_generator_forward.37} parent=0 // loop_exit
    _

</llo_original>
